<compile_context>
chip_gen: v7x
topology: tpu7x:2x2x1
jax: 0.10.0
libtpu: 0.0.40
codegen_flags: <defaults>
</compile_context>

<pallas_src>
import functools

import jax
import jax.numpy as jnp
from jax.experimental import pallas as pl
from jax.experimental.pallas import tpu as pltpu


# -----------------------------------------------------------------------------
# Kernel A: Linear(latent -> 128*s*s) fused with BatchNorm2d(128) (train stats)
# -----------------------------------------------------------------------------
def linear_bn_kernel(z_ref, w_ref, b_ref, g_ref, bt_ref, out_ref, *, n_blk, C, eps):
    # z: (B, K) bf16, w: (K, n_blk*C) bf16 (columns permuted to NHWC order),
    # b: (1, n_blk*C) f32, g/bt: (1, C) f32, out: (B, n_blk*C) f32.
    y = jnp.dot(z_ref[...], w_ref[...], preferred_element_type=jnp.float32)
    y = y + b_ref[...]
    B = y.shape[0]
    R = B * n_blk                                  # elements per channel (B*H*W)

    # One-pass per-channel stats; channel c lives in columns {p*C + c}.
    s1 = jnp.zeros((1, C), jnp.float32)
    s2 = jnp.zeros((1, C), jnp.float32)
    for p in range(n_blk):                         # 128-lane-aligned slices
        blk = y[:, p * C:(p + 1) * C]
        s1 = s1 + jnp.sum(blk, axis=0, keepdims=True)
        s2 = s2 + jnp.sum(blk * blk, axis=0, keepdims=True)
    mean = s1 / R
    var = s2 / R - mean * mean
    scale = jax.lax.rsqrt(var + eps) * g_ref[...]       # (1, C)
    shift = bt_ref[...] - mean * scale                  # (1, C)

    scale_f = jnp.concatenate([scale] * n_blk, axis=-1)  # (1, n_blk*C)
    shift_f = jnp.concatenate([shift] * n_blk, axis=-1)
    out_ref[...] = y * scale_f + shift_f


# -----------------------------------------------------------------------------
# Kernel B: [nearest-2x upsample -> Conv3x3(pad=1) -> BN -> LeakyReLU] with the
# upsample folded into the conv (parity decomposition, 2x2 effective taps).
# -----------------------------------------------------------------------------
def up_conv_bn_lrelu_kernel(xp_ref, w_ref, b_ref, g_ref, bt_ref, out_ref,
                            *, h, w, eps, slope):
    # xp: (B, h+2, w+2, Cin) f32 -- LOW-RES input, padded by 1 (no upsample).
    # w : (4, 4*Cin, Cout) bf16  -- effective 2x2 weights per parity p=2*py+px.
    # out: (4, B*h*w, Cout) f32  -- parity planes of the (B, 2h, 2w, Cout) map.
    B, _, _, Cin = xp_ref.shape
    Cout = out_ref.shape[-1]
    R = B * h * w
    Rtot = 4 * R                                   # = B * (2h) * (2w)
    xp = xp_ref[...]

    s1 = jnp.zeros((1, Cout), jnp.float32)
    s2 = jnp.zeros((1, Cout), jnp.float32)
    ys = []
    for py in range(2):
        for px in range(2):
            cols = [xp[:, py + ky:py + ky + h, px + kx:px + kx + w, :].reshape(R, Cin)
                    for ky in range(2) for kx in range(2)]
            lhs = jnp.concatenate(cols, axis=-1).astype(jnp.bfloat16)   # (R, 4*Cin)
            p = 2 * py + px
            y = jnp.dot(lhs, w_ref[p, :, :], preferred_element_type=jnp.float32)
            y = y + b_ref[...]
            s1 = s1 + jnp.sum(y, axis=0, keepdims=True)
            s2 = s2 + jnp.sum(y * y, axis=0, keepdims=True)
            ys.append(y)

    mean = s1 / Rtot
    var = s2 / Rtot - mean * mean
    scale = jax.lax.rsqrt(var + eps) * g_ref[...]
    shift = bt_ref[...] - mean * scale
    for p in range(4):
        y = ys[p] * scale + shift
        out_ref[p, :, :] = jnp.where(y > 0, y, slope * y)


# -----------------------------------------------------------------------------
# Kernel C: [up2x -> conv2 -> BN -> LReLU -> conv3 -> Tanh -> BN(affine=False)],
# fully fused; conv2 is upsample-fused (parity), its output stays in VMEM as 4
# padded parity planes, and conv3 reads those planes via a static tap table.
# -----------------------------------------------------------------------------
# For conv3 output parity q and tap d in {0,1,2}: (source plane parity, slice start)
_TAP = (((1, 0), (0, 1), (1, 1)),    # q = 0
        ((0, 1), (1, 1), (0, 2)))    # q = 1


def up_convblock2_kernel(xp_ref, w2_ref, b2_ref, g2_ref, bt2_ref, w3_ref, b3_ref,
                         out_ref, up_ref, *, h, w, Cmid, eps2, eps3, slope):
    # xp : (B, h+2, w+2, Cin) f32   -- x1 padded by 1 (h,w = x1 resolution)
    # w2 : (4, 4*Cin, Cmid) bf16    -- upsample-fused conv2 weights
    # w3 : (9*CP, CP) bf16          -- conv3 weights, Cin 64->CP, Cout C->CP zero-pad
    # out: (4, B*h*w, CP) f32       -- parity planes of the (B, 2h, 2w, CP) image
    # up : (4*B, h+2, w+2, CP) f32  -- VMEM scratch: conv2 parity planes + halo
    B, _, _, Cin = xp_ref.shape
    CP = up_ref.shape[-1]
    R = B * h * w
    Rtot = 4 * R
    xp = xp_ref[...]

    # ---- conv2 (upsample-fused, per parity) + BN2 batch stats ---------------
    s1 = jnp.zeros((1, Cmid), jnp.float32)
    s2 = jnp.zeros((1, Cmid), jnp.float32)
    ys = []
    for py in range(2):
        for px in range(2):
            cols = [xp[:, py + ky:py + ky + h, px + kx:px + kx + w, :].reshape(R, Cin)
                    for ky in range(2) for kx in range(2)]
            lhs = jnp.concatenate(cols, axis=-1).astype(jnp.bfloat16)
            p = 2 * py + px
            y = jnp.dot(lhs, w2_ref[p, :, :], preferred_element_type=jnp.float32)
            y = y + b2_ref[...]
            s1 = s1 + jnp.sum(y, axis=0, keepdims=True)
            s2 = s2 + jnp.sum(y * y, axis=0, keepdims=True)
            ys.append(y)
    mean = s1 / Rtot
    var = s2 / Rtot - mean * mean
    scale = jax.lax.rsqrt(var + eps2) * g2_ref[...]
    shift = bt2_ref[...] - mean * scale

    # ---- BN2 + LeakyReLU; stash parity planes (1-px halo, channels padded to
    # CP=128 for lane-aligned conv3 taps) in VMEM -- never touches HBM --------
    up_ref[...] = jnp.zeros(up_ref.shape, jnp.float32)
    for p in range(4):
        y = ys[p] * scale + shift
        y = jnp.where(y > 0, y, slope * y)
        up_ref[p * B:(p + 1) * B, 1:1 + h, 1:1 + w, 0:Cmid] = y.reshape(B, h, w, Cmid)

    # ---- conv3 (plain 3x3 on the interleaved 2h x 2w grid, per parity) ------
    # ---- + Tanh + affine-free BN over the whole batch -----------------------
    s1_3 = jnp.zeros((1, CP), jnp.float32)
    s2_3 = jnp.zeros((1, CP), jnp.float32)
    y3s = []
    for qy in range(2):
        for qx in range(2):
            cols = []
            for (rp, rs) in _TAP[qy]:
                for (cp, cs) in _TAP[qx]:
                    p_src = 2 * rp + cp
                    cols.append(up_ref[p_src * B:(p_src + 1) * B,
                                       rs:rs + h, cs:cs + w, :].reshape(R, CP))
            lhs = jnp.concatenate(cols, axis=-1).astype(jnp.bfloat16)   # (R, 9*CP)
            y3 = jnp.dot(lhs, w3_ref[...], preferred_element_type=jnp.float32)
            y3 = jnp.tanh(y3 + b3_ref[...])
            s1_3 = s1_3 + jnp.sum(y3, axis=0, keepdims=True)
            s2_3 = s2_3 + jnp.sum(y3 * y3, axis=0, keepdims=True)
            y3s.append(y3)
    mean3 = s1_3 / Rtot
    var3 = s2_3 / Rtot - mean3 * mean3
    inv3 = jax.lax.rsqrt(var3 + eps3)
    for q in range(4):
        out_ref[q, :, :] = (y3s[q] - mean3) * inv3


# -----------------------------------------------------------------------------
# Wrappers (single grid point; whole (small) tensors live in VMEM)
# -----------------------------------------------------------------------------
_VMEM = pl.BlockSpec(memory_space=pltpu.MemorySpace.VMEM)
_CPARAMS = pltpu.CompilerParams(vmem_limit_bytes=32 * 1024 * 1024)


def _eff_up_conv_weights(w_oihw):
    """Fold a nearest-2x upsample into a 3x3 / pad-1 conv.

    For output parity (py, px) the conv over the upsampled map is exactly a 2x2
    conv over the 1-px zero-padded low-res map whose taps are sums of the
    original 3x3 taps.  Returns (4, 4*Cin, Cout) with p = 2*py + px and columns
    ordered (ky, kx, ci) to match the in-kernel tap concatenation.
    """
    w = jnp.transpose(w_oihw, (2, 3, 1, 0))            # (dy, dx, Cin, Cout)
    m = jnp.array([[[1., 0.], [0., 1.], [0., 1.]],     # parity 0: collapse 3 -> 2 taps
                   [[1., 0.], [1., 0.], [0., 1.]]],    # parity 1
                  w.dtype)
    we = jnp.einsum('pik,qjl,ijco->pqklco', m, m, w)   # (2,2,2,2,Cin,Cout)
    cin, cout = w.shape[2], w.shape[3]
    return we.reshape(4, 4 * cin, cout)


def _interleave_parity(y, B, h, w, C):
    # y: (4, B*h*w, C) with p = 2*py + px  ->  (B, 2h, 2w, C)
    y = y.reshape(2, 2, B, h, w, C).transpose(2, 3, 0, 4, 1, 5)
    return y.reshape(B, 2 * h, 2 * w, C)


def pallas_linear_bn0(z, l1_w, l1_b, gamma, beta, *, s, eps=1e-5):
    """Linear(latent -> 128*s*s) + view + BatchNorm2d(128), fused; NHWC out."""
    B, K = z.shape
    C = 128
    # Permute Linear output columns (c, h, w) -> (h, w, c) so the matmul result
    # is already NHWC-ordered (no separate BN kernel, no NCHW transpose).
    w_nhwc = l1_w.reshape(K, C, s, s).transpose(0, 2, 3, 1).reshape(K, s * s * C)
    b_nhwc = l1_b.reshape(C, s, s).transpose(1, 2, 0).reshape(1, s * s * C)
    out = pl.pallas_call(
        functools.partial(linear_bn_kernel, n_blk=s * s, C=C, eps=eps),
        out_shape=jax.ShapeDtypeStruct((B, s * s * C), jnp.float32),
        in_specs=[_VMEM] * 5,
        out_specs=_VMEM,
        compiler_params=_CPARAMS,
    )(z.astype(jnp.bfloat16), w_nhwc.astype(jnp.bfloat16), b_nhwc,
      gamma.reshape(1, C), beta.reshape(1, C))
    return out.reshape(B, s, s, C)


def pallas_up_conv_bn_lrelu(x_nhwc, wgt, bias, gamma, beta, *, eps=0.8, slope=0.2):
    """nearest-2x upsample -> Conv3x3 -> BN(train stats) -> LeakyReLU (fused)."""
    B, h, w, Cin = x_nhwc.shape
    Cout = wgt.shape[0]
    xp = jnp.pad(x_nhwc, ((0, 0), (1, 1), (1, 1), (0, 0)))     # low-res + halo only
    we = _eff_up_conv_weights(wgt).astype(jnp.bfloat16)        # (4, 4*Cin, Cout)
    y = pl.pallas_call(
        functools.partial(up_conv_bn_lrelu_kernel, h=h, w=w, eps=eps, slope=slope),
        out_shape=jax.ShapeDtypeStruct((4, B * h * w, Cout), jnp.float32),
        in_specs=[_VMEM] * 5,
        out_specs=_VMEM,
        compiler_params=_CPARAMS,
    )(xp, we, bias.reshape(1, Cout), gamma.reshape(1, Cout), beta.reshape(1, Cout))
    return _interleave_parity(y, B, h, w, Cout)                # (B, 2h, 2w, Cout)


def pallas_up_convblock2(x_nhwc, w2, b2, g2, bt2, w3, b3, channels,
                         *, eps2=0.8, eps3=1e-5, slope=0.2):
    """upsample -> [conv2+BN+LReLU -> conv3+Tanh+BN(affine=False)] fully fused."""
    B, h, w, Cin = x_nhwc.shape
    Cmid = w2.shape[0]          # 64
    CP = 128                    # lane-dense channel padding for conv3 / output
    xp = jnp.pad(x_nhwc, ((0, 0), (1, 1), (1, 1), (0, 0)))
    we2 = _eff_up_conv_weights(w2).astype(jnp.bfloat16)        # (4, 4*Cin, Cmid)
    # conv3 weights: (C, Cmid, 3, 3) -> (9*CP, CP), taps (dy,dx,ci)-major, zero-pad
    w3t = jnp.transpose(w3, (2, 3, 1, 0))                      # (3, 3, Cmid, C)
    w3t = jnp.pad(w3t, ((0, 0), (0, 0), (0, CP - Cmid), (0, CP - channels)))
    w3cat = w3t.reshape(9 * CP, CP).astype(jnp.bfloat16)
    b3p = jnp.pad(b3, (0, CP - channels)).reshape(1, CP)

    y = pl.pallas_call(
        functools.partial(up_convblock2_kernel, h=h, w=w, Cmid=Cmid,
                          eps2=eps2, eps3=eps3, slope=slope),
        out_shape=jax.ShapeDtypeStruct((4, B * h * w, CP), jnp.float32),
        in_specs=[_VMEM] * 7,
        out_specs=_VMEM,
        scratch_shapes=[pltpu.VMEM((4 * B, h + 2, w + 2, CP), jnp.float32)],
        compiler_params=_CPARAMS,
    )(xp, we2, b2.reshape(1, Cmid), g2.reshape(1, Cmid), bt2.reshape(1, Cmid),
      w3cat, b3p)

    y = _interleave_parity(y, B, h, w, CP)[..., :channels]     # drop padded lanes
    return jnp.transpose(y, (0, 3, 1, 2))                      # -> NCHW


# -----------------------------------------------------------------------------
# Parameters (deterministic, synthetic) and forward pass
# -----------------------------------------------------------------------------
def init_params(key, *, latent_dim, img_size, channels):
    init_size = img_size // 4
    ks = jax.random.split(key, 8)
    p = {}
    # nn.Linear(latent_dim, 128*init_size**2): weight stored as (in, out) here
    p["l1_w"] = 0.05 * jax.random.normal(ks[0], (latent_dim, 128 * init_size**2), jnp.float32)
    p["l1_b"] = 0.01 * jax.random.normal(ks[1], (128 * init_size**2,), jnp.float32)
    # BatchNorm2d(128) (conv_blocks0)
    p["bn0_g"] = jnp.ones((128,), jnp.float32)
    p["bn0_b"] = jnp.zeros((128,), jnp.float32)
    # Conv2d(128,128,3) + BN(128, eps=0.8)
    p["c1_w"] = 0.05 * jax.random.normal(ks[2], (128, 128, 3, 3), jnp.float32)
    p["c1_b"] = 0.01 * jax.random.normal(ks[3], (128,), jnp.float32)
    p["bn1_g"] = jnp.ones((128,), jnp.float32)
    p["bn1_b"] = jnp.zeros((128,), jnp.float32)
    # Conv2d(128,64,3) + BN(64, eps=0.8)
    p["c2_w"] = 0.05 * jax.random.normal(ks[4], (64, 128, 3, 3), jnp.float32)
    p["c2_b"] = 0.01 * jax.random.normal(ks[5], (64,), jnp.float32)
    p["bn2_g"] = jnp.ones((64,), jnp.float32)
    p["bn2_b"] = jnp.zeros((64,), jnp.float32)
    # Conv2d(64, channels, 3); final BN(channels, affine=False) has no params
    p["c3_w"] = 0.05 * jax.random.normal(ks[6], (channels, 64, 3, 3), jnp.float32)
    p["c3_b"] = 0.01 * jax.random.normal(ks[7], (channels,), jnp.float32)
    return p


def generator_forward(params, z, *, img_size, channels):
    s = img_size // 4

    # l1 + view + conv_blocks0 (BN128, eps=1e-5), fused; output NHWC (B,s,s,128)
    x = pallas_linear_bn0(z, params["l1_w"], params["l1_b"],
                          params["bn0_g"], params["bn0_b"], s=s, eps=1e-5)

    # upsample x2 -> conv_blocks1: Conv(128,128) + BN(eps=0.8) + LeakyReLU(0.2)
    # (upsample folded into the conv; no full-res intermediate in HBM)
    x = pallas_up_conv_bn_lrelu(x, params["c1_w"], params["c1_b"],
                                params["bn1_g"], params["bn1_b"],
                                eps=0.8, slope=0.2)

    # upsample x2 -> conv_blocks2 (fully fused): Conv(128,64)+BN(0.8)+LeakyReLU
    #                -> Conv(64,C)+Tanh+BN(C, affine=False, eps=1e-5)
    img = pallas_up_convblock2(x, params["c2_w"], params["c2_b"],
                               params["bn2_g"], params["bn2_b"],
                               params["c3_w"], params["c3_b"], channels,
                               eps2=0.8, eps3=1e-5, slope=0.2)
    return img                                                 # NCHW


if __name__ == "__main__":
    # Small, module-consistent hyper-params
    LATENT_DIM = 32
    IMG_SIZE = 16          # init_size = 4; output is 16x16
    CHANNELS = 3
    BATCH = 2

    key = jax.random.PRNGKey(0)
    pkey, zkey = jax.random.split(key)
    params = init_params(pkey, latent_dim=LATENT_DIM, img_size=IMG_SIZE, channels=CHANNELS)
    z = jax.random.normal(zkey, (BATCH, LATENT_DIM), jnp.float32)

    fwd = jax.jit(functools.partial(generator_forward, img_size=IMG_SIZE, channels=CHANNELS))
    img = fwd(params, z)
    jax.block_until_ready(img)

    assert img.shape == (BATCH, CHANNELS, IMG_SIZE, IMG_SIZE), img.shape
    assert img.dtype == jnp.float32
    assert bool(jnp.all(jnp.isfinite(img)))
    print("KERNEL_OK")
</pallas_src>

<mosaic_0001>
module attributes {stable_mosaic.version = 11 : i64} {
  func.func @linear_bn_kernel(%arg0: memref<2x32xbf16, #tpu.memory_space<vmem>>, %arg1: memref<32x2048xbf16, #tpu.memory_space<vmem>>, %arg2: memref<1x2048xf32, #tpu.memory_space<vmem>>, %arg3: memref<1x128xf32, #tpu.memory_space<vmem>>, %arg4: memref<1x128xf32, #tpu.memory_space<vmem>>, %arg5: memref<2x2048xf32, #tpu.memory_space<vmem>>) attributes {dimension_semantics = [], scalar_prefetch = 0 : i64, scratch_operands = 0 : i64, tpu.core_type = #tpu.core_type<tc>} {
    %c0 = arith.constant 0 : index
    %c0_0 = arith.constant 0 : index
    %0 = vector.load %arg0[%c0, %c0_0] : memref<2x32xbf16, #tpu.memory_space<vmem>>, vector<2x32xbf16>
    %c0_1 = arith.constant 0 : index
    %c0_2 = arith.constant 0 : index
    %1 = vector.load %arg1[%c0_1, %c0_2] : memref<32x2048xbf16, #tpu.memory_space<vmem>>, vector<32x2048xbf16>
    %cst = arith.constant dense<0.000000e+00> : vector<2x2048xf32>
    %2 = tpu.matmul %0, %1, %cst {dimension_numbers = #tpu.dot_dimension_numbers<[1], [0], [0], [1], [0, 0, 1, 1], [], []>} : vector<2x32xbf16>, vector<32x2048xbf16>, vector<2x2048xf32> -> vector<2x2048xf32>
    %c0_3 = arith.constant 0 : index
    %c0_4 = arith.constant 0 : index
    %3 = vector.load %arg2[%c0_3, %c0_4] : memref<1x2048xf32, #tpu.memory_space<vmem>>, vector<1x2048xf32>
    %4 = vector.broadcast %3 : vector<1x2048xf32> to vector<2x2048xf32>
    %5 = arith.addf %2, %4 : vector<2x2048xf32>
    %cst_5 = arith.constant 0.000000e+00 : f32
    %6 = vector.broadcast %cst_5 : f32 to vector<1x128xf32>
    %cst_6 = arith.constant 0.000000e+00 : f32
    %7 = vector.broadcast %cst_6 : f32 to vector<1x128xf32>
    %8 = vector.extract_strided_slice %5 {offsets = [0, 0], sizes = [2, 128], strides = [1, 1]} : vector<2x2048xf32> to vector<2x128xf32>
    %cst_7 = arith.constant dense<0.000000e+00> : vector<128xf32>
    %9 = vector.multi_reduction <add>, %8, %cst_7 [0] : vector<2x128xf32> to vector<128xf32>
    %10 = vector.shape_cast %9 : vector<128xf32> to vector<1x128xf32>
    %11 = arith.addf %6, %10 : vector<1x128xf32>
    %12 = arith.mulf %8, %8 : vector<2x128xf32>
    %cst_8 = arith.constant dense<0.000000e+00> : vector<128xf32>
    %13 = vector.multi_reduction <add>, %12, %cst_8 [0] : vector<2x128xf32> to vector<128xf32>
    %14 = vector.shape_cast %13 : vector<128xf32> to vector<1x128xf32>
    %15 = arith.addf %7, %14 : vector<1x128xf32>
    %16 = vector.extract_strided_slice %5 {offsets = [0, 128], sizes = [2, 128], strides = [1, 1]} : vector<2x2048xf32> to vector<2x128xf32>
    %cst_9 = arith.constant dense<0.000000e+00> : vector<128xf32>
    %17 = vector.multi_reduction <add>, %16, %cst_9 [0] : vector<2x128xf32> to vector<128xf32>
    %18 = vector.shape_cast %17 : vector<128xf32> to vector<1x128xf32>
    %19 = arith.addf %11, %18 : vector<1x128xf32>
    %20 = arith.mulf %16, %16 : vector<2x128xf32>
    %cst_10 = arith.constant dense<0.000000e+00> : vector<128xf32>
    %21 = vector.multi_reduction <add>, %20, %cst_10 [0] : vector<2x128xf32> to vector<128xf32>
    %22 = vector.shape_cast %21 : vector<128xf32> to vector<1x128xf32>
    %23 = arith.addf %15, %22 : vector<1x128xf32>
    %24 = vector.extract_strided_slice %5 {offsets = [0, 256], sizes = [2, 128], strides = [1, 1]} : vector<2x2048xf32> to vector<2x128xf32>
    %cst_11 = arith.constant dense<0.000000e+00> : vector<128xf32>
    %25 = vector.multi_reduction <add>, %24, %cst_11 [0] : vector<2x128xf32> to vector<128xf32>
    %26 = vector.shape_cast %25 : vector<128xf32> to vector<1x128xf32>
    %27 = arith.addf %19, %26 : vector<1x128xf32>
    %28 = arith.mulf %24, %24 : vector<2x128xf32>
    %cst_12 = arith.constant dense<0.000000e+00> : vector<128xf32>
    %29 = vector.multi_reduction <add>, %28, %cst_12 [0] : vector<2x128xf32> to vector<128xf32>
    %30 = vector.shape_cast %29 : vector<128xf32> to vector<1x128xf32>
    %31 = arith.addf %23, %30 : vector<1x128xf32>
    %32 = vector.extract_strided_slice %5 {offsets = [0, 384], sizes = [2, 128], strides = [1, 1]} : vector<2x2048xf32> to vector<2x128xf32>
    %cst_13 = arith.constant dense<0.000000e+00> : vector<128xf32>
    %33 = vector.multi_reduction <add>, %32, %cst_13 [0] : vector<2x128xf32> to vector<128xf32>
    %34 = vector.shape_cast %33 : vector<128xf32> to vector<1x128xf32>
    %35 = arith.addf %27, %34 : vector<1x128xf32>
    %36 = arith.mulf %32, %32 : vector<2x128xf32>
    %cst_14 = arith.constant dense<0.000000e+00> : vector<128xf32>
    %37 = vector.multi_reduction <add>, %36, %cst_14 [0] : vector<2x128xf32> to vector<128xf32>
    %38 = vector.shape_cast %37 : vector<128xf32> to vector<1x128xf32>
    %39 = arith.addf %31, %38 : vector<1x128xf32>
    %40 = vector.extract_strided_slice %5 {offsets = [0, 512], sizes = [2, 128], strides = [1, 1]} : vector<2x2048xf32> to vector<2x128xf32>
    %cst_15 = arith.constant dense<0.000000e+00> : vector<128xf32>
    %41 = vector.multi_reduction <add>, %40, %cst_15 [0] : vector<2x128xf32> to vector<128xf32>
    %42 = vector.shape_cast %41 : vector<128xf32> to vector<1x128xf32>
    %43 = arith.addf %35, %42 : vector<1x128xf32>
    %44 = arith.mulf %40, %40 : vector<2x128xf32>
    %cst_16 = arith.constant dense<0.000000e+00> : vector<128xf32>
    %45 = vector.multi_reduction <add>, %44, %cst_16 [0] : vector<2x128xf32> to vector<128xf32>
    %46 = vector.shape_cast %45 : vector<128xf32> to vector<1x128xf32>
    %47 = arith.addf %39, %46 : vector<1x128xf32>
    %48 = vector.extract_strided_slice %5 {offsets = [0, 640], sizes = [2, 128], strides = [1, 1]} : vector<2x2048xf32> to vector<2x128xf32>
    %cst_17 = arith.constant dense<0.000000e+00> : vector<128xf32>
    %49 = vector.multi_reduction <add>, %48, %cst_17 [0] : vector<2x128xf32> to vector<128xf32>
    %50 = vector.shape_cast %49 : vector<128xf32> to vector<1x128xf32>
    %51 = arith.addf %43, %50 : vector<1x128xf32>
    %52 = arith.mulf %48, %48 : vector<2x128xf32>
    %cst_18 = arith.constant dense<0.000000e+00> : vector<128xf32>
    %53 = vector.multi_reduction <add>, %52, %cst_18 [0] : vector<2x128xf32> to vector<128xf32>
    %54 = vector.shape_cast %53 : vector<128xf32> to vector<1x128xf32>
    %55 = arith.addf %47, %54 : vector<1x128xf32>
    %56 = vector.extract_strided_slice %5 {offsets = [0, 768], sizes = [2, 128], strides = [1, 1]} : vector<2x2048xf32> to vector<2x128xf32>
    %cst_19 = arith.constant dense<0.000000e+00> : vector<128xf32>
    %57 = vector.multi_reduction <add>, %56, %cst_19 [0] : vector<2x128xf32> to vector<128xf32>
    %58 = vector.shape_cast %57 : vector<128xf32> to vector<1x128xf32>
    %59 = arith.addf %51, %58 : vector<1x128xf32>
    %60 = arith.mulf %56, %56 : vector<2x128xf32>
    %cst_20 = arith.constant dense<0.000000e+00> : vector<128xf32>
    %61 = vector.multi_reduction <add>, %60, %cst_20 [0] : vector<2x128xf32> to vector<128xf32>
    %62 = vector.shape_cast %61 : vector<128xf32> to vector<1x128xf32>
    %63 = arith.addf %55, %62 : vector<1x128xf32>
    %64 = vector.extract_strided_slice %5 {offsets = [0, 896], sizes = [2, 128], strides = [1, 1]} : vector<2x2048xf32> to vector<2x128xf32>
    %cst_21 = arith.constant dense<0.000000e+00> : vector<128xf32>
    %65 = vector.multi_reduction <add>, %64, %cst_21 [0] : vector<2x128xf32> to vector<128xf32>
    %66 = vector.shape_cast %65 : vector<128xf32> to vector<1x128xf32>
    %67 = arith.addf %59, %66 : vector<1x128xf32>
    %68 = arith.mulf %64, %64 : vector<2x128xf32>
    %cst_22 = arith.constant dense<0.000000e+00> : vector<128xf32>
    %69 = vector.multi_reduction <add>, %68, %cst_22 [0] : vector<2x128xf32> to vector<128xf32>
    %70 = vector.shape_cast %69 : vector<128xf32> to vector<1x128xf32>
    %71 = arith.addf %63, %70 : vector<1x128xf32>
    %72 = vector.extract_strided_slice %5 {offsets = [0, 1024], sizes = [2, 128], strides = [1, 1]} : vector<2x2048xf32> to vector<2x128xf32>
    %cst_23 = arith.constant dense<0.000000e+00> : vector<128xf32>
    %73 = vector.multi_reduction <add>, %72, %cst_23 [0] : vector<2x128xf32> to vector<128xf32>
    %74 = vector.shape_cast %73 : vector<128xf32> to vector<1x128xf32>
    %75 = arith.addf %67, %74 : vector<1x128xf32>
    %76 = arith.mulf %72, %72 : vector<2x128xf32>
    %cst_24 = arith.constant dense<0.000000e+00> : vector<128xf32>
    %77 = vector.multi_reduction <add>, %76, %cst_24 [0] : vector<2x128xf32> to vector<128xf32>
    %78 = vector.shape_cast %77 : vector<128xf32> to vector<1x128xf32>
    %79 = arith.addf %71, %78 : vector<1x128xf32>
    %80 = vector.extract_strided_slice %5 {offsets = [0, 1152], sizes = [2, 128], strides = [1, 1]} : vector<2x2048xf32> to vector<2x128xf32>
    %cst_25 = arith.constant dense<0.000000e+00> : vector<128xf32>
    %81 = vector.multi_reduction <add>, %80, %cst_25 [0] : vector<2x128xf32> to vector<128xf32>
    %82 = vector.shape_cast %81 : vector<128xf32> to vector<1x128xf32>
    %83 = arith.addf %75, %82 : vector<1x128xf32>
    %84 = arith.mulf %80, %80 : vector<2x128xf32>
    %cst_26 = arith.constant dense<0.000000e+00> : vector<128xf32>
    %85 = vector.multi_reduction <add>, %84, %cst_26 [0] : vector<2x128xf32> to vector<128xf32>
    %86 = vector.shape_cast %85 : vector<128xf32> to vector<1x128xf32>
    %87 = arith.addf %79, %86 : vector<1x128xf32>
    %88 = vector.extract_strided_slice %5 {offsets = [0, 1280], sizes = [2, 128], strides = [1, 1]} : vector<2x2048xf32> to vector<2x128xf32>
    %cst_27 = arith.constant dense<0.000000e+00> : vector<128xf32>
    %89 = vector.multi_reduction <add>, %88, %cst_27 [0] : vector<2x128xf32> to vector<128xf32>
    %90 = vector.shape_cast %89 : vector<128xf32> to vector<1x128xf32>
    %91 = arith.addf %83, %90 : vector<1x128xf32>
    %92 = arith.mulf %88, %88 : vector<2x128xf32>
    %cst_28 = arith.constant dense<0.000000e+00> : vector<128xf32>
    %93 = vector.multi_reduction <add>, %92, %cst_28 [0] : vector<2x128xf32> to vector<128xf32>
    %94 = vector.shape_cast %93 : vector<128xf32> to vector<1x128xf32>
    %95 = arith.addf %87, %94 : vector<1x128xf32>
    %96 = vector.extract_strided_slice %5 {offsets = [0, 1408], sizes = [2, 128], strides = [1, 1]} : vector<2x2048xf32> to vector<2x128xf32>
    %cst_29 = arith.constant dense<0.000000e+00> : vector<128xf32>
    %97 = vector.multi_reduction <add>, %96, %cst_29 [0] : vector<2x128xf32> to vector<128xf32>
    %98 = vector.shape_cast %97 : vector<128xf32> to vector<1x128xf32>
    %99 = arith.addf %91, %98 : vector<1x128xf32>
    %100 = arith.mulf %96, %96 : vector<2x128xf32>
    %cst_30 = arith.constant dense<0.000000e+00> : vector<128xf32>
    %101 = vector.multi_reduction <add>, %100, %cst_30 [0] : vector<2x128xf32> to vector<128xf32>
    %102 = vector.shape_cast %101 : vector<128xf32> to vector<1x128xf32>
    %103 = arith.addf %95, %102 : vector<1x128xf32>
    %104 = vector.extract_strided_slice %5 {offsets = [0, 1536], sizes = [2, 128], strides = [1, 1]} : vector<2x2048xf32> to vector<2x128xf32>
    %cst_31 = arith.constant dense<0.000000e+00> : vector<128xf32>
    %105 = vector.multi_reduction <add>, %104, %cst_31 [0] : vector<2x128xf32> to vector<128xf32>
    %106 = vector.shape_cast %105 : vector<128xf32> to vector<1x128xf32>
    %107 = arith.addf %99, %106 : vector<1x128xf32>
    %108 = arith.mulf %104, %104 : vector<2x128xf32>
    %cst_32 = arith.constant dense<0.000000e+00> : vector<128xf32>
    %109 = vector.multi_reduction <add>, %108, %cst_32 [0] : vector<2x128xf32> to vector<128xf32>
    %110 = vector.shape_cast %109 : vector<128xf32> to vector<1x128xf32>
    %111 = arith.addf %103, %110 : vector<1x128xf32>
    %112 = vector.extract_strided_slice %5 {offsets = [0, 1664], sizes = [2, 128], strides = [1, 1]} : vector<2x2048xf32> to vector<2x128xf32>
    %cst_33 = arith.constant dense<0.000000e+00> : vector<128xf32>
    %113 = vector.multi_reduction <add>, %112, %cst_33 [0] : vector<2x128xf32> to vector<128xf32>
    %114 = vector.shape_cast %113 : vector<128xf32> to vector<1x128xf32>
    %115 = arith.addf %107, %114 : vector<1x128xf32>
    %116 = arith.mulf %112, %112 : vector<2x128xf32>
    %cst_34 = arith.constant dense<0.000000e+00> : vector<128xf32>
    %117 = vector.multi_reduction <add>, %116, %cst_34 [0] : vector<2x128xf32> to vector<128xf32>
    %118 = vector.shape_cast %117 : vector<128xf32> to vector<1x128xf32>
    %119 = arith.addf %111, %118 : vector<1x128xf32>
    %120 = vector.extract_strided_slice %5 {offsets = [0, 1792], sizes = [2, 128], strides = [1, 1]} : vector<2x2048xf32> to vector<2x128xf32>
    %cst_35 = arith.constant dense<0.000000e+00> : vector<128xf32>
    %121 = vector.multi_reduction <add>, %120, %cst_35 [0] : vector<2x128xf32> to vector<128xf32>
    %122 = vector.shape_cast %121 : vector<128xf32> to vector<1x128xf32>
    %123 = arith.addf %115, %122 : vector<1x128xf32>
    %124 = arith.mulf %120, %120 : vector<2x128xf32>
    %cst_36 = arith.constant dense<0.000000e+00> : vector<128xf32>
    %125 = vector.multi_reduction <add>, %124, %cst_36 [0] : vector<2x128xf32> to vector<128xf32>
    %126 = vector.shape_cast %125 : vector<128xf32> to vector<1x128xf32>
    %127 = arith.addf %119, %126 : vector<1x128xf32>
    %128 = vector.extract_strided_slice %5 {offsets = [0, 1920], sizes = [2, 128], strides = [1, 1]} : vector<2x2048xf32> to vector<2x128xf32>
    %cst_37 = arith.constant dense<0.000000e+00> : vector<128xf32>
    %129 = vector.multi_reduction <add>, %128, %cst_37 [0] : vector<2x128xf32> to vector<128xf32>
    %130 = vector.shape_cast %129 : vector<128xf32> to vector<1x128xf32>
    %131 = arith.addf %123, %130 : vector<1x128xf32>
    %132 = arith.mulf %128, %128 : vector<2x128xf32>
    %cst_38 = arith.constant dense<0.000000e+00> : vector<128xf32>
    %133 = vector.multi_reduction <add>, %132, %cst_38 [0] : vector<2x128xf32> to vector<128xf32>
    %134 = vector.shape_cast %133 : vector<128xf32> to vector<1x128xf32>
    %135 = arith.addf %127, %134 : vector<1x128xf32>
    %cst_39 = arith.constant 3.200000e+01 : f32
    %136 = vector.broadcast %cst_39 : f32 to vector<1x128xf32>
    %137 = arith.divf %131, %136 : vector<1x128xf32>
    %cst_40 = arith.constant 3.200000e+01 : f32
    %138 = vector.broadcast %cst_40 : f32 to vector<1x128xf32>
    %139 = arith.divf %135, %138 : vector<1x128xf32>
    %140 = arith.mulf %137, %137 : vector<1x128xf32>
    %141 = arith.subf %139, %140 : vector<1x128xf32>
    %cst_41 = arith.constant 9.99999974E-6 : f32
    %142 = vector.broadcast %cst_41 : f32 to vector<1x128xf32>
    %143 = arith.addf %141, %142 : vector<1x128xf32>
    %144 = math.rsqrt %143 : vector<1x128xf32>
    %c0_42 = arith.constant 0 : index
    %c0_43 = arith.constant 0 : index
    %145 = vector.load %arg3[%c0_42, %c0_43] : memref<1x128xf32, #tpu.memory_space<vmem>>, vector<1x128xf32>
    %146 = arith.mulf %144, %145 : vector<1x128xf32>
    %c0_44 = arith.constant 0 : index
    %c0_45 = arith.constant 0 : index
    %147 = vector.load %arg4[%c0_44, %c0_45] : memref<1x128xf32, #tpu.memory_space<vmem>>, vector<1x128xf32>
    %148 = arith.mulf %137, %146 : vector<1x128xf32>
    %149 = arith.subf %147, %148 : vector<1x128xf32>
    %150 = tpu.concatenate %146, %146, %146, %146, %146, %146, %146, %146, %146, %146, %146, %146, %146, %146, %146, %146 in 1 : vector<1x128xf32>, vector<1x128xf32>, vector<1x128xf32>, vector<1x128xf32>, vector<1x128xf32>, vector<1x128xf32>, vector<1x128xf32>, vector<1x128xf32>, vector<1x128xf32>, vector<1x128xf32>, vector<1x128xf32>, vector<1x128xf32>, vector<1x128xf32>, vector<1x128xf32>, vector<1x128xf32>, vector<1x128xf32> -> vector<1x2048xf32>
    %151 = tpu.concatenate %149, %149, %149, %149, %149, %149, %149, %149, %149, %149, %149, %149, %149, %149, %149, %149 in 1 : vector<1x128xf32>, vector<1x128xf32>, vector<1x128xf32>, vector<1x128xf32>, vector<1x128xf32>, vector<1x128xf32>, vector<1x128xf32>, vector<1x128xf32>, vector<1x128xf32>, vector<1x128xf32>, vector<1x128xf32>, vector<1x128xf32>, vector<1x128xf32>, vector<1x128xf32>, vector<1x128xf32>, vector<1x128xf32> -> vector<1x2048xf32>
    %152 = vector.broadcast %150 : vector<1x2048xf32> to vector<2x2048xf32>
    %153 = arith.mulf %5, %152 : vector<2x2048xf32>
    %154 = vector.broadcast %151 : vector<1x2048xf32> to vector<2x2048xf32>
    %155 = arith.addf %153, %154 : vector<2x2048xf32>
    %c0_46 = arith.constant 0 : index
    %c0_47 = arith.constant 0 : index
    %156 = vector.load %arg5[%c0_46, %c0_47] : memref<2x2048xf32, #tpu.memory_space<vmem>>, vector<2x2048xf32>
    tpu.vector_store %arg5[%c0_46, %c0_47], %155 {strides = array<i32>} : memref<2x2048xf32, #tpu.memory_space<vmem>>, vector<2x2048xf32>,
    return
  }
}

module attributes {stable_mosaic.version = 11 : i64} {
  func.func @up_conv_bn_lrelu_kernel(%arg0: memref<2x6x6x128xf32, #tpu.memory_space<vmem>>, %arg1: memref<4x512x128xbf16, #tpu.memory_space<vmem>>, %arg2: memref<1x128xf32, #tpu.memory_space<vmem>>, %arg3: memref<1x128xf32, #tpu.memory_space<vmem>>, %arg4: memref<1x128xf32, #tpu.memory_space<vmem>>, %arg5: memref<4x32x128xf32, #tpu.memory_space<vmem>>) attributes {dimension_semantics = [], scalar_prefetch = 0 : i64, scratch_operands = 0 : i64, tpu.core_type = #tpu.core_type<tc>} {
    %c0 = arith.constant 0 : index
    %c0_0 = arith.constant 0 : index
    %c0_1 = arith.constant 0 : index
    %c0_2 = arith.constant 0 : index
    %0 = vector.load %arg0[%c0, %c0_0, %c0_1, %c0_2] : memref<2x6x6x128xf32, #tpu.memory_space<vmem>>, vector<2x6x6x128xf32>
    %cst = arith.constant 0.000000e+00 : f32
    %1 = vector.broadcast %cst : f32 to vector<1x128xf32>
    %cst_3 = arith.constant 0.000000e+00 : f32
    %2 = vector.broadcast %cst_3 : f32 to vector<1x128xf32>
    %3 = vector.extract_strided_slice %0 {offsets = [0, 0, 0, 0], sizes = [2, 4, 4, 128], strides = [1, 1, 1, 1]} : vector<2x6x6x128xf32> to vector<2x4x4x128xf32>
    %4 = vector.shape_cast %3 : vector<2x4x4x128xf32> to vector<32x128xf32>
    %5 = vector.extract_strided_slice %0 {offsets = [0, 0, 1, 0], sizes = [2, 4, 4, 128], strides = [1, 1, 1, 1]} : vector<2x6x6x128xf32> to vector<2x4x4x128xf32>
    %6 = vector.shape_cast %5 : vector<2x4x4x128xf32> to vector<32x128xf32>
    %7 = vector.extract_strided_slice %0 {offsets = [0, 1, 0, 0], sizes = [2, 4, 4, 128], strides = [1, 1, 1, 1]} : vector<2x6x6x128xf32> to vector<2x4x4x128xf32>
    %8 = vector.shape_cast %7 : vector<2x4x4x128xf32> to vector<32x128xf32>
    %9 = vector.extract_strided_slice %0 {offsets = [0, 1, 1, 0], sizes = [2, 4, 4, 128], strides = [1, 1, 1, 1]} : vector<2x6x6x128xf32> to vector<2x4x4x128xf32>
    %10 = vector.shape_cast %9 : vector<2x4x4x128xf32> to vector<32x128xf32>
    %11 = tpu.concatenate %4, %6, %8, %10 in 1 : vector<32x128xf32>, vector<32x128xf32>, vector<32x128xf32>, vector<32x128xf32> -> vector<32x512xf32>
    %12 = arith.truncf %11 : vector<32x512xf32> to vector<32x512xbf16>
    %c0_4 = arith.constant 0 : index
    %c0_5 = arith.constant 0 : index
    %c0_6 = arith.constant 0 : index
    %13 = vector.load %arg1[%c0_4, %c0_5, %c0_6] : memref<4x512x128xbf16, #tpu.memory_space<vmem>>, vector<1x512x128xbf16>
    %14 = vector.shape_cast %13 : vector<1x512x128xbf16> to vector<512x128xbf16>
    %cst_7 = arith.constant dense<0.000000e+00> : vector<32x128xf32>
    %15 = tpu.matmul %12, %14, %cst_7 {dimension_numbers = #tpu.dot_dimension_numbers<[1], [0], [0], [1], [0, 0, 1, 1], [], []>} : vector<32x512xbf16>, vector<512x128xbf16>, vector<32x128xf32> -> vector<32x128xf32>
    %c0_8 = arith.constant 0 : index
    %c0_9 = arith.constant 0 : index
    %16 = vector.load %arg2[%c0_8, %c0_9] : memref<1x128xf32, #tpu.memory_space<vmem>>, vector<1x128xf32>
    %17 = vector.broadcast %16 : vector<1x128xf32> to vector<32x128xf32>
    %18 = arith.addf %15, %17 : vector<32x128xf32>
    %cst_10 = arith.constant dense<0.000000e+00> : vector<128xf32>
    %19 = vector.multi_reduction <add>, %18, %cst_10 [0] : vector<32x128xf32> to vector<128xf32>
    %20 = vector.shape_cast %19 : vector<128xf32> to vector<1x128xf32>
    %21 = arith.addf %1, %20 : vector<1x128xf32>
    %22 = arith.mulf %18, %18 : vector<32x128xf32>
    %cst_11 = arith.constant dense<0.000000e+00> : vector<128xf32>
    %23 = vector.multi_reduction <add>, %22, %cst_11 [0] : vector<32x128xf32> to vector<128xf32>
    %24 = vector.shape_cast %23 : vector<128xf32> to vector<1x128xf32>
    %25 = arith.addf %2, %24 : vector<1x128xf32>
    %26 = vector.extract_strided_slice %0 {offsets = [0, 0, 1, 0], sizes = [2, 4, 4, 128], strides = [1, 1, 1, 1]} : vector<2x6x6x128xf32> to vector<2x4x4x128xf32>
    %27 = vector.shape_cast %26 : vector<2x4x4x128xf32> to vector<32x128xf32>
    %28 = vector.extract_strided_slice %0 {offsets = [0, 0, 2, 0], sizes = [2, 4, 4, 128], strides = [1, 1, 1, 1]} : vector<2x6x6x128xf32> to vector<2x4x4x128xf32>
    %29 = vector.shape_cast %28 : vector<2x4x4x128xf32> to vector<32x128xf32>
    %30 = vector.extract_strided_slice %0 {offsets = [0, 1, 1, 0], sizes = [2, 4, 4, 128], strides = [1, 1, 1, 1]} : vector<2x6x6x128xf32> to vector<2x4x4x128xf32>
    %31 = vector.shape_cast %30 : vector<2x4x4x128xf32> to vector<32x128xf32>
    %32 = vector.extract_strided_slice %0 {offsets = [0, 1, 2, 0], sizes = [2, 4, 4, 128], strides = [1, 1, 1, 1]} : vector<2x6x6x128xf32> to vector<2x4x4x128xf32>
    %33 = vector.shape_cast %32 : vector<2x4x4x128xf32> to vector<32x128xf32>
    %34 = tpu.concatenate %27, %29, %31, %33 in 1 : vector<32x128xf32>, vector<32x128xf32>, vector<32x128xf32>, vector<32x128xf32> -> vector<32x512xf32>
    %35 = arith.truncf %34 : vector<32x512xf32> to vector<32x512xbf16>
    %c1 = arith.constant 1 : index
    %c0_12 = arith.constant 0 : index
    %c0_13 = arith.constant 0 : index
    %36 = vector.load %arg1[%c1, %c0_12, %c0_13] : memref<4x512x128xbf16, #tpu.memory_space<vmem>>, vector<1x512x128xbf16>
    %37 = vector.shape_cast %36 : vector<1x512x128xbf16> to vector<512x128xbf16>
    %cst_14 = arith.constant dense<0.000000e+00> : vector<32x128xf32>
    %38 = tpu.matmul %35, %37, %cst_14 {dimension_numbers = #tpu.dot_dimension_numbers<[1], [0], [0], [1], [0, 0, 1, 1], [], []>} : vector<32x512xbf16>, vector<512x128xbf16>, vector<32x128xf32> -> vector<32x128xf32>
    %c0_15 = arith.constant 0 : index
    %c0_16 = arith.constant 0 : index
    %39 = vector.load %arg2[%c0_15, %c0_16] : memref<1x128xf32, #tpu.memory_space<vmem>>, vector<1x128xf32>
    %40 = vector.broadcast %39 : vector<1x128xf32> to vector<32x128xf32>
    %41 = arith.addf %38, %40 : vector<32x128xf32>
    %cst_17 = arith.constant dense<0.000000e+00> : vector<128xf32>
    %42 = vector.multi_reduction <add>, %41, %cst_17 [0] : vector<32x128xf32> to vector<128xf32>
    %43 = vector.shape_cast %42 : vector<128xf32> to vector<1x128xf32>
    %44 = arith.addf %21, %43 : vector<1x128xf32>
    %45 = arith.mulf %41, %41 : vector<32x128xf32>
    %cst_18 = arith.constant dense<0.000000e+00> : vector<128xf32>
    %46 = vector.multi_reduction <add>, %45, %cst_18 [0] : vector<32x128xf32> to vector<128xf32>
    %47 = vector.shape_cast %46 : vector<128xf32> to vector<1x128xf32>
    %48 = arith.addf %25, %47 : vector<1x128xf32>
    %49 = vector.extract_strided_slice %0 {offsets = [0, 1, 0, 0], sizes = [2, 4, 4, 128], strides = [1, 1, 1, 1]} : vector<2x6x6x128xf32> to vector<2x4x4x128xf32>
    %50 = vector.shape_cast %49 : vector<2x4x4x128xf32> to vector<32x128xf32>
    %51 = vector.extract_strided_slice %0 {offsets = [0, 1, 1, 0], sizes = [2, 4, 4, 128], strides = [1, 1, 1, 1]} : vector<2x6x6x128xf32> to vector<2x4x4x128xf32>
    %52 = vector.shape_cast %51 : vector<2x4x4x128xf32> to vector<32x128xf32>
    %53 = vector.extract_strided_slice %0 {offsets = [0, 2, 0, 0], sizes = [2, 4, 4, 128], strides = [1, 1, 1, 1]} : vector<2x6x6x128xf32> to vector<2x4x4x128xf32>
    %54 = vector.shape_cast %53 : vector<2x4x4x128xf32> to vector<32x128xf32>
    %55 = vector.extract_strided_slice %0 {offsets = [0, 2, 1, 0], sizes = [2, 4, 4, 128], strides = [1, 1, 1, 1]} : vector<2x6x6x128xf32> to vector<2x4x4x128xf32>
    %56 = vector.shape_cast %55 : vector<2x4x4x128xf32> to vector<32x128xf32>
    %57 = tpu.concatenate %50, %52, %54, %56 in 1 : vector<32x128xf32>, vector<32x128xf32>, vector<32x128xf32>, vector<32x128xf32> -> vector<32x512xf32>
    %58 = arith.truncf %57 : vector<32x512xf32> to vector<32x512xbf16>
    %c2 = arith.constant 2 : index
    %c0_19 = arith.constant 0 : index
    %c0_20 = arith.constant 0 : index
    %59 = vector.load %arg1[%c2, %c0_19, %c0_20] : memref<4x512x128xbf16, #tpu.memory_space<vmem>>, vector<1x512x128xbf16>
    %60 = vector.shape_cast %59 : vector<1x512x128xbf16> to vector<512x128xbf16>
    %cst_21 = arith.constant dense<0.000000e+00> : vector<32x128xf32>
    %61 = tpu.matmul %58, %60, %cst_21 {dimension_numbers = #tpu.dot_dimension_numbers<[1], [0], [0], [1], [0, 0, 1, 1], [], []>} : vector<32x512xbf16>, vector<512x128xbf16>, vector<32x128xf32> -> vector<32x128xf32>
    %c0_22 = arith.constant 0 : index
    %c0_23 = arith.constant 0 : index
    %62 = vector.load %arg2[%c0_22, %c0_23] : memref<1x128xf32, #tpu.memory_space<vmem>>, vector<1x128xf32>
    %63 = vector.broadcast %62 : vector<1x128xf32> to vector<32x128xf32>
    %64 = arith.addf %61, %63 : vector<32x128xf32>
    %cst_24 = arith.constant dense<0.000000e+00> : vector<128xf32>
    %65 = vector.multi_reduction <add>, %64, %cst_24 [0] : vector<32x128xf32> to vector<128xf32>
    %66 = vector.shape_cast %65 : vector<128xf32> to vector<1x128xf32>
    %67 = arith.addf %44, %66 : vector<1x128xf32>
    %68 = arith.mulf %64, %64 : vector<32x128xf32>
    %cst_25 = arith.constant dense<0.000000e+00> : vector<128xf32>
    %69 = vector.multi_reduction <add>, %68, %cst_25 [0] : vector<32x128xf32> to vector<128xf32>
    %70 = vector.shape_cast %69 : vector<128xf32> to vector<1x128xf32>
    %71 = arith.addf %48, %70 : vector<1x128xf32>
    %72 = vector.extract_strided_slice %0 {offsets = [0, 1, 1, 0], sizes = [2, 4, 4, 128], strides = [1, 1, 1, 1]} : vector<2x6x6x128xf32> to vector<2x4x4x128xf32>
    %73 = vector.shape_cast %72 : vector<2x4x4x128xf32> to vector<32x128xf32>
    %74 = vector.extract_strided_slice %0 {offsets = [0, 1, 2, 0], sizes = [2, 4, 4, 128], strides = [1, 1, 1, 1]} : vector<2x6x6x128xf32> to vector<2x4x4x128xf32>
    %75 = vector.shape_cast %74 : vector<2x4x4x128xf32> to vector<32x128xf32>
    %76 = vector.extract_strided_slice %0 {offsets = [0, 2, 1, 0], sizes = [2, 4, 4, 128], strides = [1, 1, 1, 1]} : vector<2x6x6x128xf32> to vector<2x4x4x128xf32>
    %77 = vector.shape_cast %76 : vector<2x4x4x128xf32> to vector<32x128xf32>
    %78 = vector.extract_strided_slice %0 {offsets = [0, 2, 2, 0], sizes = [2, 4, 4, 128], strides = [1, 1, 1, 1]} : vector<2x6x6x128xf32> to vector<2x4x4x128xf32>
    %79 = vector.shape_cast %78 : vector<2x4x4x128xf32> to vector<32x128xf32>
    %80 = tpu.concatenate %73, %75, %77, %79 in 1 : vector<32x128xf32>, vector<32x128xf32>, vector<32x128xf32>, vector<32x128xf32> -> vector<32x512xf32>
    %81 = arith.truncf %80 : vector<32x512xf32> to vector<32x512xbf16>
    %c3 = arith.constant 3 : index
    %c0_26 = arith.constant 0 : index
    %c0_27 = arith.constant 0 : index
    %82 = vector.load %arg1[%c3, %c0_26, %c0_27] : memref<4x512x128xbf16, #tpu.memory_space<vmem>>, vector<1x512x128xbf16>
    %83 = vector.shape_cast %82 : vector<1x512x128xbf16> to vector<512x128xbf16>
    %cst_28 = arith.constant dense<0.000000e+00> : vector<32x128xf32>
    %84 = tpu.matmul %81, %83, %cst_28 {dimension_numbers = #tpu.dot_dimension_numbers<[1], [0], [0], [1], [0, 0, 1, 1], [], []>} : vector<32x512xbf16>, vector<512x128xbf16>, vector<32x128xf32> -> vector<32x128xf32>
    %c0_29 = arith.constant 0 : index
    %c0_30 = arith.constant 0 : index
    %85 = vector.load %arg2[%c0_29, %c0_30] : memref<1x128xf32, #tpu.memory_space<vmem>>, vector<1x128xf32>
    %86 = vector.broadcast %85 : vector<1x128xf32> to vector<32x128xf32>
    %87 = arith.addf %84, %86 : vector<32x128xf32>
    %cst_31 = arith.constant dense<0.000000e+00> : vector<128xf32>
    %88 = vector.multi_reduction <add>, %87, %cst_31 [0] : vector<32x128xf32> to vector<128xf32>
    %89 = vector.shape_cast %88 : vector<128xf32> to vector<1x128xf32>
    %90 = arith.addf %67, %89 : vector<1x128xf32>
    %91 = arith.mulf %87, %87 : vector<32x128xf32>
    %cst_32 = arith.constant dense<0.000000e+00> : vector<128xf32>
    %92 = vector.multi_reduction <add>, %91, %cst_32 [0] : vector<32x128xf32> to vector<128xf32>
    %93 = vector.shape_cast %92 : vector<128xf32> to vector<1x128xf32>
    %94 = arith.addf %71, %93 : vector<1x128xf32>
    %cst_33 = arith.constant 1.280000e+02 : f32
    %95 = vector.broadcast %cst_33 : f32 to vector<1x128xf32>
    %96 = arith.divf %90, %95 : vector<1x128xf32>
    %cst_34 = arith.constant 1.280000e+02 : f32
    %97 = vector.broadcast %cst_34 : f32 to vector<1x128xf32>
    %98 = arith.divf %94, %97 : vector<1x128xf32>
    %99 = arith.mulf %96, %96 : vector<1x128xf32>
    %100 = arith.subf %98, %99 : vector<1x128xf32>
    %cst_35 = arith.constant 8.000000e-01 : f32
    %101 = vector.broadcast %cst_35 : f32 to vector<1x128xf32>
    %102 = arith.addf %100, %101 : vector<1x128xf32>
    %103 = math.rsqrt %102 : vector<1x128xf32>
    %c0_36 = arith.constant 0 : index
    %c0_37 = arith.constant 0 : index
    %104 = vector.load %arg3[%c0_36, %c0_37] : memref<1x128xf32, #tpu.memory_space<vmem>>, vector<1x128xf32>
    %105 = arith.mulf %103, %104 : vector<1x128xf32>
    %c0_38 = arith.constant 0 : index
    %c0_39 = arith.constant 0 : index
    %106 = vector.load %arg4[%c0_38, %c0_39] : memref<1x128xf32, #tpu.memory_space<vmem>>, vector<1x128xf32>
    %107 = arith.mulf %96, %105 : vector<1x128xf32>
    %108 = arith.subf %106, %107 : vector<1x128xf32>
    %109 = vector.broadcast %105 : vector<1x128xf32> to vector<32x128xf32>
    %110 = arith.mulf %18, %109 : vector<32x128xf32>
    %111 = vector.broadcast %108 : vector<1x128xf32> to vector<32x128xf32>
    %112 = arith.addf %110, %111 : vector<32x128xf32>
    %cst_40 = arith.constant 0.000000e+00 : f32
    %113 = vector.broadcast %cst_40 : f32 to vector<32x128xf32>
    %114 = arith.cmpf ogt, %112, %113 : vector<32x128xf32>
    %cst_41 = arith.constant 2.000000e-01 : f32
    %115 = vector.broadcast %cst_41 : f32 to vector<32x128xf32>
    %116 = arith.mulf %115, %112 : vector<32x128xf32>
    %117 = arith.select %114, %112, %116 : vector<32x128xi1>, vector<32x128xf32>
    %c0_42 = arith.constant 0 : index
    %c0_43 = arith.constant 0 : index
    %c0_44 = arith.constant 0 : index
    %118 = vector.load %arg5[%c0_42, %c0_43, %c0_44] : memref<4x32x128xf32, #tpu.memory_space<vmem>>, vector<1x32x128xf32>
    %119 = vector.shape_cast %118 : vector<1x32x128xf32> to vector<32x128xf32>
    %120 = vector.shape_cast %117 : vector<32x128xf32> to vector<1x32x128xf32>
    tpu.vector_store %arg5[%c0_42, %c0_43, %c0_44], %120 {strides = array<i32>} : memref<4x32x128xf32, #tpu.memory_space<vmem>>, vector<1x32x128xf32>,
    %121 = vector.broadcast %105 : vector<1x128xf32> to vector<32x128xf32>
    %122 = arith.mulf %41, %121 : vector<32x128xf32>
    %123 = vector.broadcast %108 : vector<1x128xf32> to vector<32x128xf32>
    %124 = arith.addf %122, %123 : vector<32x128xf32>
    %cst_45 = arith.constant 0.000000e+00 : f32
    %125 = vector.broadcast %cst_45 : f32 to vector<32x128xf32>
    %126 = arith.cmpf ogt, %124, %125 : vector<32x128xf32>
    %cst_46 = arith.constant 2.000000e-01 : f32
    %127 = vector.broadcast %cst_46 : f32 to vector<32x128xf32>
    %128 = arith.mulf %127, %124 : vector<32x128xf32>
    %129 = arith.select %126, %124, %128 : vector<32x128xi1>, vector<32x128xf32>
    %c1_47 = arith.constant 1 : index
    %c0_48 = arith.constant 0 : index
    %c0_49 = arith.constant 0 : index
    %130 = vector.load %arg5[%c1_47, %c0_48, %c0_49] : memref<4x32x128xf32, #tpu.memory_space<vmem>>, vector<1x32x128xf32>
    %131 = vector.shape_cast %130 : vector<1x32x128xf32> to vector<32x128xf32>
    %132 = vector.shape_cast %129 : vector<32x128xf32> to vector<1x32x128xf32>
    tpu.vector_store %arg5[%c1_47, %c0_48, %c0_49], %132 {strides = array<i32>} : memref<4x32x128xf32, #tpu.memory_space<vmem>>, vector<1x32x128xf32>,
    %133 = vector.broadcast %105 : vector<1x128xf32> to vector<32x128xf32>
    %134 = arith.mulf %64, %133 : vector<32x128xf32>
    %135 = vector.broadcast %108 : vector<1x128xf32> to vector<32x128xf32>
    %136 = arith.addf %134, %135 : vector<32x128xf32>
    %cst_50 = arith.constant 0.000000e+00 : f32
    %137 = vector.broadcast %cst_50 : f32 to vector<32x128xf32>
    %138 = arith.cmpf ogt, %136, %137 : vector<32x128xf32>
    %cst_51 = arith.constant 2.000000e-01 : f32
    %139 = vector.broadcast %cst_51 : f32 to vector<32x128xf32>
    %140 = arith.mulf %139, %136 : vector<32x128xf32>
    %141 = arith.select %138, %136, %140 : vector<32x128xi1>, vector<32x128xf32>
    %c2_52 = arith.constant 2 : index
    %c0_53 = arith.constant 0 : index
    %c0_54 = arith.constant 0 : index
    %142 = vector.load %arg5[%c2_52, %c0_53, %c0_54] : memref<4x32x128xf32, #tpu.memory_space<vmem>>, vector<1x32x128xf32>
    %143 = vector.shape_cast %142 : vector<1x32x128xf32> to vector<32x128xf32>
    %144 = vector.shape_cast %141 : vector<32x128xf32> to vector<1x32x128xf32>
    tpu.vector_store %arg5[%c2_52, %c0_53, %c0_54], %144 {strides = array<i32>} : memref<4x32x128xf32, #tpu.memory_space<vmem>>, vector<1x32x128xf32>,
    %145 = vector.broadcast %105 : vector<1x128xf32> to vector<32x128xf32>
    %146 = arith.mulf %87, %145 : vector<32x128xf32>
    %147 = vector.broadcast %108 : vector<1x128xf32> to vector<32x128xf32>
    %148 = arith.addf %146, %147 : vector<32x128xf32>
    %cst_55 = arith.constant 0.000000e+00 : f32
    %149 = vector.broadcast %cst_55 : f32 to vector<32x128xf32>
    %150 = arith.cmpf ogt, %148, %149 : vector<32x128xf32>
    %cst_56 = arith.constant 2.000000e-01 : f32
    %151 = vector.broadcast %cst_56 : f32 to vector<32x128xf32>
    %152 = arith.mulf %151, %148 : vector<32x128xf32>
    %153 = arith.select %150, %148, %152 : vector<32x128xi1>, vector<32x128xf32>
    %c3_57 = arith.constant 3 : index
    %c0_58 = arith.constant 0 : index
    %c0_59 = arith.constant 0 : index
    %154 = vector.load %arg5[%c3_57, %c0_58, %c0_59] : memref<4x32x128xf32, #tpu.memory_space<vmem>>, vector<1x32x128xf32>
    %155 = vector.shape_cast %154 : vector<1x32x128xf32> to vector<32x128xf32>
    %156 = vector.shape_cast %153 : vector<32x128xf32> to vector<1x32x128xf32>
    tpu.vector_store %arg5[%c3_57, %c0_58, %c0_59], %156 {strides = array<i32>} : memref<4x32x128xf32, #tpu.memory_space<vmem>>, vector<1x32x128xf32>,
    return
  }
}

module attributes {stable_mosaic.version = 11 : i64} {
  func.func @up_convblock2_kernel(%arg0: memref<2x10x10x128xf32, #tpu.memory_space<vmem>>, %arg1: memref<4x512x64xbf16, #tpu.memory_space<vmem>>, %arg2: memref<1x64xf32, #tpu.memory_space<vmem>>, %arg3: memref<1x64xf32, #tpu.memory_space<vmem>>, %arg4: memref<1x64xf32, #tpu.memory_space<vmem>>, %arg5: memref<1152x128xbf16, #tpu.memory_space<vmem>>, %arg6: memref<1x128xf32, #tpu.memory_space<vmem>>, %arg7: memref<4x128x128xf32, #tpu.memory_space<vmem>>, %arg8: memref<8x10x10x128xf32, #tpu.memory_space<vmem>>) attributes {dimension_semantics = [], scalar_prefetch = 0 : i64, scratch_operands = 1 : i64, tpu.core_type = #tpu.core_type<tc>} {
    %c0 = arith.constant 0 : index
    %c0_0 = arith.constant 0 : index
    %c0_1 = arith.constant 0 : index
    %c0_2 = arith.constant 0 : index
    %0 = vector.load %arg0[%c0, %c0_0, %c0_1, %c0_2] : memref<2x10x10x128xf32, #tpu.memory_space<vmem>>, vector<2x10x10x128xf32>
    %cst = arith.constant 0.000000e+00 : f32
    %1 = vector.broadcast %cst : f32 to vector<1x64xf32>
    %cst_3 = arith.constant 0.000000e+00 : f32
    %2 = vector.broadcast %cst_3 : f32 to vector<1x64xf32>
    %3 = vector.extract_strided_slice %0 {offsets = [0, 0, 0, 0], sizes = [2, 8, 8, 128], strides = [1, 1, 1, 1]} : vector<2x10x10x128xf32> to vector<2x8x8x128xf32>
    %4 = vector.shape_cast %3 : vector<2x8x8x128xf32> to vector<128x128xf32>
    %5 = vector.extract_strided_slice %0 {offsets = [0, 0, 1, 0], sizes = [2, 8, 8, 128], strides = [1, 1, 1, 1]} : vector<2x10x10x128xf32> to vector<2x8x8x128xf32>
    %6 = vector.shape_cast %5 : vector<2x8x8x128xf32> to vector<128x128xf32>
    %7 = vector.extract_strided_slice %0 {offsets = [0, 1, 0, 0], sizes = [2, 8, 8, 128], strides = [1, 1, 1, 1]} : vector<2x10x10x128xf32> to vector<2x8x8x128xf32>
    %8 = vector.shape_cast %7 : vector<2x8x8x128xf32> to vector<128x128xf32>
    %9 = vector.extract_strided_slice %0 {offsets = [0, 1, 1, 0], sizes = [2, 8, 8, 128], strides = [1, 1, 1, 1]} : vector<2x10x10x128xf32> to vector<2x8x8x128xf32>
    %10 = vector.shape_cast %9 : vector<2x8x8x128xf32> to vector<128x128xf32>
    %11 = tpu.concatenate %4, %6, %8, %10 in 1 : vector<128x128xf32>, vector<128x128xf32>, vector<128x128xf32>, vector<128x128xf32> -> vector<128x512xf32>
    %12 = arith.truncf %11 : vector<128x512xf32> to vector<128x512xbf16>
    %c0_4 = arith.constant 0 : index
    %c0_5 = arith.constant 0 : index
    %c0_6 = arith.constant 0 : index
    %13 = vector.load %arg1[%c0_4, %c0_5, %c0_6] : memref<4x512x64xbf16, #tpu.memory_space<vmem>>, vector<1x512x64xbf16>
    %14 = vector.shape_cast %13 : vector<1x512x64xbf16> to vector<512x64xbf16>
    %cst_7 = arith.constant dense<0.000000e+00> : vector<128x64xf32>
    %15 = tpu.matmul %12, %14, %cst_7 {dimension_numbers = #tpu.dot_dimension_numbers<[1], [0], [0], [1], [0, 0, 1, 1], [], []>} : vector<128x512xbf16>, vector<512x64xbf16>, vector<128x64xf32> -> vector<128x64xf32>
    %c0_8 = arith.constant 0 : index
    %c0_9 = arith.constant 0 : index
    %16 = vector.load %arg2[%c0_8, %c0_9] : memref<1x64xf32, #tpu.memory_space<vmem>>, vector<1x64xf32>
    %17 = vector.broadcast %16 : vector<1x64xf32> to vector<128x64xf32>
    %18 = arith.addf %15, %17 : vector<128x64xf32>
    %cst_10 = arith.constant dense<0.000000e+00> : vector<64xf32>
    %19 = vector.multi_reduction <add>, %18, %cst_10 [0] : vector<128x64xf32> to vector<64xf32>
    %20 = vector.shape_cast %19 : vector<64xf32> to vector<1x64xf32>
    %21 = arith.addf %1, %20 : vector<1x64xf32>
    %22 = arith.mulf %18, %18 : vector<128x64xf32>
    %cst_11 = arith.constant dense<0.000000e+00> : vector<64xf32>
    %23 = vector.multi_reduction <add>, %22, %cst_11 [0] : vector<128x64xf32> to vector<64xf32>
    %24 = vector.shape_cast %23 : vector<64xf32> to vector<1x64xf32>
    %25 = arith.addf %2, %24 : vector<1x64xf32>
    %26 = vector.extract_strided_slice %0 {offsets = [0, 0, 1, 0], sizes = [2, 8, 8, 128], strides = [1, 1, 1, 1]} : vector<2x10x10x128xf32> to vector<2x8x8x128xf32>
    %27 = vector.shape_cast %26 : vector<2x8x8x128xf32> to vector<128x128xf32>
    %28 = vector.extract_strided_slice %0 {offsets = [0, 0, 2, 0], sizes = [2, 8, 8, 128], strides = [1, 1, 1, 1]} : vector<2x10x10x128xf32> to vector<2x8x8x128xf32>
    %29 = vector.shape_cast %28 : vector<2x8x8x128xf32> to vector<128x128xf32>
    %30 = vector.extract_strided_slice %0 {offsets = [0, 1, 1, 0], sizes = [2, 8, 8, 128], strides = [1, 1, 1, 1]} : vector<2x10x10x128xf32> to vector<2x8x8x128xf32>
    %31 = vector.shape_cast %30 : vector<2x8x8x128xf32> to vector<128x128xf32>
    %32 = vector.extract_strided_slice %0 {offsets = [0, 1, 2, 0], sizes = [2, 8, 8, 128], strides = [1, 1, 1, 1]} : vector<2x10x10x128xf32> to vector<2x8x8x128xf32>
    %33 = vector.shape_cast %32 : vector<2x8x8x128xf32> to vector<128x128xf32>
    %34 = tpu.concatenate %27, %29, %31, %33 in 1 : vector<128x128xf32>, vector<128x128xf32>, vector<128x128xf32>, vector<128x128xf32> -> vector<128x512xf32>
    %35 = arith.truncf %34 : vector<128x512xf32> to vector<128x512xbf16>
    %c1 = arith.constant 1 : index
    %c0_12 = arith.constant 0 : index
    %c0_13 = arith.constant 0 : index
    %36 = vector.load %arg1[%c1, %c0_12, %c0_13] : memref<4x512x64xbf16, #tpu.memory_space<vmem>>, vector<1x512x64xbf16>
    %37 = vector.shape_cast %36 : vector<1x512x64xbf16> to vector<512x64xbf16>
    %cst_14 = arith.constant dense<0.000000e+00> : vector<128x64xf32>
    %38 = tpu.matmul %35, %37, %cst_14 {dimension_numbers = #tpu.dot_dimension_numbers<[1], [0], [0], [1], [0, 0, 1, 1], [], []>} : vector<128x512xbf16>, vector<512x64xbf16>, vector<128x64xf32> -> vector<128x64xf32>
    %c0_15 = arith.constant 0 : index
    %c0_16 = arith.constant 0 : index
    %39 = vector.load %arg2[%c0_15, %c0_16] : memref<1x64xf32, #tpu.memory_space<vmem>>, vector<1x64xf32>
    %40 = vector.broadcast %39 : vector<1x64xf32> to vector<128x64xf32>
    %41 = arith.addf %38, %40 : vector<128x64xf32>
    %cst_17 = arith.constant dense<0.000000e+00> : vector<64xf32>
    %42 = vector.multi_reduction <add>, %41, %cst_17 [0] : vector<128x64xf32> to vector<64xf32>
    %43 = vector.shape_cast %42 : vector<64xf32> to vector<1x64xf32>
    %44 = arith.addf %21, %43 : vector<1x64xf32>
    %45 = arith.mulf %41, %41 : vector<128x64xf32>
    %cst_18 = arith.constant dense<0.000000e+00> : vector<64xf32>
    %46 = vector.multi_reduction <add>, %45, %cst_18 [0] : vector<128x64xf32> to vector<64xf32>
    %47 = vector.shape_cast %46 : vector<64xf32> to vector<1x64xf32>
    %48 = arith.addf %25, %47 : vector<1x64xf32>
    %49 = vector.extract_strided_slice %0 {offsets = [0, 1, 0, 0], sizes = [2, 8, 8, 128], strides = [1, 1, 1, 1]} : vector<2x10x10x128xf32> to vector<2x8x8x128xf32>
    %50 = vector.shape_cast %49 : vector<2x8x8x128xf32> to vector<128x128xf32>
    %51 = vector.extract_strided_slice %0 {offsets = [0, 1, 1, 0], sizes = [2, 8, 8, 128], strides = [1, 1, 1, 1]} : vector<2x10x10x128xf32> to vector<2x8x8x128xf32>
    %52 = vector.shape_cast %51 : vector<2x8x8x128xf32> to vector<128x128xf32>
    %53 = vector.extract_strided_slice %0 {offsets = [0, 2, 0, 0], sizes = [2, 8, 8, 128], strides = [1, 1, 1, 1]} : vector<2x10x10x128xf32> to vector<2x8x8x128xf32>
    %54 = vector.shape_cast %53 : vector<2x8x8x128xf32> to vector<128x128xf32>
    %55 = vector.extract_strided_slice %0 {offsets = [0, 2, 1, 0], sizes = [2, 8, 8, 128], strides = [1, 1, 1, 1]} : vector<2x10x10x128xf32> to vector<2x8x8x128xf32>
    %56 = vector.shape_cast %55 : vector<2x8x8x128xf32> to vector<128x128xf32>
    %57 = tpu.concatenate %50, %52, %54, %56 in 1 : vector<128x128xf32>, vector<128x128xf32>, vector<128x128xf32>, vector<128x128xf32> -> vector<128x512xf32>
    %58 = arith.truncf %57 : vector<128x512xf32> to vector<128x512xbf16>
    %c2 = arith.constant 2 : index
    %c0_19 = arith.constant 0 : index
    %c0_20 = arith.constant 0 : index
    %59 = vector.load %arg1[%c2, %c0_19, %c0_20] : memref<4x512x64xbf16, #tpu.memory_space<vmem>>, vector<1x512x64xbf16>
    %60 = vector.shape_cast %59 : vector<1x512x64xbf16> to vector<512x64xbf16>
    %cst_21 = arith.constant dense<0.000000e+00> : vector<128x64xf32>
    %61 = tpu.matmul %58, %60, %cst_21 {dimension_numbers = #tpu.dot_dimension_numbers<[1], [0], [0], [1], [0, 0, 1, 1], [], []>} : vector<128x512xbf16>, vector<512x64xbf16>, vector<128x64xf32> -> vector<128x64xf32>
    %c0_22 = arith.constant 0 : index
    %c0_23 = arith.constant 0 : index
    %62 = vector.load %arg2[%c0_22, %c0_23] : memref<1x64xf32, #tpu.memory_space<vmem>>, vector<1x64xf32>
    %63 = vector.broadcast %62 : vector<1x64xf32> to vector<128x64xf32>
    %64 = arith.addf %61, %63 : vector<128x64xf32>
    %cst_24 = arith.constant dense<0.000000e+00> : vector<64xf32>
    %65 = vector.multi_reduction <add>, %64, %cst_24 [0] : vector<128x64xf32> to vector<64xf32>
    %66 = vector.shape_cast %65 : vector<64xf32> to vector<1x64xf32>
    %67 = arith.addf %44, %66 : vector<1x64xf32>
    %68 = arith.mulf %64, %64 : vector<128x64xf32>
    %cst_25 = arith.constant dense<0.000000e+00> : vector<64xf32>
    %69 = vector.multi_reduction <add>, %68, %cst_25 [0] : vector<128x64xf32> to vector<64xf32>
    %70 = vector.shape_cast %69 : vector<64xf32> to vector<1x64xf32>
    %71 = arith.addf %48, %70 : vector<1x64xf32>
    %72 = vector.extract_strided_slice %0 {offsets = [0, 1, 1, 0], sizes = [2, 8, 8, 128], strides = [1, 1, 1, 1]} : vector<2x10x10x128xf32> to vector<2x8x8x128xf32>
    %73 = vector.shape_cast %72 : vector<2x8x8x128xf32> to vector<128x128xf32>
    %74 = vector.extract_strided_slice %0 {offsets = [0, 1, 2, 0], sizes = [2, 8, 8, 128], strides = [1, 1, 1, 1]} : vector<2x10x10x128xf32> to vector<2x8x8x128xf32>
    %75 = vector.shape_cast %74 : vector<2x8x8x128xf32> to vector<128x128xf32>
    %76 = vector.extract_strided_slice %0 {offsets = [0, 2, 1, 0], sizes = [2, 8, 8, 128], strides = [1, 1, 1, 1]} : vector<2x10x10x128xf32> to vector<2x8x8x128xf32>
    %77 = vector.shape_cast %76 : vector<2x8x8x128xf32> to vector<128x128xf32>
    %78 = vector.extract_strided_slice %0 {offsets = [0, 2, 2, 0], sizes = [2, 8, 8, 128], strides = [1, 1, 1, 1]} : vector<2x10x10x128xf32> to vector<2x8x8x128xf32>
    %79 = vector.shape_cast %78 : vector<2x8x8x128xf32> to vector<128x128xf32>
    %80 = tpu.concatenate %73, %75, %77, %79 in 1 : vector<128x128xf32>, vector<128x128xf32>, vector<128x128xf32>, vector<128x128xf32> -> vector<128x512xf32>
    %81 = arith.truncf %80 : vector<128x512xf32> to vector<128x512xbf16>
    %c3 = arith.constant 3 : index
    %c0_26 = arith.constant 0 : index
    %c0_27 = arith.constant 0 : index
    %82 = vector.load %arg1[%c3, %c0_26, %c0_27] : memref<4x512x64xbf16, #tpu.memory_space<vmem>>, vector<1x512x64xbf16>
    %83 = vector.shape_cast %82 : vector<1x512x64xbf16> to vector<512x64xbf16>
    %cst_28 = arith.constant dense<0.000000e+00> : vector<128x64xf32>
    %84 = tpu.matmul %81, %83, %cst_28 {dimension_numbers = #tpu.dot_dimension_numbers<[1], [0], [0], [1], [0, 0, 1, 1], [], []>} : vector<128x512xbf16>, vector<512x64xbf16>, vector<128x64xf32> -> vector<128x64xf32>
    %c0_29 = arith.constant 0 : index
    %c0_30 = arith.constant 0 : index
    %85 = vector.load %arg2[%c0_29, %c0_30] : memref<1x64xf32, #tpu.memory_space<vmem>>, vector<1x64xf32>
    %86 = vector.broadcast %85 : vector<1x64xf32> to vector<128x64xf32>
    %87 = arith.addf %84, %86 : vector<128x64xf32>
    %cst_31 = arith.constant dense<0.000000e+00> : vector<64xf32>
    %88 = vector.multi_reduction <add>, %87, %cst_31 [0] : vector<128x64xf32> to vector<64xf32>
    %89 = vector.shape_cast %88 : vector<64xf32> to vector<1x64xf32>
    %90 = arith.addf %67, %89 : vector<1x64xf32>
    %91 = arith.mulf %87, %87 : vector<128x64xf32>
    %cst_32 = arith.constant dense<0.000000e+00> : vector<64xf32>
    %92 = vector.multi_reduction <add>, %91, %cst_32 [0] : vector<128x64xf32> to vector<64xf32>
    %93 = vector.shape_cast %92 : vector<64xf32> to vector<1x64xf32>
    %94 = arith.addf %71, %93 : vector<1x64xf32>
    %cst_33 = arith.constant 5.120000e+02 : f32
    %95 = vector.broadcast %cst_33 : f32 to vector<1x64xf32>
    %96 = arith.divf %90, %95 : vector<1x64xf32>
    %cst_34 = arith.constant 5.120000e+02 : f32
    %97 = vector.broadcast %cst_34 : f32 to vector<1x64xf32>
    %98 = arith.divf %94, %97 : vector<1x64xf32>
    %99 = arith.mulf %96, %96 : vector<1x64xf32>
    %100 = arith.subf %98, %99 : vector<1x64xf32>
    %cst_35 = arith.constant 8.000000e-01 : f32
    %101 = vector.broadcast %cst_35 : f32 to vector<1x64xf32>
    %102 = arith.addf %100, %101 : vector<1x64xf32>
    %103 = math.rsqrt %102 : vector<1x64xf32>
    %c0_36 = arith.constant 0 : index
    %c0_37 = arith.constant 0 : index
    %104 = vector.load %arg3[%c0_36, %c0_37] : memref<1x64xf32, #tpu.memory_space<vmem>>, vector<1x64xf32>
    %105 = arith.mulf %103, %104 : vector<1x64xf32>
    %c0_38 = arith.constant 0 : index
    %c0_39 = arith.constant 0 : index
    %106 = vector.load %arg4[%c0_38, %c0_39] : memref<1x64xf32, #tpu.memory_space<vmem>>, vector<1x64xf32>
    %107 = arith.mulf %96, %105 : vector<1x64xf32>
    %108 = arith.subf %106, %107 : vector<1x64xf32>
    %cst_40 = arith.constant 0.000000e+00 : f32
    %109 = vector.broadcast %cst_40 : f32 to vector<8x10x10x128xf32>
    %c0_41 = arith.constant 0 : index
    %c0_42 = arith.constant 0 : index
    %c0_43 = arith.constant 0 : index
    %c0_44 = arith.constant 0 : index
    %110 = vector.load %arg8[%c0_41, %c0_42, %c0_43, %c0_44] : memref<8x10x10x128xf32, #tpu.memory_space<vmem>>, vector<8x10x10x128xf32>
    tpu.vector_store %arg8[%c0_41, %c0_42, %c0_43, %c0_44], %109 {strides = array<i32>} : memref<8x10x10x128xf32, #tpu.memory_space<vmem>>, vector<8x10x10x128xf32>,
    %111 = vector.broadcast %105 : vector<1x64xf32> to vector<128x64xf32>
    %112 = arith.mulf %18, %111 : vector<128x64xf32>
    %113 = vector.broadcast %108 : vector<1x64xf32> to vector<128x64xf32>
    %114 = arith.addf %112, %113 : vector<128x64xf32>
    %cst_45 = arith.constant 0.000000e+00 : f32
    %115 = vector.broadcast %cst_45 : f32 to vector<128x64xf32>
    %116 = arith.cmpf ogt, %114, %115 : vector<128x64xf32>
    %cst_46 = arith.constant 2.000000e-01 : f32
    %117 = vector.broadcast %cst_46 : f32 to vector<128x64xf32>
    %118 = arith.mulf %117, %114 : vector<128x64xf32>
    %119 = arith.select %116, %114, %118 : vector<128x64xi1>, vector<128x64xf32>
    %120 = vector.shape_cast %119 : vector<128x64xf32> to vector<2x8x8x64xf32>
    %c0_47 = arith.constant 0 : index
    %c1_48 = arith.constant 1 : index
    %c1_49 = arith.constant 1 : index
    %c0_50 = arith.constant 0 : index
    %121 = vector.load %arg8[%c0_47, %c1_48, %c1_49, %c0_50] : memref<8x10x10x128xf32, #tpu.memory_space<vmem>>, vector<2x8x8x64xf32>
    tpu.vector_store %arg8[%c0_47, %c1_48, %c1_49, %c0_50], %120 {strides = array<i32>} : memref<8x10x10x128xf32, #tpu.memory_space<vmem>>, vector<2x8x8x64xf32>,
    %122 = vector.broadcast %105 : vector<1x64xf32> to vector<128x64xf32>
    %123 = arith.mulf %41, %122 : vector<128x64xf32>
    %124 = vector.broadcast %108 : vector<1x64xf32> to vector<128x64xf32>
    %125 = arith.addf %123, %124 : vector<128x64xf32>
    %cst_51 = arith.constant 0.000000e+00 : f32
    %126 = vector.broadcast %cst_51 : f32 to vector<128x64xf32>
    %127 = arith.cmpf ogt, %125, %126 : vector<128x64xf32>
    %cst_52 = arith.constant 2.000000e-01 : f32
    %128 = vector.broadcast %cst_52 : f32 to vector<128x64xf32>
    %129 = arith.mulf %128, %125 : vector<128x64xf32>
    %130 = arith.select %127, %125, %129 : vector<128x64xi1>, vector<128x64xf32>
    %131 = vector.shape_cast %130 : vector<128x64xf32> to vector<2x8x8x64xf32>
    %c2_53 = arith.constant 2 : index
    %c1_54 = arith.constant 1 : index
    %c1_55 = arith.constant 1 : index
    %c0_56 = arith.constant 0 : index
    %132 = vector.load %arg8[%c2_53, %c1_54, %c1_55, %c0_56] : memref<8x10x10x128xf32, #tpu.memory_space<vmem>>, vector<2x8x8x64xf32>
    tpu.vector_store %arg8[%c2_53, %c1_54, %c1_55, %c0_56], %131 {strides = array<i32>} : memref<8x10x10x128xf32, #tpu.memory_space<vmem>>, vector<2x8x8x64xf32>,
    %133 = vector.broadcast %105 : vector<1x64xf32> to vector<128x64xf32>
    %134 = arith.mulf %64, %133 : vector<128x64xf32>
    %135 = vector.broadcast %108 : vector<1x64xf32> to vector<128x64xf32>
    %136 = arith.addf %134, %135 : vector<128x64xf32>
    %cst_57 = arith.constant 0.000000e+00 : f32
    %137 = vector.broadcast %cst_57 : f32 to vector<128x64xf32>
    %138 = arith.cmpf ogt, %136, %137 : vector<128x64xf32>
    %cst_58 = arith.constant 2.000000e-01 : f32
    %139 = vector.broadcast %cst_58 : f32 to vector<128x64xf32>
    %140 = arith.mulf %139, %136 : vector<128x64xf32>
    %141 = arith.select %138, %136, %140 : vector<128x64xi1>, vector<128x64xf32>
    %142 = vector.shape_cast %141 : vector<128x64xf32> to vector<2x8x8x64xf32>
    %c4 = arith.constant 4 : index
    %c1_59 = arith.constant 1 : index
    %c1_60 = arith.constant 1 : index
    %c0_61 = arith.constant 0 : index
    %143 = vector.load %arg8[%c4, %c1_59, %c1_60, %c0_61] : memref<8x10x10x128xf32, #tpu.memory_space<vmem>>, vector<2x8x8x64xf32>
    tpu.vector_store %arg8[%c4, %c1_59, %c1_60, %c0_61], %142 {strides = array<i32>} : memref<8x10x10x128xf32, #tpu.memory_space<vmem>>, vector<2x8x8x64xf32>,
    %144 = vector.broadcast %105 : vector<1x64xf32> to vector<128x64xf32>
    %145 = arith.mulf %87, %144 : vector<128x64xf32>
    %146 = vector.broadcast %108 : vector<1x64xf32> to vector<128x64xf32>
    %147 = arith.addf %145, %146 : vector<128x64xf32>
    %cst_62 = arith.constant 0.000000e+00 : f32
    %148 = vector.broadcast %cst_62 : f32 to vector<128x64xf32>
    %149 = arith.cmpf ogt, %147, %148 : vector<128x64xf32>
    %cst_63 = arith.constant 2.000000e-01 : f32
    %150 = vector.broadcast %cst_63 : f32 to vector<128x64xf32>
    %151 = arith.mulf %150, %147 : vector<128x64xf32>
    %152 = arith.select %149, %147, %151 : vector<128x64xi1>, vector<128x64xf32>
    %153 = vector.shape_cast %152 : vector<128x64xf32> to vector<2x8x8x64xf32>
    %c6 = arith.constant 6 : index
    %c1_64 = arith.constant 1 : index
    %c1_65 = arith.constant 1 : index
    %c0_66 = arith.constant 0 : index
    %154 = vector.load %arg8[%c6, %c1_64, %c1_65, %c0_66] : memref<8x10x10x128xf32, #tpu.memory_space<vmem>>, vector<2x8x8x64xf32>
    tpu.vector_store %arg8[%c6, %c1_64, %c1_65, %c0_66], %153 {strides = array<i32>} : memref<8x10x10x128xf32, #tpu.memory_space<vmem>>, vector<2x8x8x64xf32>,
    %cst_67 = arith.constant 0.000000e+00 : f32
    %155 = vector.broadcast %cst_67 : f32 to vector<1x128xf32>
    %cst_68 = arith.constant 0.000000e+00 : f32
    %156 = vector.broadcast %cst_68 : f32 to vector<1x128xf32>
    %c6_69 = arith.constant 6 : index
    %c0_70 = arith.constant 0 : index
    %c0_71 = arith.constant 0 : index
    %c0_72 = arith.constant 0 : index
    %157 = vector.load %arg8[%c6_69, %c0_70, %c0_71, %c0_72] : memref<8x10x10x128xf32, #tpu.memory_space<vmem>>, vector<2x8x8x128xf32>
    %158 = vector.shape_cast %157 : vector<2x8x8x128xf32> to vector<128x128xf32>
    %c4_73 = arith.constant 4 : index
    %c0_74 = arith.constant 0 : index
    %c1_75 = arith.constant 1 : index
    %c0_76 = arith.constant 0 : index
    %159 = vector.load %arg8[%c4_73, %c0_74, %c1_75, %c0_76] : memref<8x10x10x128xf32, #tpu.memory_space<vmem>>, vector<2x8x8x128xf32>
    %160 = vector.shape_cast %159 : vector<2x8x8x128xf32> to vector<128x128xf32>
    %c6_77 = arith.constant 6 : index
    %c0_78 = arith.constant 0 : index
    %c1_79 = arith.constant 1 : index
    %c0_80 = arith.constant 0 : index
    %161 = vector.load %arg8[%c6_77, %c0_78, %c1_79, %c0_80] : memref<8x10x10x128xf32, #tpu.memory_space<vmem>>, vector<2x8x8x128xf32>
    %162 = vector.shape_cast %161 : vector<2x8x8x128xf32> to vector<128x128xf32>
    %c2_81 = arith.constant 2 : index
    %c1_82 = arith.constant 1 : index
    %c0_83 = arith.constant 0 : index
    %c0_84 = arith.constant 0 : index
    %163 = vector.load %arg8[%c2_81, %c1_82, %c0_83, %c0_84] : memref<8x10x10x128xf32, #tpu.memory_space<vmem>>, vector<2x8x8x128xf32>
    %164 = vector.shape_cast %163 : vector<2x8x8x128xf32> to vector<128x128xf32>
    %c0_85 = arith.constant 0 : index
    %c1_86 = arith.constant 1 : index
    %c1_87 = arith.constant 1 : index
    %c0_88 = arith.constant 0 : index
    %165 = vector.load %arg8[%c0_85, %c1_86, %c1_87, %c0_88] : memref<8x10x10x128xf32, #tpu.memory_space<vmem>>, vector<2x8x8x128xf32>
    %166 = vector.shape_cast %165 : vector<2x8x8x128xf32> to vector<128x128xf32>
    %c2_89 = arith.constant 2 : index
    %c1_90 = arith.constant 1 : index
    %c1_91 = arith.constant 1 : index
    %c0_92 = arith.constant 0 : index
    %167 = vector.load %arg8[%c2_89, %c1_90, %c1_91, %c0_92] : memref<8x10x10x128xf32, #tpu.memory_space<vmem>>, vector<2x8x8x128xf32>
    %168 = vector.shape_cast %167 : vector<2x8x8x128xf32> to vector<128x128xf32>
    %c6_93 = arith.constant 6 : index
    %c1_94 = arith.constant 1 : index
    %c0_95 = arith.constant 0 : index
    %c0_96 = arith.constant 0 : index
    %169 = vector.load %arg8[%c6_93, %c1_94, %c0_95, %c0_96] : memref<8x10x10x128xf32, #tpu.memory_space<vmem>>, vector<2x8x8x128xf32>
    %170 = vector.shape_cast %169 : vector<2x8x8x128xf32> to vector<128x128xf32>
    %c4_97 = arith.constant 4 : index
    %c1_98 = arith.constant 1 : index
    %c1_99 = arith.constant 1 : index
    %c0_100 = arith.constant 0 : index
    %171 = vector.load %arg8[%c4_97, %c1_98, %c1_99, %c0_100] : memref<8x10x10x128xf32, #tpu.memory_space<vmem>>, vector<2x8x8x128xf32>
    %172 = vector.shape_cast %171 : vector<2x8x8x128xf32> to vector<128x128xf32>
    %c6_101 = arith.constant 6 : index
    %c1_102 = arith.constant 1 : index
    %c1_103 = arith.constant 1 : index
    %c0_104 = arith.constant 0 : index
    %173 = vector.load %arg8[%c6_101, %c1_102, %c1_103, %c0_104] : memref<8x10x10x128xf32, #tpu.memory_space<vmem>>, vector<2x8x8x128xf32>
    %174 = vector.shape_cast %173 : vector<2x8x8x128xf32> to vector<128x128xf32>
    %175 = tpu.concatenate %158, %160, %162, %164, %166, %168, %170, %172, %174 in 1 : vector<128x128xf32>, vector<128x128xf32>, vector<128x128xf32>, vector<128x128xf32>, vector<128x128xf32>, vector<128x128xf32>, vector<128x128xf32>, vector<128x128xf32>, vector<128x128xf32> -> vector<128x1152xf32>
    %176 = arith.truncf %175 : vector<128x1152xf32> to vector<128x1152xbf16>
    %c0_105 = arith.constant 0 : index
    %c0_106 = arith.constant 0 : index
    %177 = vector.load %arg5[%c0_105, %c0_106] : memref<1152x128xbf16, #tpu.memory_space<vmem>>, vector<1152x128xbf16>
    %cst_107 = arith.constant dense<0.000000e+00> : vector<128x128xf32>
    %178 = tpu.matmul %176, %177, %cst_107 {dimension_numbers = #tpu.dot_dimension_numbers<[1], [0], [0], [1], [0, 0, 1, 1], [], []>} : vector<128x1152xbf16>, vector<1152x128xbf16>, vector<128x128xf32> -> vector<128x128xf32>
    %c0_108 = arith.constant 0 : index
    %c0_109 = arith.constant 0 : index
    %179 = vector.load %arg6[%c0_108, %c0_109] : memref<1x128xf32, #tpu.memory_space<vmem>>, vector<1x128xf32>
    %180 = vector.broadcast %179 : vector<1x128xf32> to vector<128x128xf32>
    %181 = arith.addf %178, %180 : vector<128x128xf32>
    %182 = math.tanh %181 : vector<128x128xf32>
    %cst_110 = arith.constant dense<0.000000e+00> : vector<128xf32>
    %183 = vector.multi_reduction <add>, %182, %cst_110 [0] : vector<128x128xf32> to vector<128xf32>
    %184 = vector.shape_cast %183 : vector<128xf32> to vector<1x128xf32>
    %185 = arith.addf %155, %184 : vector<1x128xf32>
    %186 = arith.mulf %182, %182 : vector<128x128xf32>
    %cst_111 = arith.constant dense<0.000000e+00> : vector<128xf32>
    %187 = vector.multi_reduction <add>, %186, %cst_111 [0] : vector<128x128xf32> to vector<128xf32>
    %188 = vector.shape_cast %187 : vector<128xf32> to vector<1x128xf32>
    %189 = arith.addf %156, %188 : vector<1x128xf32>
    %c4_112 = arith.constant 4 : index
    %c0_113 = arith.constant 0 : index
    %c1_114 = arith.constant 1 : index
    %c0_115 = arith.constant 0 : index
    %190 = vector.load %arg8[%c4_112, %c0_113, %c1_114, %c0_115] : memref<8x10x10x128xf32, #tpu.memory_space<vmem>>, vector<2x8x8x128xf32>
    %191 = vector.shape_cast %190 : vector<2x8x8x128xf32> to vector<128x128xf32>
    %c6_116 = arith.constant 6 : index
    %c0_117 = arith.constant 0 : index
    %c1_118 = arith.constant 1 : index
    %c0_119 = arith.constant 0 : index
    %192 = vector.load %arg8[%c6_116, %c0_117, %c1_118, %c0_119] : memref<8x10x10x128xf32, #tpu.memory_space<vmem>>, vector<2x8x8x128xf32>
    %193 = vector.shape_cast %192 : vector<2x8x8x128xf32> to vector<128x128xf32>
    %c4_120 = arith.constant 4 : index
    %c0_121 = arith.constant 0 : index
    %c2_122 = arith.constant 2 : index
    %c0_123 = arith.constant 0 : index
    %194 = vector.load %arg8[%c4_120, %c0_121, %c2_122, %c0_123] : memref<8x10x10x128xf32, #tpu.memory_space<vmem>>, vector<2x8x8x128xf32>
    %195 = vector.shape_cast %194 : vector<2x8x8x128xf32> to vector<128x128xf32>
    %c0_124 = arith.constant 0 : index
    %c1_125 = arith.constant 1 : index
    %c1_126 = arith.constant 1 : index
    %c0_127 = arith.constant 0 : index
    %196 = vector.load %arg8[%c0_124, %c1_125, %c1_126, %c0_127] : memref<8x10x10x128xf32, #tpu.memory_space<vmem>>, vector<2x8x8x128xf32>
    %197 = vector.shape_cast %196 : vector<2x8x8x128xf32> to vector<128x128xf32>
    %c2_128 = arith.constant 2 : index
    %c1_129 = arith.constant 1 : index
    %c1_130 = arith.constant 1 : index
    %c0_131 = arith.constant 0 : index
    %198 = vector.load %arg8[%c2_128, %c1_129, %c1_130, %c0_131] : memref<8x10x10x128xf32, #tpu.memory_space<vmem>>, vector<2x8x8x128xf32>
    %199 = vector.shape_cast %198 : vector<2x8x8x128xf32> to vector<128x128xf32>
    %c0_132 = arith.constant 0 : index
    %c1_133 = arith.constant 1 : index
    %c2_134 = arith.constant 2 : index
    %c0_135 = arith.constant 0 : index
    %200 = vector.load %arg8[%c0_132, %c1_133, %c2_134, %c0_135] : memref<8x10x10x128xf32, #tpu.memory_space<vmem>>, vector<2x8x8x128xf32>
    %201 = vector.shape_cast %200 : vector<2x8x8x128xf32> to vector<128x128xf32>
    %c4_136 = arith.constant 4 : index
    %c1_137 = arith.constant 1 : index
    %c1_138 = arith.constant 1 : index
    %c0_139 = arith.constant 0 : index
    %202 = vector.load %arg8[%c4_136, %c1_137, %c1_138, %c0_139] : memref<8x10x10x128xf32, #tpu.memory_space<vmem>>, vector<2x8x8x128xf32>
    %203 = vector.shape_cast %202 : vector<2x8x8x128xf32> to vector<128x128xf32>
    %c6_140 = arith.constant 6 : index
    %c1_141 = arith.constant 1 : index
    %c1_142 = arith.constant 1 : index
    %c0_143 = arith.constant 0 : index
    %204 = vector.load %arg8[%c6_140, %c1_141, %c1_142, %c0_143] : memref<8x10x10x128xf32, #tpu.memory_space<vmem>>, vector<2x8x8x128xf32>
    %205 = vector.shape_cast %204 : vector<2x8x8x128xf32> to vector<128x128xf32>
    %c4_144 = arith.constant 4 : index
    %c1_145 = arith.constant 1 : index
    %c2_146 = arith.constant 2 : index
    %c0_147 = arith.constant 0 : index
    %206 = vector.load %arg8[%c4_144, %c1_145, %c2_146, %c0_147] : memref<8x10x10x128xf32, #tpu.memory_space<vmem>>, vector<2x8x8x128xf32>
    %207 = vector.shape_cast %206 : vector<2x8x8x128xf32> to vector<128x128xf32>
    %208 = tpu.concatenate %191, %193, %195, %197, %199, %201, %203, %205, %207 in 1 : vector<128x128xf32>, vector<128x128xf32>, vector<128x128xf32>, vector<128x128xf32>, vector<128x128xf32>, vector<128x128xf32>, vector<128x128xf32>, vector<128x128xf32>, vector<128x128xf32> -> vector<128x1152xf32>
    %209 = arith.truncf %208 : vector<128x1152xf32> to vector<128x1152xbf16>
    %c0_148 = arith.constant 0 : index
    %c0_149 = arith.constant 0 : index
    %210 = vector.load %arg5[%c0_148, %c0_149] : memref<1152x128xbf16, #tpu.memory_space<vmem>>, vector<1152x128xbf16>
    %cst_150 = arith.constant dense<0.000000e+00> : vector<128x128xf32>
    %211 = tpu.matmul %209, %210, %cst_150 {dimension_numbers = #tpu.dot_dimension_numbers<[1], [0], [0], [1], [0, 0, 1, 1], [], []>} : vector<128x1152xbf16>, vector<1152x128xbf16>, vector<128x128xf32> -> vector<128x128xf32>
    %c0_151 = arith.constant 0 : index
    %c0_152 = arith.constant 0 : index
    %212 = vector.load %arg6[%c0_151, %c0_152] : memref<1x128xf32, #tpu.memory_space<vmem>>, vector<1x128xf32>
    %213 = vector.broadcast %212 : vector<1x128xf32> to vector<128x128xf32>
    %214 = arith.addf %211, %213 : vector<128x128xf32>
    %215 = math.tanh %214 : vector<128x128xf32>
    %cst_153 = arith.constant dense<0.000000e+00> : vector<128xf32>
    %216 = vector.multi_reduction <add>, %215, %cst_153 [0] : vector<128x128xf32> to vector<128xf32>
    %217 = vector.shape_cast %216 : vector<128xf32> to vector<1x128xf32>
    %218 = arith.addf %185, %217 : vector<1x128xf32>
    %219 = arith.mulf %215, %215 : vector<128x128xf32>
    %cst_154 = arith.constant dense<0.000000e+00> : vector<128xf32>
    %220 = vector.multi_reduction <add>, %219, %cst_154 [0] : vector<128x128xf32> to vector<128xf32>
    %221 = vector.shape_cast %220 : vector<128xf32> to vector<1x128xf32>
    %222 = arith.addf %189, %221 : vector<1x128xf32>
    %c2_155 = arith.constant 2 : index
    %c1_156 = arith.constant 1 : index
    %c0_157 = arith.constant 0 : index
    %c0_158 = arith.constant 0 : index
    %223 = vector.load %arg8[%c2_155, %c1_156, %c0_157, %c0_158] : memref<8x10x10x128xf32, #tpu.memory_space<vmem>>, vector<2x8x8x128xf32>
    %224 = vector.shape_cast %223 : vector<2x8x8x128xf32> to vector<128x128xf32>
    %c0_159 = arith.constant 0 : index
    %c1_160 = arith.constant 1 : index
    %c1_161 = arith.constant 1 : index
    %c0_162 = arith.constant 0 : index
    %225 = vector.load %arg8[%c0_159, %c1_160, %c1_161, %c0_162] : memref<8x10x10x128xf32, #tpu.memory_space<vmem>>, vector<2x8x8x128xf32>
    %226 = vector.shape_cast %225 : vector<2x8x8x128xf32> to vector<128x128xf32>
    %c2_163 = arith.constant 2 : index
    %c1_164 = arith.constant 1 : index
    %c1_165 = arith.constant 1 : index
    %c0_166 = arith.constant 0 : index
    %227 = vector.load %arg8[%c2_163, %c1_164, %c1_165, %c0_166] : memref<8x10x10x128xf32, #tpu.memory_space<vmem>>, vector<2x8x8x128xf32>
    %228 = vector.shape_cast %227 : vector<2x8x8x128xf32> to vector<128x128xf32>
    %c6_167 = arith.constant 6 : index
    %c1_168 = arith.constant 1 : index
    %c0_169 = arith.constant 0 : index
    %c0_170 = arith.constant 0 : index
    %229 = vector.load %arg8[%c6_167, %c1_168, %c0_169, %c0_170] : memref<8x10x10x128xf32, #tpu.memory_space<vmem>>, vector<2x8x8x128xf32>
    %230 = vector.shape_cast %229 : vector<2x8x8x128xf32> to vector<128x128xf32>
    %c4_171 = arith.constant 4 : index
    %c1_172 = arith.constant 1 : index
    %c1_173 = arith.constant 1 : index
    %c0_174 = arith.constant 0 : index
    %231 = vector.load %arg8[%c4_171, %c1_172, %c1_173, %c0_174] : memref<8x10x10x128xf32, #tpu.memory_space<vmem>>, vector<2x8x8x128xf32>
    %232 = vector.shape_cast %231 : vector<2x8x8x128xf32> to vector<128x128xf32>
    %c6_175 = arith.constant 6 : index
    %c1_176 = arith.constant 1 : index
    %c1_177 = arith.constant 1 : index
    %c0_178 = arith.constant 0 : index
    %233 = vector.load %arg8[%c6_175, %c1_176, %c1_177, %c0_178] : memref<8x10x10x128xf32, #tpu.memory_space<vmem>>, vector<2x8x8x128xf32>
    %234 = vector.shape_cast %233 : vector<2x8x8x128xf32> to vector<128x128xf32>
    %c2_179 = arith.constant 2 : index
    %c2_180 = arith.constant 2 : index
    %c0_181 = arith.constant 0 : index
    %c0_182 = arith.constant 0 : index
    %235 = vector.load %arg8[%c2_179, %c2_180, %c0_181, %c0_182] : memref<8x10x10x128xf32, #tpu.memory_space<vmem>>, vector<2x8x8x128xf32>
    %236 = vector.shape_cast %235 : vector<2x8x8x128xf32> to vector<128x128xf32>
    %c0_183 = arith.constant 0 : index
    %c2_184 = arith.constant 2 : index
    %c1_185 = arith.constant 1 : index
    %c0_186 = arith.constant 0 : index
    %237 = vector.load %arg8[%c0_183, %c2_184, %c1_185, %c0_186] : memref<8x10x10x128xf32, #tpu.memory_space<vmem>>, vector<2x8x8x128xf32>
    %238 = vector.shape_cast %237 : vector<2x8x8x128xf32> to vector<128x128xf32>
    %c2_187 = arith.constant 2 : index
    %c2_188 = arith.constant 2 : index
    %c1_189 = arith.constant 1 : index
    %c0_190 = arith.constant 0 : index
    %239 = vector.load %arg8[%c2_187, %c2_188, %c1_189, %c0_190] : memref<8x10x10x128xf32, #tpu.memory_space<vmem>>, vector<2x8x8x128xf32>
    %240 = vector.shape_cast %239 : vector<2x8x8x128xf32> to vector<128x128xf32>
    %241 = tpu.concatenate %224, %226, %228, %230, %232, %234, %236, %238, %240 in 1 : vector<128x128xf32>, vector<128x128xf32>, vector<128x128xf32>, vector<128x128xf32>, vector<128x128xf32>, vector<128x128xf32>, vector<128x128xf32>, vector<128x128xf32>, vector<128x128xf32> -> vector<128x1152xf32>
    %242 = arith.truncf %241 : vector<128x1152xf32> to vector<128x1152xbf16>
    %c0_191 = arith.constant 0 : index
    %c0_192 = arith.constant 0 : index
    %243 = vector.load %arg5[%c0_191, %c0_192] : memref<1152x128xbf16, #tpu.memory_space<vmem>>, vector<1152x128xbf16>
    %cst_193 = arith.constant dense<0.000000e+00> : vector<128x128xf32>
    %244 = tpu.matmul %242, %243, %cst_193 {dimension_numbers = #tpu.dot_dimension_numbers<[1], [0], [0], [1], [0, 0, 1, 1], [], []>} : vector<128x1152xbf16>, vector<1152x128xbf16>, vector<128x128xf32> -> vector<128x128xf32>
    %c0_194 = arith.constant 0 : index
    %c0_195 = arith.constant 0 : index
    %245 = vector.load %arg6[%c0_194, %c0_195] : memref<1x128xf32, #tpu.memory_space<vmem>>, vector<1x128xf32>
    %246 = vector.broadcast %245 : vector<1x128xf32> to vector<128x128xf32>
    %247 = arith.addf %244, %246 : vector<128x128xf32>
    %248 = math.tanh %247 : vector<128x128xf32>
    %cst_196 = arith.constant dense<0.000000e+00> : vector<128xf32>
    %249 = vector.multi_reduction <add>, %248, %cst_196 [0] : vector<128x128xf32> to vector<128xf32>
    %250 = vector.shape_cast %249 : vector<128xf32> to vector<1x128xf32>
    %251 = arith.addf %218, %250 : vector<1x128xf32>
    %252 = arith.mulf %248, %248 : vector<128x128xf32>
    %cst_197 = arith.constant dense<0.000000e+00> : vector<128xf32>
    %253 = vector.multi_reduction <add>, %252, %cst_197 [0] : vector<128x128xf32> to vector<128xf32>
    %254 = vector.shape_cast %253 : vector<128xf32> to vector<1x128xf32>
    %255 = arith.addf %222, %254 : vector<1x128xf32>
    %c0_198 = arith.constant 0 : index
    %c1_199 = arith.constant 1 : index
    %c1_200 = arith.constant 1 : index
    %c0_201 = arith.constant 0 : index
    %256 = vector.load %arg8[%c0_198, %c1_199, %c1_200, %c0_201] : memref<8x10x10x128xf32, #tpu.memory_space<vmem>>, vector<2x8x8x128xf32>
    %257 = vector.shape_cast %256 : vector<2x8x8x128xf32> to vector<128x128xf32>
    %c2_202 = arith.constant 2 : index
    %c1_203 = arith.constant 1 : index
    %c1_204 = arith.constant 1 : index
    %c0_205 = arith.constant 0 : index
    %258 = vector.load %arg8[%c2_202, %c1_203, %c1_204, %c0_205] : memref<8x10x10x128xf32, #tpu.memory_space<vmem>>, vector<2x8x8x128xf32>
    %259 = vector.shape_cast %258 : vector<2x8x8x128xf32> to vector<128x128xf32>
    %c0_206 = arith.constant 0 : index
    %c1_207 = arith.constant 1 : index
    %c2_208 = arith.constant 2 : index
    %c0_209 = arith.constant 0 : index
    %260 = vector.load %arg8[%c0_206, %c1_207, %c2_208, %c0_209] : memref<8x10x10x128xf32, #tpu.memory_space<vmem>>, vector<2x8x8x128xf32>
    %261 = vector.shape_cast %260 : vector<2x8x8x128xf32> to vector<128x128xf32>
    %c4_210 = arith.constant 4 : index
    %c1_211 = arith.constant 1 : index
    %c1_212 = arith.constant 1 : index
    %c0_213 = arith.constant 0 : index
    %262 = vector.load %arg8[%c4_210, %c1_211, %c1_212, %c0_213] : memref<8x10x10x128xf32, #tpu.memory_space<vmem>>, vector<2x8x8x128xf32>
    %263 = vector.shape_cast %262 : vector<2x8x8x128xf32> to vector<128x128xf32>
    %c6_214 = arith.constant 6 : index
    %c1_215 = arith.constant 1 : index
    %c1_216 = arith.constant 1 : index
    %c0_217 = arith.constant 0 : index
    %264 = vector.load %arg8[%c6_214, %c1_215, %c1_216, %c0_217] : memref<8x10x10x128xf32, #tpu.memory_space<vmem>>, vector<2x8x8x128xf32>
    %265 = vector.shape_cast %264 : vector<2x8x8x128xf32> to vector<128x128xf32>
    %c4_218 = arith.constant 4 : index
    %c1_219 = arith.constant 1 : index
    %c2_220 = arith.constant 2 : index
    %c0_221 = arith.constant 0 : index
    %266 = vector.load %arg8[%c4_218, %c1_219, %c2_220, %c0_221] : memref<8x10x10x128xf32, #tpu.memory_space<vmem>>, vector<2x8x8x128xf32>
    %267 = vector.shape_cast %266 : vector<2x8x8x128xf32> to vector<128x128xf32>
    %c0_222 = arith.constant 0 : index
    %c2_223 = arith.constant 2 : index
    %c1_224 = arith.constant 1 : index
    %c0_225 = arith.constant 0 : index
    %268 = vector.load %arg8[%c0_222, %c2_223, %c1_224, %c0_225] : memref<8x10x10x128xf32, #tpu.memory_space<vmem>>, vector<2x8x8x128xf32>
    %269 = vector.shape_cast %268 : vector<2x8x8x128xf32> to vector<128x128xf32>
    %c2_226 = arith.constant 2 : index
    %c2_227 = arith.constant 2 : index
    %c1_228 = arith.constant 1 : index
    %c0_229 = arith.constant 0 : index
    %270 = vector.load %arg8[%c2_226, %c2_227, %c1_228, %c0_229] : memref<8x10x10x128xf32, #tpu.memory_space<vmem>>, vector<2x8x8x128xf32>
    %271 = vector.shape_cast %270 : vector<2x8x8x128xf32> to vector<128x128xf32>
    %c0_230 = arith.constant 0 : index
    %c2_231 = arith.constant 2 : index
    %c2_232 = arith.constant 2 : index
    %c0_233 = arith.constant 0 : index
    %272 = vector.load %arg8[%c0_230, %c2_231, %c2_232, %c0_233] : memref<8x10x10x128xf32, #tpu.memory_space<vmem>>, vector<2x8x8x128xf32>
    %273 = vector.shape_cast %272 : vector<2x8x8x128xf32> to vector<128x128xf32>
    %274 = tpu.concatenate %257, %259, %261, %263, %265, %267, %269, %271, %273 in 1 : vector<128x128xf32>, vector<128x128xf32>, vector<128x128xf32>, vector<128x128xf32>, vector<128x128xf32>, vector<128x128xf32>, vector<128x128xf32>, vector<128x128xf32>, vector<128x128xf32> -> vector<128x1152xf32>
    %275 = arith.truncf %274 : vector<128x1152xf32> to vector<128x1152xbf16>
    %c0_234 = arith.constant 0 : index
    %c0_235 = arith.constant 0 : index
    %276 = vector.load %arg5[%c0_234, %c0_235] : memref<1152x128xbf16, #tpu.memory_space<vmem>>, vector<1152x128xbf16>
    %cst_236 = arith.constant dense<0.000000e+00> : vector<128x128xf32>
    %277 = tpu.matmul %275, %276, %cst_236 {dimension_numbers = #tpu.dot_dimension_numbers<[1], [0], [0], [1], [0, 0, 1, 1], [], []>} : vector<128x1152xbf16>, vector<1152x128xbf16>, vector<128x128xf32> -> vector<128x128xf32>
    %c0_237 = arith.constant 0 : index
    %c0_238 = arith.constant 0 : index
    %278 = vector.load %arg6[%c0_237, %c0_238] : memref<1x128xf32, #tpu.memory_space<vmem>>, vector<1x128xf32>
    %279 = vector.broadcast %278 : vector<1x128xf32> to vector<128x128xf32>
    %280 = arith.addf %277, %279 : vector<128x128xf32>
    %281 = math.tanh %280 : vector<128x128xf32>
    %cst_239 = arith.constant dense<0.000000e+00> : vector<128xf32>
    %282 = vector.multi_reduction <add>, %281, %cst_239 [0] : vector<128x128xf32> to vector<128xf32>
    %283 = vector.shape_cast %282 : vector<128xf32> to vector<1x128xf32>
    %284 = arith.addf %251, %283 : vector<1x128xf32>
    %285 = arith.mulf %281, %281 : vector<128x128xf32>
    %cst_240 = arith.constant dense<0.000000e+00> : vector<128xf32>
    %286 = vector.multi_reduction <add>, %285, %cst_240 [0] : vector<128x128xf32> to vector<128xf32>
    %287 = vector.shape_cast %286 : vector<128xf32> to vector<1x128xf32>
    %288 = arith.addf %255, %287 : vector<1x128xf32>
    %cst_241 = arith.constant 5.120000e+02 : f32
    %289 = vector.broadcast %cst_241 : f32 to vector<1x128xf32>
    %290 = arith.divf %284, %289 : vector<1x128xf32>
    %cst_242 = arith.constant 5.120000e+02 : f32
    %291 = vector.broadcast %cst_242 : f32 to vector<1x128xf32>
    %292 = arith.divf %288, %291 : vector<1x128xf32>
    %293 = arith.mulf %290, %290 : vector<1x128xf32>
    %294 = arith.subf %292, %293 : vector<1x128xf32>
    %cst_243 = arith.constant 9.99999974E-6 : f32
    %295 = vector.broadcast %cst_243 : f32 to vector<1x128xf32>
    %296 = arith.addf %294, %295 : vector<1x128xf32>
    %297 = math.rsqrt %296 : vector<1x128xf32>
    %298 = vector.broadcast %290 : vector<1x128xf32> to vector<128x128xf32>
    %299 = arith.subf %182, %298 : vector<128x128xf32>
    %300 = vector.broadcast %297 : vector<1x128xf32> to vector<128x128xf32>
    %301 = arith.mulf %299, %300 : vector<128x128xf32>
    %c0_244 = arith.constant 0 : index
    %c0_245 = arith.constant 0 : index
    %c0_246 = arith.constant 0 : index
    %302 = vector.load %arg7[%c0_244, %c0_245, %c0_246] : memref<4x128x128xf32, #tpu.memory_space<vmem>>, vector<1x128x128xf32>
    %303 = vector.shape_cast %302 : vector<1x128x128xf32> to vector<128x128xf32>
    %304 = vector.shape_cast %301 : vector<128x128xf32> to vector<1x128x128xf32>
    tpu.vector_store %arg7[%c0_244, %c0_245, %c0_246], %304 {strides = array<i32>} : memref<4x128x128xf32, #tpu.memory_space<vmem>>, vector<1x128x128xf32>,
    %305 = vector.broadcast %290 : vector<1x128xf32> to vector<128x128xf32>
    %306 = arith.subf %215, %305 : vector<128x128xf32>
    %307 = vector.broadcast %297 : vector<1x128xf32> to vector<128x128xf32>
    %308 = arith.mulf %306, %307 : vector<128x128xf32>
    %c1_247 = arith.constant 1 : index
    %c0_248 = arith.constant 0 : index
    %c0_249 = arith.constant 0 : index
    %309 = vector.load %arg7[%c1_247, %c0_248, %c0_249] : memref<4x128x128xf32, #tpu.memory_space<vmem>>, vector<1x128x128xf32>
    %310 = vector.shape_cast %309 : vector<1x128x128xf32> to vector<128x128xf32>
    %311 = vector.shape_cast %308 : vector<128x128xf32> to vector<1x128x128xf32>
    tpu.vector_store %arg7[%c1_247, %c0_248, %c0_249], %311 {strides = array<i32>} : memref<4x128x128xf32, #tpu.memory_space<vmem>>, vector<1x128x128xf32>,
    %312 = vector.broadcast %290 : vector<1x128xf32> to vector<128x128xf32>
    %313 = arith.subf %248, %312 : vector<128x128xf32>
    %314 = vector.broadcast %297 : vector<1x128xf32> to vector<128x128xf32>
    %315 = arith.mulf %313, %314 : vector<128x128xf32>
    %c2_250 = arith.constant 2 : index
    %c0_251 = arith.constant 0 : index
    %c0_252 = arith.constant 0 : index
    %316 = vector.load %arg7[%c2_250, %c0_251, %c0_252] : memref<4x128x128xf32, #tpu.memory_space<vmem>>, vector<1x128x128xf32>
    %317 = vector.shape_cast %316 : vector<1x128x128xf32> to vector<128x128xf32>
    %318 = vector.shape_cast %315 : vector<128x128xf32> to vector<1x128x128xf32>
    tpu.vector_store %arg7[%c2_250, %c0_251, %c0_252], %318 {strides = array<i32>} : memref<4x128x128xf32, #tpu.memory_space<vmem>>, vector<1x128x128xf32>,
    %319 = vector.broadcast %290 : vector<1x128xf32> to vector<128x128xf32>
    %320 = arith.subf %281, %319 : vector<128x128xf32>
    %321 = vector.broadcast %297 : vector<1x128xf32> to vector<128x128xf32>
    %322 = arith.mulf %320, %321 : vector<128x128xf32>
    %c3_253 = arith.constant 3 : index
    %c0_254 = arith.constant 0 : index
    %c0_255 = arith.constant 0 : index
    %323 = vector.load %arg7[%c3_253, %c0_254, %c0_255] : memref<4x128x128xf32, #tpu.memory_space<vmem>>, vector<1x128x128xf32>
    %324 = vector.shape_cast %323 : vector<1x128x128xf32> to vector<128x128xf32>
    %325 = vector.shape_cast %322 : vector<128x128xf32> to vector<1x128x128xf32>
    tpu.vector_store %arg7[%c3_253, %c0_254, %c0_255], %325 {strides = array<i32>} : memref<4x128x128xf32, #tpu.memory_space<vmem>>, vector<1x128x128xf32>,
    return
  }
}

</mosaic_0001>

<llo_original>
// kernel: generator_forward.3
$region0: #{generator_forward.3}
  #allocation0 [shape = 'u32[]', space=smem, size = 0x4, offset = 0x4, fixed_abs, tag = 'smem constant byte address 0x4 - core index']
  #allocation1 [shape = 'u32[144,128]{1,0:T(1,128)}', space=vmem, size = 0x12000, scoped, tag = 'internal scratch']
  %s0 = inlined_call_operand.vmem [shape: bf16[2,32], index: 0, kind: input, shape index: {}]
  %s1 = inlined_call_operand.vmem [shape: bf16[32,2048], index: 1, kind: input, shape index: {}]
  %s2 = inlined_call_operand.vmem [shape: f32[1,2048], index: 2, kind: input, shape index: {}]
  %s3 = inlined_call_operand.vmem [shape: f32[1,128], index: 3, kind: input, shape index: {}]
  %s4 = inlined_call_operand.vmem [shape: f32[1,128], index: 4, kind: input, shape index: {}]
  %s5 = inlined_call_operand.vmem [shape: f32[2,2048], index: 5, kind: output, shape index: {}]
  %s6 = sld [smem:[#allocation0]]
  $region30: #{generator_forward.3} parent=0
    _
  %s8 = ssub.s32 1, %s6
  %s9 = scalar_select 0, %s8, %s6
  // Predicated region
  $region2: #{generator_forward.3} parent=0 // pred_check
    _
  $region3: #{generator_forward.3} parent=0 // pred_check_branch
    %11 = sbr.rel (0) target = $region5
  $region4: #{generator_forward.3} parent=0 // pred_region
    _
  $region5: #{generator_forward.3} parent=0 // pred_fallthru
    _
  // Predicated region
  $region6: #{generator_forward.3} parent=0 // pred_check
    _
  $region7: #{generator_forward.3} parent=0 // pred_check_branch
    %13 = sbr.rel (0) target = $region9
  $region8: #{generator_forward.3} parent=0 // pred_region
    _
  $region9: #{generator_forward.3} parent=0 // pred_fallthru
    _
  // Predicated region
  $region10: #{generator_forward.3} parent=0 // pred_check
    _
  $region11: #{generator_forward.3} parent=0 // pred_check_branch
    %15 = sbr.rel (0) target = $region13
  $region12: #{generator_forward.3} parent=0 // pred_region
    _
  $region13: #{generator_forward.3} parent=0 // pred_fallthru
    _
  // Predicated region
  $region14: #{generator_forward.3} parent=0 // pred_check
    _
  $region15: #{generator_forward.3} parent=0 // pred_check_branch
    %17 = sbr.rel (0) target = $region17
  $region16: #{generator_forward.3} parent=0 // pred_region
    _
  $region17: #{generator_forward.3} parent=0 // pred_fallthru
    _
  // Predicated region
  $region18: #{generator_forward.3} parent=0 // pred_check
    _
  $region19: #{generator_forward.3} parent=0 // pred_check_branch
    %19 = sbr.rel (0) target = $region21
  $region20: #{generator_forward.3} parent=0 // pred_region
    _
  $region21: #{generator_forward.3} parent=0 // pred_fallthru
    _
  %v21 = vld [vmem:[%s0] sm:$0x1]
  %v22 = vld [vmem:[%s1] sm:$0xff]
  %v23 = vld [vmem:[%s1 + $0x8] sm:$0xff]
  %v24 = vld [vmem:[%s1 + $0x10] sm:$0xff]
  %v25 = vld [vmem:[%s1 + $0x18] sm:$0xff]
  %v26 = vld [vmem:[%s1 + $0x20] sm:$0xff]
  %v27 = vld [vmem:[%s1 + $0x28] sm:$0xff]
  %v28 = vld [vmem:[%s1 + $0x30] sm:$0xff]
  %v29 = vld [vmem:[%s1 + $0x38] sm:$0xff]
  %v30 = vld [vmem:[%s1 + $0x40] sm:$0xff]
  %v31 = vld [vmem:[%s1 + $0x48] sm:$0xff]
  %v32 = vld [vmem:[%s1 + $0x50] sm:$0xff]
  %v33 = vld [vmem:[%s1 + $0x58] sm:$0xff]
  %v34 = vld [vmem:[%s1 + $0x60] sm:$0xff]
  %v35 = vld [vmem:[%s1 + $0x68] sm:$0xff]
  %v36 = vld [vmem:[%s1 + $0x70] sm:$0xff]
  %v37 = vld [vmem:[%s1 + $0x78] sm:$0xff]
  %v38 = vld [vmem:[%s1 + $0x80] sm:$0xff]
  %v39 = vld [vmem:[%s1 + $0x88] sm:$0xff]
  %v40 = vld [vmem:[%s1 + $0x90] sm:$0xff]
  %v41 = vld [vmem:[%s1 + $0x98] sm:$0xff]
  %v42 = vld [vmem:[%s1 + $0xa0] sm:$0xff]
  %v43 = vld [vmem:[%s1 + $0xa8] sm:$0xff]
  %v44 = vld [vmem:[%s1 + $0xb0] sm:$0xff]
  %v45 = vld [vmem:[%s1 + $0xb8] sm:$0xff]
  %v46 = vld [vmem:[%s1 + $0xc0] sm:$0xff]
  %v47 = vld [vmem:[%s1 + $0xc8] sm:$0xff]
  %v48 = vld [vmem:[%s1 + $0xd0] sm:$0xff]
  %v49 = vld [vmem:[%s1 + $0xd8] sm:$0xff]
  %v50 = vld [vmem:[%s1 + $0xe0] sm:$0xff]
  %v51 = vld [vmem:[%s1 + $0xe8] sm:$0xff]
  %v52 = vld [vmem:[%s1 + $0xf0] sm:$0xff]
  %v53 = vld [vmem:[%s1 + $0xf8] sm:$0xff]
  %v54 = vld [vmem:[%s2] sm:$0xff]
  %v55 = vld [vmem:[%s2 + $0x8] sm:$0xff]
  %v58 = vlaneseq
  %v59 = vshrl.u32 %v58, 7
  %v60 = vsub.s32 0, %v59
  %v61 = vrot.slane %v54, %v60
  %v62 = vlaneseq
  %v63 = vshrl.u32 %v62, 7
  %v64 = vsub.s32 1, %v63
  %v65 = vrot.slane %v54, %v64
  %v66 = vlaneseq
  %v67 = vshrl.u32 %v66, 7
  %v68 = vsub.s32 2, %v67
  %v69 = vrot.slane %v54, %v68
  %v70 = vlaneseq
  %v71 = vshrl.u32 %v70, 7
  %v72 = vsub.s32 3, %v71
  %v73 = vrot.slane %v54, %v72
  %v74 = vlaneseq
  %v75 = vshrl.u32 %v74, 7
  %v76 = vsub.s32 4, %v75
  %v77 = vrot.slane %v54, %v76
  %v78 = vlaneseq
  %v79 = vshrl.u32 %v78, 7
  %v80 = vsub.s32 5, %v79
  %v81 = vrot.slane %v54, %v80
  %v82 = vlaneseq
  %v83 = vshrl.u32 %v82, 7
  %v84 = vsub.s32 6, %v83
  %v85 = vrot.slane %v54, %v84
  %v86 = vlaneseq
  %v87 = vshrl.u32 %v86, 7
  %v88 = vsub.s32 7, %v87
  %v89 = vrot.slane %v54, %v88
  %v90 = vlaneseq
  %v91 = vshrl.u32 %v90, 7
  %v92 = vsub.s32 0, %v91
  %v93 = vrot.slane %v55, %v92
  %v94 = vlaneseq
  %v95 = vshrl.u32 %v94, 7
  %v96 = vsub.s32 1, %v95
  %v97 = vrot.slane %v55, %v96
  %v98 = vlaneseq
  %v99 = vshrl.u32 %v98, 7
  %v100 = vsub.s32 2, %v99
  %v101 = vrot.slane %v55, %v100
  %v102 = vlaneseq
  %v103 = vshrl.u32 %v102, 7
  %v104 = vsub.s32 3, %v103
  %v105 = vrot.slane %v55, %v104
  %v106 = vlaneseq
  %v107 = vshrl.u32 %v106, 7
  %v108 = vsub.s32 4, %v107
  %v109 = vrot.slane %v55, %v108
  %v110 = vlaneseq
  %v111 = vshrl.u32 %v110, 7
  %v112 = vsub.s32 5, %v111
  %v113 = vrot.slane %v55, %v112
  %v114 = vlaneseq
  %v115 = vshrl.u32 %v114, 7
  %v116 = vsub.s32 6, %v115
  %v117 = vrot.slane %v55, %v116
  %v118 = vlaneseq
  %v119 = vshrl.u32 %v118, 7
  %v120 = vsub.s32 7, %v119
  %v121 = vrot.slane %v55, %v120
  %v170 = vunpack.c.l.b16 %v22
  %v171 = vunpack.c.h.b16 %v22
  %v172 = vunpack.c.l.b16 %v23
  %v173 = vunpack.c.h.b16 %v23
  %v174 = vunpack.c.l.b16 %v24
  %v175 = vunpack.c.h.b16 %v24
  %v176 = vunpack.c.l.b16 %v25
  %v177 = vunpack.c.h.b16 %v25
  %v178 = vunpack.c.l.b16 %v26
  %v179 = vunpack.c.h.b16 %v26
  %v180 = vunpack.c.l.b16 %v27
  %v181 = vunpack.c.h.b16 %v27
  %v182 = vunpack.c.l.b16 %v28
  %v183 = vunpack.c.h.b16 %v28
  %v184 = vunpack.c.l.b16 %v29
  %v185 = vunpack.c.h.b16 %v29
  %v186 = vunpack.c.l.b16 %v30
  %v187 = vunpack.c.h.b16 %v30
  %v188 = vunpack.c.l.b16 %v31
  %v189 = vunpack.c.h.b16 %v31
  %v190 = vunpack.c.l.b16 %v32
  %v191 = vunpack.c.h.b16 %v32
  %v192 = vunpack.c.l.b16 %v33
  %v193 = vunpack.c.h.b16 %v33
  %v194 = vunpack.c.l.b16 %v34
  %v195 = vunpack.c.h.b16 %v34
  %v196 = vunpack.c.l.b16 %v35
  %v197 = vunpack.c.h.b16 %v35
  %v198 = vunpack.c.l.b16 %v36
  %v199 = vunpack.c.h.b16 %v36
  %v200 = vunpack.c.l.b16 %v37
  %v201 = vunpack.c.h.b16 %v37
  %v202 = vunpack.c.l.b16 %v38
  %v203 = vunpack.c.h.b16 %v38
  %v204 = vunpack.c.l.b16 %v39
  %v205 = vunpack.c.h.b16 %v39
  %v206 = vunpack.c.l.b16 %v40
  %v207 = vunpack.c.h.b16 %v40
  %v208 = vunpack.c.l.b16 %v41
  %v209 = vunpack.c.h.b16 %v41
  %v210 = vunpack.c.l.b16 %v42
  %v211 = vunpack.c.h.b16 %v42
  %v212 = vunpack.c.l.b16 %v43
  %v213 = vunpack.c.h.b16 %v43
  %v214 = vunpack.c.l.b16 %v44
  %v215 = vunpack.c.h.b16 %v44
  %v216 = vunpack.c.l.b16 %v45
  %v217 = vunpack.c.h.b16 %v45
  %v218 = vunpack.c.l.b16 %v46
  %v219 = vunpack.c.h.b16 %v46
  %v220 = vunpack.c.l.b16 %v47
  %v221 = vunpack.c.h.b16 %v47
  %v222 = vunpack.c.l.b16 %v48
  %v223 = vunpack.c.h.b16 %v48
  %v224 = vunpack.c.l.b16 %v49
  %v225 = vunpack.c.h.b16 %v49
  %v226 = vunpack.c.l.b16 %v50
  %v227 = vunpack.c.h.b16 %v50
  %v228 = vunpack.c.l.b16 %v51
  %v229 = vunpack.c.h.b16 %v51
  %v230 = vunpack.c.l.b16 %v52
  %v231 = vunpack.c.h.b16 %v52
  %v232 = vunpack.c.l.b16 %v53
  %v233 = vunpack.c.h.b16 %v53
  %v234 = vpack.c.b16 %v186, %v170
  %v235 = vpack.c.b16 %v187, %v171
  %v236 = vpack.c.b16 %v188, %v172
  %v237 = vpack.c.b16 %v189, %v173
  %v238 = vpack.c.b16 %v190, %v174
  %v239 = vpack.c.b16 %v191, %v175
  %v240 = vpack.c.b16 %v192, %v176
  %v241 = vpack.c.b16 %v193, %v177
  %v242 = vpack.c.b16 %v194, %v178
  %v243 = vpack.c.b16 %v195, %v179
  %v244 = vpack.c.b16 %v196, %v180
  %v245 = vpack.c.b16 %v197, %v181
  %v246 = vpack.c.b16 %v198, %v182
  %v247 = vpack.c.b16 %v199, %v183
  %v248 = vpack.c.b16 %v200, %v184
  %v249 = vpack.c.b16 %v201, %v185
  %v250 = vpack.c.b16 %v218, %v202
  %v251 = vpack.c.b16 %v219, %v203
  %v252 = vpack.c.b16 %v220, %v204
  %v253 = vpack.c.b16 %v221, %v205
  %v254 = vpack.c.b16 %v222, %v206
  %v255 = vpack.c.b16 %v223, %v207
  %v256 = vpack.c.b16 %v224, %v208
  %v257 = vpack.c.b16 %v225, %v209
  %v258 = vpack.c.b16 %v226, %v210
  %v259 = vpack.c.b16 %v227, %v211
  %v260 = vpack.c.b16 %v228, %v212
  %v261 = vpack.c.b16 %v229, %v213
  %v262 = vpack.c.b16 %v230, %v214
  %v263 = vpack.c.b16 %v231, %v215
  %v264 = vpack.c.b16 %v232, %v216
  %v265 = vpack.c.b16 %v233, %v217
  %vm298 = vcmask 261120
  %v300 = vsel %vm298, %v21, 0
  %302 = vmatprep.subr.bf16.mxu0 %v235
  %303 = vmatpush1.bf16.msra.mxu0 %v234
  %304 = vmatprep.subr.bf16.mxu0 %v251
  %305 = vmatpush1.bf16.msra.mxu0 %v250
  %306 = vmatprep.subr.bf16.mxu0 0
  %307 = vmatpush1.bf16.msra.mxu0 0
  %308 = vmatprep.subr.bf16.mxu0 0
  %309 = vmatpush1.bf16.msra.mxu0 0
  %310 = vmatprep.subr.bf16.mxu0 0
  %311 = vmatpush1.bf16.msra.mxu0 0
  %312 = vmatprep.subr.bf16.mxu0 0
  %313 = vmatpush1.bf16.msra.mxu0 0
  %314 = vmatprep.subr.bf16.mxu0 0
  %315 = vmatpush1.bf16.msra.mxu0 0
  %316 = vmatprep.subr.bf16.mxu0 0
  %317 = vmatpush1.bf16.msra.mxu0 0
  %318 = vmatprep.subr.bf16.mxu0 0
  %319 = vmatpush1.bf16.msra.mxu0 0
  %320 = vmatprep.subr.bf16.mxu0 0
  %321 = vmatpush1.bf16.msra.mxu0 0
  %322 = vmatprep.subr.bf16.mxu0 0
  %323 = vmatpush1.bf16.msra.mxu0 0
  %324 = vmatprep.subr.bf16.mxu0 0
  %325 = vmatpush1.bf16.msra.mxu0 0
  %326 = vmatprep.subr.bf16.mxu0 0
  %327 = vmatpush1.bf16.msra.mxu0 0
  %328 = vmatprep.subr.bf16.mxu0 0
  %329 = vmatpush1.bf16.msra.mxu0 0
  %330 = vmatprep.subr.bf16.mxu0 0
  %331 = vmatpush1.bf16.msra.mxu0 0
  %332 = vmatprep.subr.bf16.mxu0 0
  %333 = vmatpush1.bf16.msra.mxu0 0
  %334 = vmatprep.mubr.bf16.mxu0 0
  %335 = vmatmul.mubr.bf16.gmra.mrb[0].mxu0 %v300
  %v336 = vpop.f32.mrb[0].mxu0
  %v337 = vadd.f32 %v61, %v336
  %v338 = vpop.f32.mrb[0].mxu0
  %v339 = vadd.f32 %v65, %v338
  %v340 = vpop.f32.mrb[0].mxu0
  %v341 = vpop.f32.mrb[0].mxu0
  %342 = vdwg.mxu0
  %343 = vmatprep.subr.bf16.mxu0 %v237
  %344 = vmatpush1.bf16.msra.mxu0 %v236
  %345 = vmatprep.subr.bf16.mxu0 %v253
  %346 = vmatpush1.bf16.msra.mxu0 %v252
  %347 = vmatprep.subr.bf16.mxu0 0
  %348 = vmatpush1.bf16.msra.mxu0 0
  %349 = vmatprep.subr.bf16.mxu0 0
  %350 = vmatpush1.bf16.msra.mxu0 0
  %351 = vmatprep.subr.bf16.mxu0 0
  %352 = vmatpush1.bf16.msra.mxu0 0
  %353 = vmatprep.subr.bf16.mxu0 0
  %354 = vmatpush1.bf16.msra.mxu0 0
  %355 = vmatprep.subr.bf16.mxu0 0
  %356 = vmatpush1.bf16.msra.mxu0 0
  %357 = vmatprep.subr.bf16.mxu0 0
  %358 = vmatpush1.bf16.msra.mxu0 0
  %359 = vmatprep.subr.bf16.mxu0 0
  %360 = vmatpush1.bf16.msra.mxu0 0
  %361 = vmatprep.subr.bf16.mxu0 0
  %362 = vmatpush1.bf16.msra.mxu0 0
  %363 = vmatprep.subr.bf16.mxu0 0
  %364 = vmatpush1.bf16.msra.mxu0 0
  %365 = vmatprep.subr.bf16.mxu0 0
  %366 = vmatpush1.bf16.msra.mxu0 0
  %367 = vmatprep.subr.bf16.mxu0 0
  %368 = vmatpush1.bf16.msra.mxu0 0
  %369 = vmatprep.subr.bf16.mxu0 0
  %370 = vmatpush1.bf16.msra.mxu0 0
  %371 = vmatprep.subr.bf16.mxu0 0
  %372 = vmatpush1.bf16.msra.mxu0 0
  %373 = vmatprep.subr.bf16.mxu0 0
  %374 = vmatpush1.bf16.msra.mxu0 0
  %375 = vmatprep.mubr.bf16.mxu0 0
  %376 = vmatmul.mubr.bf16.gmra.mrb[0].mxu0 %v300
  %v377 = vpop.f32.mrb[0].mxu0
  %v378 = vadd.f32 %v69, %v377
  %v379 = vpop.f32.mrb[0].mxu0
  %v380 = vadd.f32 %v73, %v379
  %v381 = vpop.f32.mrb[0].mxu0
  %v382 = vpop.f32.mrb[0].mxu0
  %383 = vdwg.mxu0
  %384 = vmatprep.subr.bf16.mxu0 %v239
  %385 = vmatpush1.bf16.msra.mxu0 %v238
  %386 = vmatprep.subr.bf16.mxu0 %v255
  %387 = vmatpush1.bf16.msra.mxu0 %v254
  %388 = vmatprep.subr.bf16.mxu0 0
  %389 = vmatpush1.bf16.msra.mxu0 0
  %390 = vmatprep.subr.bf16.mxu0 0
  %391 = vmatpush1.bf16.msra.mxu0 0
  %392 = vmatprep.subr.bf16.mxu0 0
  %393 = vmatpush1.bf16.msra.mxu0 0
  %394 = vmatprep.subr.bf16.mxu0 0
  %395 = vmatpush1.bf16.msra.mxu0 0
  %396 = vmatprep.subr.bf16.mxu0 0
  %397 = vmatpush1.bf16.msra.mxu0 0
  %398 = vmatprep.subr.bf16.mxu0 0
  %399 = vmatpush1.bf16.msra.mxu0 0
  %400 = vmatprep.subr.bf16.mxu0 0
  %401 = vmatpush1.bf16.msra.mxu0 0
  %402 = vmatprep.subr.bf16.mxu0 0
  %403 = vmatpush1.bf16.msra.mxu0 0
  %404 = vmatprep.subr.bf16.mxu0 0
  %405 = vmatpush1.bf16.msra.mxu0 0
  %406 = vmatprep.subr.bf16.mxu0 0
  %407 = vmatpush1.bf16.msra.mxu0 0
  %408 = vmatprep.subr.bf16.mxu0 0
  %409 = vmatpush1.bf16.msra.mxu0 0
  %410 = vmatprep.subr.bf16.mxu0 0
  %411 = vmatpush1.bf16.msra.mxu0 0
  %412 = vmatprep.subr.bf16.mxu0 0
  %413 = vmatpush1.bf16.msra.mxu0 0
  %414 = vmatprep.subr.bf16.mxu0 0
  %415 = vmatpush1.bf16.msra.mxu0 0
  %416 = vmatprep.mubr.bf16.mxu0 0
  %417 = vmatmul.mubr.bf16.gmra.mrb[0].mxu0 %v300
  %v418 = vpop.f32.mrb[0].mxu0
  %v419 = vadd.f32 %v77, %v418
  %v420 = vpop.f32.mrb[0].mxu0
  %v421 = vadd.f32 %v81, %v420
  %v422 = vpop.f32.mrb[0].mxu0
  %v423 = vpop.f32.mrb[0].mxu0
  %424 = vdwg.mxu0
  %425 = vmatprep.subr.bf16.mxu0 %v241
  %426 = vmatpush1.bf16.msra.mxu0 %v240
  %427 = vmatprep.subr.bf16.mxu0 %v257
  %428 = vmatpush1.bf16.msra.mxu0 %v256
  %429 = vmatprep.subr.bf16.mxu0 0
  %430 = vmatpush1.bf16.msra.mxu0 0
  %431 = vmatprep.subr.bf16.mxu0 0
  %432 = vmatpush1.bf16.msra.mxu0 0
  %433 = vmatprep.subr.bf16.mxu0 0
  %434 = vmatpush1.bf16.msra.mxu0 0
  %435 = vmatprep.subr.bf16.mxu0 0
  %436 = vmatpush1.bf16.msra.mxu0 0
  %437 = vmatprep.subr.bf16.mxu0 0
  %438 = vmatpush1.bf16.msra.mxu0 0
  %439 = vmatprep.subr.bf16.mxu0 0
  %440 = vmatpush1.bf16.msra.mxu0 0
  %441 = vmatprep.subr.bf16.mxu0 0
  %442 = vmatpush1.bf16.msra.mxu0 0
  %443 = vmatprep.subr.bf16.mxu0 0
  %444 = vmatpush1.bf16.msra.mxu0 0
  %445 = vmatprep.subr.bf16.mxu0 0
  %446 = vmatpush1.bf16.msra.mxu0 0
  %447 = vmatprep.subr.bf16.mxu0 0
  %448 = vmatpush1.bf16.msra.mxu0 0
  %449 = vmatprep.subr.bf16.mxu0 0
  %450 = vmatpush1.bf16.msra.mxu0 0
  %451 = vmatprep.subr.bf16.mxu0 0
  %452 = vmatpush1.bf16.msra.mxu0 0
  %453 = vmatprep.subr.bf16.mxu0 0
  %454 = vmatpush1.bf16.msra.mxu0 0
  %455 = vmatprep.subr.bf16.mxu0 0
  %456 = vmatpush1.bf16.msra.mxu0 0
  %457 = vmatprep.mubr.bf16.mxu0 0
  %458 = vmatmul.mubr.bf16.gmra.mrb[0].mxu0 %v300
  %v459 = vpop.f32.mrb[0].mxu0
  %v460 = vadd.f32 %v85, %v459
  %v461 = vpop.f32.mrb[0].mxu0
  %v462 = vadd.f32 %v89, %v461
  %v463 = vpop.f32.mrb[0].mxu0
  %v464 = vpop.f32.mrb[0].mxu0
  %465 = vdwg.mxu0
  %466 = vmatprep.subr.bf16.mxu0 %v243
  %467 = vmatpush1.bf16.msra.mxu0 %v242
  %468 = vmatprep.subr.bf16.mxu0 %v259
  %469 = vmatpush1.bf16.msra.mxu0 %v258
  %470 = vmatprep.subr.bf16.mxu0 0
  %471 = vmatpush1.bf16.msra.mxu0 0
  %472 = vmatprep.subr.bf16.mxu0 0
  %473 = vmatpush1.bf16.msra.mxu0 0
  %474 = vmatprep.subr.bf16.mxu0 0
  %475 = vmatpush1.bf16.msra.mxu0 0
  %476 = vmatprep.subr.bf16.mxu0 0
  %477 = vmatpush1.bf16.msra.mxu0 0
  %478 = vmatprep.subr.bf16.mxu0 0
  %479 = vmatpush1.bf16.msra.mxu0 0
  %480 = vmatprep.subr.bf16.mxu0 0
  %481 = vmatpush1.bf16.msra.mxu0 0
  %482 = vmatprep.subr.bf16.mxu0 0
  %483 = vmatpush1.bf16.msra.mxu0 0
  %484 = vmatprep.subr.bf16.mxu0 0
  %485 = vmatpush1.bf16.msra.mxu0 0
  %486 = vmatprep.subr.bf16.mxu0 0
  %487 = vmatpush1.bf16.msra.mxu0 0
  %488 = vmatprep.subr.bf16.mxu0 0
  %489 = vmatpush1.bf16.msra.mxu0 0
  %490 = vmatprep.subr.bf16.mxu0 0
  %491 = vmatpush1.bf16.msra.mxu0 0
  %492 = vmatprep.subr.bf16.mxu0 0
  %493 = vmatpush1.bf16.msra.mxu0 0
  %494 = vmatprep.subr.bf16.mxu0 0
  %495 = vmatpush1.bf16.msra.mxu0 0
  %496 = vmatprep.subr.bf16.mxu0 0
  %497 = vmatpush1.bf16.msra.mxu0 0
  %498 = vmatprep.mubr.bf16.mxu0 0
  %499 = vmatmul.mubr.bf16.gmra.mrb[0].mxu0 %v300
  %v500 = vpop.f32.mrb[0].mxu0
  %v501 = vadd.f32 %v93, %v500
  %v502 = vpop.f32.mrb[0].mxu0
  %v503 = vadd.f32 %v97, %v502
  %v504 = vpop.f32.mrb[0].mxu0
  %v505 = vpop.f32.mrb[0].mxu0
  %506 = vdwg.mxu0
  %507 = vmatprep.subr.bf16.mxu0 %v245
  %508 = vmatpush1.bf16.msra.mxu0 %v244
  %509 = vmatprep.subr.bf16.mxu0 %v261
  %510 = vmatpush1.bf16.msra.mxu0 %v260
  %511 = vmatprep.subr.bf16.mxu0 0
  %512 = vmatpush1.bf16.msra.mxu0 0
  %513 = vmatprep.subr.bf16.mxu0 0
  %514 = vmatpush1.bf16.msra.mxu0 0
  %515 = vmatprep.subr.bf16.mxu0 0
  %516 = vmatpush1.bf16.msra.mxu0 0
  %517 = vmatprep.subr.bf16.mxu0 0
  %518 = vmatpush1.bf16.msra.mxu0 0
  %519 = vmatprep.subr.bf16.mxu0 0
  %520 = vmatpush1.bf16.msra.mxu0 0
  %521 = vmatprep.subr.bf16.mxu0 0
  %522 = vmatpush1.bf16.msra.mxu0 0
  %523 = vmatprep.subr.bf16.mxu0 0
  %524 = vmatpush1.bf16.msra.mxu0 0
  %525 = vmatprep.subr.bf16.mxu0 0
  %526 = vmatpush1.bf16.msra.mxu0 0
  %527 = vmatprep.subr.bf16.mxu0 0
  %528 = vmatpush1.bf16.msra.mxu0 0
  %529 = vmatprep.subr.bf16.mxu0 0
  %530 = vmatpush1.bf16.msra.mxu0 0
  %531 = vmatprep.subr.bf16.mxu0 0
  %532 = vmatpush1.bf16.msra.mxu0 0
  %533 = vmatprep.subr.bf16.mxu0 0
  %534 = vmatpush1.bf16.msra.mxu0 0
  %535 = vmatprep.subr.bf16.mxu0 0
  %536 = vmatpush1.bf16.msra.mxu0 0
  %537 = vmatprep.subr.bf16.mxu0 0
  %538 = vmatpush1.bf16.msra.mxu0 0
  %539 = vmatprep.mubr.bf16.mxu0 0
  %540 = vmatmul.mubr.bf16.gmra.mrb[0].mxu0 %v300
  %v541 = vpop.f32.mrb[0].mxu0
  %v542 = vadd.f32 %v101, %v541
  %v543 = vpop.f32.mrb[0].mxu0
  %v544 = vadd.f32 %v105, %v543
  %v545 = vpop.f32.mrb[0].mxu0
  %v546 = vpop.f32.mrb[0].mxu0
  %547 = vdwg.mxu0
  %548 = vmatprep.subr.bf16.mxu0 %v247
  %549 = vmatpush1.bf16.msra.mxu0 %v246
  %550 = vmatprep.subr.bf16.mxu0 %v263
  %551 = vmatpush1.bf16.msra.mxu0 %v262
  %552 = vmatprep.subr.bf16.mxu0 0
  %553 = vmatpush1.bf16.msra.mxu0 0
  %554 = vmatprep.subr.bf16.mxu0 0
  %555 = vmatpush1.bf16.msra.mxu0 0
  %556 = vmatprep.subr.bf16.mxu0 0
  %557 = vmatpush1.bf16.msra.mxu0 0
  %558 = vmatprep.subr.bf16.mxu0 0
  %559 = vmatpush1.bf16.msra.mxu0 0
  %560 = vmatprep.subr.bf16.mxu0 0
  %561 = vmatpush1.bf16.msra.mxu0 0
  %562 = vmatprep.subr.bf16.mxu0 0
  %563 = vmatpush1.bf16.msra.mxu0 0
  %564 = vmatprep.subr.bf16.mxu0 0
  %565 = vmatpush1.bf16.msra.mxu0 0
  %566 = vmatprep.subr.bf16.mxu0 0
  %567 = vmatpush1.bf16.msra.mxu0 0
  %568 = vmatprep.subr.bf16.mxu0 0
  %569 = vmatpush1.bf16.msra.mxu0 0
  %570 = vmatprep.subr.bf16.mxu0 0
  %571 = vmatpush1.bf16.msra.mxu0 0
  %572 = vmatprep.subr.bf16.mxu0 0
  %573 = vmatpush1.bf16.msra.mxu0 0
  %574 = vmatprep.subr.bf16.mxu0 0
  %575 = vmatpush1.bf16.msra.mxu0 0
  %576 = vmatprep.subr.bf16.mxu0 0
  %577 = vmatpush1.bf16.msra.mxu0 0
  %578 = vmatprep.subr.bf16.mxu0 0
  %579 = vmatpush1.bf16.msra.mxu0 0
  %580 = vmatprep.mubr.bf16.mxu0 0
  %581 = vmatmul.mubr.bf16.gmra.mrb[0].mxu0 %v300
  %v582 = vpop.f32.mrb[0].mxu0
  %v583 = vadd.f32 %v109, %v582
  %v584 = vpop.f32.mrb[0].mxu0
  %v585 = vadd.f32 %v113, %v584
  %v586 = vpop.f32.mrb[0].mxu0
  %v587 = vpop.f32.mrb[0].mxu0
  %588 = vdwg.mxu0
  %589 = vmatprep.subr.bf16.mxu0 %v249
  %590 = vmatpush1.bf16.msra.mxu0 %v248
  %591 = vmatprep.subr.bf16.mxu0 %v265
  %592 = vmatpush1.bf16.msra.mxu0 %v264
  %593 = vmatprep.subr.bf16.mxu0 0
  %594 = vmatpush1.bf16.msra.mxu0 0
  %595 = vmatprep.subr.bf16.mxu0 0
  %596 = vmatpush1.bf16.msra.mxu0 0
  %597 = vmatprep.subr.bf16.mxu0 0
  %598 = vmatpush1.bf16.msra.mxu0 0
  %599 = vmatprep.subr.bf16.mxu0 0
  %600 = vmatpush1.bf16.msra.mxu0 0
  %601 = vmatprep.subr.bf16.mxu0 0
  %602 = vmatpush1.bf16.msra.mxu0 0
  %603 = vmatprep.subr.bf16.mxu0 0
  %604 = vmatpush1.bf16.msra.mxu0 0
  %605 = vmatprep.subr.bf16.mxu0 0
  %606 = vmatpush1.bf16.msra.mxu0 0
  %607 = vmatprep.subr.bf16.mxu0 0
  %608 = vmatpush1.bf16.msra.mxu0 0
  %609 = vmatprep.subr.bf16.mxu0 0
  %610 = vmatpush1.bf16.msra.mxu0 0
  %611 = vmatprep.subr.bf16.mxu0 0
  %612 = vmatpush1.bf16.msra.mxu0 0
  %613 = vmatprep.subr.bf16.mxu0 0
  %614 = vmatpush1.bf16.msra.mxu0 0
  %615 = vmatprep.subr.bf16.mxu0 0
  %616 = vmatpush1.bf16.msra.mxu0 0
  %617 = vmatprep.subr.bf16.mxu0 0
  %618 = vmatpush1.bf16.msra.mxu0 0
  %619 = vmatprep.subr.bf16.mxu0 0
  %620 = vmatpush1.bf16.msra.mxu0 0
  %621 = vmatprep.mubr.bf16.mxu0 0
  %622 = vmatmul.mubr.bf16.gmra.mrb[0].mxu0 %v300
  %v623 = vpop.f32.mrb[0].mxu0
  %v624 = vadd.f32 %v117, %v623
  %v625 = vpop.f32.mrb[0].mxu0
  %v626 = vadd.f32 %v121, %v625
  %v627 = vpop.f32.mrb[0].mxu0
  %v628 = vpop.f32.mrb[0].mxu0
  %629 = vdwg.mxu0
  %vm630 = vcmask 1041408
  %v631 = vsel %vm630, %v337, 0.0
  %v632 = vrot.slane %v631, 4
  %v633 = vadd.f32 %v631, %v632
  %v634 = vrot.slane %v633, 2
  %v635 = vadd.f32 %v633, %v634
  %v636 = vrot.slane %v635, 1
  %v637 = vadd.f32 %v635, %v636
  %v638 = vadd.f32 %v637, 0.0
  %v639 = vmul.f32 %v337, %v337
  %v640 = vsel %vm630, %v639, 0.0
  %v641 = vrot.slane %v640, 4
  %v642 = vadd.f32 %v640, %v641
  %v643 = vrot.slane %v642, 2
  %v644 = vadd.f32 %v642, %v643
  %v645 = vrot.slane %v644, 1
  %v646 = vadd.f32 %v644, %v645
  %v647 = vadd.f32 %v646, 0.0
  %v648 = vsel %vm630, %v339, 0.0
  %v649 = vrot.slane %v648, 4
  %v650 = vadd.f32 %v648, %v649
  %v651 = vrot.slane %v650, 2
  %v652 = vadd.f32 %v650, %v651
  %v653 = vrot.slane %v652, 1
  %v654 = vadd.f32 %v652, %v653
  %v655 = vadd.f32 %v638, %v654
  %v656 = vmul.f32 %v339, %v339
  %v657 = vsel %vm630, %v656, 0.0
  %v658 = vrot.slane %v657, 4
  %v659 = vadd.f32 %v657, %v658
  %v660 = vrot.slane %v659, 2
  %v661 = vadd.f32 %v659, %v660
  %v662 = vrot.slane %v661, 1
  %v663 = vadd.f32 %v661, %v662
  %v664 = vadd.f32 %v647, %v663
  %v665 = vsel %vm630, %v378, 0.0
  %v666 = vrot.slane %v665, 4
  %v667 = vadd.f32 %v665, %v666
  %v668 = vrot.slane %v667, 2
  %v669 = vadd.f32 %v667, %v668
  %v670 = vrot.slane %v669, 1
  %v671 = vadd.f32 %v669, %v670
  %v672 = vadd.f32 %v655, %v671
  %v673 = vmul.f32 %v378, %v378
  %v674 = vsel %vm630, %v673, 0.0
  %v675 = vrot.slane %v674, 4
  %v676 = vadd.f32 %v674, %v675
  %v677 = vrot.slane %v676, 2
  %v678 = vadd.f32 %v676, %v677
  %v679 = vrot.slane %v678, 1
  %v680 = vadd.f32 %v678, %v679
  %v681 = vadd.f32 %v664, %v680
  %v682 = vsel %vm630, %v380, 0.0
  %v683 = vrot.slane %v682, 4
  %v684 = vadd.f32 %v682, %v683
  %v685 = vrot.slane %v684, 2
  %v686 = vadd.f32 %v684, %v685
  %v687 = vrot.slane %v686, 1
  %v688 = vadd.f32 %v686, %v687
  %v689 = vadd.f32 %v672, %v688
  %v690 = vmul.f32 %v380, %v380
  %v691 = vsel %vm630, %v690, 0.0
  %v692 = vrot.slane %v691, 4
  %v693 = vadd.f32 %v691, %v692
  %v694 = vrot.slane %v693, 2
  %v695 = vadd.f32 %v693, %v694
  %v696 = vrot.slane %v695, 1
  %v697 = vadd.f32 %v695, %v696
  %v698 = vadd.f32 %v681, %v697
  %v699 = vsel %vm630, %v419, 0.0
  %v700 = vrot.slane %v699, 4
  %v701 = vadd.f32 %v699, %v700
  %v702 = vrot.slane %v701, 2
  %v703 = vadd.f32 %v701, %v702
  %v704 = vrot.slane %v703, 1
  %v705 = vadd.f32 %v703, %v704
  %v706 = vadd.f32 %v689, %v705
  %v707 = vmul.f32 %v419, %v419
  %v708 = vsel %vm630, %v707, 0.0
  %v709 = vrot.slane %v708, 4
  %v710 = vadd.f32 %v708, %v709
  %v711 = vrot.slane %v710, 2
  %v712 = vadd.f32 %v710, %v711
  %v713 = vrot.slane %v712, 1
  %v714 = vadd.f32 %v712, %v713
  %v715 = vadd.f32 %v698, %v714
  %v716 = vsel %vm630, %v421, 0.0
  %v717 = vrot.slane %v716, 4
  %v718 = vadd.f32 %v716, %v717
  %v719 = vrot.slane %v718, 2
  %v720 = vadd.f32 %v718, %v719
  %v721 = vrot.slane %v720, 1
  %v722 = vadd.f32 %v720, %v721
  %v723 = vadd.f32 %v706, %v722
  %v724 = vmul.f32 %v421, %v421
  %v725 = vsel %vm630, %v724, 0.0
  %v726 = vrot.slane %v725, 4
  %v727 = vadd.f32 %v725, %v726
  %v728 = vrot.slane %v727, 2
  %v729 = vadd.f32 %v727, %v728
  %v730 = vrot.slane %v729, 1
  %v731 = vadd.f32 %v729, %v730
  %v732 = vadd.f32 %v715, %v731
  %v733 = vsel %vm630, %v460, 0.0
  %v734 = vrot.slane %v733, 4
  %v735 = vadd.f32 %v733, %v734
  %v736 = vrot.slane %v735, 2
  %v737 = vadd.f32 %v735, %v736
  %v738 = vrot.slane %v737, 1
  %v739 = vadd.f32 %v737, %v738
  %v740 = vadd.f32 %v723, %v739
  %v741 = vmul.f32 %v460, %v460
  %v742 = vsel %vm630, %v741, 0.0
  %v743 = vrot.slane %v742, 4
  %v744 = vadd.f32 %v742, %v743
  %v745 = vrot.slane %v744, 2
  %v746 = vadd.f32 %v744, %v745
  %v747 = vrot.slane %v746, 1
  %v748 = vadd.f32 %v746, %v747
  %v749 = vadd.f32 %v732, %v748
  %v750 = vsel %vm630, %v462, 0.0
  %v751 = vrot.slane %v750, 4
  %v752 = vadd.f32 %v750, %v751
  %v753 = vrot.slane %v752, 2
  %v754 = vadd.f32 %v752, %v753
  %v755 = vrot.slane %v754, 1
  %v756 = vadd.f32 %v754, %v755
  %v757 = vadd.f32 %v740, %v756
  %v758 = vmul.f32 %v462, %v462
  %v759 = vsel %vm630, %v758, 0.0
  %v760 = vrot.slane %v759, 4
  %v761 = vadd.f32 %v759, %v760
  %v762 = vrot.slane %v761, 2
  %v763 = vadd.f32 %v761, %v762
  %v764 = vrot.slane %v763, 1
  %v765 = vadd.f32 %v763, %v764
  %v766 = vadd.f32 %v749, %v765
  %v767 = vsel %vm630, %v501, 0.0
  %v768 = vrot.slane %v767, 4
  %v769 = vadd.f32 %v767, %v768
  %v770 = vrot.slane %v769, 2
  %v771 = vadd.f32 %v769, %v770
  %v772 = vrot.slane %v771, 1
  %v773 = vadd.f32 %v771, %v772
  %v774 = vadd.f32 %v757, %v773
  %v775 = vmul.f32 %v501, %v501
  %v776 = vsel %vm630, %v775, 0.0
  %v777 = vrot.slane %v776, 4
  %v778 = vadd.f32 %v776, %v777
  %v779 = vrot.slane %v778, 2
  %v780 = vadd.f32 %v778, %v779
  %v781 = vrot.slane %v780, 1
  %v782 = vadd.f32 %v780, %v781
  %v783 = vadd.f32 %v766, %v782
  %v784 = vsel %vm630, %v503, 0.0
  %v785 = vrot.slane %v784, 4
  %v786 = vadd.f32 %v784, %v785
  %v787 = vrot.slane %v786, 2
  %v788 = vadd.f32 %v786, %v787
  %v789 = vrot.slane %v788, 1
  %v790 = vadd.f32 %v788, %v789
  %v791 = vadd.f32 %v774, %v790
  %v792 = vmul.f32 %v503, %v503
  %v793 = vsel %vm630, %v792, 0.0
  %v794 = vrot.slane %v793, 4
  %v795 = vadd.f32 %v793, %v794
  %v796 = vrot.slane %v795, 2
  %v797 = vadd.f32 %v795, %v796
  %v798 = vrot.slane %v797, 1
  %v799 = vadd.f32 %v797, %v798
  %v800 = vadd.f32 %v783, %v799
  %v801 = vsel %vm630, %v542, 0.0
  %v802 = vrot.slane %v801, 4
  %v803 = vadd.f32 %v801, %v802
  %v804 = vrot.slane %v803, 2
  %v805 = vadd.f32 %v803, %v804
  %v806 = vrot.slane %v805, 1
  %v807 = vadd.f32 %v805, %v806
  %v808 = vadd.f32 %v791, %v807
  %v809 = vmul.f32 %v542, %v542
  %v810 = vsel %vm630, %v809, 0.0
  %v811 = vrot.slane %v810, 4
  %v812 = vadd.f32 %v810, %v811
  %v813 = vrot.slane %v812, 2
  %v814 = vadd.f32 %v812, %v813
  %v815 = vrot.slane %v814, 1
  %v816 = vadd.f32 %v814, %v815
  %v817 = vadd.f32 %v800, %v816
  %v818 = vsel %vm630, %v544, 0.0
  %v819 = vrot.slane %v818, 4
  %v820 = vadd.f32 %v818, %v819
  %v821 = vrot.slane %v820, 2
  %v822 = vadd.f32 %v820, %v821
  %v823 = vrot.slane %v822, 1
  %v824 = vadd.f32 %v822, %v823
  %v825 = vadd.f32 %v808, %v824
  %v826 = vmul.f32 %v544, %v544
  %v827 = vsel %vm630, %v826, 0.0
  %v828 = vrot.slane %v827, 4
  %v829 = vadd.f32 %v827, %v828
  %v830 = vrot.slane %v829, 2
  %v831 = vadd.f32 %v829, %v830
  %v832 = vrot.slane %v831, 1
  %v833 = vadd.f32 %v831, %v832
  %v834 = vadd.f32 %v817, %v833
  %v835 = vsel %vm630, %v583, 0.0
  %v836 = vrot.slane %v835, 4
  %v837 = vadd.f32 %v835, %v836
  %v838 = vrot.slane %v837, 2
  %v839 = vadd.f32 %v837, %v838
  %v840 = vrot.slane %v839, 1
  %v841 = vadd.f32 %v839, %v840
  %v842 = vadd.f32 %v825, %v841
  %v843 = vmul.f32 %v583, %v583
  %v844 = vsel %vm630, %v843, 0.0
  %v845 = vrot.slane %v844, 4
  %v846 = vadd.f32 %v844, %v845
  %v847 = vrot.slane %v846, 2
  %v848 = vadd.f32 %v846, %v847
  %v849 = vrot.slane %v848, 1
  %v850 = vadd.f32 %v848, %v849
  %v851 = vadd.f32 %v834, %v850
  %v852 = vsel %vm630, %v585, 0.0
  %v853 = vrot.slane %v852, 4
  %v854 = vadd.f32 %v852, %v853
  %v855 = vrot.slane %v854, 2
  %v856 = vadd.f32 %v854, %v855
  %v857 = vrot.slane %v856, 1
  %v858 = vadd.f32 %v856, %v857
  %v859 = vadd.f32 %v842, %v858
  %v860 = vmul.f32 %v585, %v585
  %v861 = vsel %vm630, %v860, 0.0
  %v862 = vrot.slane %v861, 4
  %v863 = vadd.f32 %v861, %v862
  %v864 = vrot.slane %v863, 2
  %v865 = vadd.f32 %v863, %v864
  %v866 = vrot.slane %v865, 1
  %v867 = vadd.f32 %v865, %v866
  %v868 = vadd.f32 %v851, %v867
  %v869 = vsel %vm630, %v624, 0.0
  %v870 = vrot.slane %v869, 4
  %v871 = vadd.f32 %v869, %v870
  %v872 = vrot.slane %v871, 2
  %v873 = vadd.f32 %v871, %v872
  %v874 = vrot.slane %v873, 1
  %v875 = vadd.f32 %v873, %v874
  %v876 = vadd.f32 %v859, %v875
  %v877 = vmul.f32 %v624, %v624
  %v878 = vsel %vm630, %v877, 0.0
  %v879 = vrot.slane %v878, 4
  %v880 = vadd.f32 %v878, %v879
  %v881 = vrot.slane %v880, 2
  %v882 = vadd.f32 %v880, %v881
  %v883 = vrot.slane %v882, 1
  %v884 = vadd.f32 %v882, %v883
  %v885 = vadd.f32 %v868, %v884
  %v886 = vsel %vm630, %v626, 0.0
  %v887 = vrot.slane %v886, 4
  %v888 = vadd.f32 %v886, %v887
  %v889 = vrot.slane %v888, 2
  %v890 = vadd.f32 %v888, %v889
  %v891 = vrot.slane %v890, 1
  %v892 = vadd.f32 %v890, %v891
  %v893 = vadd.f32 %v876, %v892
  %v894 = vmul.f32 %v626, %v626
  %v895 = vsel %vm630, %v894, 0.0
  %v896 = vrot.slane %v895, 4
  %v897 = vadd.f32 %v895, %v896
  %v898 = vrot.slane %v897, 2
  %v899 = vadd.f32 %v897, %v898
  %v900 = vrot.slane %v899, 1
  %v901 = vadd.f32 %v899, %v900
  %v902 = vadd.f32 %v885, %v901
  %v903 = vrcp.pop 32.0
  %v904 = vmul.f32 %v893, %v903
  %v905 = vmul.f32 %v902, %v903
  %v906 = vmul.f32 %v904, %v904
  %v907 = vsub.f32 %v905, %v906
  %v908 = vadd.f32 %v907, 1e-05
  %v909 = vrsqrt.pop %v908
  %v910 = vld [vmem:[%s3] sm:$0x1]
  %v911 = vmul.f32 %v909, %v910
  %v912 = vld [vmem:[%s4] sm:$0x1]
  %v913 = vmul.f32 %v904, %v911
  %v914 = vsub.f32 %v912, %v913
  %v915 = vlaneseq
  %v916 = vshrl.u32 %v915, 7
  %v917 = vsub.s32 0, %v916
  %v918 = vrot.slane %v911, %v917
  %v919 = vmul.f32 %v337, %v918
  %v920 = vmul.f32 %v339, %v918
  %v921 = vmul.f32 %v378, %v918
  %v922 = vmul.f32 %v380, %v918
  %v923 = vmul.f32 %v419, %v918
  %v924 = vmul.f32 %v421, %v918
  %v925 = vmul.f32 %v460, %v918
  %v926 = vmul.f32 %v462, %v918
  %v927 = vmul.f32 %v501, %v918
  %v928 = vmul.f32 %v503, %v918
  %v929 = vmul.f32 %v542, %v918
  %v930 = vmul.f32 %v544, %v918
  %v931 = vmul.f32 %v583, %v918
  %v932 = vmul.f32 %v585, %v918
  %v933 = vmul.f32 %v624, %v918
  %v934 = vmul.f32 %v626, %v918
  %v935 = vlaneseq
  %v936 = vshrl.u32 %v935, 7
  %v937 = vsub.s32 0, %v936
  %v938 = vrot.slane %v914, %v937
  %v939 = vadd.f32 %v919, %v938
  %v940 = vadd.f32 %v920, %v938
  %v941 = vadd.f32 %v921, %v938
  %v942 = vadd.f32 %v922, %v938
  %v943 = vadd.f32 %v923, %v938
  %v944 = vadd.f32 %v924, %v938
  %v945 = vadd.f32 %v925, %v938
  %v946 = vadd.f32 %v926, %v938
  %v947 = vadd.f32 %v927, %v938
  %v948 = vadd.f32 %v928, %v938
  %v949 = vadd.f32 %v929, %v938
  %v950 = vadd.f32 %v930, %v938
  %v951 = vadd.f32 %v931, %v938
  %v952 = vadd.f32 %v932, %v938
  %v953 = vadd.f32 %v933, %v938
  %v954 = vadd.f32 %v934, %v938
  %v971 = vcombine.low %v939, %v940
  %v972 = vcombine.low %v941, %v942
  %v974 = vunpack.c.l.s4 1983009808
  %v975 = vunpack.c.0.s8 %v974
  %v976 = vlaneseq
  %v977 = vshrl.u32 %v976, 7
  %v978 = vsub.s32 %v975, %v977
  %v979 = vrot.slane %v971, %v978
  %v981 = vunpack.c.l.s4 1983009808
  %v982 = vunpack.c.0.s8 %v981
  %v983 = vlaneseq
  %v984 = vshrl.u32 %v983, 7
  %v985 = vsub.s32 %v982, %v984
  %v986 = vrot.slane %v972, %v985
  %v987 = vcombine.low %v979, %v986
  %v988 = vcombine.low %v943, %v944
  %v989 = vcombine.low %v945, %v946
  %v991 = vunpack.c.l.s4 1983009808
  %v992 = vunpack.c.0.s8 %v991
  %v993 = vlaneseq
  %v994 = vshrl.u32 %v993, 7
  %v995 = vsub.s32 %v992, %v994
  %v996 = vrot.slane %v988, %v995
  %v998 = vunpack.c.l.s4 1983009808
  %v999 = vunpack.c.0.s8 %v998
  %v1000 = vlaneseq
  %v1001 = vshrl.u32 %v1000, 7
  %v1002 = vsub.s32 %v999, %v1001
  %v1003 = vrot.slane %v989, %v1002
  %v1004 = vcombine.low %v996, %v1003
  %v1005 = vcombine.low %v947, %v948
  %v1006 = vcombine.low %v949, %v950
  %v1008 = vunpack.c.l.s4 1983009808
  %v1009 = vunpack.c.0.s8 %v1008
  %v1010 = vlaneseq
  %v1011 = vshrl.u32 %v1010, 7
  %v1012 = vsub.s32 %v1009, %v1011
  %v1013 = vrot.slane %v1005, %v1012
  %v1015 = vunpack.c.l.s4 1983009808
  %v1016 = vunpack.c.0.s8 %v1015
  %v1017 = vlaneseq
  %v1018 = vshrl.u32 %v1017, 7
  %v1019 = vsub.s32 %v1016, %v1018
  %v1020 = vrot.slane %v1006, %v1019
  %v1021 = vcombine.low %v1013, %v1020
  %v1022 = vcombine.low %v951, %v952
  %v1023 = vcombine.low %v953, %v954
  %v1025 = vunpack.c.l.s4 1983009808
  %v1026 = vunpack.c.0.s8 %v1025
  %v1027 = vlaneseq
  %v1028 = vshrl.u32 %v1027, 7
  %v1029 = vsub.s32 %v1026, %v1028
  %v1030 = vrot.slane %v1022, %v1029
  %v1032 = vunpack.c.l.s4 1983009808
  %v1033 = vunpack.c.0.s8 %v1032
  %v1034 = vlaneseq
  %v1035 = vshrl.u32 %v1034, 7
  %v1036 = vsub.s32 %v1033, %v1035
  %v1037 = vrot.slane %v1023, %v1036
  %v1038 = vcombine.low %v1030, %v1037
  %1043 = vst [vmem:[%s5] sm:$0xff] %v987
  %1044 = vst [vmem:[%s5 + $0x8] sm:$0xff] %v1004
  %1045 = vst [vmem:[%s5 + $0x10] sm:$0xff] %v1021
  %1046 = vst [vmem:[%s5 + $0x18] sm:$0xff] %v1038
  // Predicated region
  $region22: #{generator_forward.3} parent=0 // pred_check
    _
  $region23: #{generator_forward.3} parent=0 // pred_check_branch
    %1048 = sbr.rel (0) target = $region25
  $region24: #{generator_forward.3} parent=0 // pred_region
    _
  $region25: #{generator_forward.3} parent=0 // pred_fallthru
    _
  // Predicated region
  $region26: #{generator_forward.3} parent=0 // pred_check
    _
  $region27: #{generator_forward.3} parent=0 // pred_check_branch
    %1050 = sbr.rel (0) target = $region29
  $region28: #{generator_forward.3} parent=0 // pred_region
    _
  $region29: #{generator_forward.3} parent=0 // pred_fallthru
    _

// kernel: generator_forward.4
$region0: #{generator_forward.4}
  #allocation0 [shape = 'u32[]', space=smem, size = 0x4, offset = 0x4, fixed_abs, tag = 'smem constant byte address 0x4 - core index']
  #allocation1 [shape = 'u32[144,128]{1,0:T(1,128)}', space=vmem, size = 0x12000, scoped, tag = 'internal scratch']
  %s0 = inlined_call_operand.vmem [shape: f32[2,6,6,128], index: 0, kind: input, shape index: {}]
  %s1 = inlined_call_operand.vmem [shape: bf16[4,512,128], index: 1, kind: input, shape index: {}]
  %s2 = inlined_call_operand.vmem [shape: f32[1,128], index: 2, kind: input, shape index: {}]
  %s3 = inlined_call_operand.vmem [shape: f32[1,128], index: 3, kind: input, shape index: {}]
  %s4 = inlined_call_operand.vmem [shape: f32[1,128], index: 4, kind: input, shape index: {}]
  %s5 = inlined_call_operand.vmem [shape: f32[4,32,128], index: 5, kind: output, shape index: {}]
  %s6 = sld [smem:[#allocation0]]
  $region30: #{generator_forward.4} parent=0
    _
  %s8 = ssub.s32 1, %s6
  %s9 = scalar_select 0, %s8, %s6
  // Predicated region
  $region2: #{generator_forward.4} parent=0 // pred_check
    _
  $region3: #{generator_forward.4} parent=0 // pred_check_branch
    %11 = sbr.rel (0) target = $region5
  $region4: #{generator_forward.4} parent=0 // pred_region
    _
  $region5: #{generator_forward.4} parent=0 // pred_fallthru
    _
  // Predicated region
  $region6: #{generator_forward.4} parent=0 // pred_check
    _
  $region7: #{generator_forward.4} parent=0 // pred_check_branch
    %13 = sbr.rel (0) target = $region9
  $region8: #{generator_forward.4} parent=0 // pred_region
    _
  $region9: #{generator_forward.4} parent=0 // pred_fallthru
    _
  // Predicated region
  $region10: #{generator_forward.4} parent=0 // pred_check
    _
  $region11: #{generator_forward.4} parent=0 // pred_check_branch
    %15 = sbr.rel (0) target = $region13
  $region12: #{generator_forward.4} parent=0 // pred_region
    _
  $region13: #{generator_forward.4} parent=0 // pred_fallthru
    _
  // Predicated region
  $region14: #{generator_forward.4} parent=0 // pred_check
    _
  $region15: #{generator_forward.4} parent=0 // pred_check_branch
    %17 = sbr.rel (0) target = $region17
  $region16: #{generator_forward.4} parent=0 // pred_region
    _
  $region17: #{generator_forward.4} parent=0 // pred_fallthru
    _
  // Predicated region
  $region18: #{generator_forward.4} parent=0 // pred_check
    _
  $region19: #{generator_forward.4} parent=0 // pred_check_branch
    %19 = sbr.rel (0) target = $region21
  $region20: #{generator_forward.4} parent=0 // pred_region
    _
  $region21: #{generator_forward.4} parent=0 // pred_fallthru
    _
  %v21 = vld [vmem:[%s0] sm:$0x3f]
  %v22 = vld [vmem:[%s0 + $0x8] sm:$0x3f]
  %v23 = vld [vmem:[%s0 + $0x10] sm:$0x3f]
  %v24 = vld [vmem:[%s0 + $0x18] sm:$0x3f]
  %v25 = vld [vmem:[%s0 + $0x20] sm:$0x3f]
  %v26 = vld [vmem:[%s0 + $0x28] sm:$0x3f]
  %v27 = vld [vmem:[%s0 + $0x30] sm:$0x3f]
  %v28 = vld [vmem:[%s0 + $0x38] sm:$0x3f]
  %v29 = vld [vmem:[%s0 + $0x40] sm:$0x3f]
  %v30 = vld [vmem:[%s0 + $0x48] sm:$0x3f]
  %v31 = vld [vmem:[%s0 + $0x50] sm:$0x3f]
  %v32 = vld [vmem:[%s0 + $0x58] sm:$0x3f]
  %v41 = vcombine.high %v21, %v21
  %v42 = vcombine.high %v22, %v22
  %v43 = vcombine.high %v23, %v23
  %v44 = vcombine.high %v24, %v24
  %v45 = vcombine.high %v27, %v27
  %v46 = vcombine.high %v28, %v28
  %v47 = vcombine.high %v29, %v29
  %v48 = vcombine.high %v30, %v30
  %vm49 = vcmask 1042432
  %vm50 = vcmask 1046532
  %vm51 = vmor %vm49, %vm50
  %v52 = vrot.slane %v21, 5
  %v53 = vrot.slane %v52, 4
  %v54 = vrot.slane %v41, 5
  %v55 = vsel %vm51, %v53, %v54
  %v56 = vrot.slane %v22, 5
  %v57 = vrot.slane %v56, 4
  %v58 = vrot.slane %v42, 5
  %v59 = vsel %vm51, %v57, %v58
  %v60 = vrot.slane %v23, 5
  %v61 = vrot.slane %v60, 4
  %v62 = vrot.slane %v43, 5
  %v63 = vsel %vm51, %v61, %v62
  %v64 = vrot.slane %v24, 5
  %v65 = vrot.slane %v64, 4
  %v66 = vrot.slane %v44, 5
  %v67 = vsel %vm51, %v65, %v66
  %v68 = vrot.slane %v27, 5
  %v69 = vrot.slane %v68, 4
  %v70 = vrot.slane %v45, 5
  %v71 = vsel %vm51, %v69, %v70
  %v72 = vrot.slane %v28, 5
  %v73 = vrot.slane %v72, 4
  %v74 = vrot.slane %v46, 5
  %v75 = vsel %vm51, %v73, %v74
  %v76 = vrot.slane %v29, 5
  %v77 = vrot.slane %v76, 4
  %v78 = vrot.slane %v47, 5
  %v79 = vsel %vm51, %v77, %v78
  %v80 = vrot.slane %v30, 5
  %v81 = vrot.slane %v80, 4
  %v82 = vrot.slane %v48, 5
  %v83 = vsel %vm51, %v81, %v82
  %v86 = vcombine.high %v25, %v25
  %v87 = vcombine.high %v31, %v31
  %v88 = vrot.slane %v25, 5
  %v89 = vrot.slane %v88, 4
  %v90 = vrot.slane %v86, 5
  %v91 = vsel %vm51, %v89, %v90
  %v92 = vrot.slane %v31, 5
  %v93 = vrot.slane %v92, 4
  %v94 = vrot.slane %v87, 5
  %v95 = vsel %vm51, %v93, %v94
  %v96 = vcombine.low %v21, %v22
  %v97 = vcombine.low %v23, %v24
  %v98 = vcombine.low %v27, %v28
  %v99 = vcombine.low %v29, %v30
  %v104 = vcombine.low %v55, %v59
  %v105 = vcombine.low %v63, %v67
  %v106 = vcombine.low %v71, %v75
  %v107 = vcombine.low %v79, %v83
  %v112 = vcombine.low %v22, %v23
  %v113 = vcombine.low %v24, %v25
  %v114 = vcombine.low %v28, %v29
  %v115 = vcombine.low %v30, %v31
  %v120 = vcombine.low %v59, %v63
  %v121 = vcombine.low %v67, %v91
  %v122 = vcombine.low %v75, %v79
  %v123 = vcombine.low %v83, %v95
  %v128 = vpack.c.bf16 %v97, %v96
  %v129 = vpack.c.bf16 %v105, %v104
  %v130 = vpack.c.bf16 %v113, %v112
  %v131 = vpack.c.bf16 %v121, %v120
  %v132 = vpack.c.bf16 %v99, %v98
  %v133 = vpack.c.bf16 %v107, %v106
  %v134 = vpack.c.bf16 %v115, %v114
  %v135 = vpack.c.bf16 %v123, %v122
  %v136 = vld [vmem:[%s1] sm:$0xf]
  %v137 = vld [vmem:[%s1 + $0x4] sm:$0xf]
  %v138 = vld [vmem:[%s1 + $0x8] sm:$0xf]
  %v139 = vld [vmem:[%s1 + $0xc] sm:$0xf]
  %v140 = vld [vmem:[%s1 + $0x10] sm:$0xf]
  %v141 = vld [vmem:[%s1 + $0x14] sm:$0xf]
  %v142 = vld [vmem:[%s1 + $0x18] sm:$0xf]
  %v143 = vld [vmem:[%s1 + $0x1c] sm:$0xf]
  %v144 = vld [vmem:[%s1 + $0x20] sm:$0xf]
  %v145 = vld [vmem:[%s1 + $0x24] sm:$0xf]
  %v146 = vld [vmem:[%s1 + $0x28] sm:$0xf]
  %v147 = vld [vmem:[%s1 + $0x2c] sm:$0xf]
  %v148 = vld [vmem:[%s1 + $0x30] sm:$0xf]
  %v149 = vld [vmem:[%s1 + $0x34] sm:$0xf]
  %v150 = vld [vmem:[%s1 + $0x38] sm:$0xf]
  %v151 = vld [vmem:[%s1 + $0x3c] sm:$0xf]
  %v152 = vld [vmem:[%s1 + $0x40] sm:$0xf]
  %v153 = vld [vmem:[%s1 + $0x44] sm:$0xf]
  %v154 = vld [vmem:[%s1 + $0x48] sm:$0xf]
  %v155 = vld [vmem:[%s1 + $0x4c] sm:$0xf]
  %v156 = vld [vmem:[%s1 + $0x50] sm:$0xf]
  %v157 = vld [vmem:[%s1 + $0x54] sm:$0xf]
  %v158 = vld [vmem:[%s1 + $0x58] sm:$0xf]
  %v159 = vld [vmem:[%s1 + $0x5c] sm:$0xf]
  %v160 = vld [vmem:[%s1 + $0x60] sm:$0xf]
  %v161 = vld [vmem:[%s1 + $0x64] sm:$0xf]
  %v162 = vld [vmem:[%s1 + $0x68] sm:$0xf]
  %v163 = vld [vmem:[%s1 + $0x6c] sm:$0xf]
  %v164 = vld [vmem:[%s1 + $0x70] sm:$0xf]
  %v165 = vld [vmem:[%s1 + $0x74] sm:$0xf]
  %v166 = vld [vmem:[%s1 + $0x78] sm:$0xf]
  %v167 = vld [vmem:[%s1 + $0x7c] sm:$0xf]
  %v168 = vld [vmem:[%s1 + $0x80] sm:$0xf]
  %v169 = vld [vmem:[%s1 + $0x84] sm:$0xf]
  %v170 = vld [vmem:[%s1 + $0x88] sm:$0xf]
  %v171 = vld [vmem:[%s1 + $0x8c] sm:$0xf]
  %v172 = vld [vmem:[%s1 + $0x90] sm:$0xf]
  %v173 = vld [vmem:[%s1 + $0x94] sm:$0xf]
  %v174 = vld [vmem:[%s1 + $0x98] sm:$0xf]
  %v175 = vld [vmem:[%s1 + $0x9c] sm:$0xf]
  %v176 = vld [vmem:[%s1 + $0xa0] sm:$0xf]
  %v177 = vld [vmem:[%s1 + $0xa4] sm:$0xf]
  %v178 = vld [vmem:[%s1 + $0xa8] sm:$0xf]
  %v179 = vld [vmem:[%s1 + $0xac] sm:$0xf]
  %v180 = vld [vmem:[%s1 + $0xb0] sm:$0xf]
  %v181 = vld [vmem:[%s1 + $0xb4] sm:$0xf]
  %v182 = vld [vmem:[%s1 + $0xb8] sm:$0xf]
  %v183 = vld [vmem:[%s1 + $0xbc] sm:$0xf]
  %v184 = vld [vmem:[%s1 + $0xc0] sm:$0xf]
  %v185 = vld [vmem:[%s1 + $0xc4] sm:$0xf]
  %v186 = vld [vmem:[%s1 + $0xc8] sm:$0xf]
  %v187 = vld [vmem:[%s1 + $0xcc] sm:$0xf]
  %v188 = vld [vmem:[%s1 + $0xd0] sm:$0xf]
  %v189 = vld [vmem:[%s1 + $0xd4] sm:$0xf]
  %v190 = vld [vmem:[%s1 + $0xd8] sm:$0xf]
  %v191 = vld [vmem:[%s1 + $0xdc] sm:$0xf]
  %v192 = vld [vmem:[%s1 + $0xe0] sm:$0xf]
  %v193 = vld [vmem:[%s1 + $0xe4] sm:$0xf]
  %v194 = vld [vmem:[%s1 + $0xe8] sm:$0xf]
  %v195 = vld [vmem:[%s1 + $0xec] sm:$0xf]
  %v196 = vld [vmem:[%s1 + $0xf0] sm:$0xf]
  %v197 = vld [vmem:[%s1 + $0xf4] sm:$0xf]
  %v198 = vld [vmem:[%s1 + $0xf8] sm:$0xf]
  %v199 = vld [vmem:[%s1 + $0xfc] sm:$0xf]
  %v200 = vld [vmem:[%s2] sm:$0x1]
  %v202 = vlaneseq
  %v203 = vshrl.u32 %v202, 7
  %v204 = vsub.s32 0, %v203
  %v205 = vrot.slane %v200, %v204
  %v271 = vunpack.c.l.b16 %v136
  %v272 = vunpack.c.l.b16 %v137
  %v273 = vunpack.c.l.b16 %v138
  %v274 = vunpack.c.l.b16 %v139
  %v275 = vunpack.c.l.b16 %v140
  %v276 = vunpack.c.l.b16 %v141
  %v277 = vunpack.c.l.b16 %v142
  %v278 = vunpack.c.l.b16 %v143
  %v279 = vunpack.c.l.b16 %v144
  %v280 = vunpack.c.l.b16 %v145
  %v281 = vunpack.c.l.b16 %v146
  %v282 = vunpack.c.l.b16 %v147
  %v283 = vunpack.c.l.b16 %v148
  %v284 = vunpack.c.l.b16 %v149
  %v285 = vunpack.c.l.b16 %v150
  %v286 = vunpack.c.l.b16 %v151
  %v287 = vunpack.c.l.b16 %v152
  %v288 = vunpack.c.l.b16 %v153
  %v289 = vunpack.c.l.b16 %v154
  %v290 = vunpack.c.l.b16 %v155
  %v291 = vunpack.c.l.b16 %v156
  %v292 = vunpack.c.l.b16 %v157
  %v293 = vunpack.c.l.b16 %v158
  %v294 = vunpack.c.l.b16 %v159
  %v295 = vunpack.c.l.b16 %v160
  %v296 = vunpack.c.l.b16 %v161
  %v297 = vunpack.c.l.b16 %v162
  %v298 = vunpack.c.l.b16 %v163
  %v299 = vunpack.c.l.b16 %v164
  %v300 = vunpack.c.l.b16 %v165
  %v301 = vunpack.c.l.b16 %v166
  %v302 = vunpack.c.l.b16 %v167
  %v303 = vunpack.c.l.b16 %v168
  %v304 = vunpack.c.l.b16 %v169
  %v305 = vunpack.c.l.b16 %v170
  %v306 = vunpack.c.l.b16 %v171
  %v307 = vunpack.c.l.b16 %v172
  %v308 = vunpack.c.l.b16 %v173
  %v309 = vunpack.c.l.b16 %v174
  %v310 = vunpack.c.l.b16 %v175
  %v311 = vunpack.c.l.b16 %v176
  %v312 = vunpack.c.l.b16 %v177
  %v313 = vunpack.c.l.b16 %v178
  %v314 = vunpack.c.l.b16 %v179
  %v315 = vunpack.c.l.b16 %v180
  %v316 = vunpack.c.l.b16 %v181
  %v317 = vunpack.c.l.b16 %v182
  %v318 = vunpack.c.l.b16 %v183
  %v319 = vunpack.c.l.b16 %v184
  %v320 = vunpack.c.l.b16 %v185
  %v321 = vunpack.c.l.b16 %v186
  %v322 = vunpack.c.l.b16 %v187
  %v323 = vunpack.c.l.b16 %v188
  %v324 = vunpack.c.l.b16 %v189
  %v325 = vunpack.c.l.b16 %v190
  %v326 = vunpack.c.l.b16 %v191
  %v327 = vunpack.c.l.b16 %v192
  %v328 = vunpack.c.l.b16 %v193
  %v329 = vunpack.c.l.b16 %v194
  %v330 = vunpack.c.l.b16 %v195
  %v331 = vunpack.c.l.b16 %v196
  %v332 = vunpack.c.l.b16 %v197
  %v333 = vunpack.c.l.b16 %v198
  %v334 = vunpack.c.l.b16 %v199
  %v335 = vpack.c.b16 %v272, %v271
  %v336 = vpack.c.b16 %v274, %v273
  %v337 = vpack.c.b16 %v276, %v275
  %v338 = vpack.c.b16 %v278, %v277
  %v339 = vpack.c.b16 %v280, %v279
  %v340 = vpack.c.b16 %v282, %v281
  %v341 = vpack.c.b16 %v284, %v283
  %v342 = vpack.c.b16 %v286, %v285
  %v343 = vpack.c.b16 %v288, %v287
  %v344 = vpack.c.b16 %v290, %v289
  %v345 = vpack.c.b16 %v292, %v291
  %v346 = vpack.c.b16 %v294, %v293
  %v347 = vpack.c.b16 %v296, %v295
  %v348 = vpack.c.b16 %v298, %v297
  %v349 = vpack.c.b16 %v300, %v299
  %v350 = vpack.c.b16 %v302, %v301
  %v351 = vpack.c.b16 %v304, %v303
  %v352 = vpack.c.b16 %v306, %v305
  %v353 = vpack.c.b16 %v308, %v307
  %v354 = vpack.c.b16 %v310, %v309
  %v355 = vpack.c.b16 %v312, %v311
  %v356 = vpack.c.b16 %v314, %v313
  %v357 = vpack.c.b16 %v316, %v315
  %v358 = vpack.c.b16 %v318, %v317
  %v359 = vpack.c.b16 %v320, %v319
  %v360 = vpack.c.b16 %v322, %v321
  %v361 = vpack.c.b16 %v324, %v323
  %v362 = vpack.c.b16 %v326, %v325
  %v363 = vpack.c.b16 %v328, %v327
  %v364 = vpack.c.b16 %v330, %v329
  %v365 = vpack.c.b16 %v332, %v331
  %v366 = vpack.c.b16 %v334, %v333
  %399 = vmatprep.subr.bf16.mxu0 0
  %400 = vmatpush1.bf16.msra.mxu0 %v335
  %401 = vmatprep.subr.bf16.mxu0 0
  %402 = vmatpush1.bf16.msra.mxu0 %v336
  %403 = vmatprep.subr.bf16.mxu0 0
  %404 = vmatpush1.bf16.msra.mxu0 %v337
  %405 = vmatprep.subr.bf16.mxu0 0
  %406 = vmatpush1.bf16.msra.mxu0 %v338
  %407 = vmatprep.subr.bf16.mxu0 0
  %408 = vmatpush1.bf16.msra.mxu0 %v339
  %409 = vmatprep.subr.bf16.mxu0 0
  %410 = vmatpush1.bf16.msra.mxu0 %v340
  %411 = vmatprep.subr.bf16.mxu0 0
  %412 = vmatpush1.bf16.msra.mxu0 %v341
  %413 = vmatprep.subr.bf16.mxu0 0
  %414 = vmatpush1.bf16.msra.mxu0 %v342
  %415 = vmatprep.subr.bf16.mxu0 0
  %416 = vmatpush1.bf16.msra.mxu0 %v343
  %417 = vmatprep.subr.bf16.mxu0 0
  %418 = vmatpush1.bf16.msra.mxu0 %v344
  %419 = vmatprep.subr.bf16.mxu0 0
  %420 = vmatpush1.bf16.msra.mxu0 %v345
  %421 = vmatprep.subr.bf16.mxu0 0
  %422 = vmatpush1.bf16.msra.mxu0 %v346
  %423 = vmatprep.subr.bf16.mxu0 0
  %424 = vmatpush1.bf16.msra.mxu0 %v347
  %425 = vmatprep.subr.bf16.mxu0 0
  %426 = vmatpush1.bf16.msra.mxu0 %v348
  %427 = vmatprep.subr.bf16.mxu0 0
  %428 = vmatpush1.bf16.msra.mxu0 %v349
  %429 = vmatprep.subr.bf16.mxu0 0
  %430 = vmatpush1.bf16.msra.mxu0 %v350
  %431 = vmatprep.mubr.bf16.mxu0 %v129
  %432 = vmatmul.mubr.bf16.gmra.mrb[0].mxu0 %v128
  %v433 = vpop.f32.mrb[0].mxu0
  %v434 = vadd.f32 %v205, %v433
  %v435 = vpop.f32.mrb[0].mxu0
  %v436 = vpop.f32.mrb[0].mxu0
  %v437 = vadd.f32 %v205, %v436
  %v438 = vpop.f32.mrb[0].mxu0
  %439 = vmatprep.mubr.bf16.mxu0 %v133
  %440 = vmatmul.mubr.bf16.gmra.mrb[0].mxu0 %v132
  %v441 = vpop.f32.mrb[0].mxu0
  %v442 = vadd.f32 %v205, %v441
  %v443 = vpop.f32.mrb[0].mxu0
  %v444 = vpop.f32.mrb[0].mxu0
  %v445 = vadd.f32 %v205, %v444
  %v446 = vpop.f32.mrb[0].mxu0
  %447 = vdwg.mxu0
  %448 = vmatprep.subr.bf16.mxu0 0
  %449 = vmatpush1.bf16.msra.mxu0 %v351
  %450 = vmatprep.subr.bf16.mxu0 0
  %451 = vmatpush1.bf16.msra.mxu0 %v352
  %452 = vmatprep.subr.bf16.mxu0 0
  %453 = vmatpush1.bf16.msra.mxu0 %v353
  %454 = vmatprep.subr.bf16.mxu0 0
  %455 = vmatpush1.bf16.msra.mxu0 %v354
  %456 = vmatprep.subr.bf16.mxu0 0
  %457 = vmatpush1.bf16.msra.mxu0 %v355
  %458 = vmatprep.subr.bf16.mxu0 0
  %459 = vmatpush1.bf16.msra.mxu0 %v356
  %460 = vmatprep.subr.bf16.mxu0 0
  %461 = vmatpush1.bf16.msra.mxu0 %v357
  %462 = vmatprep.subr.bf16.mxu0 0
  %463 = vmatpush1.bf16.msra.mxu0 %v358
  %464 = vmatprep.subr.bf16.mxu0 0
  %465 = vmatpush1.bf16.msra.mxu0 %v359
  %466 = vmatprep.subr.bf16.mxu0 0
  %467 = vmatpush1.bf16.msra.mxu0 %v360
  %468 = vmatprep.subr.bf16.mxu0 0
  %469 = vmatpush1.bf16.msra.mxu0 %v361
  %470 = vmatprep.subr.bf16.mxu0 0
  %471 = vmatpush1.bf16.msra.mxu0 %v362
  %472 = vmatprep.subr.bf16.mxu0 0
  %473 = vmatpush1.bf16.msra.mxu0 %v363
  %474 = vmatprep.subr.bf16.mxu0 0
  %475 = vmatpush1.bf16.msra.mxu0 %v364
  %476 = vmatprep.subr.bf16.mxu0 0
  %477 = vmatpush1.bf16.msra.mxu0 %v365
  %478 = vmatprep.subr.bf16.mxu0 0
  %479 = vmatpush1.bf16.msra.mxu0 %v366
  %480 = vmatprep.mubr.bf16.mxu0 %v131
  %481 = vmatmul.mubr.bf16.gmra.mrb[0].mxu0 %v130
  %v482 = vpop.f32.mrb[0].mxu0
  %v483 = vadd.f32 %v434, %v482
  %v484 = vpop.f32.mrb[0].mxu0
  %v485 = vpop.f32.mrb[0].mxu0
  %v486 = vadd.f32 %v437, %v485
  %v487 = vpop.f32.mrb[0].mxu0
  %488 = vmatprep.mubr.bf16.mxu0 %v135
  %489 = vmatmul.mubr.bf16.gmra.mrb[0].mxu0 %v134
  %v490 = vpop.f32.mrb[0].mxu0
  %v491 = vadd.f32 %v442, %v490
  %v492 = vpop.f32.mrb[0].mxu0
  %v493 = vpop.f32.mrb[0].mxu0
  %v494 = vadd.f32 %v445, %v493
  %v495 = vpop.f32.mrb[0].mxu0
  %496 = vdwg.mxu0
  %v497 = vadd.f32 %v483, %v486
  %v498 = vadd.f32 %v497, %v491
  %v499 = vadd.f32 %v498, %v494
  %v500 = vrot.slane %v499, 4
  %v501 = vadd.f32 %v499, %v500
  %v502 = vrot.slane %v501, 2
  %v503 = vadd.f32 %v501, %v502
  %v504 = vrot.slane %v503, 1
  %v505 = vadd.f32 %v503, %v504
  %v506 = vadd.f32 %v505, 0.0
  %v507 = vmul.f32 %v483, %v483
  %v508 = vmul.f32 %v486, %v486
  %v509 = vmul.f32 %v491, %v491
  %v510 = vmul.f32 %v494, %v494
  %v511 = vadd.f32 %v507, %v508
  %v512 = vadd.f32 %v511, %v509
  %v513 = vadd.f32 %v512, %v510
  %v514 = vrot.slane %v513, 4
  %v515 = vadd.f32 %v513, %v514
  %v516 = vrot.slane %v515, 2
  %v517 = vadd.f32 %v515, %v516
  %v518 = vrot.slane %v517, 1
  %v519 = vadd.f32 %v517, %v518
  %v520 = vadd.f32 %v519, 0.0
  %vm521 = vcmask 1041408
  %vm522 = vcmask 1045508
  %vm523 = vmor %vm521, %vm522
  %v524 = vrot.slane %v21, 6
  %v525 = vrot.slane %v524, 4
  %v526 = vrot.slane %v41, 6
  %v527 = vsel %vm523, %v525, %v526
  %v528 = vrot.slane %v22, 6
  %v529 = vrot.slane %v528, 4
  %v530 = vrot.slane %v42, 6
  %v531 = vsel %vm523, %v529, %v530
  %v532 = vrot.slane %v23, 6
  %v533 = vrot.slane %v532, 4
  %v534 = vrot.slane %v43, 6
  %v535 = vsel %vm523, %v533, %v534
  %v536 = vrot.slane %v24, 6
  %v537 = vrot.slane %v536, 4
  %v538 = vrot.slane %v44, 6
  %v539 = vsel %vm523, %v537, %v538
  %v540 = vrot.slane %v27, 6
  %v541 = vrot.slane %v540, 4
  %v542 = vrot.slane %v45, 6
  %v543 = vsel %vm523, %v541, %v542
  %v544 = vrot.slane %v28, 6
  %v545 = vrot.slane %v544, 4
  %v546 = vrot.slane %v46, 6
  %v547 = vsel %vm523, %v545, %v546
  %v548 = vrot.slane %v29, 6
  %v549 = vrot.slane %v548, 4
  %v550 = vrot.slane %v47, 6
  %v551 = vsel %vm523, %v549, %v550
  %v552 = vrot.slane %v30, 6
  %v553 = vrot.slane %v552, 4
  %v554 = vrot.slane %v48, 6
  %v555 = vsel %vm523, %v553, %v554
  %v556 = vrot.slane %v25, 6
  %v557 = vrot.slane %v556, 4
  %v558 = vrot.slane %v86, 6
  %v559 = vsel %vm523, %v557, %v558
  %v560 = vrot.slane %v31, 6
  %v561 = vrot.slane %v560, 4
  %v562 = vrot.slane %v87, 6
  %v563 = vsel %vm523, %v561, %v562
  %v564 = vcombine.low %v527, %v531
  %v565 = vcombine.low %v535, %v539
  %v566 = vcombine.low %v543, %v547
  %v567 = vcombine.low %v551, %v555
  %v572 = vcombine.low %v531, %v535
  %v573 = vcombine.low %v539, %v559
  %v574 = vcombine.low %v547, %v551
  %v575 = vcombine.low %v555, %v563
  %v580 = vpack.c.bf16 %v565, %v564
  %v581 = vpack.c.bf16 %v573, %v572
  %v582 = vpack.c.bf16 %v567, %v566
  %v583 = vpack.c.bf16 %v575, %v574
  %s584 = scalar_lea.vmem %s1, 256
  %v585 = vld [vmem:[%s584] sm:$0xf]
  %v586 = vld [vmem:[%s584 + $0x4] sm:$0xf]
  %v587 = vld [vmem:[%s584 + $0x8] sm:$0xf]
  %v588 = vld [vmem:[%s584 + $0xc] sm:$0xf]
  %v589 = vld [vmem:[%s584 + $0x10] sm:$0xf]
  %v590 = vld [vmem:[%s584 + $0x14] sm:$0xf]
  %v591 = vld [vmem:[%s584 + $0x18] sm:$0xf]
  %v592 = vld [vmem:[%s584 + $0x1c] sm:$0xf]
  %v593 = vld [vmem:[%s584 + $0x20] sm:$0xf]
  %v594 = vld [vmem:[%s584 + $0x24] sm:$0xf]
  %v595 = vld [vmem:[%s584 + $0x28] sm:$0xf]
  %v596 = vld [vmem:[%s584 + $0x2c] sm:$0xf]
  %v597 = vld [vmem:[%s584 + $0x30] sm:$0xf]
  %v598 = vld [vmem:[%s584 + $0x34] sm:$0xf]
  %v599 = vld [vmem:[%s584 + $0x38] sm:$0xf]
  %v600 = vld [vmem:[%s584 + $0x3c] sm:$0xf]
  %v601 = vld [vmem:[%s584 + $0x40] sm:$0xf]
  %v602 = vld [vmem:[%s584 + $0x44] sm:$0xf]
  %v603 = vld [vmem:[%s584 + $0x48] sm:$0xf]
  %v604 = vld [vmem:[%s584 + $0x4c] sm:$0xf]
  %v605 = vld [vmem:[%s584 + $0x50] sm:$0xf]
  %v606 = vld [vmem:[%s584 + $0x54] sm:$0xf]
  %v607 = vld [vmem:[%s584 + $0x58] sm:$0xf]
  %v608 = vld [vmem:[%s584 + $0x5c] sm:$0xf]
  %v609 = vld [vmem:[%s584 + $0x60] sm:$0xf]
  %v610 = vld [vmem:[%s584 + $0x64] sm:$0xf]
  %v611 = vld [vmem:[%s584 + $0x68] sm:$0xf]
  %v612 = vld [vmem:[%s584 + $0x6c] sm:$0xf]
  %v613 = vld [vmem:[%s584 + $0x70] sm:$0xf]
  %v614 = vld [vmem:[%s584 + $0x74] sm:$0xf]
  %v615 = vld [vmem:[%s584 + $0x78] sm:$0xf]
  %v616 = vld [vmem:[%s584 + $0x7c] sm:$0xf]
  %v617 = vld [vmem:[%s584 + $0x80] sm:$0xf]
  %v618 = vld [vmem:[%s584 + $0x84] sm:$0xf]
  %v619 = vld [vmem:[%s584 + $0x88] sm:$0xf]
  %v620 = vld [vmem:[%s584 + $0x8c] sm:$0xf]
  %v621 = vld [vmem:[%s584 + $0x90] sm:$0xf]
  %v622 = vld [vmem:[%s584 + $0x94] sm:$0xf]
  %v623 = vld [vmem:[%s584 + $0x98] sm:$0xf]
  %v624 = vld [vmem:[%s584 + $0x9c] sm:$0xf]
  %v625 = vld [vmem:[%s584 + $0xa0] sm:$0xf]
  %v626 = vld [vmem:[%s584 + $0xa4] sm:$0xf]
  %v627 = vld [vmem:[%s584 + $0xa8] sm:$0xf]
  %v628 = vld [vmem:[%s584 + $0xac] sm:$0xf]
  %v629 = vld [vmem:[%s584 + $0xb0] sm:$0xf]
  %v630 = vld [vmem:[%s584 + $0xb4] sm:$0xf]
  %v631 = vld [vmem:[%s584 + $0xb8] sm:$0xf]
  %v632 = vld [vmem:[%s584 + $0xbc] sm:$0xf]
  %v633 = vld [vmem:[%s584 + $0xc0] sm:$0xf]
  %v634 = vld [vmem:[%s584 + $0xc4] sm:$0xf]
  %v635 = vld [vmem:[%s584 + $0xc8] sm:$0xf]
  %v636 = vld [vmem:[%s584 + $0xcc] sm:$0xf]
  %v637 = vld [vmem:[%s584 + $0xd0] sm:$0xf]
  %v638 = vld [vmem:[%s584 + $0xd4] sm:$0xf]
  %v639 = vld [vmem:[%s584 + $0xd8] sm:$0xf]
  %v640 = vld [vmem:[%s584 + $0xdc] sm:$0xf]
  %v641 = vld [vmem:[%s584 + $0xe0] sm:$0xf]
  %v642 = vld [vmem:[%s584 + $0xe4] sm:$0xf]
  %v643 = vld [vmem:[%s584 + $0xe8] sm:$0xf]
  %v644 = vld [vmem:[%s584 + $0xec] sm:$0xf]
  %v645 = vld [vmem:[%s584 + $0xf0] sm:$0xf]
  %v646 = vld [vmem:[%s584 + $0xf4] sm:$0xf]
  %v647 = vld [vmem:[%s584 + $0xf8] sm:$0xf]
  %v648 = vld [vmem:[%s584 + $0xfc] sm:$0xf]
  %v713 = vunpack.c.l.b16 %v585
  %v714 = vunpack.c.l.b16 %v586
  %v715 = vunpack.c.l.b16 %v587
  %v716 = vunpack.c.l.b16 %v588
  %v717 = vunpack.c.l.b16 %v589
  %v718 = vunpack.c.l.b16 %v590
  %v719 = vunpack.c.l.b16 %v591
  %v720 = vunpack.c.l.b16 %v592
  %v721 = vunpack.c.l.b16 %v593
  %v722 = vunpack.c.l.b16 %v594
  %v723 = vunpack.c.l.b16 %v595
  %v724 = vunpack.c.l.b16 %v596
  %v725 = vunpack.c.l.b16 %v597
  %v726 = vunpack.c.l.b16 %v598
  %v727 = vunpack.c.l.b16 %v599
  %v728 = vunpack.c.l.b16 %v600
  %v729 = vunpack.c.l.b16 %v601
  %v730 = vunpack.c.l.b16 %v602
  %v731 = vunpack.c.l.b16 %v603
  %v732 = vunpack.c.l.b16 %v604
  %v733 = vunpack.c.l.b16 %v605
  %v734 = vunpack.c.l.b16 %v606
  %v735 = vunpack.c.l.b16 %v607
  %v736 = vunpack.c.l.b16 %v608
  %v737 = vunpack.c.l.b16 %v609
  %v738 = vunpack.c.l.b16 %v610
  %v739 = vunpack.c.l.b16 %v611
  %v740 = vunpack.c.l.b16 %v612
  %v741 = vunpack.c.l.b16 %v613
  %v742 = vunpack.c.l.b16 %v614
  %v743 = vunpack.c.l.b16 %v615
  %v744 = vunpack.c.l.b16 %v616
  %v745 = vunpack.c.l.b16 %v617
  %v746 = vunpack.c.l.b16 %v618
  %v747 = vunpack.c.l.b16 %v619
  %v748 = vunpack.c.l.b16 %v620
  %v749 = vunpack.c.l.b16 %v621
  %v750 = vunpack.c.l.b16 %v622
  %v751 = vunpack.c.l.b16 %v623
  %v752 = vunpack.c.l.b16 %v624
  %v753 = vunpack.c.l.b16 %v625
  %v754 = vunpack.c.l.b16 %v626
  %v755 = vunpack.c.l.b16 %v627
  %v756 = vunpack.c.l.b16 %v628
  %v757 = vunpack.c.l.b16 %v629
  %v758 = vunpack.c.l.b16 %v630
  %v759 = vunpack.c.l.b16 %v631
  %v760 = vunpack.c.l.b16 %v632
  %v761 = vunpack.c.l.b16 %v633
  %v762 = vunpack.c.l.b16 %v634
  %v763 = vunpack.c.l.b16 %v635
  %v764 = vunpack.c.l.b16 %v636
  %v765 = vunpack.c.l.b16 %v637
  %v766 = vunpack.c.l.b16 %v638
  %v767 = vunpack.c.l.b16 %v639
  %v768 = vunpack.c.l.b16 %v640
  %v769 = vunpack.c.l.b16 %v641
  %v770 = vunpack.c.l.b16 %v642
  %v771 = vunpack.c.l.b16 %v643
  %v772 = vunpack.c.l.b16 %v644
  %v773 = vunpack.c.l.b16 %v645
  %v774 = vunpack.c.l.b16 %v646
  %v775 = vunpack.c.l.b16 %v647
  %v776 = vunpack.c.l.b16 %v648
  %v777 = vpack.c.b16 %v714, %v713
  %v778 = vpack.c.b16 %v716, %v715
  %v779 = vpack.c.b16 %v718, %v717
  %v780 = vpack.c.b16 %v720, %v719
  %v781 = vpack.c.b16 %v722, %v721
  %v782 = vpack.c.b16 %v724, %v723
  %v783 = vpack.c.b16 %v726, %v725
  %v784 = vpack.c.b16 %v728, %v727
  %v785 = vpack.c.b16 %v730, %v729
  %v786 = vpack.c.b16 %v732, %v731
  %v787 = vpack.c.b16 %v734, %v733
  %v788 = vpack.c.b16 %v736, %v735
  %v789 = vpack.c.b16 %v738, %v737
  %v790 = vpack.c.b16 %v740, %v739
  %v791 = vpack.c.b16 %v742, %v741
  %v792 = vpack.c.b16 %v744, %v743
  %v793 = vpack.c.b16 %v746, %v745
  %v794 = vpack.c.b16 %v748, %v747
  %v795 = vpack.c.b16 %v750, %v749
  %v796 = vpack.c.b16 %v752, %v751
  %v797 = vpack.c.b16 %v754, %v753
  %v798 = vpack.c.b16 %v756, %v755
  %v799 = vpack.c.b16 %v758, %v757
  %v800 = vpack.c.b16 %v760, %v759
  %v801 = vpack.c.b16 %v762, %v761
  %v802 = vpack.c.b16 %v764, %v763
  %v803 = vpack.c.b16 %v766, %v765
  %v804 = vpack.c.b16 %v768, %v767
  %v805 = vpack.c.b16 %v770, %v769
  %v806 = vpack.c.b16 %v772, %v771
  %v807 = vpack.c.b16 %v774, %v773
  %v808 = vpack.c.b16 %v776, %v775
  %841 = vmatprep.subr.bf16.mxu0 0
  %842 = vmatpush1.bf16.msra.mxu0 %v777
  %843 = vmatprep.subr.bf16.mxu0 0
  %844 = vmatpush1.bf16.msra.mxu0 %v778
  %845 = vmatprep.subr.bf16.mxu0 0
  %846 = vmatpush1.bf16.msra.mxu0 %v779
  %847 = vmatprep.subr.bf16.mxu0 0
  %848 = vmatpush1.bf16.msra.mxu0 %v780
  %849 = vmatprep.subr.bf16.mxu0 0
  %850 = vmatpush1.bf16.msra.mxu0 %v781
  %851 = vmatprep.subr.bf16.mxu0 0
  %852 = vmatpush1.bf16.msra.mxu0 %v782
  %853 = vmatprep.subr.bf16.mxu0 0
  %854 = vmatpush1.bf16.msra.mxu0 %v783
  %855 = vmatprep.subr.bf16.mxu0 0
  %856 = vmatpush1.bf16.msra.mxu0 %v784
  %857 = vmatprep.subr.bf16.mxu0 0
  %858 = vmatpush1.bf16.msra.mxu0 %v785
  %859 = vmatprep.subr.bf16.mxu0 0
  %860 = vmatpush1.bf16.msra.mxu0 %v786
  %861 = vmatprep.subr.bf16.mxu0 0
  %862 = vmatpush1.bf16.msra.mxu0 %v787
  %863 = vmatprep.subr.bf16.mxu0 0
  %864 = vmatpush1.bf16.msra.mxu0 %v788
  %865 = vmatprep.subr.bf16.mxu0 0
  %866 = vmatpush1.bf16.msra.mxu0 %v789
  %867 = vmatprep.subr.bf16.mxu0 0
  %868 = vmatpush1.bf16.msra.mxu0 %v790
  %869 = vmatprep.subr.bf16.mxu0 0
  %870 = vmatpush1.bf16.msra.mxu0 %v791
  %871 = vmatprep.subr.bf16.mxu0 0
  %872 = vmatpush1.bf16.msra.mxu0 %v792
  %873 = vmatprep.mubr.bf16.mxu0 %v580
  %874 = vmatmul.mubr.bf16.gmra.mrb[0].mxu0 %v129
  %v875 = vpop.f32.mrb[0].mxu0
  %v876 = vadd.f32 %v205, %v875
  %v877 = vpop.f32.mrb[0].mxu0
  %v878 = vpop.f32.mrb[0].mxu0
  %v879 = vadd.f32 %v205, %v878
  %v880 = vpop.f32.mrb[0].mxu0
  %881 = vmatprep.mubr.bf16.mxu0 %v582
  %882 = vmatmul.mubr.bf16.gmra.mrb[0].mxu0 %v133
  %v883 = vpop.f32.mrb[0].mxu0
  %v884 = vadd.f32 %v205, %v883
  %v885 = vpop.f32.mrb[0].mxu0
  %v886 = vpop.f32.mrb[0].mxu0
  %v887 = vadd.f32 %v205, %v886
  %v888 = vpop.f32.mrb[0].mxu0
  %889 = vdwg.mxu0
  %890 = vmatprep.subr.bf16.mxu0 0
  %891 = vmatpush1.bf16.msra.mxu0 %v793
  %892 = vmatprep.subr.bf16.mxu0 0
  %893 = vmatpush1.bf16.msra.mxu0 %v794
  %894 = vmatprep.subr.bf16.mxu0 0
  %895 = vmatpush1.bf16.msra.mxu0 %v795
  %896 = vmatprep.subr.bf16.mxu0 0
  %897 = vmatpush1.bf16.msra.mxu0 %v796
  %898 = vmatprep.subr.bf16.mxu0 0
  %899 = vmatpush1.bf16.msra.mxu0 %v797
  %900 = vmatprep.subr.bf16.mxu0 0
  %901 = vmatpush1.bf16.msra.mxu0 %v798
  %902 = vmatprep.subr.bf16.mxu0 0
  %903 = vmatpush1.bf16.msra.mxu0 %v799
  %904 = vmatprep.subr.bf16.mxu0 0
  %905 = vmatpush1.bf16.msra.mxu0 %v800
  %906 = vmatprep.subr.bf16.mxu0 0
  %907 = vmatpush1.bf16.msra.mxu0 %v801
  %908 = vmatprep.subr.bf16.mxu0 0
  %909 = vmatpush1.bf16.msra.mxu0 %v802
  %910 = vmatprep.subr.bf16.mxu0 0
  %911 = vmatpush1.bf16.msra.mxu0 %v803
  %912 = vmatprep.subr.bf16.mxu0 0
  %913 = vmatpush1.bf16.msra.mxu0 %v804
  %914 = vmatprep.subr.bf16.mxu0 0
  %915 = vmatpush1.bf16.msra.mxu0 %v805
  %916 = vmatprep.subr.bf16.mxu0 0
  %917 = vmatpush1.bf16.msra.mxu0 %v806
  %918 = vmatprep.subr.bf16.mxu0 0
  %919 = vmatpush1.bf16.msra.mxu0 %v807
  %920 = vmatprep.subr.bf16.mxu0 0
  %921 = vmatpush1.bf16.msra.mxu0 %v808
  %922 = vmatprep.mubr.bf16.mxu0 %v581
  %923 = vmatmul.mubr.bf16.gmra.mrb[0].mxu0 %v131
  %v924 = vpop.f32.mrb[0].mxu0
  %v925 = vadd.f32 %v876, %v924
  %v926 = vpop.f32.mrb[0].mxu0
  %v927 = vpop.f32.mrb[0].mxu0
  %v928 = vadd.f32 %v879, %v927
  %v929 = vpop.f32.mrb[0].mxu0
  %930 = vmatprep.mubr.bf16.mxu0 %v583
  %931 = vmatmul.mubr.bf16.gmra.mrb[0].mxu0 %v135
  %v932 = vpop.f32.mrb[0].mxu0
  %v933 = vadd.f32 %v884, %v932
  %v934 = vpop.f32.mrb[0].mxu0
  %v935 = vpop.f32.mrb[0].mxu0
  %v936 = vadd.f32 %v887, %v935
  %v937 = vpop.f32.mrb[0].mxu0
  %938 = vdwg.mxu0
  %v939 = vadd.f32 %v925, %v928
  %v940 = vadd.f32 %v939, %v933
  %v941 = vadd.f32 %v940, %v936
  %v942 = vrot.slane %v941, 4
  %v943 = vadd.f32 %v941, %v942
  %v944 = vrot.slane %v943, 2
  %v945 = vadd.f32 %v943, %v944
  %v946 = vrot.slane %v945, 1
  %v947 = vadd.f32 %v945, %v946
  %v948 = vadd.f32 %v506, %v947
  %v949 = vmul.f32 %v925, %v925
  %v950 = vmul.f32 %v928, %v928
  %v951 = vmul.f32 %v933, %v933
  %v952 = vmul.f32 %v936, %v936
  %v953 = vadd.f32 %v949, %v950
  %v954 = vadd.f32 %v953, %v951
  %v955 = vadd.f32 %v954, %v952
  %v956 = vrot.slane %v955, 4
  %v957 = vadd.f32 %v955, %v956
  %v958 = vrot.slane %v957, 2
  %v959 = vadd.f32 %v957, %v958
  %v960 = vrot.slane %v959, 1
  %v961 = vadd.f32 %v959, %v960
  %v962 = vadd.f32 %v520, %v961
  %v965 = vcombine.high %v26, %v26
  %v966 = vcombine.high %v32, %v32
  %v967 = vrot.slane %v26, 5
  %v968 = vrot.slane %v967, 4
  %v969 = vrot.slane %v965, 5
  %v970 = vsel %vm51, %v968, %v969
  %v971 = vrot.slane %v32, 5
  %v972 = vrot.slane %v971, 4
  %v973 = vrot.slane %v966, 5
  %v974 = vsel %vm51, %v972, %v973
  %v975 = vcombine.low %v25, %v26
  %v976 = vcombine.low %v31, %v32
  %v979 = vcombine.low %v91, %v970
  %v980 = vcombine.low %v95, %v974
  %v983 = vpack.c.bf16 %v975, %v97
  %v984 = vpack.c.bf16 %v979, %v105
  %v985 = vpack.c.bf16 %v976, %v99
  %v986 = vpack.c.bf16 %v980, %v107
  %s987 = scalar_lea.vmem %s1, 512
  %v988 = vld [vmem:[%s987] sm:$0xf]
  %v989 = vld [vmem:[%s987 + $0x4] sm:$0xf]
  %v990 = vld [vmem:[%s987 + $0x8] sm:$0xf]
  %v991 = vld [vmem:[%s987 + $0xc] sm:$0xf]
  %v992 = vld [vmem:[%s987 + $0x10] sm:$0xf]
  %v993 = vld [vmem:[%s987 + $0x14] sm:$0xf]
  %v994 = vld [vmem:[%s987 + $0x18] sm:$0xf]
  %v995 = vld [vmem:[%s987 + $0x1c] sm:$0xf]
  %v996 = vld [vmem:[%s987 + $0x20] sm:$0xf]
  %v997 = vld [vmem:[%s987 + $0x24] sm:$0xf]
  %v998 = vld [vmem:[%s987 + $0x28] sm:$0xf]
  %v999 = vld [vmem:[%s987 + $0x2c] sm:$0xf]
  %v1000 = vld [vmem:[%s987 + $0x30] sm:$0xf]
  %v1001 = vld [vmem:[%s987 + $0x34] sm:$0xf]
  %v1002 = vld [vmem:[%s987 + $0x38] sm:$0xf]
  %v1003 = vld [vmem:[%s987 + $0x3c] sm:$0xf]
  %v1004 = vld [vmem:[%s987 + $0x40] sm:$0xf]
  %v1005 = vld [vmem:[%s987 + $0x44] sm:$0xf]
  %v1006 = vld [vmem:[%s987 + $0x48] sm:$0xf]
  %v1007 = vld [vmem:[%s987 + $0x4c] sm:$0xf]
  %v1008 = vld [vmem:[%s987 + $0x50] sm:$0xf]
  %v1009 = vld [vmem:[%s987 + $0x54] sm:$0xf]
  %v1010 = vld [vmem:[%s987 + $0x58] sm:$0xf]
  %v1011 = vld [vmem:[%s987 + $0x5c] sm:$0xf]
  %v1012 = vld [vmem:[%s987 + $0x60] sm:$0xf]
  %v1013 = vld [vmem:[%s987 + $0x64] sm:$0xf]
  %v1014 = vld [vmem:[%s987 + $0x68] sm:$0xf]
  %v1015 = vld [vmem:[%s987 + $0x6c] sm:$0xf]
  %v1016 = vld [vmem:[%s987 + $0x70] sm:$0xf]
  %v1017 = vld [vmem:[%s987 + $0x74] sm:$0xf]
  %v1018 = vld [vmem:[%s987 + $0x78] sm:$0xf]
  %v1019 = vld [vmem:[%s987 + $0x7c] sm:$0xf]
  %v1020 = vld [vmem:[%s987 + $0x80] sm:$0xf]
  %v1021 = vld [vmem:[%s987 + $0x84] sm:$0xf]
  %v1022 = vld [vmem:[%s987 + $0x88] sm:$0xf]
  %v1023 = vld [vmem:[%s987 + $0x8c] sm:$0xf]
  %v1024 = vld [vmem:[%s987 + $0x90] sm:$0xf]
  %v1025 = vld [vmem:[%s987 + $0x94] sm:$0xf]
  %v1026 = vld [vmem:[%s987 + $0x98] sm:$0xf]
  %v1027 = vld [vmem:[%s987 + $0x9c] sm:$0xf]
  %v1028 = vld [vmem:[%s987 + $0xa0] sm:$0xf]
  %v1029 = vld [vmem:[%s987 + $0xa4] sm:$0xf]
  %v1030 = vld [vmem:[%s987 + $0xa8] sm:$0xf]
  %v1031 = vld [vmem:[%s987 + $0xac] sm:$0xf]
  %v1032 = vld [vmem:[%s987 + $0xb0] sm:$0xf]
  %v1033 = vld [vmem:[%s987 + $0xb4] sm:$0xf]
  %v1034 = vld [vmem:[%s987 + $0xb8] sm:$0xf]
  %v1035 = vld [vmem:[%s987 + $0xbc] sm:$0xf]
  %v1036 = vld [vmem:[%s987 + $0xc0] sm:$0xf]
  %v1037 = vld [vmem:[%s987 + $0xc4] sm:$0xf]
  %v1038 = vld [vmem:[%s987 + $0xc8] sm:$0xf]
  %v1039 = vld [vmem:[%s987 + $0xcc] sm:$0xf]
  %v1040 = vld [vmem:[%s987 + $0xd0] sm:$0xf]
  %v1041 = vld [vmem:[%s987 + $0xd4] sm:$0xf]
  %v1042 = vld [vmem:[%s987 + $0xd8] sm:$0xf]
  %v1043 = vld [vmem:[%s987 + $0xdc] sm:$0xf]
  %v1044 = vld [vmem:[%s987 + $0xe0] sm:$0xf]
  %v1045 = vld [vmem:[%s987 + $0xe4] sm:$0xf]
  %v1046 = vld [vmem:[%s987 + $0xe8] sm:$0xf]
  %v1047 = vld [vmem:[%s987 + $0xec] sm:$0xf]
  %v1048 = vld [vmem:[%s987 + $0xf0] sm:$0xf]
  %v1049 = vld [vmem:[%s987 + $0xf4] sm:$0xf]
  %v1050 = vld [vmem:[%s987 + $0xf8] sm:$0xf]
  %v1051 = vld [vmem:[%s987 + $0xfc] sm:$0xf]
  %v1116 = vunpack.c.l.b16 %v988
  %v1117 = vunpack.c.l.b16 %v989
  %v1118 = vunpack.c.l.b16 %v990
  %v1119 = vunpack.c.l.b16 %v991
  %v1120 = vunpack.c.l.b16 %v992
  %v1121 = vunpack.c.l.b16 %v993
  %v1122 = vunpack.c.l.b16 %v994
  %v1123 = vunpack.c.l.b16 %v995
  %v1124 = vunpack.c.l.b16 %v996
  %v1125 = vunpack.c.l.b16 %v997
  %v1126 = vunpack.c.l.b16 %v998
  %v1127 = vunpack.c.l.b16 %v999
  %v1128 = vunpack.c.l.b16 %v1000
  %v1129 = vunpack.c.l.b16 %v1001
  %v1130 = vunpack.c.l.b16 %v1002
  %v1131 = vunpack.c.l.b16 %v1003
  %v1132 = vunpack.c.l.b16 %v1004
  %v1133 = vunpack.c.l.b16 %v1005
  %v1134 = vunpack.c.l.b16 %v1006
  %v1135 = vunpack.c.l.b16 %v1007
  %v1136 = vunpack.c.l.b16 %v1008
  %v1137 = vunpack.c.l.b16 %v1009
  %v1138 = vunpack.c.l.b16 %v1010
  %v1139 = vunpack.c.l.b16 %v1011
  %v1140 = vunpack.c.l.b16 %v1012
  %v1141 = vunpack.c.l.b16 %v1013
  %v1142 = vunpack.c.l.b16 %v1014
  %v1143 = vunpack.c.l.b16 %v1015
  %v1144 = vunpack.c.l.b16 %v1016
  %v1145 = vunpack.c.l.b16 %v1017
  %v1146 = vunpack.c.l.b16 %v1018
  %v1147 = vunpack.c.l.b16 %v1019
  %v1148 = vunpack.c.l.b16 %v1020
  %v1149 = vunpack.c.l.b16 %v1021
  %v1150 = vunpack.c.l.b16 %v1022
  %v1151 = vunpack.c.l.b16 %v1023
  %v1152 = vunpack.c.l.b16 %v1024
  %v1153 = vunpack.c.l.b16 %v1025
  %v1154 = vunpack.c.l.b16 %v1026
  %v1155 = vunpack.c.l.b16 %v1027
  %v1156 = vunpack.c.l.b16 %v1028
  %v1157 = vunpack.c.l.b16 %v1029
  %v1158 = vunpack.c.l.b16 %v1030
  %v1159 = vunpack.c.l.b16 %v1031
  %v1160 = vunpack.c.l.b16 %v1032
  %v1161 = vunpack.c.l.b16 %v1033
  %v1162 = vunpack.c.l.b16 %v1034
  %v1163 = vunpack.c.l.b16 %v1035
  %v1164 = vunpack.c.l.b16 %v1036
  %v1165 = vunpack.c.l.b16 %v1037
  %v1166 = vunpack.c.l.b16 %v1038
  %v1167 = vunpack.c.l.b16 %v1039
  %v1168 = vunpack.c.l.b16 %v1040
  %v1169 = vunpack.c.l.b16 %v1041
  %v1170 = vunpack.c.l.b16 %v1042
  %v1171 = vunpack.c.l.b16 %v1043
  %v1172 = vunpack.c.l.b16 %v1044
  %v1173 = vunpack.c.l.b16 %v1045
  %v1174 = vunpack.c.l.b16 %v1046
  %v1175 = vunpack.c.l.b16 %v1047
  %v1176 = vunpack.c.l.b16 %v1048
  %v1177 = vunpack.c.l.b16 %v1049
  %v1178 = vunpack.c.l.b16 %v1050
  %v1179 = vunpack.c.l.b16 %v1051
  %v1180 = vpack.c.b16 %v1117, %v1116
  %v1181 = vpack.c.b16 %v1119, %v1118
  %v1182 = vpack.c.b16 %v1121, %v1120
  %v1183 = vpack.c.b16 %v1123, %v1122
  %v1184 = vpack.c.b16 %v1125, %v1124
  %v1185 = vpack.c.b16 %v1127, %v1126
  %v1186 = vpack.c.b16 %v1129, %v1128
  %v1187 = vpack.c.b16 %v1131, %v1130
  %v1188 = vpack.c.b16 %v1133, %v1132
  %v1189 = vpack.c.b16 %v1135, %v1134
  %v1190 = vpack.c.b16 %v1137, %v1136
  %v1191 = vpack.c.b16 %v1139, %v1138
  %v1192 = vpack.c.b16 %v1141, %v1140
  %v1193 = vpack.c.b16 %v1143, %v1142
  %v1194 = vpack.c.b16 %v1145, %v1144
  %v1195 = vpack.c.b16 %v1147, %v1146
  %v1196 = vpack.c.b16 %v1149, %v1148
  %v1197 = vpack.c.b16 %v1151, %v1150
  %v1198 = vpack.c.b16 %v1153, %v1152
  %v1199 = vpack.c.b16 %v1155, %v1154
  %v1200 = vpack.c.b16 %v1157, %v1156
  %v1201 = vpack.c.b16 %v1159, %v1158
  %v1202 = vpack.c.b16 %v1161, %v1160
  %v1203 = vpack.c.b16 %v1163, %v1162
  %v1204 = vpack.c.b16 %v1165, %v1164
  %v1205 = vpack.c.b16 %v1167, %v1166
  %v1206 = vpack.c.b16 %v1169, %v1168
  %v1207 = vpack.c.b16 %v1171, %v1170
  %v1208 = vpack.c.b16 %v1173, %v1172
  %v1209 = vpack.c.b16 %v1175, %v1174
  %v1210 = vpack.c.b16 %v1177, %v1176
  %v1211 = vpack.c.b16 %v1179, %v1178
  %1244 = vmatprep.subr.bf16.mxu0 0
  %1245 = vmatpush1.bf16.msra.mxu0 %v1180
  %1246 = vmatprep.subr.bf16.mxu0 0
  %1247 = vmatpush1.bf16.msra.mxu0 %v1181
  %1248 = vmatprep.subr.bf16.mxu0 0
  %1249 = vmatpush1.bf16.msra.mxu0 %v1182
  %1250 = vmatprep.subr.bf16.mxu0 0
  %1251 = vmatpush1.bf16.msra.mxu0 %v1183
  %1252 = vmatprep.subr.bf16.mxu0 0
  %1253 = vmatpush1.bf16.msra.mxu0 %v1184
  %1254 = vmatprep.subr.bf16.mxu0 0
  %1255 = vmatpush1.bf16.msra.mxu0 %v1185
  %1256 = vmatprep.subr.bf16.mxu0 0
  %1257 = vmatpush1.bf16.msra.mxu0 %v1186
  %1258 = vmatprep.subr.bf16.mxu0 0
  %1259 = vmatpush1.bf16.msra.mxu0 %v1187
  %1260 = vmatprep.subr.bf16.mxu0 0
  %1261 = vmatpush1.bf16.msra.mxu0 %v1188
  %1262 = vmatprep.subr.bf16.mxu0 0
  %1263 = vmatpush1.bf16.msra.mxu0 %v1189
  %1264 = vmatprep.subr.bf16.mxu0 0
  %1265 = vmatpush1.bf16.msra.mxu0 %v1190
  %1266 = vmatprep.subr.bf16.mxu0 0
  %1267 = vmatpush1.bf16.msra.mxu0 %v1191
  %1268 = vmatprep.subr.bf16.mxu0 0
  %1269 = vmatpush1.bf16.msra.mxu0 %v1192
  %1270 = vmatprep.subr.bf16.mxu0 0
  %1271 = vmatpush1.bf16.msra.mxu0 %v1193
  %1272 = vmatprep.subr.bf16.mxu0 0
  %1273 = vmatpush1.bf16.msra.mxu0 %v1194
  %1274 = vmatprep.subr.bf16.mxu0 0
  %1275 = vmatpush1.bf16.msra.mxu0 %v1195
  %1276 = vmatprep.mubr.bf16.mxu0 %v131
  %1277 = vmatmul.mubr.bf16.gmra.mrb[0].mxu0 %v130
  %v1278 = vpop.f32.mrb[0].mxu0
  %v1279 = vadd.f32 %v205, %v1278
  %v1280 = vpop.f32.mrb[0].mxu0
  %v1281 = vpop.f32.mrb[0].mxu0
  %v1282 = vadd.f32 %v205, %v1281
  %v1283 = vpop.f32.mrb[0].mxu0
  %1284 = vmatprep.mubr.bf16.mxu0 %v135
  %1285 = vmatmul.mubr.bf16.gmra.mrb[0].mxu0 %v134
  %v1286 = vpop.f32.mrb[0].mxu0
  %v1287 = vadd.f32 %v205, %v1286
  %v1288 = vpop.f32.mrb[0].mxu0
  %v1289 = vpop.f32.mrb[0].mxu0
  %v1290 = vadd.f32 %v205, %v1289
  %v1291 = vpop.f32.mrb[0].mxu0
  %1292 = vdwg.mxu0
  %1293 = vmatprep.subr.bf16.mxu0 0
  %1294 = vmatpush1.bf16.msra.mxu0 %v1196
  %1295 = vmatprep.subr.bf16.mxu0 0
  %1296 = vmatpush1.bf16.msra.mxu0 %v1197
  %1297 = vmatprep.subr.bf16.mxu0 0
  %1298 = vmatpush1.bf16.msra.mxu0 %v1198
  %1299 = vmatprep.subr.bf16.mxu0 0
  %1300 = vmatpush1.bf16.msra.mxu0 %v1199
  %1301 = vmatprep.subr.bf16.mxu0 0
  %1302 = vmatpush1.bf16.msra.mxu0 %v1200
  %1303 = vmatprep.subr.bf16.mxu0 0
  %1304 = vmatpush1.bf16.msra.mxu0 %v1201
  %1305 = vmatprep.subr.bf16.mxu0 0
  %1306 = vmatpush1.bf16.msra.mxu0 %v1202
  %1307 = vmatprep.subr.bf16.mxu0 0
  %1308 = vmatpush1.bf16.msra.mxu0 %v1203
  %1309 = vmatprep.subr.bf16.mxu0 0
  %1310 = vmatpush1.bf16.msra.mxu0 %v1204
  %1311 = vmatprep.subr.bf16.mxu0 0
  %1312 = vmatpush1.bf16.msra.mxu0 %v1205
  %1313 = vmatprep.subr.bf16.mxu0 0
  %1314 = vmatpush1.bf16.msra.mxu0 %v1206
  %1315 = vmatprep.subr.bf16.mxu0 0
  %1316 = vmatpush1.bf16.msra.mxu0 %v1207
  %1317 = vmatprep.subr.bf16.mxu0 0
  %1318 = vmatpush1.bf16.msra.mxu0 %v1208
  %1319 = vmatprep.subr.bf16.mxu0 0
  %1320 = vmatpush1.bf16.msra.mxu0 %v1209
  %1321 = vmatprep.subr.bf16.mxu0 0
  %1322 = vmatpush1.bf16.msra.mxu0 %v1210
  %1323 = vmatprep.subr.bf16.mxu0 0
  %1324 = vmatpush1.bf16.msra.mxu0 %v1211
  %1325 = vmatprep.mubr.bf16.mxu0 %v984
  %1326 = vmatmul.mubr.bf16.gmra.mrb[0].mxu0 %v983
  %v1327 = vpop.f32.mrb[0].mxu0
  %v1328 = vadd.f32 %v1279, %v1327
  %v1329 = vpop.f32.mrb[0].mxu0
  %v1330 = vpop.f32.mrb[0].mxu0
  %v1331 = vadd.f32 %v1282, %v1330
  %v1332 = vpop.f32.mrb[0].mxu0
  %1333 = vmatprep.mubr.bf16.mxu0 %v986
  %1334 = vmatmul.mubr.bf16.gmra.mrb[0].mxu0 %v985
  %v1335 = vpop.f32.mrb[0].mxu0
  %v1336 = vadd.f32 %v1287, %v1335
  %v1337 = vpop.f32.mrb[0].mxu0
  %v1338 = vpop.f32.mrb[0].mxu0
  %v1339 = vadd.f32 %v1290, %v1338
  %v1340 = vpop.f32.mrb[0].mxu0
  %1341 = vdwg.mxu0
  %v1342 = vadd.f32 %v1328, %v1331
  %v1343 = vadd.f32 %v1342, %v1336
  %v1344 = vadd.f32 %v1343, %v1339
  %v1345 = vrot.slane %v1344, 4
  %v1346 = vadd.f32 %v1344, %v1345
  %v1347 = vrot.slane %v1346, 2
  %v1348 = vadd.f32 %v1346, %v1347
  %v1349 = vrot.slane %v1348, 1
  %v1350 = vadd.f32 %v1348, %v1349
  %v1351 = vadd.f32 %v948, %v1350
  %v1352 = vmul.f32 %v1328, %v1328
  %v1353 = vmul.f32 %v1331, %v1331
  %v1354 = vmul.f32 %v1336, %v1336
  %v1355 = vmul.f32 %v1339, %v1339
  %v1356 = vadd.f32 %v1352, %v1353
  %v1357 = vadd.f32 %v1356, %v1354
  %v1358 = vadd.f32 %v1357, %v1355
  %v1359 = vrot.slane %v1358, 4
  %v1360 = vadd.f32 %v1358, %v1359
  %v1361 = vrot.slane %v1360, 2
  %v1362 = vadd.f32 %v1360, %v1361
  %v1363 = vrot.slane %v1362, 1
  %v1364 = vadd.f32 %v1362, %v1363
  %v1365 = vadd.f32 %v962, %v1364
  %v1366 = vrot.slane %v26, 6
  %v1367 = vrot.slane %v1366, 4
  %v1368 = vrot.slane %v965, 6
  %v1369 = vsel %vm523, %v1367, %v1368
  %v1370 = vrot.slane %v32, 6
  %v1371 = vrot.slane %v1370, 4
  %v1372 = vrot.slane %v966, 6
  %v1373 = vsel %vm523, %v1371, %v1372
  %v1374 = vcombine.low %v559, %v1369
  %v1375 = vcombine.low %v563, %v1373
  %v1378 = vpack.c.bf16 %v1374, %v565
  %v1379 = vpack.c.bf16 %v1375, %v567
  %s1380 = scalar_lea.vmem %s1, 768
  %v1381 = vld [vmem:[%s1380] sm:$0xf]
  %v1382 = vld [vmem:[%s1380 + $0x4] sm:$0xf]
  %v1383 = vld [vmem:[%s1380 + $0x8] sm:$0xf]
  %v1384 = vld [vmem:[%s1380 + $0xc] sm:$0xf]
  %v1385 = vld [vmem:[%s1380 + $0x10] sm:$0xf]
  %v1386 = vld [vmem:[%s1380 + $0x14] sm:$0xf]
  %v1387 = vld [vmem:[%s1380 + $0x18] sm:$0xf]
  %v1388 = vld [vmem:[%s1380 + $0x1c] sm:$0xf]
  %v1389 = vld [vmem:[%s1380 + $0x20] sm:$0xf]
  %v1390 = vld [vmem:[%s1380 + $0x24] sm:$0xf]
  %v1391 = vld [vmem:[%s1380 + $0x28] sm:$0xf]
  %v1392 = vld [vmem:[%s1380 + $0x2c] sm:$0xf]
  %v1393 = vld [vmem:[%s1380 + $0x30] sm:$0xf]
  %v1394 = vld [vmem:[%s1380 + $0x34] sm:$0xf]
  %v1395 = vld [vmem:[%s1380 + $0x38] sm:$0xf]
  %v1396 = vld [vmem:[%s1380 + $0x3c] sm:$0xf]
  %v1397 = vld [vmem:[%s1380 + $0x40] sm:$0xf]
  %v1398 = vld [vmem:[%s1380 + $0x44] sm:$0xf]
  %v1399 = vld [vmem:[%s1380 + $0x48] sm:$0xf]
  %v1400 = vld [vmem:[%s1380 + $0x4c] sm:$0xf]
  %v1401 = vld [vmem:[%s1380 + $0x50] sm:$0xf]
  %v1402 = vld [vmem:[%s1380 + $0x54] sm:$0xf]
  %v1403 = vld [vmem:[%s1380 + $0x58] sm:$0xf]
  %v1404 = vld [vmem:[%s1380 + $0x5c] sm:$0xf]
  %v1405 = vld [vmem:[%s1380 + $0x60] sm:$0xf]
  %v1406 = vld [vmem:[%s1380 + $0x64] sm:$0xf]
  %v1407 = vld [vmem:[%s1380 + $0x68] sm:$0xf]
  %v1408 = vld [vmem:[%s1380 + $0x6c] sm:$0xf]
  %v1409 = vld [vmem:[%s1380 + $0x70] sm:$0xf]
  %v1410 = vld [vmem:[%s1380 + $0x74] sm:$0xf]
  %v1411 = vld [vmem:[%s1380 + $0x78] sm:$0xf]
  %v1412 = vld [vmem:[%s1380 + $0x7c] sm:$0xf]
  %v1413 = vld [vmem:[%s1380 + $0x80] sm:$0xf]
  %v1414 = vld [vmem:[%s1380 + $0x84] sm:$0xf]
  %v1415 = vld [vmem:[%s1380 + $0x88] sm:$0xf]
  %v1416 = vld [vmem:[%s1380 + $0x8c] sm:$0xf]
  %v1417 = vld [vmem:[%s1380 + $0x90] sm:$0xf]
  %v1418 = vld [vmem:[%s1380 + $0x94] sm:$0xf]
  %v1419 = vld [vmem:[%s1380 + $0x98] sm:$0xf]
  %v1420 = vld [vmem:[%s1380 + $0x9c] sm:$0xf]
  %v1421 = vld [vmem:[%s1380 + $0xa0] sm:$0xf]
  %v1422 = vld [vmem:[%s1380 + $0xa4] sm:$0xf]
  %v1423 = vld [vmem:[%s1380 + $0xa8] sm:$0xf]
  %v1424 = vld [vmem:[%s1380 + $0xac] sm:$0xf]
  %v1425 = vld [vmem:[%s1380 + $0xb0] sm:$0xf]
  %v1426 = vld [vmem:[%s1380 + $0xb4] sm:$0xf]
  %v1427 = vld [vmem:[%s1380 + $0xb8] sm:$0xf]
  %v1428 = vld [vmem:[%s1380 + $0xbc] sm:$0xf]
  %v1429 = vld [vmem:[%s1380 + $0xc0] sm:$0xf]
  %v1430 = vld [vmem:[%s1380 + $0xc4] sm:$0xf]
  %v1431 = vld [vmem:[%s1380 + $0xc8] sm:$0xf]
  %v1432 = vld [vmem:[%s1380 + $0xcc] sm:$0xf]
  %v1433 = vld [vmem:[%s1380 + $0xd0] sm:$0xf]
  %v1434 = vld [vmem:[%s1380 + $0xd4] sm:$0xf]
  %v1435 = vld [vmem:[%s1380 + $0xd8] sm:$0xf]
  %v1436 = vld [vmem:[%s1380 + $0xdc] sm:$0xf]
  %v1437 = vld [vmem:[%s1380 + $0xe0] sm:$0xf]
  %v1438 = vld [vmem:[%s1380 + $0xe4] sm:$0xf]
  %v1439 = vld [vmem:[%s1380 + $0xe8] sm:$0xf]
  %v1440 = vld [vmem:[%s1380 + $0xec] sm:$0xf]
  %v1441 = vld [vmem:[%s1380 + $0xf0] sm:$0xf]
  %v1442 = vld [vmem:[%s1380 + $0xf4] sm:$0xf]
  %v1443 = vld [vmem:[%s1380 + $0xf8] sm:$0xf]
  %v1444 = vld [vmem:[%s1380 + $0xfc] sm:$0xf]
  %v1509 = vunpack.c.l.b16 %v1381
  %v1510 = vunpack.c.l.b16 %v1382
  %v1511 = vunpack.c.l.b16 %v1383
  %v1512 = vunpack.c.l.b16 %v1384
  %v1513 = vunpack.c.l.b16 %v1385
  %v1514 = vunpack.c.l.b16 %v1386
  %v1515 = vunpack.c.l.b16 %v1387
  %v1516 = vunpack.c.l.b16 %v1388
  %v1517 = vunpack.c.l.b16 %v1389
  %v1518 = vunpack.c.l.b16 %v1390
  %v1519 = vunpack.c.l.b16 %v1391
  %v1520 = vunpack.c.l.b16 %v1392
  %v1521 = vunpack.c.l.b16 %v1393
  %v1522 = vunpack.c.l.b16 %v1394
  %v1523 = vunpack.c.l.b16 %v1395
  %v1524 = vunpack.c.l.b16 %v1396
  %v1525 = vunpack.c.l.b16 %v1397
  %v1526 = vunpack.c.l.b16 %v1398
  %v1527 = vunpack.c.l.b16 %v1399
  %v1528 = vunpack.c.l.b16 %v1400
  %v1529 = vunpack.c.l.b16 %v1401
  %v1530 = vunpack.c.l.b16 %v1402
  %v1531 = vunpack.c.l.b16 %v1403
  %v1532 = vunpack.c.l.b16 %v1404
  %v1533 = vunpack.c.l.b16 %v1405
  %v1534 = vunpack.c.l.b16 %v1406
  %v1535 = vunpack.c.l.b16 %v1407
  %v1536 = vunpack.c.l.b16 %v1408
  %v1537 = vunpack.c.l.b16 %v1409
  %v1538 = vunpack.c.l.b16 %v1410
  %v1539 = vunpack.c.l.b16 %v1411
  %v1540 = vunpack.c.l.b16 %v1412
  %v1541 = vunpack.c.l.b16 %v1413
  %v1542 = vunpack.c.l.b16 %v1414
  %v1543 = vunpack.c.l.b16 %v1415
  %v1544 = vunpack.c.l.b16 %v1416
  %v1545 = vunpack.c.l.b16 %v1417
  %v1546 = vunpack.c.l.b16 %v1418
  %v1547 = vunpack.c.l.b16 %v1419
  %v1548 = vunpack.c.l.b16 %v1420
  %v1549 = vunpack.c.l.b16 %v1421
  %v1550 = vunpack.c.l.b16 %v1422
  %v1551 = vunpack.c.l.b16 %v1423
  %v1552 = vunpack.c.l.b16 %v1424
  %v1553 = vunpack.c.l.b16 %v1425
  %v1554 = vunpack.c.l.b16 %v1426
  %v1555 = vunpack.c.l.b16 %v1427
  %v1556 = vunpack.c.l.b16 %v1428
  %v1557 = vunpack.c.l.b16 %v1429
  %v1558 = vunpack.c.l.b16 %v1430
  %v1559 = vunpack.c.l.b16 %v1431
  %v1560 = vunpack.c.l.b16 %v1432
  %v1561 = vunpack.c.l.b16 %v1433
  %v1562 = vunpack.c.l.b16 %v1434
  %v1563 = vunpack.c.l.b16 %v1435
  %v1564 = vunpack.c.l.b16 %v1436
  %v1565 = vunpack.c.l.b16 %v1437
  %v1566 = vunpack.c.l.b16 %v1438
  %v1567 = vunpack.c.l.b16 %v1439
  %v1568 = vunpack.c.l.b16 %v1440
  %v1569 = vunpack.c.l.b16 %v1441
  %v1570 = vunpack.c.l.b16 %v1442
  %v1571 = vunpack.c.l.b16 %v1443
  %v1572 = vunpack.c.l.b16 %v1444
  %v1573 = vpack.c.b16 %v1510, %v1509
  %v1574 = vpack.c.b16 %v1512, %v1511
  %v1575 = vpack.c.b16 %v1514, %v1513
  %v1576 = vpack.c.b16 %v1516, %v1515
  %v1577 = vpack.c.b16 %v1518, %v1517
  %v1578 = vpack.c.b16 %v1520, %v1519
  %v1579 = vpack.c.b16 %v1522, %v1521
  %v1580 = vpack.c.b16 %v1524, %v1523
  %v1581 = vpack.c.b16 %v1526, %v1525
  %v1582 = vpack.c.b16 %v1528, %v1527
  %v1583 = vpack.c.b16 %v1530, %v1529
  %v1584 = vpack.c.b16 %v1532, %v1531
  %v1585 = vpack.c.b16 %v1534, %v1533
  %v1586 = vpack.c.b16 %v1536, %v1535
  %v1587 = vpack.c.b16 %v1538, %v1537
  %v1588 = vpack.c.b16 %v1540, %v1539
  %v1589 = vpack.c.b16 %v1542, %v1541
  %v1590 = vpack.c.b16 %v1544, %v1543
  %v1591 = vpack.c.b16 %v1546, %v1545
  %v1592 = vpack.c.b16 %v1548, %v1547
  %v1593 = vpack.c.b16 %v1550, %v1549
  %v1594 = vpack.c.b16 %v1552, %v1551
  %v1595 = vpack.c.b16 %v1554, %v1553
  %v1596 = vpack.c.b16 %v1556, %v1555
  %v1597 = vpack.c.b16 %v1558, %v1557
  %v1598 = vpack.c.b16 %v1560, %v1559
  %v1599 = vpack.c.b16 %v1562, %v1561
  %v1600 = vpack.c.b16 %v1564, %v1563
  %v1601 = vpack.c.b16 %v1566, %v1565
  %v1602 = vpack.c.b16 %v1568, %v1567
  %v1603 = vpack.c.b16 %v1570, %v1569
  %v1604 = vpack.c.b16 %v1572, %v1571
  %1637 = vmatprep.subr.bf16.mxu0 0
  %1638 = vmatpush1.bf16.msra.mxu0 %v1573
  %1639 = vmatprep.subr.bf16.mxu0 0
  %1640 = vmatpush1.bf16.msra.mxu0 %v1574
  %1641 = vmatprep.subr.bf16.mxu0 0
  %1642 = vmatpush1.bf16.msra.mxu0 %v1575
  %1643 = vmatprep.subr.bf16.mxu0 0
  %1644 = vmatpush1.bf16.msra.mxu0 %v1576
  %1645 = vmatprep.subr.bf16.mxu0 0
  %1646 = vmatpush1.bf16.msra.mxu0 %v1577
  %1647 = vmatprep.subr.bf16.mxu0 0
  %1648 = vmatpush1.bf16.msra.mxu0 %v1578
  %1649 = vmatprep.subr.bf16.mxu0 0
  %1650 = vmatpush1.bf16.msra.mxu0 %v1579
  %1651 = vmatprep.subr.bf16.mxu0 0
  %1652 = vmatpush1.bf16.msra.mxu0 %v1580
  %1653 = vmatprep.subr.bf16.mxu0 0
  %1654 = vmatpush1.bf16.msra.mxu0 %v1581
  %1655 = vmatprep.subr.bf16.mxu0 0
  %1656 = vmatpush1.bf16.msra.mxu0 %v1582
  %1657 = vmatprep.subr.bf16.mxu0 0
  %1658 = vmatpush1.bf16.msra.mxu0 %v1583
  %1659 = vmatprep.subr.bf16.mxu0 0
  %1660 = vmatpush1.bf16.msra.mxu0 %v1584
  %1661 = vmatprep.subr.bf16.mxu0 0
  %1662 = vmatpush1.bf16.msra.mxu0 %v1585
  %1663 = vmatprep.subr.bf16.mxu0 0
  %1664 = vmatpush1.bf16.msra.mxu0 %v1586
  %1665 = vmatprep.subr.bf16.mxu0 0
  %1666 = vmatpush1.bf16.msra.mxu0 %v1587
  %1667 = vmatprep.subr.bf16.mxu0 0
  %1668 = vmatpush1.bf16.msra.mxu0 %v1588
  %1669 = vmatprep.mubr.bf16.mxu0 %v581
  %1670 = vmatmul.mubr.bf16.gmra.mrb[0].mxu0 %v131
  %v1671 = vpop.f32.mrb[0].mxu0
  %v1672 = vadd.f32 %v205, %v1671
  %v1673 = vpop.f32.mrb[0].mxu0
  %v1674 = vpop.f32.mrb[0].mxu0
  %v1675 = vadd.f32 %v205, %v1674
  %v1676 = vpop.f32.mrb[0].mxu0
  %1677 = vmatprep.mubr.bf16.mxu0 %v583
  %1678 = vmatmul.mubr.bf16.gmra.mrb[0].mxu0 %v135
  %v1679 = vpop.f32.mrb[0].mxu0
  %v1680 = vadd.f32 %v205, %v1679
  %v1681 = vpop.f32.mrb[0].mxu0
  %v1682 = vpop.f32.mrb[0].mxu0
  %v1683 = vadd.f32 %v205, %v1682
  %v1684 = vpop.f32.mrb[0].mxu0
  %1685 = vdwg.mxu0
  %1686 = vmatprep.subr.bf16.mxu0 0
  %1687 = vmatpush1.bf16.msra.mxu0 %v1589
  %1688 = vmatprep.subr.bf16.mxu0 0
  %1689 = vmatpush1.bf16.msra.mxu0 %v1590
  %1690 = vmatprep.subr.bf16.mxu0 0
  %1691 = vmatpush1.bf16.msra.mxu0 %v1591
  %1692 = vmatprep.subr.bf16.mxu0 0
  %1693 = vmatpush1.bf16.msra.mxu0 %v1592
  %1694 = vmatprep.subr.bf16.mxu0 0
  %1695 = vmatpush1.bf16.msra.mxu0 %v1593
  %1696 = vmatprep.subr.bf16.mxu0 0
  %1697 = vmatpush1.bf16.msra.mxu0 %v1594
  %1698 = vmatprep.subr.bf16.mxu0 0
  %1699 = vmatpush1.bf16.msra.mxu0 %v1595
  %1700 = vmatprep.subr.bf16.mxu0 0
  %1701 = vmatpush1.bf16.msra.mxu0 %v1596
  %1702 = vmatprep.subr.bf16.mxu0 0
  %1703 = vmatpush1.bf16.msra.mxu0 %v1597
  %1704 = vmatprep.subr.bf16.mxu0 0
  %1705 = vmatpush1.bf16.msra.mxu0 %v1598
  %1706 = vmatprep.subr.bf16.mxu0 0
  %1707 = vmatpush1.bf16.msra.mxu0 %v1599
  %1708 = vmatprep.subr.bf16.mxu0 0
  %1709 = vmatpush1.bf16.msra.mxu0 %v1600
  %1710 = vmatprep.subr.bf16.mxu0 0
  %1711 = vmatpush1.bf16.msra.mxu0 %v1601
  %1712 = vmatprep.subr.bf16.mxu0 0
  %1713 = vmatpush1.bf16.msra.mxu0 %v1602
  %1714 = vmatprep.subr.bf16.mxu0 0
  %1715 = vmatpush1.bf16.msra.mxu0 %v1603
  %1716 = vmatprep.subr.bf16.mxu0 0
  %1717 = vmatpush1.bf16.msra.mxu0 %v1604
  %1718 = vmatprep.mubr.bf16.mxu0 %v1378
  %1719 = vmatmul.mubr.bf16.gmra.mrb[0].mxu0 %v984
  %v1720 = vpop.f32.mrb[0].mxu0
  %v1721 = vadd.f32 %v1672, %v1720
  %v1722 = vpop.f32.mrb[0].mxu0
  %v1723 = vpop.f32.mrb[0].mxu0
  %v1724 = vadd.f32 %v1675, %v1723
  %v1725 = vpop.f32.mrb[0].mxu0
  %1726 = vmatprep.mubr.bf16.mxu0 %v1379
  %1727 = vmatmul.mubr.bf16.gmra.mrb[0].mxu0 %v986
  %v1728 = vpop.f32.mrb[0].mxu0
  %v1729 = vadd.f32 %v1680, %v1728
  %v1730 = vpop.f32.mrb[0].mxu0
  %v1731 = vpop.f32.mrb[0].mxu0
  %v1732 = vadd.f32 %v1683, %v1731
  %v1733 = vpop.f32.mrb[0].mxu0
  %1734 = vdwg.mxu0
  %v1735 = vadd.f32 %v1721, %v1724
  %v1736 = vadd.f32 %v1735, %v1729
  %v1737 = vadd.f32 %v1736, %v1732
  %v1738 = vrot.slane %v1737, 4
  %v1739 = vadd.f32 %v1737, %v1738
  %v1740 = vrot.slane %v1739, 2
  %v1741 = vadd.f32 %v1739, %v1740
  %v1742 = vrot.slane %v1741, 1
  %v1743 = vadd.f32 %v1741, %v1742
  %v1744 = vadd.f32 %v1351, %v1743
  %v1745 = vmul.f32 %v1721, %v1721
  %v1746 = vmul.f32 %v1724, %v1724
  %v1747 = vmul.f32 %v1729, %v1729
  %v1748 = vmul.f32 %v1732, %v1732
  %v1749 = vadd.f32 %v1745, %v1746
  %v1750 = vadd.f32 %v1749, %v1747
  %v1751 = vadd.f32 %v1750, %v1748
  %v1752 = vrot.slane %v1751, 4
  %v1753 = vadd.f32 %v1751, %v1752
  %v1754 = vrot.slane %v1753, 2
  %v1755 = vadd.f32 %v1753, %v1754
  %v1756 = vrot.slane %v1755, 1
  %v1757 = vadd.f32 %v1755, %v1756
  %v1758 = vadd.f32 %v1365, %v1757
  %v1759 = vrcp.pop 128.0
  %v1760 = vmul.f32 %v1744, %v1759
  %v1761 = vmul.f32 %v1758, %v1759
  %v1762 = vmul.f32 %v1760, %v1760
  %v1763 = vsub.f32 %v1761, %v1762
  %v1764 = vadd.f32 %v1763, 0.8
  %v1765 = vrsqrt.pop %v1764
  %v1766 = vld [vmem:[%s3] sm:$0x1]
  %v1767 = vmul.f32 %v1765, %v1766
  %v1768 = vld [vmem:[%s4] sm:$0x1]
  %v1769 = vmul.f32 %v1760, %v1767
  %v1770 = vsub.f32 %v1768, %v1769
  %v1771 = vlaneseq
  %v1772 = vshrl.u32 %v1771, 7
  %v1773 = vsub.s32 0, %v1772
  %v1774 = vrot.slane %v1767, %v1773
  %v1775 = vmul.f32 %v483, %v1774
  %v1776 = vmul.f32 %v486, %v1774
  %v1777 = vmul.f32 %v491, %v1774
  %v1778 = vmul.f32 %v494, %v1774
  %v1780 = vlaneseq
  %v1781 = vshrl.u32 %v1780, 7
  %v1782 = vsub.s32 0, %v1781
  %v1783 = vrot.slane %v1770, %v1782
  %v1785 = vadd.f32 %v1775, %v1783
  %v1786 = vadd.f32 %v1776, %v1783
  %v1787 = vadd.f32 %v1777, %v1783
  %v1788 = vadd.f32 %v1778, %v1783
  %vm1789 = vcmp.gt.f32.partialorder %v1785, 0.0
  %vm1790 = vcmp.gt.f32.partialorder %v1786, 0.0
  %vm1791 = vcmp.gt.f32.partialorder %v1787, 0.0
  %vm1792 = vcmp.gt.f32.partialorder %v1788, 0.0
  %v1793 = vmul.f32 %v1785, 0.2
  %v1794 = vmul.f32 %v1786, 0.2
  %v1795 = vmul.f32 %v1787, 0.2
  %v1796 = vmul.f32 %v1788, 0.2
  %v1797 = vsel %vm1789, %v1785, %v1793
  %v1798 = vsel %vm1790, %v1786, %v1794
  %v1799 = vsel %vm1791, %v1787, %v1795
  %v1800 = vsel %vm1792, %v1788, %v1796
  %1801 = vst [vmem:[%s5] sm:$0xff] %v1797
  %1802 = vst [vmem:[%s5 + $0x8] sm:$0xff] %v1798
  %1803 = vst [vmem:[%s5 + $0x10] sm:$0xff] %v1799
  %1804 = vst [vmem:[%s5 + $0x18] sm:$0xff] %v1800
  %v1805 = vmul.f32 %v925, %v1774
  %v1806 = vmul.f32 %v928, %v1774
  %v1807 = vmul.f32 %v933, %v1774
  %v1808 = vmul.f32 %v936, %v1774
  %v1809 = vadd.f32 %v1805, %v1783
  %v1810 = vadd.f32 %v1806, %v1783
  %v1811 = vadd.f32 %v1807, %v1783
  %v1812 = vadd.f32 %v1808, %v1783
  %vm1813 = vcmp.gt.f32.partialorder %v1809, 0.0
  %vm1814 = vcmp.gt.f32.partialorder %v1810, 0.0
  %vm1815 = vcmp.gt.f32.partialorder %v1811, 0.0
  %vm1816 = vcmp.gt.f32.partialorder %v1812, 0.0
  %v1817 = vmul.f32 %v1809, 0.2
  %v1818 = vmul.f32 %v1810, 0.2
  %v1819 = vmul.f32 %v1811, 0.2
  %v1820 = vmul.f32 %v1812, 0.2
  %v1821 = vsel %vm1813, %v1809, %v1817
  %v1822 = vsel %vm1814, %v1810, %v1818
  %v1823 = vsel %vm1815, %v1811, %v1819
  %v1824 = vsel %vm1816, %v1812, %v1820
  %s1825 = scalar_lea.vmem %s5, 32
  %1826 = vst [vmem:[%s1825] sm:$0xff] %v1821
  %1827 = vst [vmem:[%s1825 + $0x8] sm:$0xff] %v1822
  %1828 = vst [vmem:[%s1825 + $0x10] sm:$0xff] %v1823
  %1829 = vst [vmem:[%s1825 + $0x18] sm:$0xff] %v1824
  %v1830 = vmul.f32 %v1328, %v1774
  %v1831 = vmul.f32 %v1331, %v1774
  %v1832 = vmul.f32 %v1336, %v1774
  %v1833 = vmul.f32 %v1339, %v1774
  %v1834 = vadd.f32 %v1830, %v1783
  %v1835 = vadd.f32 %v1831, %v1783
  %v1836 = vadd.f32 %v1832, %v1783
  %v1837 = vadd.f32 %v1833, %v1783
  %vm1838 = vcmp.gt.f32.partialorder %v1834, 0.0
  %vm1839 = vcmp.gt.f32.partialorder %v1835, 0.0
  %vm1840 = vcmp.gt.f32.partialorder %v1836, 0.0
  %vm1841 = vcmp.gt.f32.partialorder %v1837, 0.0
  %v1842 = vmul.f32 %v1834, 0.2
  %v1843 = vmul.f32 %v1835, 0.2
  %v1844 = vmul.f32 %v1836, 0.2
  %v1845 = vmul.f32 %v1837, 0.2
  %v1846 = vsel %vm1838, %v1834, %v1842
  %v1847 = vsel %vm1839, %v1835, %v1843
  %v1848 = vsel %vm1840, %v1836, %v1844
  %v1849 = vsel %vm1841, %v1837, %v1845
  %s1850 = scalar_lea.vmem %s5, 64
  %1851 = vst [vmem:[%s1850] sm:$0xff] %v1846
  %1852 = vst [vmem:[%s1850 + $0x8] sm:$0xff] %v1847
  %1853 = vst [vmem:[%s1850 + $0x10] sm:$0xff] %v1848
  %1854 = vst [vmem:[%s1850 + $0x18] sm:$0xff] %v1849
  %v1855 = vmul.f32 %v1721, %v1774
  %v1856 = vmul.f32 %v1724, %v1774
  %v1857 = vmul.f32 %v1729, %v1774
  %v1858 = vmul.f32 %v1732, %v1774
  %v1859 = vadd.f32 %v1855, %v1783
  %v1860 = vadd.f32 %v1856, %v1783
  %v1861 = vadd.f32 %v1857, %v1783
  %v1862 = vadd.f32 %v1858, %v1783
  %vm1863 = vcmp.gt.f32.partialorder %v1859, 0.0
  %vm1864 = vcmp.gt.f32.partialorder %v1860, 0.0
  %vm1865 = vcmp.gt.f32.partialorder %v1861, 0.0
  %vm1866 = vcmp.gt.f32.partialorder %v1862, 0.0
  %v1867 = vmul.f32 %v1859, 0.2
  %v1868 = vmul.f32 %v1860, 0.2
  %v1869 = vmul.f32 %v1861, 0.2
  %v1870 = vmul.f32 %v1862, 0.2
  %v1871 = vsel %vm1863, %v1859, %v1867
  %v1872 = vsel %vm1864, %v1860, %v1868
  %v1873 = vsel %vm1865, %v1861, %v1869
  %v1874 = vsel %vm1866, %v1862, %v1870
  %s1875 = scalar_lea.vmem %s5, 96
  %1876 = vst [vmem:[%s1875] sm:$0xff] %v1871
  %1877 = vst [vmem:[%s1875 + $0x8] sm:$0xff] %v1872
  %1878 = vst [vmem:[%s1875 + $0x10] sm:$0xff] %v1873
  %1879 = vst [vmem:[%s1875 + $0x18] sm:$0xff] %v1874
  // Predicated region
  $region22: #{generator_forward.4} parent=0 // pred_check
    _
  $region23: #{generator_forward.4} parent=0 // pred_check_branch
    %1881 = sbr.rel (0) target = $region25
  $region24: #{generator_forward.4} parent=0 // pred_region
    _
  $region25: #{generator_forward.4} parent=0 // pred_fallthru
    _
  // Predicated region
  $region26: #{generator_forward.4} parent=0 // pred_check
    _
  $region27: #{generator_forward.4} parent=0 // pred_check_branch
    %1883 = sbr.rel (0) target = $region29
  $region28: #{generator_forward.4} parent=0 // pred_region
    _
  $region29: #{generator_forward.4} parent=0 // pred_fallthru
    _

// kernel: generator_forward.5
$region0: #{generator_forward.5}
  #allocation0 [shape = 'u32[]', space=smem, size = 0x4, offset = 0x4, fixed_abs, tag = 'smem constant byte address 0x4 - core index']
  #allocation1 [shape = 'u32[144,128]{1,0:T(1,128)}', space=vmem, size = 0x12000, scoped, tag = 'internal scratch']
  #allocation2 [shape = 'f32[8,10,10,128]{3,2,1,0:T(8,128)}', space=vmem, size = 0xa0000, scoped, tag = 'scratch operand']
  %s0 = inlined_call_operand.vmem [shape: f32[2,10,10,128], index: 0, kind: input, shape index: {}]
  %s1 = inlined_call_operand.vmem [shape: bf16[4,512,64], index: 1, kind: input, shape index: {}]
  %s2 = inlined_call_operand.vmem [shape: f32[1,64], index: 2, kind: input, shape index: {}]
  %s3 = inlined_call_operand.vmem [shape: f32[1,64], index: 3, kind: input, shape index: {}]
  %s4 = inlined_call_operand.vmem [shape: f32[1,64], index: 4, kind: input, shape index: {}]
  %s5 = inlined_call_operand.vmem [shape: bf16[1152,128], index: 5, kind: input, shape index: {}]
  %s6 = inlined_call_operand.vmem [shape: f32[1,128], index: 6, kind: input, shape index: {}]
  %s7 = inlined_call_operand.vmem [shape: f32[4,128,128], index: 7, kind: output, shape index: {}]
  %s8 = sld [smem:[#allocation0]]
  $region38: #{generator_forward.5} parent=0
    _
  %s10 = ssub.s32 1, %s8
  %s11 = scalar_select 0, %s10, %s8
  // Predicated region
  $region2: #{generator_forward.5} parent=0 // pred_check
    _
  $region3: #{generator_forward.5} parent=0 // pred_check_branch
    %13 = sbr.rel (0) target = $region5
  $region4: #{generator_forward.5} parent=0 // pred_region
    _
  $region5: #{generator_forward.5} parent=0 // pred_fallthru
    _
  // Predicated region
  $region6: #{generator_forward.5} parent=0 // pred_check
    _
  $region7: #{generator_forward.5} parent=0 // pred_check_branch
    %15 = sbr.rel (0) target = $region9
  $region8: #{generator_forward.5} parent=0 // pred_region
    _
  $region9: #{generator_forward.5} parent=0 // pred_fallthru
    _
  // Predicated region
  $region10: #{generator_forward.5} parent=0 // pred_check
    _
  $region11: #{generator_forward.5} parent=0 // pred_check_branch
    %17 = sbr.rel (0) target = $region13
  $region12: #{generator_forward.5} parent=0 // pred_region
    _
  $region13: #{generator_forward.5} parent=0 // pred_fallthru
    _
  // Predicated region
  $region14: #{generator_forward.5} parent=0 // pred_check
    _
  $region15: #{generator_forward.5} parent=0 // pred_check_branch
    %19 = sbr.rel (0) target = $region17
  $region16: #{generator_forward.5} parent=0 // pred_region
    _
  $region17: #{generator_forward.5} parent=0 // pred_fallthru
    _
  // Predicated region
  $region18: #{generator_forward.5} parent=0 // pred_check
    _
  $region19: #{generator_forward.5} parent=0 // pred_check_branch
    %21 = sbr.rel (0) target = $region21
  $region20: #{generator_forward.5} parent=0 // pred_region
    _
  $region21: #{generator_forward.5} parent=0 // pred_fallthru
    _
  // Predicated region
  $region22: #{generator_forward.5} parent=0 // pred_check
    _
  $region23: #{generator_forward.5} parent=0 // pred_check_branch
    %23 = sbr.rel (0) target = $region25
  $region24: #{generator_forward.5} parent=0 // pred_region
    _
  $region25: #{generator_forward.5} parent=0 // pred_fallthru
    _
  // Predicated region
  $region26: #{generator_forward.5} parent=0 // pred_check
    _
  $region27: #{generator_forward.5} parent=0 // pred_check_branch
    %25 = sbr.rel (0) target = $region29
  $region28: #{generator_forward.5} parent=0 // pred_region
    _
  $region29: #{generator_forward.5} parent=0 // pred_fallthru
    _
  %v27 = vld [vmem:[%s0] sm:$0xff]
  %v28 = vld [vmem:[%s0 + $0x8] sm:$0x3]
  %v29 = vld [vmem:[%s0 + $0x10] sm:$0xff]
  %v30 = vld [vmem:[%s0 + $0x18] sm:$0x3]
  %v31 = vld [vmem:[%s0 + $0x20] sm:$0xff]
  %v32 = vld [vmem:[%s0 + $0x28] sm:$0x3]
  %v33 = vld [vmem:[%s0 + $0x30] sm:$0xff]
  %v34 = vld [vmem:[%s0 + $0x38] sm:$0x3]
  %v35 = vld [vmem:[%s0 + $0x40] sm:$0xff]
  %v36 = vld [vmem:[%s0 + $0x48] sm:$0x3]
  %v37 = vld [vmem:[%s0 + $0x50] sm:$0xff]
  %v38 = vld [vmem:[%s0 + $0x58] sm:$0x3]
  %v39 = vld [vmem:[%s0 + $0x60] sm:$0xff]
  %v40 = vld [vmem:[%s0 + $0x68] sm:$0x3]
  %v41 = vld [vmem:[%s0 + $0x70] sm:$0xff]
  %v42 = vld [vmem:[%s0 + $0x78] sm:$0x3]
  %v43 = vld [vmem:[%s0 + $0x80] sm:$0xff]
  %v44 = vld [vmem:[%s0 + $0x88] sm:$0x3]
  %v45 = vld [vmem:[%s0 + $0x90] sm:$0xff]
  %v46 = vld [vmem:[%s0 + $0x98] sm:$0x3]
  %v47 = vld [vmem:[%s0 + $0xa0] sm:$0xff]
  %v48 = vld [vmem:[%s0 + $0xa8] sm:$0x3]
  %v49 = vld [vmem:[%s0 + $0xb0] sm:$0xff]
  %v50 = vld [vmem:[%s0 + $0xb8] sm:$0x3]
  %v51 = vld [vmem:[%s0 + $0xc0] sm:$0xff]
  %v52 = vld [vmem:[%s0 + $0xc8] sm:$0x3]
  %v53 = vld [vmem:[%s0 + $0xd0] sm:$0xff]
  %v54 = vld [vmem:[%s0 + $0xd8] sm:$0x3]
  %v55 = vld [vmem:[%s0 + $0xe0] sm:$0xff]
  %v56 = vld [vmem:[%s0 + $0xe8] sm:$0x3]
  %v57 = vld [vmem:[%s0 + $0xf0] sm:$0xff]
  %v58 = vld [vmem:[%s0 + $0xf8] sm:$0x3]
  %v59 = vld [vmem:[%s0 + $0x100] sm:$0xff]
  %v60 = vld [vmem:[%s0 + $0x108] sm:$0x3]
  %v61 = vld [vmem:[%s0 + $0x110] sm:$0xff]
  %v62 = vld [vmem:[%s0 + $0x118] sm:$0x3]
  %v63 = vld [vmem:[%s0 + $0x120] sm:$0xff]
  %v64 = vld [vmem:[%s0 + $0x128] sm:$0x3]
  %v65 = vld [vmem:[%s0 + $0x130] sm:$0xff]
  %v66 = vld [vmem:[%s0 + $0x138] sm:$0x3]
  %vm99 = vcmask 1046528
  %v100 = vrot.slane %v27, 1
  %v101 = vrot.slane %v28, 1
  %v102 = vsel %vm99, %v100, %v101
  %v103 = vrot.slane %v29, 1
  %v104 = vrot.slane %v30, 1
  %v105 = vsel %vm99, %v103, %v104
  %v106 = vrot.slane %v31, 1
  %v107 = vrot.slane %v32, 1
  %v108 = vsel %vm99, %v106, %v107
  %v109 = vrot.slane %v33, 1
  %v110 = vrot.slane %v34, 1
  %v111 = vsel %vm99, %v109, %v110
  %v112 = vrot.slane %v35, 1
  %v113 = vrot.slane %v36, 1
  %v114 = vsel %vm99, %v112, %v113
  %v115 = vrot.slane %v37, 1
  %v116 = vrot.slane %v38, 1
  %v117 = vsel %vm99, %v115, %v116
  %v118 = vrot.slane %v39, 1
  %v119 = vrot.slane %v40, 1
  %v120 = vsel %vm99, %v118, %v119
  %v121 = vrot.slane %v41, 1
  %v122 = vrot.slane %v42, 1
  %v123 = vsel %vm99, %v121, %v122
  %v124 = vrot.slane %v47, 1
  %v125 = vrot.slane %v48, 1
  %v126 = vsel %vm99, %v124, %v125
  %v127 = vrot.slane %v49, 1
  %v128 = vrot.slane %v50, 1
  %v129 = vsel %vm99, %v127, %v128
  %v130 = vrot.slane %v51, 1
  %v131 = vrot.slane %v52, 1
  %v132 = vsel %vm99, %v130, %v131
  %v133 = vrot.slane %v53, 1
  %v134 = vrot.slane %v54, 1
  %v135 = vsel %vm99, %v133, %v134
  %v136 = vrot.slane %v55, 1
  %v137 = vrot.slane %v56, 1
  %v138 = vsel %vm99, %v136, %v137
  %v139 = vrot.slane %v57, 1
  %v140 = vrot.slane %v58, 1
  %v141 = vsel %vm99, %v139, %v140
  %v142 = vrot.slane %v59, 1
  %v143 = vrot.slane %v60, 1
  %v144 = vsel %vm99, %v142, %v143
  %v145 = vrot.slane %v61, 1
  %v146 = vrot.slane %v62, 1
  %v147 = vsel %vm99, %v145, %v146
  %v168 = vrot.slane %v43, 1
  %v169 = vrot.slane %v44, 1
  %v170 = vsel %vm99, %v168, %v169
  %v171 = vrot.slane %v63, 1
  %v172 = vrot.slane %v64, 1
  %v173 = vsel %vm99, %v171, %v172
  %v176 = vpack.c.bf16 %v29, %v27
  %v177 = vpack.c.bf16 %v105, %v102
  %v178 = vpack.c.bf16 %v31, %v29
  %v179 = vpack.c.bf16 %v108, %v105
  %v180 = vpack.c.bf16 %v33, %v31
  %v181 = vpack.c.bf16 %v111, %v108
  %v182 = vpack.c.bf16 %v35, %v33
  %v183 = vpack.c.bf16 %v114, %v111
  %v184 = vpack.c.bf16 %v37, %v35
  %v185 = vpack.c.bf16 %v117, %v114
  %v186 = vpack.c.bf16 %v39, %v37
  %v187 = vpack.c.bf16 %v120, %v117
  %v188 = vpack.c.bf16 %v41, %v39
  %v189 = vpack.c.bf16 %v123, %v120
  %v190 = vpack.c.bf16 %v43, %v41
  %v191 = vpack.c.bf16 %v170, %v123
  %v192 = vpack.c.bf16 %v49, %v47
  %v193 = vpack.c.bf16 %v129, %v126
  %v194 = vpack.c.bf16 %v51, %v49
  %v195 = vpack.c.bf16 %v132, %v129
  %v196 = vpack.c.bf16 %v53, %v51
  %v197 = vpack.c.bf16 %v135, %v132
  %v198 = vpack.c.bf16 %v55, %v53
  %v199 = vpack.c.bf16 %v138, %v135
  %v200 = vpack.c.bf16 %v57, %v55
  %v201 = vpack.c.bf16 %v141, %v138
  %v202 = vpack.c.bf16 %v59, %v57
  %v203 = vpack.c.bf16 %v144, %v141
  %v204 = vpack.c.bf16 %v61, %v59
  %v205 = vpack.c.bf16 %v147, %v144
  %v206 = vpack.c.bf16 %v63, %v61
  %v207 = vpack.c.bf16 %v173, %v147
  %v208 = vld [vmem:[%s1] sm:$0xf]
  %v209 = vld [vmem:[%s1 + $0x4] sm:$0xf]
  %v210 = vld [vmem:[%s1 + $0x8] sm:$0xf]
  %v211 = vld [vmem:[%s1 + $0xc] sm:$0xf]
  %v212 = vld [vmem:[%s1 + $0x10] sm:$0xf]
  %v213 = vld [vmem:[%s1 + $0x14] sm:$0xf]
  %v214 = vld [vmem:[%s1 + $0x18] sm:$0xf]
  %v215 = vld [vmem:[%s1 + $0x1c] sm:$0xf]
  %v216 = vld [vmem:[%s1 + $0x20] sm:$0xf]
  %v217 = vld [vmem:[%s1 + $0x24] sm:$0xf]
  %v218 = vld [vmem:[%s1 + $0x28] sm:$0xf]
  %v219 = vld [vmem:[%s1 + $0x2c] sm:$0xf]
  %v220 = vld [vmem:[%s1 + $0x30] sm:$0xf]
  %v221 = vld [vmem:[%s1 + $0x34] sm:$0xf]
  %v222 = vld [vmem:[%s1 + $0x38] sm:$0xf]
  %v223 = vld [vmem:[%s1 + $0x3c] sm:$0xf]
  %v224 = vld [vmem:[%s1 + $0x40] sm:$0xf]
  %v225 = vld [vmem:[%s1 + $0x44] sm:$0xf]
  %v226 = vld [vmem:[%s1 + $0x48] sm:$0xf]
  %v227 = vld [vmem:[%s1 + $0x4c] sm:$0xf]
  %v228 = vld [vmem:[%s1 + $0x50] sm:$0xf]
  %v229 = vld [vmem:[%s1 + $0x54] sm:$0xf]
  %v230 = vld [vmem:[%s1 + $0x58] sm:$0xf]
  %v231 = vld [vmem:[%s1 + $0x5c] sm:$0xf]
  %v232 = vld [vmem:[%s1 + $0x60] sm:$0xf]
  %v233 = vld [vmem:[%s1 + $0x64] sm:$0xf]
  %v234 = vld [vmem:[%s1 + $0x68] sm:$0xf]
  %v235 = vld [vmem:[%s1 + $0x6c] sm:$0xf]
  %v236 = vld [vmem:[%s1 + $0x70] sm:$0xf]
  %v237 = vld [vmem:[%s1 + $0x74] sm:$0xf]
  %v238 = vld [vmem:[%s1 + $0x78] sm:$0xf]
  %v239 = vld [vmem:[%s1 + $0x7c] sm:$0xf]
  %v240 = vld [vmem:[%s1 + $0x80] sm:$0xf]
  %v241 = vld [vmem:[%s1 + $0x84] sm:$0xf]
  %v242 = vld [vmem:[%s1 + $0x88] sm:$0xf]
  %v243 = vld [vmem:[%s1 + $0x8c] sm:$0xf]
  %v244 = vld [vmem:[%s1 + $0x90] sm:$0xf]
  %v245 = vld [vmem:[%s1 + $0x94] sm:$0xf]
  %v246 = vld [vmem:[%s1 + $0x98] sm:$0xf]
  %v247 = vld [vmem:[%s1 + $0x9c] sm:$0xf]
  %v248 = vld [vmem:[%s1 + $0xa0] sm:$0xf]
  %v249 = vld [vmem:[%s1 + $0xa4] sm:$0xf]
  %v250 = vld [vmem:[%s1 + $0xa8] sm:$0xf]
  %v251 = vld [vmem:[%s1 + $0xac] sm:$0xf]
  %v252 = vld [vmem:[%s1 + $0xb0] sm:$0xf]
  %v253 = vld [vmem:[%s1 + $0xb4] sm:$0xf]
  %v254 = vld [vmem:[%s1 + $0xb8] sm:$0xf]
  %v255 = vld [vmem:[%s1 + $0xbc] sm:$0xf]
  %v256 = vld [vmem:[%s1 + $0xc0] sm:$0xf]
  %v257 = vld [vmem:[%s1 + $0xc4] sm:$0xf]
  %v258 = vld [vmem:[%s1 + $0xc8] sm:$0xf]
  %v259 = vld [vmem:[%s1 + $0xcc] sm:$0xf]
  %v260 = vld [vmem:[%s1 + $0xd0] sm:$0xf]
  %v261 = vld [vmem:[%s1 + $0xd4] sm:$0xf]
  %v262 = vld [vmem:[%s1 + $0xd8] sm:$0xf]
  %v263 = vld [vmem:[%s1 + $0xdc] sm:$0xf]
  %v264 = vld [vmem:[%s1 + $0xe0] sm:$0xf]
  %v265 = vld [vmem:[%s1 + $0xe4] sm:$0xf]
  %v266 = vld [vmem:[%s1 + $0xe8] sm:$0xf]
  %v267 = vld [vmem:[%s1 + $0xec] sm:$0xf]
  %v268 = vld [vmem:[%s1 + $0xf0] sm:$0xf]
  %v269 = vld [vmem:[%s1 + $0xf4] sm:$0xf]
  %v270 = vld [vmem:[%s1 + $0xf8] sm:$0xf]
  %v271 = vld [vmem:[%s1 + $0xfc] sm:$0xf]
  %v272 = vld [vmem:[%s2] sm:$0x1]
  %v274 = vlaneseq
  %v275 = vshrl.u32 %v274, 7
  %v276 = vsub.s32 0, %v275
  %v277 = vrot.slane %v272, %v276
  %v343 = vunpack.c.l.b16 %v208
  %v344 = vunpack.c.l.b16 %v209
  %v345 = vunpack.c.l.b16 %v210
  %v346 = vunpack.c.l.b16 %v211
  %v347 = vunpack.c.l.b16 %v212
  %v348 = vunpack.c.l.b16 %v213
  %v349 = vunpack.c.l.b16 %v214
  %v350 = vunpack.c.l.b16 %v215
  %v351 = vunpack.c.l.b16 %v216
  %v352 = vunpack.c.l.b16 %v217
  %v353 = vunpack.c.l.b16 %v218
  %v354 = vunpack.c.l.b16 %v219
  %v355 = vunpack.c.l.b16 %v220
  %v356 = vunpack.c.l.b16 %v221
  %v357 = vunpack.c.l.b16 %v222
  %v358 = vunpack.c.l.b16 %v223
  %v359 = vunpack.c.l.b16 %v224
  %v360 = vunpack.c.l.b16 %v225
  %v361 = vunpack.c.l.b16 %v226
  %v362 = vunpack.c.l.b16 %v227
  %v363 = vunpack.c.l.b16 %v228
  %v364 = vunpack.c.l.b16 %v229
  %v365 = vunpack.c.l.b16 %v230
  %v366 = vunpack.c.l.b16 %v231
  %v367 = vunpack.c.l.b16 %v232
  %v368 = vunpack.c.l.b16 %v233
  %v369 = vunpack.c.l.b16 %v234
  %v370 = vunpack.c.l.b16 %v235
  %v371 = vunpack.c.l.b16 %v236
  %v372 = vunpack.c.l.b16 %v237
  %v373 = vunpack.c.l.b16 %v238
  %v374 = vunpack.c.l.b16 %v239
  %v375 = vunpack.c.l.b16 %v240
  %v376 = vunpack.c.l.b16 %v241
  %v377 = vunpack.c.l.b16 %v242
  %v378 = vunpack.c.l.b16 %v243
  %v379 = vunpack.c.l.b16 %v244
  %v380 = vunpack.c.l.b16 %v245
  %v381 = vunpack.c.l.b16 %v246
  %v382 = vunpack.c.l.b16 %v247
  %v383 = vunpack.c.l.b16 %v248
  %v384 = vunpack.c.l.b16 %v249
  %v385 = vunpack.c.l.b16 %v250
  %v386 = vunpack.c.l.b16 %v251
  %v387 = vunpack.c.l.b16 %v252
  %v388 = vunpack.c.l.b16 %v253
  %v389 = vunpack.c.l.b16 %v254
  %v390 = vunpack.c.l.b16 %v255
  %v391 = vunpack.c.l.b16 %v256
  %v392 = vunpack.c.l.b16 %v257
  %v393 = vunpack.c.l.b16 %v258
  %v394 = vunpack.c.l.b16 %v259
  %v395 = vunpack.c.l.b16 %v260
  %v396 = vunpack.c.l.b16 %v261
  %v397 = vunpack.c.l.b16 %v262
  %v398 = vunpack.c.l.b16 %v263
  %v399 = vunpack.c.l.b16 %v264
  %v400 = vunpack.c.l.b16 %v265
  %v401 = vunpack.c.l.b16 %v266
  %v402 = vunpack.c.l.b16 %v267
  %v403 = vunpack.c.l.b16 %v268
  %v404 = vunpack.c.l.b16 %v269
  %v405 = vunpack.c.l.b16 %v270
  %v406 = vunpack.c.l.b16 %v271
  %v407 = vpack.c.b16 %v344, %v343
  %v408 = vpack.c.b16 %v346, %v345
  %v409 = vpack.c.b16 %v348, %v347
  %v410 = vpack.c.b16 %v350, %v349
  %v411 = vpack.c.b16 %v352, %v351
  %v412 = vpack.c.b16 %v354, %v353
  %v413 = vpack.c.b16 %v356, %v355
  %v414 = vpack.c.b16 %v358, %v357
  %v415 = vpack.c.b16 %v360, %v359
  %v416 = vpack.c.b16 %v362, %v361
  %v417 = vpack.c.b16 %v364, %v363
  %v418 = vpack.c.b16 %v366, %v365
  %v419 = vpack.c.b16 %v368, %v367
  %v420 = vpack.c.b16 %v370, %v369
  %v421 = vpack.c.b16 %v372, %v371
  %v422 = vpack.c.b16 %v374, %v373
  %v423 = vpack.c.b16 %v376, %v375
  %v424 = vpack.c.b16 %v378, %v377
  %v425 = vpack.c.b16 %v380, %v379
  %v426 = vpack.c.b16 %v382, %v381
  %v427 = vpack.c.b16 %v384, %v383
  %v428 = vpack.c.b16 %v386, %v385
  %v429 = vpack.c.b16 %v388, %v387
  %v430 = vpack.c.b16 %v390, %v389
  %v431 = vpack.c.b16 %v392, %v391
  %v432 = vpack.c.b16 %v394, %v393
  %v433 = vpack.c.b16 %v396, %v395
  %v434 = vpack.c.b16 %v398, %v397
  %v435 = vpack.c.b16 %v400, %v399
  %v436 = vpack.c.b16 %v402, %v401
  %v437 = vpack.c.b16 %v404, %v403
  %v438 = vpack.c.b16 %v406, %v405
  %471 = vmatprep.subr.bf16.mxu0 0
  %472 = vmatpush1.bf16.msra.mxu0 %v407
  %473 = vmatprep.subr.bf16.mxu0 0
  %474 = vmatpush1.bf16.msra.mxu0 %v408
  %475 = vmatprep.subr.bf16.mxu0 0
  %476 = vmatpush1.bf16.msra.mxu0 %v409
  %477 = vmatprep.subr.bf16.mxu0 0
  %478 = vmatpush1.bf16.msra.mxu0 %v410
  %479 = vmatprep.subr.bf16.mxu0 0
  %480 = vmatpush1.bf16.msra.mxu0 %v411
  %481 = vmatprep.subr.bf16.mxu0 0
  %482 = vmatpush1.bf16.msra.mxu0 %v412
  %483 = vmatprep.subr.bf16.mxu0 0
  %484 = vmatpush1.bf16.msra.mxu0 %v413
  %485 = vmatprep.subr.bf16.mxu0 0
  %486 = vmatpush1.bf16.msra.mxu0 %v414
  %487 = vmatprep.subr.bf16.mxu0 0
  %488 = vmatpush1.bf16.msra.mxu0 %v415
  %489 = vmatprep.subr.bf16.mxu0 0
  %490 = vmatpush1.bf16.msra.mxu0 %v416
  %491 = vmatprep.subr.bf16.mxu0 0
  %492 = vmatpush1.bf16.msra.mxu0 %v417
  %493 = vmatprep.subr.bf16.mxu0 0
  %494 = vmatpush1.bf16.msra.mxu0 %v418
  %495 = vmatprep.subr.bf16.mxu0 0
  %496 = vmatpush1.bf16.msra.mxu0 %v419
  %497 = vmatprep.subr.bf16.mxu0 0
  %498 = vmatpush1.bf16.msra.mxu0 %v420
  %499 = vmatprep.subr.bf16.mxu0 0
  %500 = vmatpush1.bf16.msra.mxu0 %v421
  %501 = vmatprep.subr.bf16.mxu0 0
  %502 = vmatpush1.bf16.msra.mxu0 %v422
  %503 = vmatprep.mubr.bf16.mxu0 %v177
  %504 = vmatmul.mubr.bf16.gmra.mrb[0].mxu0 %v176
  %v505 = vpop.f32.mrb[0].mxu0
  %v506 = vadd.f32 %v277, %v505
  %v507 = vpop.f32.mrb[0].mxu0
  %v508 = vpop.f32.mrb[0].mxu0
  %v509 = vadd.f32 %v277, %v508
  %v510 = vpop.f32.mrb[0].mxu0
  %511 = vmatprep.mubr.bf16.mxu0 %v181
  %512 = vmatmul.mubr.bf16.gmra.mrb[0].mxu0 %v180
  %v513 = vpop.f32.mrb[0].mxu0
  %v514 = vadd.f32 %v277, %v513
  %v515 = vpop.f32.mrb[0].mxu0
  %v516 = vpop.f32.mrb[0].mxu0
  %v517 = vadd.f32 %v277, %v516
  %v518 = vpop.f32.mrb[0].mxu0
  %519 = vmatprep.mubr.bf16.mxu0 %v185
  %520 = vmatmul.mubr.bf16.gmra.mrb[0].mxu0 %v184
  %v521 = vpop.f32.mrb[0].mxu0
  %v522 = vadd.f32 %v277, %v521
  %v523 = vpop.f32.mrb[0].mxu0
  %v524 = vpop.f32.mrb[0].mxu0
  %v525 = vadd.f32 %v277, %v524
  %v526 = vpop.f32.mrb[0].mxu0
  %527 = vmatprep.mubr.bf16.mxu0 %v189
  %528 = vmatmul.mubr.bf16.gmra.mrb[0].mxu0 %v188
  %v529 = vpop.f32.mrb[0].mxu0
  %v530 = vadd.f32 %v277, %v529
  %v531 = vpop.f32.mrb[0].mxu0
  %v532 = vpop.f32.mrb[0].mxu0
  %v533 = vadd.f32 %v277, %v532
  %v534 = vpop.f32.mrb[0].mxu0
  %535 = vmatprep.mubr.bf16.mxu0 %v193
  %536 = vmatmul.mubr.bf16.gmra.mrb[0].mxu0 %v192
  %v537 = vpop.f32.mrb[0].mxu0
  %v538 = vadd.f32 %v277, %v537
  %v539 = vpop.f32.mrb[0].mxu0
  %v540 = vpop.f32.mrb[0].mxu0
  %v541 = vadd.f32 %v277, %v540
  %v542 = vpop.f32.mrb[0].mxu0
  %543 = vmatprep.mubr.bf16.mxu0 %v197
  %544 = vmatmul.mubr.bf16.gmra.mrb[0].mxu0 %v196
  %v545 = vpop.f32.mrb[0].mxu0
  %v546 = vadd.f32 %v277, %v545
  %v547 = vpop.f32.mrb[0].mxu0
  %v548 = vpop.f32.mrb[0].mxu0
  %v549 = vadd.f32 %v277, %v548
  %v550 = vpop.f32.mrb[0].mxu0
  %551 = vmatprep.mubr.bf16.mxu0 %v201
  %552 = vmatmul.mubr.bf16.gmra.mrb[0].mxu0 %v200
  %v553 = vpop.f32.mrb[0].mxu0
  %v554 = vadd.f32 %v277, %v553
  %v555 = vpop.f32.mrb[0].mxu0
  %v556 = vpop.f32.mrb[0].mxu0
  %v557 = vadd.f32 %v277, %v556
  %v558 = vpop.f32.mrb[0].mxu0
  %559 = vmatprep.mubr.bf16.mxu0 %v205
  %560 = vmatmul.mubr.bf16.gmra.mrb[0].mxu0 %v204
  %v561 = vpop.f32.mrb[0].mxu0
  %v562 = vadd.f32 %v277, %v561
  %v563 = vpop.f32.mrb[0].mxu0
  %v564 = vpop.f32.mrb[0].mxu0
  %v565 = vadd.f32 %v277, %v564
  %v566 = vpop.f32.mrb[0].mxu0
  %567 = vdwg.mxu0
  %568 = vmatprep.subr.bf16.mxu0 0
  %569 = vmatpush1.bf16.msra.mxu0 %v423
  %570 = vmatprep.subr.bf16.mxu0 0
  %571 = vmatpush1.bf16.msra.mxu0 %v424
  %572 = vmatprep.subr.bf16.mxu0 0
  %573 = vmatpush1.bf16.msra.mxu0 %v425
  %574 = vmatprep.subr.bf16.mxu0 0
  %575 = vmatpush1.bf16.msra.mxu0 %v426
  %576 = vmatprep.subr.bf16.mxu0 0
  %577 = vmatpush1.bf16.msra.mxu0 %v427
  %578 = vmatprep.subr.bf16.mxu0 0
  %579 = vmatpush1.bf16.msra.mxu0 %v428
  %580 = vmatprep.subr.bf16.mxu0 0
  %581 = vmatpush1.bf16.msra.mxu0 %v429
  %582 = vmatprep.subr.bf16.mxu0 0
  %583 = vmatpush1.bf16.msra.mxu0 %v430
  %584 = vmatprep.subr.bf16.mxu0 0
  %585 = vmatpush1.bf16.msra.mxu0 %v431
  %586 = vmatprep.subr.bf16.mxu0 0
  %587 = vmatpush1.bf16.msra.mxu0 %v432
  %588 = vmatprep.subr.bf16.mxu0 0
  %589 = vmatpush1.bf16.msra.mxu0 %v433
  %590 = vmatprep.subr.bf16.mxu0 0
  %591 = vmatpush1.bf16.msra.mxu0 %v434
  %592 = vmatprep.subr.bf16.mxu0 0
  %593 = vmatpush1.bf16.msra.mxu0 %v435
  %594 = vmatprep.subr.bf16.mxu0 0
  %595 = vmatpush1.bf16.msra.mxu0 %v436
  %596 = vmatprep.subr.bf16.mxu0 0
  %597 = vmatpush1.bf16.msra.mxu0 %v437
  %598 = vmatprep.subr.bf16.mxu0 0
  %599 = vmatpush1.bf16.msra.mxu0 %v438
  %600 = vmatprep.mubr.bf16.mxu0 %v179
  %601 = vmatmul.mubr.bf16.gmra.mrb[0].mxu0 %v178
  %v602 = vpop.f32.mrb[0].mxu0
  %v603 = vadd.f32 %v506, %v602
  %v604 = vpop.f32.mrb[0].mxu0
  %v605 = vpop.f32.mrb[0].mxu0
  %v606 = vadd.f32 %v509, %v605
  %v607 = vpop.f32.mrb[0].mxu0
  %608 = vmatprep.mubr.bf16.mxu0 %v183
  %609 = vmatmul.mubr.bf16.gmra.mrb[0].mxu0 %v182
  %v610 = vpop.f32.mrb[0].mxu0
  %v611 = vadd.f32 %v514, %v610
  %v612 = vpop.f32.mrb[0].mxu0
  %v613 = vpop.f32.mrb[0].mxu0
  %v614 = vadd.f32 %v517, %v613
  %v615 = vpop.f32.mrb[0].mxu0
  %616 = vmatprep.mubr.bf16.mxu0 %v187
  %617 = vmatmul.mubr.bf16.gmra.mrb[0].mxu0 %v186
  %v618 = vpop.f32.mrb[0].mxu0
  %v619 = vadd.f32 %v522, %v618
  %v620 = vpop.f32.mrb[0].mxu0
  %v621 = vpop.f32.mrb[0].mxu0
  %v622 = vadd.f32 %v525, %v621
  %v623 = vpop.f32.mrb[0].mxu0
  %624 = vmatprep.mubr.bf16.mxu0 %v191
  %625 = vmatmul.mubr.bf16.gmra.mrb[0].mxu0 %v190
  %v626 = vpop.f32.mrb[0].mxu0
  %v627 = vadd.f32 %v530, %v626
  %v628 = vpop.f32.mrb[0].mxu0
  %v629 = vpop.f32.mrb[0].mxu0
  %v630 = vadd.f32 %v533, %v629
  %v631 = vpop.f32.mrb[0].mxu0
  %632 = vmatprep.mubr.bf16.mxu0 %v195
  %633 = vmatmul.mubr.bf16.gmra.mrb[0].mxu0 %v194
  %v634 = vpop.f32.mrb[0].mxu0
  %v635 = vadd.f32 %v538, %v634
  %v636 = vpop.f32.mrb[0].mxu0
  %v637 = vpop.f32.mrb[0].mxu0
  %v638 = vadd.f32 %v541, %v637
  %v639 = vpop.f32.mrb[0].mxu0
  %640 = vmatprep.mubr.bf16.mxu0 %v199
  %641 = vmatmul.mubr.bf16.gmra.mrb[0].mxu0 %v198
  %v642 = vpop.f32.mrb[0].mxu0
  %v643 = vadd.f32 %v546, %v642
  %v644 = vpop.f32.mrb[0].mxu0
  %v645 = vpop.f32.mrb[0].mxu0
  %v646 = vadd.f32 %v549, %v645
  %v647 = vpop.f32.mrb[0].mxu0
  %648 = vmatprep.mubr.bf16.mxu0 %v203
  %649 = vmatmul.mubr.bf16.gmra.mrb[0].mxu0 %v202
  %v650 = vpop.f32.mrb[0].mxu0
  %v651 = vadd.f32 %v554, %v650
  %v652 = vpop.f32.mrb[0].mxu0
  %v653 = vpop.f32.mrb[0].mxu0
  %v654 = vadd.f32 %v557, %v653
  %v655 = vpop.f32.mrb[0].mxu0
  %656 = vmatprep.mubr.bf16.mxu0 %v207
  %657 = vmatmul.mubr.bf16.gmra.mrb[0].mxu0 %v206
  %v658 = vpop.f32.mrb[0].mxu0
  %v659 = vadd.f32 %v562, %v658
  %v660 = vpop.f32.mrb[0].mxu0
  %v661 = vpop.f32.mrb[0].mxu0
  %v662 = vadd.f32 %v565, %v661
  %v663 = vpop.f32.mrb[0].mxu0
  %664 = vdwg.mxu0
  %vm665 = vcmask 523264
  %v666 = vsel %vm665, %v603, 0.0
  %v667 = vsel %vm665, %v606, 0.0
  %v668 = vadd.f32 %v666, %v667
  %v669 = vsel %vm665, %v611, 0.0
  %v670 = vadd.f32 %v668, %v669
  %v671 = vsel %vm665, %v614, 0.0
  %v672 = vadd.f32 %v670, %v671
  %v673 = vsel %vm665, %v619, 0.0
  %v674 = vadd.f32 %v672, %v673
  %v675 = vsel %vm665, %v622, 0.0
  %v676 = vadd.f32 %v674, %v675
  %v677 = vsel %vm665, %v627, 0.0
  %v678 = vadd.f32 %v676, %v677
  %v679 = vsel %vm665, %v630, 0.0
  %v680 = vadd.f32 %v678, %v679
  %v681 = vsel %vm665, %v635, 0.0
  %v682 = vadd.f32 %v680, %v681
  %v683 = vsel %vm665, %v638, 0.0
  %v684 = vadd.f32 %v682, %v683
  %v685 = vsel %vm665, %v643, 0.0
  %v686 = vadd.f32 %v684, %v685
  %v687 = vsel %vm665, %v646, 0.0
  %v688 = vadd.f32 %v686, %v687
  %v689 = vsel %vm665, %v651, 0.0
  %v690 = vadd.f32 %v688, %v689
  %v691 = vsel %vm665, %v654, 0.0
  %v692 = vadd.f32 %v690, %v691
  %v693 = vsel %vm665, %v659, 0.0
  %v694 = vadd.f32 %v692, %v693
  %v695 = vsel %vm665, %v662, 0.0
  %v696 = vadd.f32 %v694, %v695
  %v697 = vrot.slane %v696, 4
  %v698 = vadd.f32 %v696, %v697
  %v699 = vrot.slane %v698, 2
  %v700 = vadd.f32 %v698, %v699
  %v701 = vrot.slane %v700, 1
  %v702 = vadd.f32 %v700, %v701
  %v703 = vadd.f32 %v702, 0.0
  %v704 = vmul.f32 %v603, %v603
  %v705 = vmul.f32 %v606, %v606
  %v706 = vmul.f32 %v611, %v611
  %v707 = vmul.f32 %v614, %v614
  %v708 = vmul.f32 %v619, %v619
  %v709 = vmul.f32 %v622, %v622
  %v710 = vmul.f32 %v627, %v627
  %v711 = vmul.f32 %v630, %v630
  %v712 = vmul.f32 %v635, %v635
  %v713 = vmul.f32 %v638, %v638
  %v714 = vmul.f32 %v643, %v643
  %v715 = vmul.f32 %v646, %v646
  %v716 = vmul.f32 %v651, %v651
  %v717 = vmul.f32 %v654, %v654
  %v718 = vmul.f32 %v659, %v659
  %v719 = vmul.f32 %v662, %v662
  %v720 = vsel %vm665, %v704, 0.0
  %v721 = vsel %vm665, %v705, 0.0
  %v722 = vadd.f32 %v720, %v721
  %v723 = vsel %vm665, %v706, 0.0
  %v724 = vadd.f32 %v722, %v723
  %v725 = vsel %vm665, %v707, 0.0
  %v726 = vadd.f32 %v724, %v725
  %v727 = vsel %vm665, %v708, 0.0
  %v728 = vadd.f32 %v726, %v727
  %v729 = vsel %vm665, %v709, 0.0
  %v730 = vadd.f32 %v728, %v729
  %v731 = vsel %vm665, %v710, 0.0
  %v732 = vadd.f32 %v730, %v731
  %v733 = vsel %vm665, %v711, 0.0
  %v734 = vadd.f32 %v732, %v733
  %v735 = vsel %vm665, %v712, 0.0
  %v736 = vadd.f32 %v734, %v735
  %v737 = vsel %vm665, %v713, 0.0
  %v738 = vadd.f32 %v736, %v737
  %v739 = vsel %vm665, %v714, 0.0
  %v740 = vadd.f32 %v738, %v739
  %v741 = vsel %vm665, %v715, 0.0
  %v742 = vadd.f32 %v740, %v741
  %v743 = vsel %vm665, %v716, 0.0
  %v744 = vadd.f32 %v742, %v743
  %v745 = vsel %vm665, %v717, 0.0
  %v746 = vadd.f32 %v744, %v745
  %v747 = vsel %vm665, %v718, 0.0
  %v748 = vadd.f32 %v746, %v747
  %v749 = vsel %vm665, %v719, 0.0
  %v750 = vadd.f32 %v748, %v749
  %v751 = vrot.slane %v750, 4
  %v752 = vadd.f32 %v750, %v751
  %v753 = vrot.slane %v752, 2
  %v754 = vadd.f32 %v752, %v753
  %v755 = vrot.slane %v754, 1
  %v756 = vadd.f32 %v754, %v755
  %v757 = vadd.f32 %v756, 0.0
  %vm758 = vcmask 1045504
  %v759 = vrot.slane %v27, 2
  %v760 = vrot.slane %v28, 2
  %v761 = vsel %vm758, %v759, %v760
  %v762 = vrot.slane %v29, 2
  %v763 = vrot.slane %v30, 2
  %v764 = vsel %vm758, %v762, %v763
  %v765 = vrot.slane %v31, 2
  %v766 = vrot.slane %v32, 2
  %v767 = vsel %vm758, %v765, %v766
  %v768 = vrot.slane %v33, 2
  %v769 = vrot.slane %v34, 2
  %v770 = vsel %vm758, %v768, %v769
  %v771 = vrot.slane %v35, 2
  %v772 = vrot.slane %v36, 2
  %v773 = vsel %vm758, %v771, %v772
  %v774 = vrot.slane %v37, 2
  %v775 = vrot.slane %v38, 2
  %v776 = vsel %vm758, %v774, %v775
  %v777 = vrot.slane %v39, 2
  %v778 = vrot.slane %v40, 2
  %v779 = vsel %vm758, %v777, %v778
  %v780 = vrot.slane %v41, 2
  %v781 = vrot.slane %v42, 2
  %v782 = vsel %vm758, %v780, %v781
  %v783 = vrot.slane %v47, 2
  %v784 = vrot.slane %v48, 2
  %v785 = vsel %vm758, %v783, %v784
  %v786 = vrot.slane %v49, 2
  %v787 = vrot.slane %v50, 2
  %v788 = vsel %vm758, %v786, %v787
  %v789 = vrot.slane %v51, 2
  %v790 = vrot.slane %v52, 2
  %v791 = vsel %vm758, %v789, %v790
  %v792 = vrot.slane %v53, 2
  %v793 = vrot.slane %v54, 2
  %v794 = vsel %vm758, %v792, %v793
  %v795 = vrot.slane %v55, 2
  %v796 = vrot.slane %v56, 2
  %v797 = vsel %vm758, %v795, %v796
  %v798 = vrot.slane %v57, 2
  %v799 = vrot.slane %v58, 2
  %v800 = vsel %vm758, %v798, %v799
  %v801 = vrot.slane %v59, 2
  %v802 = vrot.slane %v60, 2
  %v803 = vsel %vm758, %v801, %v802
  %v804 = vrot.slane %v61, 2
  %v805 = vrot.slane %v62, 2
  %v806 = vsel %vm758, %v804, %v805
  %v823 = vrot.slane %v43, 2
  %v824 = vrot.slane %v44, 2
  %v825 = vsel %vm758, %v823, %v824
  %v826 = vrot.slane %v63, 2
  %v827 = vrot.slane %v64, 2
  %v828 = vsel %vm758, %v826, %v827
  %v831 = vpack.c.bf16 %v764, %v761
  %v832 = vpack.c.bf16 %v767, %v764
  %v833 = vpack.c.bf16 %v770, %v767
  %v834 = vpack.c.bf16 %v773, %v770
  %v835 = vpack.c.bf16 %v776, %v773
  %v836 = vpack.c.bf16 %v779, %v776
  %v837 = vpack.c.bf16 %v782, %v779
  %v838 = vpack.c.bf16 %v825, %v782
  %v839 = vpack.c.bf16 %v788, %v785
  %v840 = vpack.c.bf16 %v791, %v788
  %v841 = vpack.c.bf16 %v794, %v791
  %v842 = vpack.c.bf16 %v797, %v794
  %v843 = vpack.c.bf16 %v800, %v797
  %v844 = vpack.c.bf16 %v803, %v800
  %v845 = vpack.c.bf16 %v806, %v803
  %v846 = vpack.c.bf16 %v828, %v806
  %s847 = scalar_lea.vmem %s1, 256
  %v848 = vld [vmem:[%s847] sm:$0xf]
  %v849 = vld [vmem:[%s847 + $0x4] sm:$0xf]
  %v850 = vld [vmem:[%s847 + $0x8] sm:$0xf]
  %v851 = vld [vmem:[%s847 + $0xc] sm:$0xf]
  %v852 = vld [vmem:[%s847 + $0x10] sm:$0xf]
  %v853 = vld [vmem:[%s847 + $0x14] sm:$0xf]
  %v854 = vld [vmem:[%s847 + $0x18] sm:$0xf]
  %v855 = vld [vmem:[%s847 + $0x1c] sm:$0xf]
  %v856 = vld [vmem:[%s847 + $0x20] sm:$0xf]
  %v857 = vld [vmem:[%s847 + $0x24] sm:$0xf]
  %v858 = vld [vmem:[%s847 + $0x28] sm:$0xf]
  %v859 = vld [vmem:[%s847 + $0x2c] sm:$0xf]
  %v860 = vld [vmem:[%s847 + $0x30] sm:$0xf]
  %v861 = vld [vmem:[%s847 + $0x34] sm:$0xf]
  %v862 = vld [vmem:[%s847 + $0x38] sm:$0xf]
  %v863 = vld [vmem:[%s847 + $0x3c] sm:$0xf]
  %v864 = vld [vmem:[%s847 + $0x40] sm:$0xf]
  %v865 = vld [vmem:[%s847 + $0x44] sm:$0xf]
  %v866 = vld [vmem:[%s847 + $0x48] sm:$0xf]
  %v867 = vld [vmem:[%s847 + $0x4c] sm:$0xf]
  %v868 = vld [vmem:[%s847 + $0x50] sm:$0xf]
  %v869 = vld [vmem:[%s847 + $0x54] sm:$0xf]
  %v870 = vld [vmem:[%s847 + $0x58] sm:$0xf]
  %v871 = vld [vmem:[%s847 + $0x5c] sm:$0xf]
  %v872 = vld [vmem:[%s847 + $0x60] sm:$0xf]
  %v873 = vld [vmem:[%s847 + $0x64] sm:$0xf]
  %v874 = vld [vmem:[%s847 + $0x68] sm:$0xf]
  %v875 = vld [vmem:[%s847 + $0x6c] sm:$0xf]
  %v876 = vld [vmem:[%s847 + $0x70] sm:$0xf]
  %v877 = vld [vmem:[%s847 + $0x74] sm:$0xf]
  %v878 = vld [vmem:[%s847 + $0x78] sm:$0xf]
  %v879 = vld [vmem:[%s847 + $0x7c] sm:$0xf]
  %v880 = vld [vmem:[%s847 + $0x80] sm:$0xf]
  %v881 = vld [vmem:[%s847 + $0x84] sm:$0xf]
  %v882 = vld [vmem:[%s847 + $0x88] sm:$0xf]
  %v883 = vld [vmem:[%s847 + $0x8c] sm:$0xf]
  %v884 = vld [vmem:[%s847 + $0x90] sm:$0xf]
  %v885 = vld [vmem:[%s847 + $0x94] sm:$0xf]
  %v886 = vld [vmem:[%s847 + $0x98] sm:$0xf]
  %v887 = vld [vmem:[%s847 + $0x9c] sm:$0xf]
  %v888 = vld [vmem:[%s847 + $0xa0] sm:$0xf]
  %v889 = vld [vmem:[%s847 + $0xa4] sm:$0xf]
  %v890 = vld [vmem:[%s847 + $0xa8] sm:$0xf]
  %v891 = vld [vmem:[%s847 + $0xac] sm:$0xf]
  %v892 = vld [vmem:[%s847 + $0xb0] sm:$0xf]
  %v893 = vld [vmem:[%s847 + $0xb4] sm:$0xf]
  %v894 = vld [vmem:[%s847 + $0xb8] sm:$0xf]
  %v895 = vld [vmem:[%s847 + $0xbc] sm:$0xf]
  %v896 = vld [vmem:[%s847 + $0xc0] sm:$0xf]
  %v897 = vld [vmem:[%s847 + $0xc4] sm:$0xf]
  %v898 = vld [vmem:[%s847 + $0xc8] sm:$0xf]
  %v899 = vld [vmem:[%s847 + $0xcc] sm:$0xf]
  %v900 = vld [vmem:[%s847 + $0xd0] sm:$0xf]
  %v901 = vld [vmem:[%s847 + $0xd4] sm:$0xf]
  %v902 = vld [vmem:[%s847 + $0xd8] sm:$0xf]
  %v903 = vld [vmem:[%s847 + $0xdc] sm:$0xf]
  %v904 = vld [vmem:[%s847 + $0xe0] sm:$0xf]
  %v905 = vld [vmem:[%s847 + $0xe4] sm:$0xf]
  %v906 = vld [vmem:[%s847 + $0xe8] sm:$0xf]
  %v907 = vld [vmem:[%s847 + $0xec] sm:$0xf]
  %v908 = vld [vmem:[%s847 + $0xf0] sm:$0xf]
  %v909 = vld [vmem:[%s847 + $0xf4] sm:$0xf]
  %v910 = vld [vmem:[%s847 + $0xf8] sm:$0xf]
  %v911 = vld [vmem:[%s847 + $0xfc] sm:$0xf]
  %v976 = vunpack.c.l.b16 %v848
  %v977 = vunpack.c.l.b16 %v849
  %v978 = vunpack.c.l.b16 %v850
  %v979 = vunpack.c.l.b16 %v851
  %v980 = vunpack.c.l.b16 %v852
  %v981 = vunpack.c.l.b16 %v853
  %v982 = vunpack.c.l.b16 %v854
  %v983 = vunpack.c.l.b16 %v855
  %v984 = vunpack.c.l.b16 %v856
  %v985 = vunpack.c.l.b16 %v857
  %v986 = vunpack.c.l.b16 %v858
  %v987 = vunpack.c.l.b16 %v859
  %v988 = vunpack.c.l.b16 %v860
  %v989 = vunpack.c.l.b16 %v861
  %v990 = vunpack.c.l.b16 %v862
  %v991 = vunpack.c.l.b16 %v863
  %v992 = vunpack.c.l.b16 %v864
  %v993 = vunpack.c.l.b16 %v865
  %v994 = vunpack.c.l.b16 %v866
  %v995 = vunpack.c.l.b16 %v867
  %v996 = vunpack.c.l.b16 %v868
  %v997 = vunpack.c.l.b16 %v869
  %v998 = vunpack.c.l.b16 %v870
  %v999 = vunpack.c.l.b16 %v871
  %v1000 = vunpack.c.l.b16 %v872
  %v1001 = vunpack.c.l.b16 %v873
  %v1002 = vunpack.c.l.b16 %v874
  %v1003 = vunpack.c.l.b16 %v875
  %v1004 = vunpack.c.l.b16 %v876
  %v1005 = vunpack.c.l.b16 %v877
  %v1006 = vunpack.c.l.b16 %v878
  %v1007 = vunpack.c.l.b16 %v879
  %v1008 = vunpack.c.l.b16 %v880
  %v1009 = vunpack.c.l.b16 %v881
  %v1010 = vunpack.c.l.b16 %v882
  %v1011 = vunpack.c.l.b16 %v883
  %v1012 = vunpack.c.l.b16 %v884
  %v1013 = vunpack.c.l.b16 %v885
  %v1014 = vunpack.c.l.b16 %v886
  %v1015 = vunpack.c.l.b16 %v887
  %v1016 = vunpack.c.l.b16 %v888
  %v1017 = vunpack.c.l.b16 %v889
  %v1018 = vunpack.c.l.b16 %v890
  %v1019 = vunpack.c.l.b16 %v891
  %v1020 = vunpack.c.l.b16 %v892
  %v1021 = vunpack.c.l.b16 %v893
  %v1022 = vunpack.c.l.b16 %v894
  %v1023 = vunpack.c.l.b16 %v895
  %v1024 = vunpack.c.l.b16 %v896
  %v1025 = vunpack.c.l.b16 %v897
  %v1026 = vunpack.c.l.b16 %v898
  %v1027 = vunpack.c.l.b16 %v899
  %v1028 = vunpack.c.l.b16 %v900
  %v1029 = vunpack.c.l.b16 %v901
  %v1030 = vunpack.c.l.b16 %v902
  %v1031 = vunpack.c.l.b16 %v903
  %v1032 = vunpack.c.l.b16 %v904
  %v1033 = vunpack.c.l.b16 %v905
  %v1034 = vunpack.c.l.b16 %v906
  %v1035 = vunpack.c.l.b16 %v907
  %v1036 = vunpack.c.l.b16 %v908
  %v1037 = vunpack.c.l.b16 %v909
  %v1038 = vunpack.c.l.b16 %v910
  %v1039 = vunpack.c.l.b16 %v911
  %v1040 = vpack.c.b16 %v977, %v976
  %v1041 = vpack.c.b16 %v979, %v978
  %v1042 = vpack.c.b16 %v981, %v980
  %v1043 = vpack.c.b16 %v983, %v982
  %v1044 = vpack.c.b16 %v985, %v984
  %v1045 = vpack.c.b16 %v987, %v986
  %v1046 = vpack.c.b16 %v989, %v988
  %v1047 = vpack.c.b16 %v991, %v990
  %v1048 = vpack.c.b16 %v993, %v992
  %v1049 = vpack.c.b16 %v995, %v994
  %v1050 = vpack.c.b16 %v997, %v996
  %v1051 = vpack.c.b16 %v999, %v998
  %v1052 = vpack.c.b16 %v1001, %v1000
  %v1053 = vpack.c.b16 %v1003, %v1002
  %v1054 = vpack.c.b16 %v1005, %v1004
  %v1055 = vpack.c.b16 %v1007, %v1006
  %v1056 = vpack.c.b16 %v1009, %v1008
  %v1057 = vpack.c.b16 %v1011, %v1010
  %v1058 = vpack.c.b16 %v1013, %v1012
  %v1059 = vpack.c.b16 %v1015, %v1014
  %v1060 = vpack.c.b16 %v1017, %v1016
  %v1061 = vpack.c.b16 %v1019, %v1018
  %v1062 = vpack.c.b16 %v1021, %v1020
  %v1063 = vpack.c.b16 %v1023, %v1022
  %v1064 = vpack.c.b16 %v1025, %v1024
  %v1065 = vpack.c.b16 %v1027, %v1026
  %v1066 = vpack.c.b16 %v1029, %v1028
  %v1067 = vpack.c.b16 %v1031, %v1030
  %v1068 = vpack.c.b16 %v1033, %v1032
  %v1069 = vpack.c.b16 %v1035, %v1034
  %v1070 = vpack.c.b16 %v1037, %v1036
  %v1071 = vpack.c.b16 %v1039, %v1038
  %1104 = vmatprep.subr.bf16.mxu0 0
  %1105 = vmatpush1.bf16.msra.mxu0 %v1040
  %1106 = vmatprep.subr.bf16.mxu0 0
  %1107 = vmatpush1.bf16.msra.mxu0 %v1041
  %1108 = vmatprep.subr.bf16.mxu0 0
  %1109 = vmatpush1.bf16.msra.mxu0 %v1042
  %1110 = vmatprep.subr.bf16.mxu0 0
  %1111 = vmatpush1.bf16.msra.mxu0 %v1043
  %1112 = vmatprep.subr.bf16.mxu0 0
  %1113 = vmatpush1.bf16.msra.mxu0 %v1044
  %1114 = vmatprep.subr.bf16.mxu0 0
  %1115 = vmatpush1.bf16.msra.mxu0 %v1045
  %1116 = vmatprep.subr.bf16.mxu0 0
  %1117 = vmatpush1.bf16.msra.mxu0 %v1046
  %1118 = vmatprep.subr.bf16.mxu0 0
  %1119 = vmatpush1.bf16.msra.mxu0 %v1047
  %1120 = vmatprep.subr.bf16.mxu0 0
  %1121 = vmatpush1.bf16.msra.mxu0 %v1048
  %1122 = vmatprep.subr.bf16.mxu0 0
  %1123 = vmatpush1.bf16.msra.mxu0 %v1049
  %1124 = vmatprep.subr.bf16.mxu0 0
  %1125 = vmatpush1.bf16.msra.mxu0 %v1050
  %1126 = vmatprep.subr.bf16.mxu0 0
  %1127 = vmatpush1.bf16.msra.mxu0 %v1051
  %1128 = vmatprep.subr.bf16.mxu0 0
  %1129 = vmatpush1.bf16.msra.mxu0 %v1052
  %1130 = vmatprep.subr.bf16.mxu0 0
  %1131 = vmatpush1.bf16.msra.mxu0 %v1053
  %1132 = vmatprep.subr.bf16.mxu0 0
  %1133 = vmatpush1.bf16.msra.mxu0 %v1054
  %1134 = vmatprep.subr.bf16.mxu0 0
  %1135 = vmatpush1.bf16.msra.mxu0 %v1055
  %1136 = vmatprep.mubr.bf16.mxu0 %v831
  %1137 = vmatmul.mubr.bf16.gmra.mrb[0].mxu0 %v177
  %v1138 = vpop.f32.mrb[0].mxu0
  %v1139 = vadd.f32 %v277, %v1138
  %v1140 = vpop.f32.mrb[0].mxu0
  %v1141 = vpop.f32.mrb[0].mxu0
  %v1142 = vadd.f32 %v277, %v1141
  %v1143 = vpop.f32.mrb[0].mxu0
  %1144 = vmatprep.mubr.bf16.mxu0 %v833
  %1145 = vmatmul.mubr.bf16.gmra.mrb[0].mxu0 %v181
  %v1146 = vpop.f32.mrb[0].mxu0
  %v1147 = vadd.f32 %v277, %v1146
  %v1148 = vpop.f32.mrb[0].mxu0
  %v1149 = vpop.f32.mrb[0].mxu0
  %v1150 = vadd.f32 %v277, %v1149
  %v1151 = vpop.f32.mrb[0].mxu0
  %1152 = vmatprep.mubr.bf16.mxu0 %v835
  %1153 = vmatmul.mubr.bf16.gmra.mrb[0].mxu0 %v185
  %v1154 = vpop.f32.mrb[0].mxu0
  %v1155 = vadd.f32 %v277, %v1154
  %v1156 = vpop.f32.mrb[0].mxu0
  %v1157 = vpop.f32.mrb[0].mxu0
  %v1158 = vadd.f32 %v277, %v1157
  %v1159 = vpop.f32.mrb[0].mxu0
  %1160 = vmatprep.mubr.bf16.mxu0 %v837
  %1161 = vmatmul.mubr.bf16.gmra.mrb[0].mxu0 %v189
  %v1162 = vpop.f32.mrb[0].mxu0
  %v1163 = vadd.f32 %v277, %v1162
  %v1164 = vpop.f32.mrb[0].mxu0
  %v1165 = vpop.f32.mrb[0].mxu0
  %v1166 = vadd.f32 %v277, %v1165
  %v1167 = vpop.f32.mrb[0].mxu0
  %1168 = vmatprep.mubr.bf16.mxu0 %v839
  %1169 = vmatmul.mubr.bf16.gmra.mrb[0].mxu0 %v193
  %v1170 = vpop.f32.mrb[0].mxu0
  %v1171 = vadd.f32 %v277, %v1170
  %v1172 = vpop.f32.mrb[0].mxu0
  %v1173 = vpop.f32.mrb[0].mxu0
  %v1174 = vadd.f32 %v277, %v1173
  %v1175 = vpop.f32.mrb[0].mxu0
  %1176 = vmatprep.mubr.bf16.mxu0 %v841
  %1177 = vmatmul.mubr.bf16.gmra.mrb[0].mxu0 %v197
  %v1178 = vpop.f32.mrb[0].mxu0
  %v1179 = vadd.f32 %v277, %v1178
  %v1180 = vpop.f32.mrb[0].mxu0
  %v1181 = vpop.f32.mrb[0].mxu0
  %v1182 = vadd.f32 %v277, %v1181
  %v1183 = vpop.f32.mrb[0].mxu0
  %1184 = vmatprep.mubr.bf16.mxu0 %v843
  %1185 = vmatmul.mubr.bf16.gmra.mrb[0].mxu0 %v201
  %v1186 = vpop.f32.mrb[0].mxu0
  %v1187 = vadd.f32 %v277, %v1186
  %v1188 = vpop.f32.mrb[0].mxu0
  %v1189 = vpop.f32.mrb[0].mxu0
  %v1190 = vadd.f32 %v277, %v1189
  %v1191 = vpop.f32.mrb[0].mxu0
  %1192 = vmatprep.mubr.bf16.mxu0 %v845
  %1193 = vmatmul.mubr.bf16.gmra.mrb[0].mxu0 %v205
  %v1194 = vpop.f32.mrb[0].mxu0
  %v1195 = vadd.f32 %v277, %v1194
  %v1196 = vpop.f32.mrb[0].mxu0
  %v1197 = vpop.f32.mrb[0].mxu0
  %v1198 = vadd.f32 %v277, %v1197
  %v1199 = vpop.f32.mrb[0].mxu0
  %1200 = vdwg.mxu0
  %1201 = vmatprep.subr.bf16.mxu0 0
  %1202 = vmatpush1.bf16.msra.mxu0 %v1056
  %1203 = vmatprep.subr.bf16.mxu0 0
  %1204 = vmatpush1.bf16.msra.mxu0 %v1057
  %1205 = vmatprep.subr.bf16.mxu0 0
  %1206 = vmatpush1.bf16.msra.mxu0 %v1058
  %1207 = vmatprep.subr.bf16.mxu0 0
  %1208 = vmatpush1.bf16.msra.mxu0 %v1059
  %1209 = vmatprep.subr.bf16.mxu0 0
  %1210 = vmatpush1.bf16.msra.mxu0 %v1060
  %1211 = vmatprep.subr.bf16.mxu0 0
  %1212 = vmatpush1.bf16.msra.mxu0 %v1061
  %1213 = vmatprep.subr.bf16.mxu0 0
  %1214 = vmatpush1.bf16.msra.mxu0 %v1062
  %1215 = vmatprep.subr.bf16.mxu0 0
  %1216 = vmatpush1.bf16.msra.mxu0 %v1063
  %1217 = vmatprep.subr.bf16.mxu0 0
  %1218 = vmatpush1.bf16.msra.mxu0 %v1064
  %1219 = vmatprep.subr.bf16.mxu0 0
  %1220 = vmatpush1.bf16.msra.mxu0 %v1065
  %1221 = vmatprep.subr.bf16.mxu0 0
  %1222 = vmatpush1.bf16.msra.mxu0 %v1066
  %1223 = vmatprep.subr.bf16.mxu0 0
  %1224 = vmatpush1.bf16.msra.mxu0 %v1067
  %1225 = vmatprep.subr.bf16.mxu0 0
  %1226 = vmatpush1.bf16.msra.mxu0 %v1068
  %1227 = vmatprep.subr.bf16.mxu0 0
  %1228 = vmatpush1.bf16.msra.mxu0 %v1069
  %1229 = vmatprep.subr.bf16.mxu0 0
  %1230 = vmatpush1.bf16.msra.mxu0 %v1070
  %1231 = vmatprep.subr.bf16.mxu0 0
  %1232 = vmatpush1.bf16.msra.mxu0 %v1071
  %1233 = vmatprep.mubr.bf16.mxu0 %v832
  %1234 = vmatmul.mubr.bf16.gmra.mrb[0].mxu0 %v179
  %v1235 = vpop.f32.mrb[0].mxu0
  %v1236 = vadd.f32 %v1139, %v1235
  %v1237 = vpop.f32.mrb[0].mxu0
  %v1238 = vpop.f32.mrb[0].mxu0
  %v1239 = vadd.f32 %v1142, %v1238
  %v1240 = vpop.f32.mrb[0].mxu0
  %1241 = vmatprep.mubr.bf16.mxu0 %v834
  %1242 = vmatmul.mubr.bf16.gmra.mrb[0].mxu0 %v183
  %v1243 = vpop.f32.mrb[0].mxu0
  %v1244 = vadd.f32 %v1147, %v1243
  %v1245 = vpop.f32.mrb[0].mxu0
  %v1246 = vpop.f32.mrb[0].mxu0
  %v1247 = vadd.f32 %v1150, %v1246
  %v1248 = vpop.f32.mrb[0].mxu0
  %1249 = vmatprep.mubr.bf16.mxu0 %v836
  %1250 = vmatmul.mubr.bf16.gmra.mrb[0].mxu0 %v187
  %v1251 = vpop.f32.mrb[0].mxu0
  %v1252 = vadd.f32 %v1155, %v1251
  %v1253 = vpop.f32.mrb[0].mxu0
  %v1254 = vpop.f32.mrb[0].mxu0
  %v1255 = vadd.f32 %v1158, %v1254
  %v1256 = vpop.f32.mrb[0].mxu0
  %1257 = vmatprep.mubr.bf16.mxu0 %v838
  %1258 = vmatmul.mubr.bf16.gmra.mrb[0].mxu0 %v191
  %v1259 = vpop.f32.mrb[0].mxu0
  %v1260 = vadd.f32 %v1163, %v1259
  %v1261 = vpop.f32.mrb[0].mxu0
  %v1262 = vpop.f32.mrb[0].mxu0
  %v1263 = vadd.f32 %v1166, %v1262
  %v1264 = vpop.f32.mrb[0].mxu0
  %1265 = vmatprep.mubr.bf16.mxu0 %v840
  %1266 = vmatmul.mubr.bf16.gmra.mrb[0].mxu0 %v195
  %v1267 = vpop.f32.mrb[0].mxu0
  %v1268 = vadd.f32 %v1171, %v1267
  %v1269 = vpop.f32.mrb[0].mxu0
  %v1270 = vpop.f32.mrb[0].mxu0
  %v1271 = vadd.f32 %v1174, %v1270
  %v1272 = vpop.f32.mrb[0].mxu0
  %1273 = vmatprep.mubr.bf16.mxu0 %v842
  %1274 = vmatmul.mubr.bf16.gmra.mrb[0].mxu0 %v199
  %v1275 = vpop.f32.mrb[0].mxu0
  %v1276 = vadd.f32 %v1179, %v1275
  %v1277 = vpop.f32.mrb[0].mxu0
  %v1278 = vpop.f32.mrb[0].mxu0
  %v1279 = vadd.f32 %v1182, %v1278
  %v1280 = vpop.f32.mrb[0].mxu0
  %1281 = vmatprep.mubr.bf16.mxu0 %v844
  %1282 = vmatmul.mubr.bf16.gmra.mrb[0].mxu0 %v203
  %v1283 = vpop.f32.mrb[0].mxu0
  %v1284 = vadd.f32 %v1187, %v1283
  %v1285 = vpop.f32.mrb[0].mxu0
  %v1286 = vpop.f32.mrb[0].mxu0
  %v1287 = vadd.f32 %v1190, %v1286
  %v1288 = vpop.f32.mrb[0].mxu0
  %1289 = vmatprep.mubr.bf16.mxu0 %v846
  %1290 = vmatmul.mubr.bf16.gmra.mrb[0].mxu0 %v207
  %v1291 = vpop.f32.mrb[0].mxu0
  %v1292 = vadd.f32 %v1195, %v1291
  %v1293 = vpop.f32.mrb[0].mxu0
  %v1294 = vpop.f32.mrb[0].mxu0
  %v1295 = vadd.f32 %v1198, %v1294
  %v1296 = vpop.f32.mrb[0].mxu0
  %1297 = vdwg.mxu0
  %v1298 = vsel %vm665, %v1236, 0.0
  %v1299 = vsel %vm665, %v1239, 0.0
  %v1300 = vadd.f32 %v1298, %v1299
  %v1301 = vsel %vm665, %v1244, 0.0
  %v1302 = vadd.f32 %v1300, %v1301
  %v1303 = vsel %vm665, %v1247, 0.0
  %v1304 = vadd.f32 %v1302, %v1303
  %v1305 = vsel %vm665, %v1252, 0.0
  %v1306 = vadd.f32 %v1304, %v1305
  %v1307 = vsel %vm665, %v1255, 0.0
  %v1308 = vadd.f32 %v1306, %v1307
  %v1309 = vsel %vm665, %v1260, 0.0
  %v1310 = vadd.f32 %v1308, %v1309
  %v1311 = vsel %vm665, %v1263, 0.0
  %v1312 = vadd.f32 %v1310, %v1311
  %v1313 = vsel %vm665, %v1268, 0.0
  %v1314 = vadd.f32 %v1312, %v1313
  %v1315 = vsel %vm665, %v1271, 0.0
  %v1316 = vadd.f32 %v1314, %v1315
  %v1317 = vsel %vm665, %v1276, 0.0
  %v1318 = vadd.f32 %v1316, %v1317
  %v1319 = vsel %vm665, %v1279, 0.0
  %v1320 = vadd.f32 %v1318, %v1319
  %v1321 = vsel %vm665, %v1284, 0.0
  %v1322 = vadd.f32 %v1320, %v1321
  %v1323 = vsel %vm665, %v1287, 0.0
  %v1324 = vadd.f32 %v1322, %v1323
  %v1325 = vsel %vm665, %v1292, 0.0
  %v1326 = vadd.f32 %v1324, %v1325
  %v1327 = vsel %vm665, %v1295, 0.0
  %v1328 = vadd.f32 %v1326, %v1327
  %v1329 = vrot.slane %v1328, 4
  %v1330 = vadd.f32 %v1328, %v1329
  %v1331 = vrot.slane %v1330, 2
  %v1332 = vadd.f32 %v1330, %v1331
  %v1333 = vrot.slane %v1332, 1
  %v1334 = vadd.f32 %v1332, %v1333
  %v1335 = vadd.f32 %v703, %v1334
  %v1336 = vmul.f32 %v1236, %v1236
  %v1337 = vmul.f32 %v1239, %v1239
  %v1338 = vmul.f32 %v1244, %v1244
  %v1339 = vmul.f32 %v1247, %v1247
  %v1340 = vmul.f32 %v1252, %v1252
  %v1341 = vmul.f32 %v1255, %v1255
  %v1342 = vmul.f32 %v1260, %v1260
  %v1343 = vmul.f32 %v1263, %v1263
  %v1344 = vmul.f32 %v1268, %v1268
  %v1345 = vmul.f32 %v1271, %v1271
  %v1346 = vmul.f32 %v1276, %v1276
  %v1347 = vmul.f32 %v1279, %v1279
  %v1348 = vmul.f32 %v1284, %v1284
  %v1349 = vmul.f32 %v1287, %v1287
  %v1350 = vmul.f32 %v1292, %v1292
  %v1351 = vmul.f32 %v1295, %v1295
  %v1352 = vsel %vm665, %v1336, 0.0
  %v1353 = vsel %vm665, %v1337, 0.0
  %v1354 = vadd.f32 %v1352, %v1353
  %v1355 = vsel %vm665, %v1338, 0.0
  %v1356 = vadd.f32 %v1354, %v1355
  %v1357 = vsel %vm665, %v1339, 0.0
  %v1358 = vadd.f32 %v1356, %v1357
  %v1359 = vsel %vm665, %v1340, 0.0
  %v1360 = vadd.f32 %v1358, %v1359
  %v1361 = vsel %vm665, %v1341, 0.0
  %v1362 = vadd.f32 %v1360, %v1361
  %v1363 = vsel %vm665, %v1342, 0.0
  %v1364 = vadd.f32 %v1362, %v1363
  %v1365 = vsel %vm665, %v1343, 0.0
  %v1366 = vadd.f32 %v1364, %v1365
  %v1367 = vsel %vm665, %v1344, 0.0
  %v1368 = vadd.f32 %v1366, %v1367
  %v1369 = vsel %vm665, %v1345, 0.0
  %v1370 = vadd.f32 %v1368, %v1369
  %v1371 = vsel %vm665, %v1346, 0.0
  %v1372 = vadd.f32 %v1370, %v1371
  %v1373 = vsel %vm665, %v1347, 0.0
  %v1374 = vadd.f32 %v1372, %v1373
  %v1375 = vsel %vm665, %v1348, 0.0
  %v1376 = vadd.f32 %v1374, %v1375
  %v1377 = vsel %vm665, %v1349, 0.0
  %v1378 = vadd.f32 %v1376, %v1377
  %v1379 = vsel %vm665, %v1350, 0.0
  %v1380 = vadd.f32 %v1378, %v1379
  %v1381 = vsel %vm665, %v1351, 0.0
  %v1382 = vadd.f32 %v1380, %v1381
  %v1383 = vrot.slane %v1382, 4
  %v1384 = vadd.f32 %v1382, %v1383
  %v1385 = vrot.slane %v1384, 2
  %v1386 = vadd.f32 %v1384, %v1385
  %v1387 = vrot.slane %v1386, 1
  %v1388 = vadd.f32 %v1386, %v1387
  %v1389 = vadd.f32 %v757, %v1388
  %v1394 = vrot.slane %v45, 1
  %v1395 = vrot.slane %v46, 1
  %v1396 = vsel %vm99, %v1394, %v1395
  %v1397 = vrot.slane %v65, 1
  %v1398 = vrot.slane %v66, 1
  %v1399 = vsel %vm99, %v1397, %v1398
  %v1402 = vpack.c.bf16 %v45, %v43
  %v1403 = vpack.c.bf16 %v1396, %v170
  %v1404 = vpack.c.bf16 %v65, %v63
  %v1405 = vpack.c.bf16 %v1399, %v173
  %s1406 = scalar_lea.vmem %s1, 512
  %v1407 = vld [vmem:[%s1406] sm:$0xf]
  %v1408 = vld [vmem:[%s1406 + $0x4] sm:$0xf]
  %v1409 = vld [vmem:[%s1406 + $0x8] sm:$0xf]
  %v1410 = vld [vmem:[%s1406 + $0xc] sm:$0xf]
  %v1411 = vld [vmem:[%s1406 + $0x10] sm:$0xf]
  %v1412 = vld [vmem:[%s1406 + $0x14] sm:$0xf]
  %v1413 = vld [vmem:[%s1406 + $0x18] sm:$0xf]
  %v1414 = vld [vmem:[%s1406 + $0x1c] sm:$0xf]
  %v1415 = vld [vmem:[%s1406 + $0x20] sm:$0xf]
  %v1416 = vld [vmem:[%s1406 + $0x24] sm:$0xf]
  %v1417 = vld [vmem:[%s1406 + $0x28] sm:$0xf]
  %v1418 = vld [vmem:[%s1406 + $0x2c] sm:$0xf]
  %v1419 = vld [vmem:[%s1406 + $0x30] sm:$0xf]
  %v1420 = vld [vmem:[%s1406 + $0x34] sm:$0xf]
  %v1421 = vld [vmem:[%s1406 + $0x38] sm:$0xf]
  %v1422 = vld [vmem:[%s1406 + $0x3c] sm:$0xf]
  %v1423 = vld [vmem:[%s1406 + $0x40] sm:$0xf]
  %v1424 = vld [vmem:[%s1406 + $0x44] sm:$0xf]
  %v1425 = vld [vmem:[%s1406 + $0x48] sm:$0xf]
  %v1426 = vld [vmem:[%s1406 + $0x4c] sm:$0xf]
  %v1427 = vld [vmem:[%s1406 + $0x50] sm:$0xf]
  %v1428 = vld [vmem:[%s1406 + $0x54] sm:$0xf]
  %v1429 = vld [vmem:[%s1406 + $0x58] sm:$0xf]
  %v1430 = vld [vmem:[%s1406 + $0x5c] sm:$0xf]
  %v1431 = vld [vmem:[%s1406 + $0x60] sm:$0xf]
  %v1432 = vld [vmem:[%s1406 + $0x64] sm:$0xf]
  %v1433 = vld [vmem:[%s1406 + $0x68] sm:$0xf]
  %v1434 = vld [vmem:[%s1406 + $0x6c] sm:$0xf]
  %v1435 = vld [vmem:[%s1406 + $0x70] sm:$0xf]
  %v1436 = vld [vmem:[%s1406 + $0x74] sm:$0xf]
  %v1437 = vld [vmem:[%s1406 + $0x78] sm:$0xf]
  %v1438 = vld [vmem:[%s1406 + $0x7c] sm:$0xf]
  %v1439 = vld [vmem:[%s1406 + $0x80] sm:$0xf]
  %v1440 = vld [vmem:[%s1406 + $0x84] sm:$0xf]
  %v1441 = vld [vmem:[%s1406 + $0x88] sm:$0xf]
  %v1442 = vld [vmem:[%s1406 + $0x8c] sm:$0xf]
  %v1443 = vld [vmem:[%s1406 + $0x90] sm:$0xf]
  %v1444 = vld [vmem:[%s1406 + $0x94] sm:$0xf]
  %v1445 = vld [vmem:[%s1406 + $0x98] sm:$0xf]
  %v1446 = vld [vmem:[%s1406 + $0x9c] sm:$0xf]
  %v1447 = vld [vmem:[%s1406 + $0xa0] sm:$0xf]
  %v1448 = vld [vmem:[%s1406 + $0xa4] sm:$0xf]
  %v1449 = vld [vmem:[%s1406 + $0xa8] sm:$0xf]
  %v1450 = vld [vmem:[%s1406 + $0xac] sm:$0xf]
  %v1451 = vld [vmem:[%s1406 + $0xb0] sm:$0xf]
  %v1452 = vld [vmem:[%s1406 + $0xb4] sm:$0xf]
  %v1453 = vld [vmem:[%s1406 + $0xb8] sm:$0xf]
  %v1454 = vld [vmem:[%s1406 + $0xbc] sm:$0xf]
  %v1455 = vld [vmem:[%s1406 + $0xc0] sm:$0xf]
  %v1456 = vld [vmem:[%s1406 + $0xc4] sm:$0xf]
  %v1457 = vld [vmem:[%s1406 + $0xc8] sm:$0xf]
  %v1458 = vld [vmem:[%s1406 + $0xcc] sm:$0xf]
  %v1459 = vld [vmem:[%s1406 + $0xd0] sm:$0xf]
  %v1460 = vld [vmem:[%s1406 + $0xd4] sm:$0xf]
  %v1461 = vld [vmem:[%s1406 + $0xd8] sm:$0xf]
  %v1462 = vld [vmem:[%s1406 + $0xdc] sm:$0xf]
  %v1463 = vld [vmem:[%s1406 + $0xe0] sm:$0xf]
  %v1464 = vld [vmem:[%s1406 + $0xe4] sm:$0xf]
  %v1465 = vld [vmem:[%s1406 + $0xe8] sm:$0xf]
  %v1466 = vld [vmem:[%s1406 + $0xec] sm:$0xf]
  %v1467 = vld [vmem:[%s1406 + $0xf0] sm:$0xf]
  %v1468 = vld [vmem:[%s1406 + $0xf4] sm:$0xf]
  %v1469 = vld [vmem:[%s1406 + $0xf8] sm:$0xf]
  %v1470 = vld [vmem:[%s1406 + $0xfc] sm:$0xf]
  %v1535 = vunpack.c.l.b16 %v1407
  %v1536 = vunpack.c.l.b16 %v1408
  %v1537 = vunpack.c.l.b16 %v1409
  %v1538 = vunpack.c.l.b16 %v1410
  %v1539 = vunpack.c.l.b16 %v1411
  %v1540 = vunpack.c.l.b16 %v1412
  %v1541 = vunpack.c.l.b16 %v1413
  %v1542 = vunpack.c.l.b16 %v1414
  %v1543 = vunpack.c.l.b16 %v1415
  %v1544 = vunpack.c.l.b16 %v1416
  %v1545 = vunpack.c.l.b16 %v1417
  %v1546 = vunpack.c.l.b16 %v1418
  %v1547 = vunpack.c.l.b16 %v1419
  %v1548 = vunpack.c.l.b16 %v1420
  %v1549 = vunpack.c.l.b16 %v1421
  %v1550 = vunpack.c.l.b16 %v1422
  %v1551 = vunpack.c.l.b16 %v1423
  %v1552 = vunpack.c.l.b16 %v1424
  %v1553 = vunpack.c.l.b16 %v1425
  %v1554 = vunpack.c.l.b16 %v1426
  %v1555 = vunpack.c.l.b16 %v1427
  %v1556 = vunpack.c.l.b16 %v1428
  %v1557 = vunpack.c.l.b16 %v1429
  %v1558 = vunpack.c.l.b16 %v1430
  %v1559 = vunpack.c.l.b16 %v1431
  %v1560 = vunpack.c.l.b16 %v1432
  %v1561 = vunpack.c.l.b16 %v1433
  %v1562 = vunpack.c.l.b16 %v1434
  %v1563 = vunpack.c.l.b16 %v1435
  %v1564 = vunpack.c.l.b16 %v1436
  %v1565 = vunpack.c.l.b16 %v1437
  %v1566 = vunpack.c.l.b16 %v1438
  %v1567 = vunpack.c.l.b16 %v1439
  %v1568 = vunpack.c.l.b16 %v1440
  %v1569 = vunpack.c.l.b16 %v1441
  %v1570 = vunpack.c.l.b16 %v1442
  %v1571 = vunpack.c.l.b16 %v1443
  %v1572 = vunpack.c.l.b16 %v1444
  %v1573 = vunpack.c.l.b16 %v1445
  %v1574 = vunpack.c.l.b16 %v1446
  %v1575 = vunpack.c.l.b16 %v1447
  %v1576 = vunpack.c.l.b16 %v1448
  %v1577 = vunpack.c.l.b16 %v1449
  %v1578 = vunpack.c.l.b16 %v1450
  %v1579 = vunpack.c.l.b16 %v1451
  %v1580 = vunpack.c.l.b16 %v1452
  %v1581 = vunpack.c.l.b16 %v1453
  %v1582 = vunpack.c.l.b16 %v1454
  %v1583 = vunpack.c.l.b16 %v1455
  %v1584 = vunpack.c.l.b16 %v1456
  %v1585 = vunpack.c.l.b16 %v1457
  %v1586 = vunpack.c.l.b16 %v1458
  %v1587 = vunpack.c.l.b16 %v1459
  %v1588 = vunpack.c.l.b16 %v1460
  %v1589 = vunpack.c.l.b16 %v1461
  %v1590 = vunpack.c.l.b16 %v1462
  %v1591 = vunpack.c.l.b16 %v1463
  %v1592 = vunpack.c.l.b16 %v1464
  %v1593 = vunpack.c.l.b16 %v1465
  %v1594 = vunpack.c.l.b16 %v1466
  %v1595 = vunpack.c.l.b16 %v1467
  %v1596 = vunpack.c.l.b16 %v1468
  %v1597 = vunpack.c.l.b16 %v1469
  %v1598 = vunpack.c.l.b16 %v1470
  %v1599 = vpack.c.b16 %v1536, %v1535
  %v1600 = vpack.c.b16 %v1538, %v1537
  %v1601 = vpack.c.b16 %v1540, %v1539
  %v1602 = vpack.c.b16 %v1542, %v1541
  %v1603 = vpack.c.b16 %v1544, %v1543
  %v1604 = vpack.c.b16 %v1546, %v1545
  %v1605 = vpack.c.b16 %v1548, %v1547
  %v1606 = vpack.c.b16 %v1550, %v1549
  %v1607 = vpack.c.b16 %v1552, %v1551
  %v1608 = vpack.c.b16 %v1554, %v1553
  %v1609 = vpack.c.b16 %v1556, %v1555
  %v1610 = vpack.c.b16 %v1558, %v1557
  %v1611 = vpack.c.b16 %v1560, %v1559
  %v1612 = vpack.c.b16 %v1562, %v1561
  %v1613 = vpack.c.b16 %v1564, %v1563
  %v1614 = vpack.c.b16 %v1566, %v1565
  %v1615 = vpack.c.b16 %v1568, %v1567
  %v1616 = vpack.c.b16 %v1570, %v1569
  %v1617 = vpack.c.b16 %v1572, %v1571
  %v1618 = vpack.c.b16 %v1574, %v1573
  %v1619 = vpack.c.b16 %v1576, %v1575
  %v1620 = vpack.c.b16 %v1578, %v1577
  %v1621 = vpack.c.b16 %v1580, %v1579
  %v1622 = vpack.c.b16 %v1582, %v1581
  %v1623 = vpack.c.b16 %v1584, %v1583
  %v1624 = vpack.c.b16 %v1586, %v1585
  %v1625 = vpack.c.b16 %v1588, %v1587
  %v1626 = vpack.c.b16 %v1590, %v1589
  %v1627 = vpack.c.b16 %v1592, %v1591
  %v1628 = vpack.c.b16 %v1594, %v1593
  %v1629 = vpack.c.b16 %v1596, %v1595
  %v1630 = vpack.c.b16 %v1598, %v1597
  %1663 = vmatprep.subr.bf16.mxu0 0
  %1664 = vmatpush1.bf16.msra.mxu0 %v1599
  %1665 = vmatprep.subr.bf16.mxu0 0
  %1666 = vmatpush1.bf16.msra.mxu0 %v1600
  %1667 = vmatprep.subr.bf16.mxu0 0
  %1668 = vmatpush1.bf16.msra.mxu0 %v1601
  %1669 = vmatprep.subr.bf16.mxu0 0
  %1670 = vmatpush1.bf16.msra.mxu0 %v1602
  %1671 = vmatprep.subr.bf16.mxu0 0
  %1672 = vmatpush1.bf16.msra.mxu0 %v1603
  %1673 = vmatprep.subr.bf16.mxu0 0
  %1674 = vmatpush1.bf16.msra.mxu0 %v1604
  %1675 = vmatprep.subr.bf16.mxu0 0
  %1676 = vmatpush1.bf16.msra.mxu0 %v1605
  %1677 = vmatprep.subr.bf16.mxu0 0
  %1678 = vmatpush1.bf16.msra.mxu0 %v1606
  %1679 = vmatprep.subr.bf16.mxu0 0
  %1680 = vmatpush1.bf16.msra.mxu0 %v1607
  %1681 = vmatprep.subr.bf16.mxu0 0
  %1682 = vmatpush1.bf16.msra.mxu0 %v1608
  %1683 = vmatprep.subr.bf16.mxu0 0
  %1684 = vmatpush1.bf16.msra.mxu0 %v1609
  %1685 = vmatprep.subr.bf16.mxu0 0
  %1686 = vmatpush1.bf16.msra.mxu0 %v1610
  %1687 = vmatprep.subr.bf16.mxu0 0
  %1688 = vmatpush1.bf16.msra.mxu0 %v1611
  %1689 = vmatprep.subr.bf16.mxu0 0
  %1690 = vmatpush1.bf16.msra.mxu0 %v1612
  %1691 = vmatprep.subr.bf16.mxu0 0
  %1692 = vmatpush1.bf16.msra.mxu0 %v1613
  %1693 = vmatprep.subr.bf16.mxu0 0
  %1694 = vmatpush1.bf16.msra.mxu0 %v1614
  %1695 = vmatprep.mubr.bf16.mxu0 %v179
  %1696 = vmatmul.mubr.bf16.gmra.mrb[0].mxu0 %v178
  %v1697 = vpop.f32.mrb[0].mxu0
  %v1698 = vadd.f32 %v277, %v1697
  %v1699 = vpop.f32.mrb[0].mxu0
  %v1700 = vpop.f32.mrb[0].mxu0
  %v1701 = vadd.f32 %v277, %v1700
  %v1702 = vpop.f32.mrb[0].mxu0
  %1703 = vmatprep.mubr.bf16.mxu0 %v183
  %1704 = vmatmul.mubr.bf16.gmra.mrb[0].mxu0 %v182
  %v1705 = vpop.f32.mrb[0].mxu0
  %v1706 = vadd.f32 %v277, %v1705
  %v1707 = vpop.f32.mrb[0].mxu0
  %v1708 = vpop.f32.mrb[0].mxu0
  %v1709 = vadd.f32 %v277, %v1708
  %v1710 = vpop.f32.mrb[0].mxu0
  %1711 = vmatprep.mubr.bf16.mxu0 %v187
  %1712 = vmatmul.mubr.bf16.gmra.mrb[0].mxu0 %v186
  %v1713 = vpop.f32.mrb[0].mxu0
  %v1714 = vadd.f32 %v277, %v1713
  %v1715 = vpop.f32.mrb[0].mxu0
  %v1716 = vpop.f32.mrb[0].mxu0
  %v1717 = vadd.f32 %v277, %v1716
  %v1718 = vpop.f32.mrb[0].mxu0
  %1719 = vmatprep.mubr.bf16.mxu0 %v191
  %1720 = vmatmul.mubr.bf16.gmra.mrb[0].mxu0 %v190
  %v1721 = vpop.f32.mrb[0].mxu0
  %v1722 = vadd.f32 %v277, %v1721
  %v1723 = vpop.f32.mrb[0].mxu0
  %v1724 = vpop.f32.mrb[0].mxu0
  %v1725 = vadd.f32 %v277, %v1724
  %v1726 = vpop.f32.mrb[0].mxu0
  %1727 = vmatprep.mubr.bf16.mxu0 %v195
  %1728 = vmatmul.mubr.bf16.gmra.mrb[0].mxu0 %v194
  %v1729 = vpop.f32.mrb[0].mxu0
  %v1730 = vadd.f32 %v277, %v1729
  %v1731 = vpop.f32.mrb[0].mxu0
  %v1732 = vpop.f32.mrb[0].mxu0
  %v1733 = vadd.f32 %v277, %v1732
  %v1734 = vpop.f32.mrb[0].mxu0
  %1735 = vmatprep.mubr.bf16.mxu0 %v199
  %1736 = vmatmul.mubr.bf16.gmra.mrb[0].mxu0 %v198
  %v1737 = vpop.f32.mrb[0].mxu0
  %v1738 = vadd.f32 %v277, %v1737
  %v1739 = vpop.f32.mrb[0].mxu0
  %v1740 = vpop.f32.mrb[0].mxu0
  %v1741 = vadd.f32 %v277, %v1740
  %v1742 = vpop.f32.mrb[0].mxu0
  %1743 = vmatprep.mubr.bf16.mxu0 %v203
  %1744 = vmatmul.mubr.bf16.gmra.mrb[0].mxu0 %v202
  %v1745 = vpop.f32.mrb[0].mxu0
  %v1746 = vadd.f32 %v277, %v1745
  %v1747 = vpop.f32.mrb[0].mxu0
  %v1748 = vpop.f32.mrb[0].mxu0
  %v1749 = vadd.f32 %v277, %v1748
  %v1750 = vpop.f32.mrb[0].mxu0
  %1751 = vmatprep.mubr.bf16.mxu0 %v207
  %1752 = vmatmul.mubr.bf16.gmra.mrb[0].mxu0 %v206
  %v1753 = vpop.f32.mrb[0].mxu0
  %v1754 = vadd.f32 %v277, %v1753
  %v1755 = vpop.f32.mrb[0].mxu0
  %v1756 = vpop.f32.mrb[0].mxu0
  %v1757 = vadd.f32 %v277, %v1756
  %v1758 = vpop.f32.mrb[0].mxu0
  %1759 = vdwg.mxu0
  %1760 = vmatprep.subr.bf16.mxu0 0
  %1761 = vmatpush1.bf16.msra.mxu0 %v1615
  %1762 = vmatprep.subr.bf16.mxu0 0
  %1763 = vmatpush1.bf16.msra.mxu0 %v1616
  %1764 = vmatprep.subr.bf16.mxu0 0
  %1765 = vmatpush1.bf16.msra.mxu0 %v1617
  %1766 = vmatprep.subr.bf16.mxu0 0
  %1767 = vmatpush1.bf16.msra.mxu0 %v1618
  %1768 = vmatprep.subr.bf16.mxu0 0
  %1769 = vmatpush1.bf16.msra.mxu0 %v1619
  %1770 = vmatprep.subr.bf16.mxu0 0
  %1771 = vmatpush1.bf16.msra.mxu0 %v1620
  %1772 = vmatprep.subr.bf16.mxu0 0
  %1773 = vmatpush1.bf16.msra.mxu0 %v1621
  %1774 = vmatprep.subr.bf16.mxu0 0
  %1775 = vmatpush1.bf16.msra.mxu0 %v1622
  %1776 = vmatprep.subr.bf16.mxu0 0
  %1777 = vmatpush1.bf16.msra.mxu0 %v1623
  %1778 = vmatprep.subr.bf16.mxu0 0
  %1779 = vmatpush1.bf16.msra.mxu0 %v1624
  %1780 = vmatprep.subr.bf16.mxu0 0
  %1781 = vmatpush1.bf16.msra.mxu0 %v1625
  %1782 = vmatprep.subr.bf16.mxu0 0
  %1783 = vmatpush1.bf16.msra.mxu0 %v1626
  %1784 = vmatprep.subr.bf16.mxu0 0
  %1785 = vmatpush1.bf16.msra.mxu0 %v1627
  %1786 = vmatprep.subr.bf16.mxu0 0
  %1787 = vmatpush1.bf16.msra.mxu0 %v1628
  %1788 = vmatprep.subr.bf16.mxu0 0
  %1789 = vmatpush1.bf16.msra.mxu0 %v1629
  %1790 = vmatprep.subr.bf16.mxu0 0
  %1791 = vmatpush1.bf16.msra.mxu0 %v1630
  %1792 = vmatprep.mubr.bf16.mxu0 %v181
  %1793 = vmatmul.mubr.bf16.gmra.mrb[0].mxu0 %v180
  %v1794 = vpop.f32.mrb[0].mxu0
  %v1795 = vadd.f32 %v1698, %v1794
  %v1796 = vpop.f32.mrb[0].mxu0
  %v1797 = vpop.f32.mrb[0].mxu0
  %v1798 = vadd.f32 %v1701, %v1797
  %v1799 = vpop.f32.mrb[0].mxu0
  %1800 = vmatprep.mubr.bf16.mxu0 %v185
  %1801 = vmatmul.mubr.bf16.gmra.mrb[0].mxu0 %v184
  %v1802 = vpop.f32.mrb[0].mxu0
  %v1803 = vadd.f32 %v1706, %v1802
  %v1804 = vpop.f32.mrb[0].mxu0
  %v1805 = vpop.f32.mrb[0].mxu0
  %v1806 = vadd.f32 %v1709, %v1805
  %v1807 = vpop.f32.mrb[0].mxu0
  %1808 = vmatprep.mubr.bf16.mxu0 %v189
  %1809 = vmatmul.mubr.bf16.gmra.mrb[0].mxu0 %v188
  %v1810 = vpop.f32.mrb[0].mxu0
  %v1811 = vadd.f32 %v1714, %v1810
  %v1812 = vpop.f32.mrb[0].mxu0
  %v1813 = vpop.f32.mrb[0].mxu0
  %v1814 = vadd.f32 %v1717, %v1813
  %v1815 = vpop.f32.mrb[0].mxu0
  %1816 = vmatprep.mubr.bf16.mxu0 %v1403
  %1817 = vmatmul.mubr.bf16.gmra.mrb[0].mxu0 %v1402
  %v1818 = vpop.f32.mrb[0].mxu0
  %v1819 = vadd.f32 %v1722, %v1818
  %v1820 = vpop.f32.mrb[0].mxu0
  %v1821 = vpop.f32.mrb[0].mxu0
  %v1822 = vadd.f32 %v1725, %v1821
  %v1823 = vpop.f32.mrb[0].mxu0
  %1824 = vmatprep.mubr.bf16.mxu0 %v197
  %1825 = vmatmul.mubr.bf16.gmra.mrb[0].mxu0 %v196
  %v1826 = vpop.f32.mrb[0].mxu0
  %v1827 = vadd.f32 %v1730, %v1826
  %v1828 = vpop.f32.mrb[0].mxu0
  %v1829 = vpop.f32.mrb[0].mxu0
  %v1830 = vadd.f32 %v1733, %v1829
  %v1831 = vpop.f32.mrb[0].mxu0
  %1832 = vmatprep.mubr.bf16.mxu0 %v201
  %1833 = vmatmul.mubr.bf16.gmra.mrb[0].mxu0 %v200
  %v1834 = vpop.f32.mrb[0].mxu0
  %v1835 = vadd.f32 %v1738, %v1834
  %v1836 = vpop.f32.mrb[0].mxu0
  %v1837 = vpop.f32.mrb[0].mxu0
  %v1838 = vadd.f32 %v1741, %v1837
  %v1839 = vpop.f32.mrb[0].mxu0
  %1840 = vmatprep.mubr.bf16.mxu0 %v205
  %1841 = vmatmul.mubr.bf16.gmra.mrb[0].mxu0 %v204
  %v1842 = vpop.f32.mrb[0].mxu0
  %v1843 = vadd.f32 %v1746, %v1842
  %v1844 = vpop.f32.mrb[0].mxu0
  %v1845 = vpop.f32.mrb[0].mxu0
  %v1846 = vadd.f32 %v1749, %v1845
  %v1847 = vpop.f32.mrb[0].mxu0
  %1848 = vmatprep.mubr.bf16.mxu0 %v1405
  %1849 = vmatmul.mubr.bf16.gmra.mrb[0].mxu0 %v1404
  %v1850 = vpop.f32.mrb[0].mxu0
  %v1851 = vadd.f32 %v1754, %v1850
  %v1852 = vpop.f32.mrb[0].mxu0
  %v1853 = vpop.f32.mrb[0].mxu0
  %v1854 = vadd.f32 %v1757, %v1853
  %v1855 = vpop.f32.mrb[0].mxu0
  %1856 = vdwg.mxu0
  %v1857 = vsel %vm665, %v1795, 0.0
  %v1858 = vsel %vm665, %v1798, 0.0
  %v1859 = vadd.f32 %v1857, %v1858
  %v1860 = vsel %vm665, %v1803, 0.0
  %v1861 = vadd.f32 %v1859, %v1860
  %v1862 = vsel %vm665, %v1806, 0.0
  %v1863 = vadd.f32 %v1861, %v1862
  %v1864 = vsel %vm665, %v1811, 0.0
  %v1865 = vadd.f32 %v1863, %v1864
  %v1866 = vsel %vm665, %v1814, 0.0
  %v1867 = vadd.f32 %v1865, %v1866
  %v1868 = vsel %vm665, %v1819, 0.0
  %v1869 = vadd.f32 %v1867, %v1868
  %v1870 = vsel %vm665, %v1822, 0.0
  %v1871 = vadd.f32 %v1869, %v1870
  %v1872 = vsel %vm665, %v1827, 0.0
  %v1873 = vadd.f32 %v1871, %v1872
  %v1874 = vsel %vm665, %v1830, 0.0
  %v1875 = vadd.f32 %v1873, %v1874
  %v1876 = vsel %vm665, %v1835, 0.0
  %v1877 = vadd.f32 %v1875, %v1876
  %v1878 = vsel %vm665, %v1838, 0.0
  %v1879 = vadd.f32 %v1877, %v1878
  %v1880 = vsel %vm665, %v1843, 0.0
  %v1881 = vadd.f32 %v1879, %v1880
  %v1882 = vsel %vm665, %v1846, 0.0
  %v1883 = vadd.f32 %v1881, %v1882
  %v1884 = vsel %vm665, %v1851, 0.0
  %v1885 = vadd.f32 %v1883, %v1884
  %v1886 = vsel %vm665, %v1854, 0.0
  %v1887 = vadd.f32 %v1885, %v1886
  %v1888 = vrot.slane %v1887, 4
  %v1889 = vadd.f32 %v1887, %v1888
  %v1890 = vrot.slane %v1889, 2
  %v1891 = vadd.f32 %v1889, %v1890
  %v1892 = vrot.slane %v1891, 1
  %v1893 = vadd.f32 %v1891, %v1892
  %v1894 = vadd.f32 %v1335, %v1893
  %v1895 = vmul.f32 %v1795, %v1795
  %v1896 = vmul.f32 %v1798, %v1798
  %v1897 = vmul.f32 %v1803, %v1803
  %v1898 = vmul.f32 %v1806, %v1806
  %v1899 = vmul.f32 %v1811, %v1811
  %v1900 = vmul.f32 %v1814, %v1814
  %v1901 = vmul.f32 %v1819, %v1819
  %v1902 = vmul.f32 %v1822, %v1822
  %v1903 = vmul.f32 %v1827, %v1827
  %v1904 = vmul.f32 %v1830, %v1830
  %v1905 = vmul.f32 %v1835, %v1835
  %v1906 = vmul.f32 %v1838, %v1838
  %v1907 = vmul.f32 %v1843, %v1843
  %v1908 = vmul.f32 %v1846, %v1846
  %v1909 = vmul.f32 %v1851, %v1851
  %v1910 = vmul.f32 %v1854, %v1854
  %v1911 = vsel %vm665, %v1895, 0.0
  %v1912 = vsel %vm665, %v1896, 0.0
  %v1913 = vadd.f32 %v1911, %v1912
  %v1914 = vsel %vm665, %v1897, 0.0
  %v1915 = vadd.f32 %v1913, %v1914
  %v1916 = vsel %vm665, %v1898, 0.0
  %v1917 = vadd.f32 %v1915, %v1916
  %v1918 = vsel %vm665, %v1899, 0.0
  %v1919 = vadd.f32 %v1917, %v1918
  %v1920 = vsel %vm665, %v1900, 0.0
  %v1921 = vadd.f32 %v1919, %v1920
  %v1922 = vsel %vm665, %v1901, 0.0
  %v1923 = vadd.f32 %v1921, %v1922
  %v1924 = vsel %vm665, %v1902, 0.0
  %v1925 = vadd.f32 %v1923, %v1924
  %v1926 = vsel %vm665, %v1903, 0.0
  %v1927 = vadd.f32 %v1925, %v1926
  %v1928 = vsel %vm665, %v1904, 0.0
  %v1929 = vadd.f32 %v1927, %v1928
  %v1930 = vsel %vm665, %v1905, 0.0
  %v1931 = vadd.f32 %v1929, %v1930
  %v1932 = vsel %vm665, %v1906, 0.0
  %v1933 = vadd.f32 %v1931, %v1932
  %v1934 = vsel %vm665, %v1907, 0.0
  %v1935 = vadd.f32 %v1933, %v1934
  %v1936 = vsel %vm665, %v1908, 0.0
  %v1937 = vadd.f32 %v1935, %v1936
  %v1938 = vsel %vm665, %v1909, 0.0
  %v1939 = vadd.f32 %v1937, %v1938
  %v1940 = vsel %vm665, %v1910, 0.0
  %v1941 = vadd.f32 %v1939, %v1940
  %v1942 = vrot.slane %v1941, 4
  %v1943 = vadd.f32 %v1941, %v1942
  %v1944 = vrot.slane %v1943, 2
  %v1945 = vadd.f32 %v1943, %v1944
  %v1946 = vrot.slane %v1945, 1
  %v1947 = vadd.f32 %v1945, %v1946
  %v1948 = vadd.f32 %v1389, %v1947
  %v1949 = vrot.slane %v45, 2
  %v1950 = vrot.slane %v46, 2
  %v1951 = vsel %vm758, %v1949, %v1950
  %v1952 = vrot.slane %v65, 2
  %v1953 = vrot.slane %v66, 2
  %v1954 = vsel %vm758, %v1952, %v1953
  %v1957 = vpack.c.bf16 %v1951, %v825
  %v1958 = vpack.c.bf16 %v1954, %v828
  %s1959 = scalar_lea.vmem %s1, 768
  %v1960 = vld [vmem:[%s1959] sm:$0xf]
  %v1961 = vld [vmem:[%s1959 + $0x4] sm:$0xf]
  %v1962 = vld [vmem:[%s1959 + $0x8] sm:$0xf]
  %v1963 = vld [vmem:[%s1959 + $0xc] sm:$0xf]
  %v1964 = vld [vmem:[%s1959 + $0x10] sm:$0xf]
  %v1965 = vld [vmem:[%s1959 + $0x14] sm:$0xf]
  %v1966 = vld [vmem:[%s1959 + $0x18] sm:$0xf]
  %v1967 = vld [vmem:[%s1959 + $0x1c] sm:$0xf]
  %v1968 = vld [vmem:[%s1959 + $0x20] sm:$0xf]
  %v1969 = vld [vmem:[%s1959 + $0x24] sm:$0xf]
  %v1970 = vld [vmem:[%s1959 + $0x28] sm:$0xf]
  %v1971 = vld [vmem:[%s1959 + $0x2c] sm:$0xf]
  %v1972 = vld [vmem:[%s1959 + $0x30] sm:$0xf]
  %v1973 = vld [vmem:[%s1959 + $0x34] sm:$0xf]
  %v1974 = vld [vmem:[%s1959 + $0x38] sm:$0xf]
  %v1975 = vld [vmem:[%s1959 + $0x3c] sm:$0xf]
  %v1976 = vld [vmem:[%s1959 + $0x40] sm:$0xf]
  %v1977 = vld [vmem:[%s1959 + $0x44] sm:$0xf]
  %v1978 = vld [vmem:[%s1959 + $0x48] sm:$0xf]
  %v1979 = vld [vmem:[%s1959 + $0x4c] sm:$0xf]
  %v1980 = vld [vmem:[%s1959 + $0x50] sm:$0xf]
  %v1981 = vld [vmem:[%s1959 + $0x54] sm:$0xf]
  %v1982 = vld [vmem:[%s1959 + $0x58] sm:$0xf]
  %v1983 = vld [vmem:[%s1959 + $0x5c] sm:$0xf]
  %v1984 = vld [vmem:[%s1959 + $0x60] sm:$0xf]
  %v1985 = vld [vmem:[%s1959 + $0x64] sm:$0xf]
  %v1986 = vld [vmem:[%s1959 + $0x68] sm:$0xf]
  %v1987 = vld [vmem:[%s1959 + $0x6c] sm:$0xf]
  %v1988 = vld [vmem:[%s1959 + $0x70] sm:$0xf]
  %v1989 = vld [vmem:[%s1959 + $0x74] sm:$0xf]
  %v1990 = vld [vmem:[%s1959 + $0x78] sm:$0xf]
  %v1991 = vld [vmem:[%s1959 + $0x7c] sm:$0xf]
  %v1992 = vld [vmem:[%s1959 + $0x80] sm:$0xf]
  %v1993 = vld [vmem:[%s1959 + $0x84] sm:$0xf]
  %v1994 = vld [vmem:[%s1959 + $0x88] sm:$0xf]
  %v1995 = vld [vmem:[%s1959 + $0x8c] sm:$0xf]
  %v1996 = vld [vmem:[%s1959 + $0x90] sm:$0xf]
  %v1997 = vld [vmem:[%s1959 + $0x94] sm:$0xf]
  %v1998 = vld [vmem:[%s1959 + $0x98] sm:$0xf]
  %v1999 = vld [vmem:[%s1959 + $0x9c] sm:$0xf]
  %v2000 = vld [vmem:[%s1959 + $0xa0] sm:$0xf]
  %v2001 = vld [vmem:[%s1959 + $0xa4] sm:$0xf]
  %v2002 = vld [vmem:[%s1959 + $0xa8] sm:$0xf]
  %v2003 = vld [vmem:[%s1959 + $0xac] sm:$0xf]
  %v2004 = vld [vmem:[%s1959 + $0xb0] sm:$0xf]
  %v2005 = vld [vmem:[%s1959 + $0xb4] sm:$0xf]
  %v2006 = vld [vmem:[%s1959 + $0xb8] sm:$0xf]
  %v2007 = vld [vmem:[%s1959 + $0xbc] sm:$0xf]
  %v2008 = vld [vmem:[%s1959 + $0xc0] sm:$0xf]
  %v2009 = vld [vmem:[%s1959 + $0xc4] sm:$0xf]
  %v2010 = vld [vmem:[%s1959 + $0xc8] sm:$0xf]
  %v2011 = vld [vmem:[%s1959 + $0xcc] sm:$0xf]
  %v2012 = vld [vmem:[%s1959 + $0xd0] sm:$0xf]
  %v2013 = vld [vmem:[%s1959 + $0xd4] sm:$0xf]
  %v2014 = vld [vmem:[%s1959 + $0xd8] sm:$0xf]
  %v2015 = vld [vmem:[%s1959 + $0xdc] sm:$0xf]
  %v2016 = vld [vmem:[%s1959 + $0xe0] sm:$0xf]
  %v2017 = vld [vmem:[%s1959 + $0xe4] sm:$0xf]
  %v2018 = vld [vmem:[%s1959 + $0xe8] sm:$0xf]
  %v2019 = vld [vmem:[%s1959 + $0xec] sm:$0xf]
  %v2020 = vld [vmem:[%s1959 + $0xf0] sm:$0xf]
  %v2021 = vld [vmem:[%s1959 + $0xf4] sm:$0xf]
  %v2022 = vld [vmem:[%s1959 + $0xf8] sm:$0xf]
  %v2023 = vld [vmem:[%s1959 + $0xfc] sm:$0xf]
  %v2088 = vunpack.c.l.b16 %v1960
  %v2089 = vunpack.c.l.b16 %v1961
  %v2090 = vunpack.c.l.b16 %v1962
  %v2091 = vunpack.c.l.b16 %v1963
  %v2092 = vunpack.c.l.b16 %v1964
  %v2093 = vunpack.c.l.b16 %v1965
  %v2094 = vunpack.c.l.b16 %v1966
  %v2095 = vunpack.c.l.b16 %v1967
  %v2096 = vunpack.c.l.b16 %v1968
  %v2097 = vunpack.c.l.b16 %v1969
  %v2098 = vunpack.c.l.b16 %v1970
  %v2099 = vunpack.c.l.b16 %v1971
  %v2100 = vunpack.c.l.b16 %v1972
  %v2101 = vunpack.c.l.b16 %v1973
  %v2102 = vunpack.c.l.b16 %v1974
  %v2103 = vunpack.c.l.b16 %v1975
  %v2104 = vunpack.c.l.b16 %v1976
  %v2105 = vunpack.c.l.b16 %v1977
  %v2106 = vunpack.c.l.b16 %v1978
  %v2107 = vunpack.c.l.b16 %v1979
  %v2108 = vunpack.c.l.b16 %v1980
  %v2109 = vunpack.c.l.b16 %v1981
  %v2110 = vunpack.c.l.b16 %v1982
  %v2111 = vunpack.c.l.b16 %v1983
  %v2112 = vunpack.c.l.b16 %v1984
  %v2113 = vunpack.c.l.b16 %v1985
  %v2114 = vunpack.c.l.b16 %v1986
  %v2115 = vunpack.c.l.b16 %v1987
  %v2116 = vunpack.c.l.b16 %v1988
  %v2117 = vunpack.c.l.b16 %v1989
  %v2118 = vunpack.c.l.b16 %v1990
  %v2119 = vunpack.c.l.b16 %v1991
  %v2120 = vunpack.c.l.b16 %v1992
  %v2121 = vunpack.c.l.b16 %v1993
  %v2122 = vunpack.c.l.b16 %v1994
  %v2123 = vunpack.c.l.b16 %v1995
  %v2124 = vunpack.c.l.b16 %v1996
  %v2125 = vunpack.c.l.b16 %v1997
  %v2126 = vunpack.c.l.b16 %v1998
  %v2127 = vunpack.c.l.b16 %v1999
  %v2128 = vunpack.c.l.b16 %v2000
  %v2129 = vunpack.c.l.b16 %v2001
  %v2130 = vunpack.c.l.b16 %v2002
  %v2131 = vunpack.c.l.b16 %v2003
  %v2132 = vunpack.c.l.b16 %v2004
  %v2133 = vunpack.c.l.b16 %v2005
  %v2134 = vunpack.c.l.b16 %v2006
  %v2135 = vunpack.c.l.b16 %v2007
  %v2136 = vunpack.c.l.b16 %v2008
  %v2137 = vunpack.c.l.b16 %v2009
  %v2138 = vunpack.c.l.b16 %v2010
  %v2139 = vunpack.c.l.b16 %v2011
  %v2140 = vunpack.c.l.b16 %v2012
  %v2141 = vunpack.c.l.b16 %v2013
  %v2142 = vunpack.c.l.b16 %v2014
  %v2143 = vunpack.c.l.b16 %v2015
  %v2144 = vunpack.c.l.b16 %v2016
  %v2145 = vunpack.c.l.b16 %v2017
  %v2146 = vunpack.c.l.b16 %v2018
  %v2147 = vunpack.c.l.b16 %v2019
  %v2148 = vunpack.c.l.b16 %v2020
  %v2149 = vunpack.c.l.b16 %v2021
  %v2150 = vunpack.c.l.b16 %v2022
  %v2151 = vunpack.c.l.b16 %v2023
  %v2152 = vpack.c.b16 %v2089, %v2088
  %v2153 = vpack.c.b16 %v2091, %v2090
  %v2154 = vpack.c.b16 %v2093, %v2092
  %v2155 = vpack.c.b16 %v2095, %v2094
  %v2156 = vpack.c.b16 %v2097, %v2096
  %v2157 = vpack.c.b16 %v2099, %v2098
  %v2158 = vpack.c.b16 %v2101, %v2100
  %v2159 = vpack.c.b16 %v2103, %v2102
  %v2160 = vpack.c.b16 %v2105, %v2104
  %v2161 = vpack.c.b16 %v2107, %v2106
  %v2162 = vpack.c.b16 %v2109, %v2108
  %v2163 = vpack.c.b16 %v2111, %v2110
  %v2164 = vpack.c.b16 %v2113, %v2112
  %v2165 = vpack.c.b16 %v2115, %v2114
  %v2166 = vpack.c.b16 %v2117, %v2116
  %v2167 = vpack.c.b16 %v2119, %v2118
  %v2168 = vpack.c.b16 %v2121, %v2120
  %v2169 = vpack.c.b16 %v2123, %v2122
  %v2170 = vpack.c.b16 %v2125, %v2124
  %v2171 = vpack.c.b16 %v2127, %v2126
  %v2172 = vpack.c.b16 %v2129, %v2128
  %v2173 = vpack.c.b16 %v2131, %v2130
  %v2174 = vpack.c.b16 %v2133, %v2132
  %v2175 = vpack.c.b16 %v2135, %v2134
  %v2176 = vpack.c.b16 %v2137, %v2136
  %v2177 = vpack.c.b16 %v2139, %v2138
  %v2178 = vpack.c.b16 %v2141, %v2140
  %v2179 = vpack.c.b16 %v2143, %v2142
  %v2180 = vpack.c.b16 %v2145, %v2144
  %v2181 = vpack.c.b16 %v2147, %v2146
  %v2182 = vpack.c.b16 %v2149, %v2148
  %v2183 = vpack.c.b16 %v2151, %v2150
  %2216 = vmatprep.subr.bf16.mxu0 0
  %2217 = vmatpush1.bf16.msra.mxu0 %v2152
  %2218 = vmatprep.subr.bf16.mxu0 0
  %2219 = vmatpush1.bf16.msra.mxu0 %v2153
  %2220 = vmatprep.subr.bf16.mxu0 0
  %2221 = vmatpush1.bf16.msra.mxu0 %v2154
  %2222 = vmatprep.subr.bf16.mxu0 0
  %2223 = vmatpush1.bf16.msra.mxu0 %v2155
  %2224 = vmatprep.subr.bf16.mxu0 0
  %2225 = vmatpush1.bf16.msra.mxu0 %v2156
  %2226 = vmatprep.subr.bf16.mxu0 0
  %2227 = vmatpush1.bf16.msra.mxu0 %v2157
  %2228 = vmatprep.subr.bf16.mxu0 0
  %2229 = vmatpush1.bf16.msra.mxu0 %v2158
  %2230 = vmatprep.subr.bf16.mxu0 0
  %2231 = vmatpush1.bf16.msra.mxu0 %v2159
  %2232 = vmatprep.subr.bf16.mxu0 0
  %2233 = vmatpush1.bf16.msra.mxu0 %v2160
  %2234 = vmatprep.subr.bf16.mxu0 0
  %2235 = vmatpush1.bf16.msra.mxu0 %v2161
  %2236 = vmatprep.subr.bf16.mxu0 0
  %2237 = vmatpush1.bf16.msra.mxu0 %v2162
  %2238 = vmatprep.subr.bf16.mxu0 0
  %2239 = vmatpush1.bf16.msra.mxu0 %v2163
  %2240 = vmatprep.subr.bf16.mxu0 0
  %2241 = vmatpush1.bf16.msra.mxu0 %v2164
  %2242 = vmatprep.subr.bf16.mxu0 0
  %2243 = vmatpush1.bf16.msra.mxu0 %v2165
  %2244 = vmatprep.subr.bf16.mxu0 0
  %2245 = vmatpush1.bf16.msra.mxu0 %v2166
  %2246 = vmatprep.subr.bf16.mxu0 0
  %2247 = vmatpush1.bf16.msra.mxu0 %v2167
  %2248 = vmatprep.mubr.bf16.mxu0 %v832
  %2249 = vmatmul.mubr.bf16.gmra.mrb[0].mxu0 %v179
  %v2250 = vpop.f32.mrb[0].mxu0
  %v2251 = vadd.f32 %v277, %v2250
  %v2252 = vpop.f32.mrb[0].mxu0
  %v2253 = vpop.f32.mrb[0].mxu0
  %v2254 = vadd.f32 %v277, %v2253
  %v2255 = vpop.f32.mrb[0].mxu0
  %2256 = vmatprep.mubr.bf16.mxu0 %v834
  %2257 = vmatmul.mubr.bf16.gmra.mrb[0].mxu0 %v183
  %v2258 = vpop.f32.mrb[0].mxu0
  %v2259 = vadd.f32 %v277, %v2258
  %v2260 = vpop.f32.mrb[0].mxu0
  %v2261 = vpop.f32.mrb[0].mxu0
  %v2262 = vadd.f32 %v277, %v2261
  %v2263 = vpop.f32.mrb[0].mxu0
  %2264 = vmatprep.mubr.bf16.mxu0 %v836
  %2265 = vmatmul.mubr.bf16.gmra.mrb[0].mxu0 %v187
  %v2266 = vpop.f32.mrb[0].mxu0
  %v2267 = vadd.f32 %v277, %v2266
  %v2268 = vpop.f32.mrb[0].mxu0
  %v2269 = vpop.f32.mrb[0].mxu0
  %v2270 = vadd.f32 %v277, %v2269
  %v2271 = vpop.f32.mrb[0].mxu0
  %2272 = vmatprep.mubr.bf16.mxu0 %v838
  %2273 = vmatmul.mubr.bf16.gmra.mrb[0].mxu0 %v191
  %v2274 = vpop.f32.mrb[0].mxu0
  %v2275 = vadd.f32 %v277, %v2274
  %v2276 = vpop.f32.mrb[0].mxu0
  %v2277 = vpop.f32.mrb[0].mxu0
  %v2278 = vadd.f32 %v277, %v2277
  %v2279 = vpop.f32.mrb[0].mxu0
  %2280 = vmatprep.mubr.bf16.mxu0 %v840
  %2281 = vmatmul.mubr.bf16.gmra.mrb[0].mxu0 %v195
  %v2282 = vpop.f32.mrb[0].mxu0
  %v2283 = vadd.f32 %v277, %v2282
  %v2284 = vpop.f32.mrb[0].mxu0
  %v2285 = vpop.f32.mrb[0].mxu0
  %v2286 = vadd.f32 %v277, %v2285
  %v2287 = vpop.f32.mrb[0].mxu0
  %2288 = vmatprep.mubr.bf16.mxu0 %v842
  %2289 = vmatmul.mubr.bf16.gmra.mrb[0].mxu0 %v199
  %v2290 = vpop.f32.mrb[0].mxu0
  %v2291 = vadd.f32 %v277, %v2290
  %v2292 = vpop.f32.mrb[0].mxu0
  %v2293 = vpop.f32.mrb[0].mxu0
  %v2294 = vadd.f32 %v277, %v2293
  %v2295 = vpop.f32.mrb[0].mxu0
  %2296 = vmatprep.mubr.bf16.mxu0 %v844
  %2297 = vmatmul.mubr.bf16.gmra.mrb[0].mxu0 %v203
  %v2298 = vpop.f32.mrb[0].mxu0
  %v2299 = vadd.f32 %v277, %v2298
  %v2300 = vpop.f32.mrb[0].mxu0
  %v2301 = vpop.f32.mrb[0].mxu0
  %v2302 = vadd.f32 %v277, %v2301
  %v2303 = vpop.f32.mrb[0].mxu0
  %2304 = vmatprep.mubr.bf16.mxu0 %v846
  %2305 = vmatmul.mubr.bf16.gmra.mrb[0].mxu0 %v207
  %v2306 = vpop.f32.mrb[0].mxu0
  %v2307 = vadd.f32 %v277, %v2306
  %v2308 = vpop.f32.mrb[0].mxu0
  %v2309 = vpop.f32.mrb[0].mxu0
  %v2310 = vadd.f32 %v277, %v2309
  %v2311 = vpop.f32.mrb[0].mxu0
  %2312 = vdwg.mxu0
  %2313 = vmatprep.subr.bf16.mxu0 0
  %2314 = vmatpush1.bf16.msra.mxu0 %v2168
  %2315 = vmatprep.subr.bf16.mxu0 0
  %2316 = vmatpush1.bf16.msra.mxu0 %v2169
  %2317 = vmatprep.subr.bf16.mxu0 0
  %2318 = vmatpush1.bf16.msra.mxu0 %v2170
  %2319 = vmatprep.subr.bf16.mxu0 0
  %2320 = vmatpush1.bf16.msra.mxu0 %v2171
  %2321 = vmatprep.subr.bf16.mxu0 0
  %2322 = vmatpush1.bf16.msra.mxu0 %v2172
  %2323 = vmatprep.subr.bf16.mxu0 0
  %2324 = vmatpush1.bf16.msra.mxu0 %v2173
  %2325 = vmatprep.subr.bf16.mxu0 0
  %2326 = vmatpush1.bf16.msra.mxu0 %v2174
  %2327 = vmatprep.subr.bf16.mxu0 0
  %2328 = vmatpush1.bf16.msra.mxu0 %v2175
  %2329 = vmatprep.subr.bf16.mxu0 0
  %2330 = vmatpush1.bf16.msra.mxu0 %v2176
  %2331 = vmatprep.subr.bf16.mxu0 0
  %2332 = vmatpush1.bf16.msra.mxu0 %v2177
  %2333 = vmatprep.subr.bf16.mxu0 0
  %2334 = vmatpush1.bf16.msra.mxu0 %v2178
  %2335 = vmatprep.subr.bf16.mxu0 0
  %2336 = vmatpush1.bf16.msra.mxu0 %v2179
  %2337 = vmatprep.subr.bf16.mxu0 0
  %2338 = vmatpush1.bf16.msra.mxu0 %v2180
  %2339 = vmatprep.subr.bf16.mxu0 0
  %2340 = vmatpush1.bf16.msra.mxu0 %v2181
  %2341 = vmatprep.subr.bf16.mxu0 0
  %2342 = vmatpush1.bf16.msra.mxu0 %v2182
  %2343 = vmatprep.subr.bf16.mxu0 0
  %2344 = vmatpush1.bf16.msra.mxu0 %v2183
  %2345 = vmatprep.mubr.bf16.mxu0 %v833
  %2346 = vmatmul.mubr.bf16.gmra.mrb[0].mxu0 %v181
  %v2347 = vpop.f32.mrb[0].mxu0
  %v2348 = vadd.f32 %v2251, %v2347
  %v2349 = vpop.f32.mrb[0].mxu0
  %v2350 = vpop.f32.mrb[0].mxu0
  %v2351 = vadd.f32 %v2254, %v2350
  %v2352 = vpop.f32.mrb[0].mxu0
  %2353 = vmatprep.mubr.bf16.mxu0 %v835
  %2354 = vmatmul.mubr.bf16.gmra.mrb[0].mxu0 %v185
  %v2355 = vpop.f32.mrb[0].mxu0
  %v2356 = vadd.f32 %v2259, %v2355
  %v2357 = vpop.f32.mrb[0].mxu0
  %v2358 = vpop.f32.mrb[0].mxu0
  %v2359 = vadd.f32 %v2262, %v2358
  %v2360 = vpop.f32.mrb[0].mxu0
  %2361 = vmatprep.mubr.bf16.mxu0 %v837
  %2362 = vmatmul.mubr.bf16.gmra.mrb[0].mxu0 %v189
  %v2363 = vpop.f32.mrb[0].mxu0
  %v2364 = vadd.f32 %v2267, %v2363
  %v2365 = vpop.f32.mrb[0].mxu0
  %v2366 = vpop.f32.mrb[0].mxu0
  %v2367 = vadd.f32 %v2270, %v2366
  %v2368 = vpop.f32.mrb[0].mxu0
  %2369 = vmatprep.mubr.bf16.mxu0 %v1957
  %2370 = vmatmul.mubr.bf16.gmra.mrb[0].mxu0 %v1403
  %v2371 = vpop.f32.mrb[0].mxu0
  %v2372 = vadd.f32 %v2275, %v2371
  %v2373 = vpop.f32.mrb[0].mxu0
  %v2374 = vpop.f32.mrb[0].mxu0
  %v2375 = vadd.f32 %v2278, %v2374
  %v2376 = vpop.f32.mrb[0].mxu0
  %2377 = vmatprep.mubr.bf16.mxu0 %v841
  %2378 = vmatmul.mubr.bf16.gmra.mrb[0].mxu0 %v197
  %v2379 = vpop.f32.mrb[0].mxu0
  %v2380 = vadd.f32 %v2283, %v2379
  %v2381 = vpop.f32.mrb[0].mxu0
  %v2382 = vpop.f32.mrb[0].mxu0
  %v2383 = vadd.f32 %v2286, %v2382
  %v2384 = vpop.f32.mrb[0].mxu0
  %2385 = vmatprep.mubr.bf16.mxu0 %v843
  %2386 = vmatmul.mubr.bf16.gmra.mrb[0].mxu0 %v201
  %v2387 = vpop.f32.mrb[0].mxu0
  %v2388 = vadd.f32 %v2291, %v2387
  %v2389 = vpop.f32.mrb[0].mxu0
  %v2390 = vpop.f32.mrb[0].mxu0
  %v2391 = vadd.f32 %v2294, %v2390
  %v2392 = vpop.f32.mrb[0].mxu0
  %2393 = vmatprep.mubr.bf16.mxu0 %v845
  %2394 = vmatmul.mubr.bf16.gmra.mrb[0].mxu0 %v205
  %v2395 = vpop.f32.mrb[0].mxu0
  %v2396 = vadd.f32 %v2299, %v2395
  %v2397 = vpop.f32.mrb[0].mxu0
  %v2398 = vpop.f32.mrb[0].mxu0
  %v2399 = vadd.f32 %v2302, %v2398
  %v2400 = vpop.f32.mrb[0].mxu0
  %2401 = vmatprep.mubr.bf16.mxu0 %v1958
  %2402 = vmatmul.mubr.bf16.gmra.mrb[0].mxu0 %v1405
  %v2403 = vpop.f32.mrb[0].mxu0
  %v2404 = vadd.f32 %v2307, %v2403
  %v2405 = vpop.f32.mrb[0].mxu0
  %v2406 = vpop.f32.mrb[0].mxu0
  %v2407 = vadd.f32 %v2310, %v2406
  %v2408 = vpop.f32.mrb[0].mxu0
  %2409 = vdwg.mxu0
  %v2410 = vsel %vm665, %v2348, 0.0
  %v2411 = vsel %vm665, %v2351, 0.0
  %v2412 = vadd.f32 %v2410, %v2411
  %v2413 = vsel %vm665, %v2356, 0.0
  %v2414 = vadd.f32 %v2412, %v2413
  %v2415 = vsel %vm665, %v2359, 0.0
  %v2416 = vadd.f32 %v2414, %v2415
  %v2417 = vsel %vm665, %v2364, 0.0
  %v2418 = vadd.f32 %v2416, %v2417
  %v2419 = vsel %vm665, %v2367, 0.0
  %v2420 = vadd.f32 %v2418, %v2419
  %v2421 = vsel %vm665, %v2372, 0.0
  %v2422 = vadd.f32 %v2420, %v2421
  %v2423 = vsel %vm665, %v2375, 0.0
  %v2424 = vadd.f32 %v2422, %v2423
  %v2425 = vsel %vm665, %v2380, 0.0
  %v2426 = vadd.f32 %v2424, %v2425
  %v2427 = vsel %vm665, %v2383, 0.0
  %v2428 = vadd.f32 %v2426, %v2427
  %v2429 = vsel %vm665, %v2388, 0.0
  %v2430 = vadd.f32 %v2428, %v2429
  %v2431 = vsel %vm665, %v2391, 0.0
  %v2432 = vadd.f32 %v2430, %v2431
  %v2433 = vsel %vm665, %v2396, 0.0
  %v2434 = vadd.f32 %v2432, %v2433
  %v2435 = vsel %vm665, %v2399, 0.0
  %v2436 = vadd.f32 %v2434, %v2435
  %v2437 = vsel %vm665, %v2404, 0.0
  %v2438 = vadd.f32 %v2436, %v2437
  %v2439 = vsel %vm665, %v2407, 0.0
  %v2440 = vadd.f32 %v2438, %v2439
  %v2441 = vrot.slane %v2440, 4
  %v2442 = vadd.f32 %v2440, %v2441
  %v2443 = vrot.slane %v2442, 2
  %v2444 = vadd.f32 %v2442, %v2443
  %v2445 = vrot.slane %v2444, 1
  %v2446 = vadd.f32 %v2444, %v2445
  %v2447 = vadd.f32 %v1894, %v2446
  %v2448 = vmul.f32 %v2348, %v2348
  %v2449 = vmul.f32 %v2351, %v2351
  %v2450 = vmul.f32 %v2356, %v2356
  %v2451 = vmul.f32 %v2359, %v2359
  %v2452 = vmul.f32 %v2364, %v2364
  %v2453 = vmul.f32 %v2367, %v2367
  %v2454 = vmul.f32 %v2372, %v2372
  %v2455 = vmul.f32 %v2375, %v2375
  %v2456 = vmul.f32 %v2380, %v2380
  %v2457 = vmul.f32 %v2383, %v2383
  %v2458 = vmul.f32 %v2388, %v2388
  %v2459 = vmul.f32 %v2391, %v2391
  %v2460 = vmul.f32 %v2396, %v2396
  %v2461 = vmul.f32 %v2399, %v2399
  %v2462 = vmul.f32 %v2404, %v2404
  %v2463 = vmul.f32 %v2407, %v2407
  %v2464 = vsel %vm665, %v2448, 0.0
  %v2465 = vsel %vm665, %v2449, 0.0
  %v2466 = vadd.f32 %v2464, %v2465
  %v2467 = vsel %vm665, %v2450, 0.0
  %v2468 = vadd.f32 %v2466, %v2467
  %v2469 = vsel %vm665, %v2451, 0.0
  %v2470 = vadd.f32 %v2468, %v2469
  %v2471 = vsel %vm665, %v2452, 0.0
  %v2472 = vadd.f32 %v2470, %v2471
  %v2473 = vsel %vm665, %v2453, 0.0
  %v2474 = vadd.f32 %v2472, %v2473
  %v2475 = vsel %vm665, %v2454, 0.0
  %v2476 = vadd.f32 %v2474, %v2475
  %v2477 = vsel %vm665, %v2455, 0.0
  %v2478 = vadd.f32 %v2476, %v2477
  %v2479 = vsel %vm665, %v2456, 0.0
  %v2480 = vadd.f32 %v2478, %v2479
  %v2481 = vsel %vm665, %v2457, 0.0
  %v2482 = vadd.f32 %v2480, %v2481
  %v2483 = vsel %vm665, %v2458, 0.0
  %v2484 = vadd.f32 %v2482, %v2483
  %v2485 = vsel %vm665, %v2459, 0.0
  %v2486 = vadd.f32 %v2484, %v2485
  %v2487 = vsel %vm665, %v2460, 0.0
  %v2488 = vadd.f32 %v2486, %v2487
  %v2489 = vsel %vm665, %v2461, 0.0
  %v2490 = vadd.f32 %v2488, %v2489
  %v2491 = vsel %vm665, %v2462, 0.0
  %v2492 = vadd.f32 %v2490, %v2491
  %v2493 = vsel %vm665, %v2463, 0.0
  %v2494 = vadd.f32 %v2492, %v2493
  %v2495 = vrot.slane %v2494, 4
  %v2496 = vadd.f32 %v2494, %v2495
  %v2497 = vrot.slane %v2496, 2
  %v2498 = vadd.f32 %v2496, %v2497
  %v2499 = vrot.slane %v2498, 1
  %v2500 = vadd.f32 %v2498, %v2499
  %v2501 = vadd.f32 %v1948, %v2500
  %v2502 = vrcp.pop 512.0
  %v2503 = vmul.f32 %v2447, %v2502
  %v2504 = vmul.f32 %v2501, %v2502
  %v2505 = vmul.f32 %v2503, %v2503
  %v2506 = vsub.f32 %v2504, %v2505
  %v2507 = vadd.f32 %v2506, 0.8
  %v2508 = vrsqrt.pop %v2507
  %v2509 = vld [vmem:[%s3] sm:$0x1]
  %v2510 = vmul.f32 %v2508, %v2509
  %v2511 = vld [vmem:[%s4] sm:$0x1]
  %v2512 = vmul.f32 %v2503, %v2510
  %v2513 = vsub.f32 %v2511, %v2512
  %2514 = vst [vmem:[#allocation2] sm:$0xff] 0.0
  %2515 = vst [vmem:[#allocation2 + $0x8] sm:$0x3] 0.0
  %2516 = vst [vmem:[#allocation2 + $0x10] sm:$0xff] 0.0
  %2517 = vst [vmem:[#allocation2 + $0x18] sm:$0x3] 0.0
  %2518 = vst [vmem:[#allocation2 + $0x20] sm:$0xff] 0.0
  %2519 = vst [vmem:[#allocation2 + $0x28] sm:$0x3] 0.0
  %2520 = vst [vmem:[#allocation2 + $0x30] sm:$0xff] 0.0
  %2521 = vst [vmem:[#allocation2 + $0x38] sm:$0x3] 0.0
  %2522 = vst [vmem:[#allocation2 + $0x40] sm:$0xff] 0.0
  %2523 = vst [vmem:[#allocation2 + $0x48] sm:$0x3] 0.0
  %2524 = vst [vmem:[#allocation2 + $0x50] sm:$0xff] 0.0
  %2525 = vst [vmem:[#allocation2 + $0x58] sm:$0x3] 0.0
  %2526 = vst [vmem:[#allocation2 + $0x60] sm:$0xff] 0.0
  %2527 = vst [vmem:[#allocation2 + $0x68] sm:$0x3] 0.0
  %2528 = vst [vmem:[#allocation2 + $0x70] sm:$0xff] 0.0
  %2529 = vst [vmem:[#allocation2 + $0x78] sm:$0x3] 0.0
  %2530 = vst [vmem:[#allocation2 + $0x80] sm:$0xff] 0.0
  %2531 = vst [vmem:[#allocation2 + $0x88] sm:$0x3] 0.0
  %2532 = vst [vmem:[#allocation2 + $0x90] sm:$0xff] 0.0
  %2533 = vst [vmem:[#allocation2 + $0x98] sm:$0x3] 0.0
  %2534 = vst [vmem:[#allocation2 + $0xa0] sm:$0xff] 0.0
  %2535 = vst [vmem:[#allocation2 + $0xa8] sm:$0x3] 0.0
  %2536 = vst [vmem:[#allocation2 + $0xb0] sm:$0xff] 0.0
  %2537 = vst [vmem:[#allocation2 + $0xb8] sm:$0x3] 0.0
  %2538 = vst [vmem:[#allocation2 + $0xc0] sm:$0xff] 0.0
  %2539 = vst [vmem:[#allocation2 + $0xc8] sm:$0x3] 0.0
  %2540 = vst [vmem:[#allocation2 + $0xd0] sm:$0xff] 0.0
  %2541 = vst [vmem:[#allocation2 + $0xd8] sm:$0x3] 0.0
  %2542 = vst [vmem:[#allocation2 + $0xe0] sm:$0xff] 0.0
  %2543 = vst [vmem:[#allocation2 + $0xe8] sm:$0x3] 0.0
  %2544 = vst [vmem:[#allocation2 + $0xf0] sm:$0xff] 0.0
  %2545 = vst [vmem:[#allocation2 + $0xf8] sm:$0x3] 0.0
  %2546 = vst [vmem:[#allocation2 + $0x100] sm:$0xff] 0.0
  %2547 = vst [vmem:[#allocation2 + $0x108] sm:$0x3] 0.0
  %2548 = vst [vmem:[#allocation2 + $0x110] sm:$0xff] 0.0
  %2549 = vst [vmem:[#allocation2 + $0x118] sm:$0x3] 0.0
  %2550 = vst [vmem:[#allocation2 + $0x120] sm:$0xff] 0.0
  %2551 = vst [vmem:[#allocation2 + $0x128] sm:$0x3] 0.0
  %2552 = vst [vmem:[#allocation2 + $0x130] sm:$0xff] 0.0
  %2553 = vst [vmem:[#allocation2 + $0x138] sm:$0x3] 0.0
  %2554 = vst [vmem:[#allocation2 + $0x140] sm:$0xff] 0.0
  %2555 = vst [vmem:[#allocation2 + $0x148] sm:$0x3] 0.0
  %2556 = vst [vmem:[#allocation2 + $0x150] sm:$0xff] 0.0
  %2557 = vst [vmem:[#allocation2 + $0x158] sm:$0x3] 0.0
  %2558 = vst [vmem:[#allocation2 + $0x160] sm:$0xff] 0.0
  %2559 = vst [vmem:[#allocation2 + $0x168] sm:$0x3] 0.0
  %2560 = vst [vmem:[#allocation2 + $0x170] sm:$0xff] 0.0
  %2561 = vst [vmem:[#allocation2 + $0x178] sm:$0x3] 0.0
  %2562 = vst [vmem:[#allocation2 + $0x180] sm:$0xff] 0.0
  %2563 = vst [vmem:[#allocation2 + $0x188] sm:$0x3] 0.0
  %2564 = vst [vmem:[#allocation2 + $0x190] sm:$0xff] 0.0
  %2565 = vst [vmem:[#allocation2 + $0x198] sm:$0x3] 0.0
  %2566 = vst [vmem:[#allocation2 + $0x1a0] sm:$0xff] 0.0
  %2567 = vst [vmem:[#allocation2 + $0x1a8] sm:$0x3] 0.0
  %2568 = vst [vmem:[#allocation2 + $0x1b0] sm:$0xff] 0.0
  %2569 = vst [vmem:[#allocation2 + $0x1b8] sm:$0x3] 0.0
  %2570 = vst [vmem:[#allocation2 + $0x1c0] sm:$0xff] 0.0
  %2571 = vst [vmem:[#allocation2 + $0x1c8] sm:$0x3] 0.0
  %2572 = vst [vmem:[#allocation2 + $0x1d0] sm:$0xff] 0.0
  %2573 = vst [vmem:[#allocation2 + $0x1d8] sm:$0x3] 0.0
  %2574 = vst [vmem:[#allocation2 + $0x1e0] sm:$0xff] 0.0
  %2575 = vst [vmem:[#allocation2 + $0x1e8] sm:$0x3] 0.0
  %2576 = vst [vmem:[#allocation2 + $0x1f0] sm:$0xff] 0.0
  %2577 = vst [vmem:[#allocation2 + $0x1f8] sm:$0x3] 0.0
  %2578 = vst [vmem:[#allocation2 + $0x200] sm:$0xff] 0.0
  %2579 = vst [vmem:[#allocation2 + $0x208] sm:$0x3] 0.0
  %2580 = vst [vmem:[#allocation2 + $0x210] sm:$0xff] 0.0
  %2581 = vst [vmem:[#allocation2 + $0x218] sm:$0x3] 0.0
  %2582 = vst [vmem:[#allocation2 + $0x220] sm:$0xff] 0.0
  %2583 = vst [vmem:[#allocation2 + $0x228] sm:$0x3] 0.0
  %2584 = vst [vmem:[#allocation2 + $0x230] sm:$0xff] 0.0
  %2585 = vst [vmem:[#allocation2 + $0x238] sm:$0x3] 0.0
  %2586 = vst [vmem:[#allocation2 + $0x240] sm:$0xff] 0.0
  %2587 = vst [vmem:[#allocation2 + $0x248] sm:$0x3] 0.0
  %2588 = vst [vmem:[#allocation2 + $0x250] sm:$0xff] 0.0
  %2589 = vst [vmem:[#allocation2 + $0x258] sm:$0x3] 0.0
  %2590 = vst [vmem:[#allocation2 + $0x260] sm:$0xff] 0.0
  %2591 = vst [vmem:[#allocation2 + $0x268] sm:$0x3] 0.0
  %2592 = vst [vmem:[#allocation2 + $0x270] sm:$0xff] 0.0
  %2593 = vst [vmem:[#allocation2 + $0x278] sm:$0x3] 0.0
  %2594 = vst [vmem:[#allocation2 + $0x280] sm:$0xff] 0.0
  %2595 = vst [vmem:[#allocation2 + $0x288] sm:$0x3] 0.0
  %2596 = vst [vmem:[#allocation2 + $0x290] sm:$0xff] 0.0
  %2597 = vst [vmem:[#allocation2 + $0x298] sm:$0x3] 0.0
  %2598 = vst [vmem:[#allocation2 + $0x2a0] sm:$0xff] 0.0
  %2599 = vst [vmem:[#allocation2 + $0x2a8] sm:$0x3] 0.0
  %2600 = vst [vmem:[#allocation2 + $0x2b0] sm:$0xff] 0.0
  %2601 = vst [vmem:[#allocation2 + $0x2b8] sm:$0x3] 0.0
  %2602 = vst [vmem:[#allocation2 + $0x2c0] sm:$0xff] 0.0
  %2603 = vst [vmem:[#allocation2 + $0x2c8] sm:$0x3] 0.0
  %2604 = vst [vmem:[#allocation2 + $0x2d0] sm:$0xff] 0.0
  %2605 = vst [vmem:[#allocation2 + $0x2d8] sm:$0x3] 0.0
  %2606 = vst [vmem:[#allocation2 + $0x2e0] sm:$0xff] 0.0
  %2607 = vst [vmem:[#allocation2 + $0x2e8] sm:$0x3] 0.0
  %2608 = vst [vmem:[#allocation2 + $0x2f0] sm:$0xff] 0.0
  %2609 = vst [vmem:[#allocation2 + $0x2f8] sm:$0x3] 0.0
  %2610 = vst [vmem:[#allocation2 + $0x300] sm:$0xff] 0.0
  %2611 = vst [vmem:[#allocation2 + $0x308] sm:$0x3] 0.0
  %2612 = vst [vmem:[#allocation2 + $0x310] sm:$0xff] 0.0
  %2613 = vst [vmem:[#allocation2 + $0x318] sm:$0x3] 0.0
  %2614 = vst [vmem:[#allocation2 + $0x320] sm:$0xff] 0.0
  %2615 = vst [vmem:[#allocation2 + $0x328] sm:$0x3] 0.0
  %2616 = vst [vmem:[#allocation2 + $0x330] sm:$0xff] 0.0
  %2617 = vst [vmem:[#allocation2 + $0x338] sm:$0x3] 0.0
  %2618 = vst [vmem:[#allocation2 + $0x340] sm:$0xff] 0.0
  %2619 = vst [vmem:[#allocation2 + $0x348] sm:$0x3] 0.0
  %2620 = vst [vmem:[#allocation2 + $0x350] sm:$0xff] 0.0
  %2621 = vst [vmem:[#allocation2 + $0x358] sm:$0x3] 0.0
  %2622 = vst [vmem:[#allocation2 + $0x360] sm:$0xff] 0.0
  %2623 = vst [vmem:[#allocation2 + $0x368] sm:$0x3] 0.0
  %2624 = vst [vmem:[#allocation2 + $0x370] sm:$0xff] 0.0
  %2625 = vst [vmem:[#allocation2 + $0x378] sm:$0x3] 0.0
  %2626 = vst [vmem:[#allocation2 + $0x380] sm:$0xff] 0.0
  %2627 = vst [vmem:[#allocation2 + $0x388] sm:$0x3] 0.0
  %2628 = vst [vmem:[#allocation2 + $0x390] sm:$0xff] 0.0
  %2629 = vst [vmem:[#allocation2 + $0x398] sm:$0x3] 0.0
  %2630 = vst [vmem:[#allocation2 + $0x3a0] sm:$0xff] 0.0
  %2631 = vst [vmem:[#allocation2 + $0x3a8] sm:$0x3] 0.0
  %2632 = vst [vmem:[#allocation2 + $0x3b0] sm:$0xff] 0.0
  %2633 = vst [vmem:[#allocation2 + $0x3b8] sm:$0x3] 0.0
  %2634 = vst [vmem:[#allocation2 + $0x3c0] sm:$0xff] 0.0
  %2635 = vst [vmem:[#allocation2 + $0x3c8] sm:$0x3] 0.0
  %2636 = vst [vmem:[#allocation2 + $0x3d0] sm:$0xff] 0.0
  %2637 = vst [vmem:[#allocation2 + $0x3d8] sm:$0x3] 0.0
  %2638 = vst [vmem:[#allocation2 + $0x3e0] sm:$0xff] 0.0
  %2639 = vst [vmem:[#allocation2 + $0x3e8] sm:$0x3] 0.0
  %2640 = vst [vmem:[#allocation2 + $0x3f0] sm:$0xff] 0.0
  %2641 = vst [vmem:[#allocation2 + $0x3f8] sm:$0x3] 0.0
  %2642 = vst [vmem:[#allocation2 + $0x400] sm:$0xff] 0.0
  %2643 = vst [vmem:[#allocation2 + $0x408] sm:$0x3] 0.0
  %2644 = vst [vmem:[#allocation2 + $0x410] sm:$0xff] 0.0
  %2645 = vst [vmem:[#allocation2 + $0x418] sm:$0x3] 0.0
  %2646 = vst [vmem:[#allocation2 + $0x420] sm:$0xff] 0.0
  %2647 = vst [vmem:[#allocation2 + $0x428] sm:$0x3] 0.0
  %2648 = vst [vmem:[#allocation2 + $0x430] sm:$0xff] 0.0
  %2649 = vst [vmem:[#allocation2 + $0x438] sm:$0x3] 0.0
  %2650 = vst [vmem:[#allocation2 + $0x440] sm:$0xff] 0.0
  %2651 = vst [vmem:[#allocation2 + $0x448] sm:$0x3] 0.0
  %2652 = vst [vmem:[#allocation2 + $0x450] sm:$0xff] 0.0
  %2653 = vst [vmem:[#allocation2 + $0x458] sm:$0x3] 0.0
  %2654 = vst [vmem:[#allocation2 + $0x460] sm:$0xff] 0.0
  %2655 = vst [vmem:[#allocation2 + $0x468] sm:$0x3] 0.0
  %2656 = vst [vmem:[#allocation2 + $0x470] sm:$0xff] 0.0
  %2657 = vst [vmem:[#allocation2 + $0x478] sm:$0x3] 0.0
  %2658 = vst [vmem:[#allocation2 + $0x480] sm:$0xff] 0.0
  %2659 = vst [vmem:[#allocation2 + $0x488] sm:$0x3] 0.0
  %2660 = vst [vmem:[#allocation2 + $0x490] sm:$0xff] 0.0
  %2661 = vst [vmem:[#allocation2 + $0x498] sm:$0x3] 0.0
  %2662 = vst [vmem:[#allocation2 + $0x4a0] sm:$0xff] 0.0
  %2663 = vst [vmem:[#allocation2 + $0x4a8] sm:$0x3] 0.0
  %2664 = vst [vmem:[#allocation2 + $0x4b0] sm:$0xff] 0.0
  %2665 = vst [vmem:[#allocation2 + $0x4b8] sm:$0x3] 0.0
  %2666 = vst [vmem:[#allocation2 + $0x4c0] sm:$0xff] 0.0
  %2667 = vst [vmem:[#allocation2 + $0x4c8] sm:$0x3] 0.0
  %2668 = vst [vmem:[#allocation2 + $0x4d0] sm:$0xff] 0.0
  %2669 = vst [vmem:[#allocation2 + $0x4d8] sm:$0x3] 0.0
  %2670 = vst [vmem:[#allocation2 + $0x4e0] sm:$0xff] 0.0
  %2671 = vst [vmem:[#allocation2 + $0x4e8] sm:$0x3] 0.0
  %2672 = vst [vmem:[#allocation2 + $0x4f0] sm:$0xff] 0.0
  %2673 = vst [vmem:[#allocation2 + $0x4f8] sm:$0x3] 0.0
  %v2674 = vlaneseq
  %v2675 = vshrl.u32 %v2674, 7
  %v2676 = vsub.s32 0, %v2675
  %v2677 = vrot.slane %v2510, %v2676
  %v2678 = vmul.f32 %v603, %v2677
  %v2679 = vmul.f32 %v606, %v2677
  %v2680 = vmul.f32 %v611, %v2677
  %v2681 = vmul.f32 %v614, %v2677
  %v2682 = vmul.f32 %v619, %v2677
  %v2683 = vmul.f32 %v622, %v2677
  %v2684 = vmul.f32 %v627, %v2677
  %v2685 = vmul.f32 %v630, %v2677
  %v2686 = vmul.f32 %v635, %v2677
  %v2687 = vmul.f32 %v638, %v2677
  %v2688 = vmul.f32 %v643, %v2677
  %v2689 = vmul.f32 %v646, %v2677
  %v2690 = vmul.f32 %v651, %v2677
  %v2691 = vmul.f32 %v654, %v2677
  %v2692 = vmul.f32 %v659, %v2677
  %v2693 = vmul.f32 %v662, %v2677
  %v2695 = vlaneseq
  %v2696 = vshrl.u32 %v2695, 7
  %v2697 = vsub.s32 0, %v2696
  %v2698 = vrot.slane %v2513, %v2697
  %v2700 = vadd.f32 %v2678, %v2698
  %v2701 = vadd.f32 %v2679, %v2698
  %v2702 = vadd.f32 %v2680, %v2698
  %v2703 = vadd.f32 %v2681, %v2698
  %v2704 = vadd.f32 %v2682, %v2698
  %v2705 = vadd.f32 %v2683, %v2698
  %v2706 = vadd.f32 %v2684, %v2698
  %v2707 = vadd.f32 %v2685, %v2698
  %v2708 = vadd.f32 %v2686, %v2698
  %v2709 = vadd.f32 %v2687, %v2698
  %v2710 = vadd.f32 %v2688, %v2698
  %v2711 = vadd.f32 %v2689, %v2698
  %v2712 = vadd.f32 %v2690, %v2698
  %v2713 = vadd.f32 %v2691, %v2698
  %v2714 = vadd.f32 %v2692, %v2698
  %v2715 = vadd.f32 %v2693, %v2698
  %vm2716 = vcmp.gt.f32.partialorder %v2700, 0.0
  %vm2717 = vcmp.gt.f32.partialorder %v2701, 0.0
  %vm2718 = vcmp.gt.f32.partialorder %v2702, 0.0
  %vm2719 = vcmp.gt.f32.partialorder %v2703, 0.0
  %vm2720 = vcmp.gt.f32.partialorder %v2704, 0.0
  %vm2721 = vcmp.gt.f32.partialorder %v2705, 0.0
  %vm2722 = vcmp.gt.f32.partialorder %v2706, 0.0
  %vm2723 = vcmp.gt.f32.partialorder %v2707, 0.0
  %vm2724 = vcmp.gt.f32.partialorder %v2708, 0.0
  %vm2725 = vcmp.gt.f32.partialorder %v2709, 0.0
  %vm2726 = vcmp.gt.f32.partialorder %v2710, 0.0
  %vm2727 = vcmp.gt.f32.partialorder %v2711, 0.0
  %vm2728 = vcmp.gt.f32.partialorder %v2712, 0.0
  %vm2729 = vcmp.gt.f32.partialorder %v2713, 0.0
  %vm2730 = vcmp.gt.f32.partialorder %v2714, 0.0
  %vm2731 = vcmp.gt.f32.partialorder %v2715, 0.0
  %v2732 = vmul.f32 %v2700, 0.2
  %v2733 = vmul.f32 %v2701, 0.2
  %v2734 = vmul.f32 %v2702, 0.2
  %v2735 = vmul.f32 %v2703, 0.2
  %v2736 = vmul.f32 %v2704, 0.2
  %v2737 = vmul.f32 %v2705, 0.2
  %v2738 = vmul.f32 %v2706, 0.2
  %v2739 = vmul.f32 %v2707, 0.2
  %v2740 = vmul.f32 %v2708, 0.2
  %v2741 = vmul.f32 %v2709, 0.2
  %v2742 = vmul.f32 %v2710, 0.2
  %v2743 = vmul.f32 %v2711, 0.2
  %v2744 = vmul.f32 %v2712, 0.2
  %v2745 = vmul.f32 %v2713, 0.2
  %v2746 = vmul.f32 %v2714, 0.2
  %v2747 = vmul.f32 %v2715, 0.2
  %v2748 = vsel %vm2716, %v2700, %v2732
  %v2749 = vsel %vm2717, %v2701, %v2733
  %v2750 = vsel %vm2718, %v2702, %v2734
  %v2751 = vsel %vm2719, %v2703, %v2735
  %v2752 = vsel %vm2720, %v2704, %v2736
  %v2753 = vsel %vm2721, %v2705, %v2737
  %v2754 = vsel %vm2722, %v2706, %v2738
  %v2755 = vsel %vm2723, %v2707, %v2739
  %v2756 = vsel %vm2724, %v2708, %v2740
  %v2757 = vsel %vm2725, %v2709, %v2741
  %v2758 = vsel %vm2726, %v2710, %v2742
  %v2759 = vsel %vm2727, %v2711, %v2743
  %v2760 = vsel %vm2728, %v2712, %v2744
  %v2761 = vsel %vm2729, %v2713, %v2745
  %v2762 = vsel %vm2730, %v2714, %v2746
  %v2763 = vsel %vm2731, %v2715, %v2747
  %s2764 = scalar_lea.vmem [#allocation2], 16
  %2765 = vst.msk [vmem:[%s2764 + $0x1] sm:$0xff] %vm665, %v2748
  %2766 = vst.msk [vmem:[%s2764 + $0x11] sm:$0xff] %vm665, %v2749
  %2767 = vst.msk [vmem:[%s2764 + $0x21] sm:$0xff] %vm665, %v2750
  %2768 = vst.msk [vmem:[%s2764 + $0x31] sm:$0xff] %vm665, %v2751
  %2769 = vst.msk [vmem:[%s2764 + $0x41] sm:$0xff] %vm665, %v2752
  %2770 = vst.msk [vmem:[%s2764 + $0x51] sm:$0xff] %vm665, %v2753
  %2771 = vst.msk [vmem:[%s2764 + $0x61] sm:$0xff] %vm665, %v2754
  %2772 = vst.msk [vmem:[%s2764 + $0x71] sm:$0xff] %vm665, %v2755
  %2773 = vst.msk [vmem:[%s2764 + $0xa1] sm:$0xff] %vm665, %v2756
  %2774 = vst.msk [vmem:[%s2764 + $0xb1] sm:$0xff] %vm665, %v2757
  %2775 = vst.msk [vmem:[%s2764 + $0xc1] sm:$0xff] %vm665, %v2758
  %2776 = vst.msk [vmem:[%s2764 + $0xd1] sm:$0xff] %vm665, %v2759
  %2777 = vst.msk [vmem:[%s2764 + $0xe1] sm:$0xff] %vm665, %v2760
  %2778 = vst.msk [vmem:[%s2764 + $0xf1] sm:$0xff] %vm665, %v2761
  %2779 = vst.msk [vmem:[%s2764 + $0x101] sm:$0xff] %vm665, %v2762
  %2780 = vst.msk [vmem:[%s2764 + $0x111] sm:$0xff] %vm665, %v2763
  %v2781 = vmul.f32 %v1236, %v2677
  %v2782 = vmul.f32 %v1239, %v2677
  %v2783 = vmul.f32 %v1244, %v2677
  %v2784 = vmul.f32 %v1247, %v2677
  %v2785 = vmul.f32 %v1252, %v2677
  %v2786 = vmul.f32 %v1255, %v2677
  %v2787 = vmul.f32 %v1260, %v2677
  %v2788 = vmul.f32 %v1263, %v2677
  %v2789 = vmul.f32 %v1268, %v2677
  %v2790 = vmul.f32 %v1271, %v2677
  %v2791 = vmul.f32 %v1276, %v2677
  %v2792 = vmul.f32 %v1279, %v2677
  %v2793 = vmul.f32 %v1284, %v2677
  %v2794 = vmul.f32 %v1287, %v2677
  %v2795 = vmul.f32 %v1292, %v2677
  %v2796 = vmul.f32 %v1295, %v2677
  %v2797 = vadd.f32 %v2781, %v2698
  %v2798 = vadd.f32 %v2782, %v2698
  %v2799 = vadd.f32 %v2783, %v2698
  %v2800 = vadd.f32 %v2784, %v2698
  %v2801 = vadd.f32 %v2785, %v2698
  %v2802 = vadd.f32 %v2786, %v2698
  %v2803 = vadd.f32 %v2787, %v2698
  %v2804 = vadd.f32 %v2788, %v2698
  %v2805 = vadd.f32 %v2789, %v2698
  %v2806 = vadd.f32 %v2790, %v2698
  %v2807 = vadd.f32 %v2791, %v2698
  %v2808 = vadd.f32 %v2792, %v2698
  %v2809 = vadd.f32 %v2793, %v2698
  %v2810 = vadd.f32 %v2794, %v2698
  %v2811 = vadd.f32 %v2795, %v2698
  %v2812 = vadd.f32 %v2796, %v2698
  %vm2813 = vcmp.gt.f32.partialorder %v2797, 0.0
  %vm2814 = vcmp.gt.f32.partialorder %v2798, 0.0
  %vm2815 = vcmp.gt.f32.partialorder %v2799, 0.0
  %vm2816 = vcmp.gt.f32.partialorder %v2800, 0.0
  %vm2817 = vcmp.gt.f32.partialorder %v2801, 0.0
  %vm2818 = vcmp.gt.f32.partialorder %v2802, 0.0
  %vm2819 = vcmp.gt.f32.partialorder %v2803, 0.0
  %vm2820 = vcmp.gt.f32.partialorder %v2804, 0.0
  %vm2821 = vcmp.gt.f32.partialorder %v2805, 0.0
  %vm2822 = vcmp.gt.f32.partialorder %v2806, 0.0
  %vm2823 = vcmp.gt.f32.partialorder %v2807, 0.0
  %vm2824 = vcmp.gt.f32.partialorder %v2808, 0.0
  %vm2825 = vcmp.gt.f32.partialorder %v2809, 0.0
  %vm2826 = vcmp.gt.f32.partialorder %v2810, 0.0
  %vm2827 = vcmp.gt.f32.partialorder %v2811, 0.0
  %vm2828 = vcmp.gt.f32.partialorder %v2812, 0.0
  %v2829 = vmul.f32 %v2797, 0.2
  %v2830 = vmul.f32 %v2798, 0.2
  %v2831 = vmul.f32 %v2799, 0.2
  %v2832 = vmul.f32 %v2800, 0.2
  %v2833 = vmul.f32 %v2801, 0.2
  %v2834 = vmul.f32 %v2802, 0.2
  %v2835 = vmul.f32 %v2803, 0.2
  %v2836 = vmul.f32 %v2804, 0.2
  %v2837 = vmul.f32 %v2805, 0.2
  %v2838 = vmul.f32 %v2806, 0.2
  %v2839 = vmul.f32 %v2807, 0.2
  %v2840 = vmul.f32 %v2808, 0.2
  %v2841 = vmul.f32 %v2809, 0.2
  %v2842 = vmul.f32 %v2810, 0.2
  %v2843 = vmul.f32 %v2811, 0.2
  %v2844 = vmul.f32 %v2812, 0.2
  %v2845 = vsel %vm2813, %v2797, %v2829
  %v2846 = vsel %vm2814, %v2798, %v2830
  %v2847 = vsel %vm2815, %v2799, %v2831
  %v2848 = vsel %vm2816, %v2800, %v2832
  %v2849 = vsel %vm2817, %v2801, %v2833
  %v2850 = vsel %vm2818, %v2802, %v2834
  %v2851 = vsel %vm2819, %v2803, %v2835
  %v2852 = vsel %vm2820, %v2804, %v2836
  %v2853 = vsel %vm2821, %v2805, %v2837
  %v2854 = vsel %vm2822, %v2806, %v2838
  %v2855 = vsel %vm2823, %v2807, %v2839
  %v2856 = vsel %vm2824, %v2808, %v2840
  %v2857 = vsel %vm2825, %v2809, %v2841
  %v2858 = vsel %vm2826, %v2810, %v2842
  %v2859 = vsel %vm2827, %v2811, %v2843
  %v2860 = vsel %vm2828, %v2812, %v2844
  %s2861 = scalar_lea.vmem [#allocation2], 336
  %2862 = vst.msk [vmem:[%s2861 + $0x1] sm:$0xff] %vm665, %v2845
  %2863 = vst.msk [vmem:[%s2861 + $0x11] sm:$0xff] %vm665, %v2846
  %2864 = vst.msk [vmem:[%s2861 + $0x21] sm:$0xff] %vm665, %v2847
  %2865 = vst.msk [vmem:[%s2861 + $0x31] sm:$0xff] %vm665, %v2848
  %2866 = vst.msk [vmem:[%s2861 + $0x41] sm:$0xff] %vm665, %v2849
  %2867 = vst.msk [vmem:[%s2861 + $0x51] sm:$0xff] %vm665, %v2850
  %2868 = vst.msk [vmem:[%s2861 + $0x61] sm:$0xff] %vm665, %v2851
  %2869 = vst.msk [vmem:[%s2861 + $0x71] sm:$0xff] %vm665, %v2852
  %2870 = vst.msk [vmem:[%s2861 + $0xa1] sm:$0xff] %vm665, %v2853
  %2871 = vst.msk [vmem:[%s2861 + $0xb1] sm:$0xff] %vm665, %v2854
  %2872 = vst.msk [vmem:[%s2861 + $0xc1] sm:$0xff] %vm665, %v2855
  %2873 = vst.msk [vmem:[%s2861 + $0xd1] sm:$0xff] %vm665, %v2856
  %2874 = vst.msk [vmem:[%s2861 + $0xe1] sm:$0xff] %vm665, %v2857
  %2875 = vst.msk [vmem:[%s2861 + $0xf1] sm:$0xff] %vm665, %v2858
  %2876 = vst.msk [vmem:[%s2861 + $0x101] sm:$0xff] %vm665, %v2859
  %2877 = vst.msk [vmem:[%s2861 + $0x111] sm:$0xff] %vm665, %v2860
  %v2878 = vmul.f32 %v1795, %v2677
  %v2879 = vmul.f32 %v1798, %v2677
  %v2880 = vmul.f32 %v1803, %v2677
  %v2881 = vmul.f32 %v1806, %v2677
  %v2882 = vmul.f32 %v1811, %v2677
  %v2883 = vmul.f32 %v1814, %v2677
  %v2884 = vmul.f32 %v1819, %v2677
  %v2885 = vmul.f32 %v1822, %v2677
  %v2886 = vmul.f32 %v1827, %v2677
  %v2887 = vmul.f32 %v1830, %v2677
  %v2888 = vmul.f32 %v1835, %v2677
  %v2889 = vmul.f32 %v1838, %v2677
  %v2890 = vmul.f32 %v1843, %v2677
  %v2891 = vmul.f32 %v1846, %v2677
  %v2892 = vmul.f32 %v1851, %v2677
  %v2893 = vmul.f32 %v1854, %v2677
  %v2894 = vadd.f32 %v2878, %v2698
  %v2895 = vadd.f32 %v2879, %v2698
  %v2896 = vadd.f32 %v2880, %v2698
  %v2897 = vadd.f32 %v2881, %v2698
  %v2898 = vadd.f32 %v2882, %v2698
  %v2899 = vadd.f32 %v2883, %v2698
  %v2900 = vadd.f32 %v2884, %v2698
  %v2901 = vadd.f32 %v2885, %v2698
  %v2902 = vadd.f32 %v2886, %v2698
  %v2903 = vadd.f32 %v2887, %v2698
  %v2904 = vadd.f32 %v2888, %v2698
  %v2905 = vadd.f32 %v2889, %v2698
  %v2906 = vadd.f32 %v2890, %v2698
  %v2907 = vadd.f32 %v2891, %v2698
  %v2908 = vadd.f32 %v2892, %v2698
  %v2909 = vadd.f32 %v2893, %v2698
  %vm2910 = vcmp.gt.f32.partialorder %v2894, 0.0
  %vm2911 = vcmp.gt.f32.partialorder %v2895, 0.0
  %vm2912 = vcmp.gt.f32.partialorder %v2896, 0.0
  %vm2913 = vcmp.gt.f32.partialorder %v2897, 0.0
  %vm2914 = vcmp.gt.f32.partialorder %v2898, 0.0
  %vm2915 = vcmp.gt.f32.partialorder %v2899, 0.0
  %vm2916 = vcmp.gt.f32.partialorder %v2900, 0.0
  %vm2917 = vcmp.gt.f32.partialorder %v2901, 0.0
  %vm2918 = vcmp.gt.f32.partialorder %v2902, 0.0
  %vm2919 = vcmp.gt.f32.partialorder %v2903, 0.0
  %vm2920 = vcmp.gt.f32.partialorder %v2904, 0.0
  %vm2921 = vcmp.gt.f32.partialorder %v2905, 0.0
  %vm2922 = vcmp.gt.f32.partialorder %v2906, 0.0
  %vm2923 = vcmp.gt.f32.partialorder %v2907, 0.0
  %vm2924 = vcmp.gt.f32.partialorder %v2908, 0.0
  %vm2925 = vcmp.gt.f32.partialorder %v2909, 0.0
  %v2926 = vmul.f32 %v2894, 0.2
  %v2927 = vmul.f32 %v2895, 0.2
  %v2928 = vmul.f32 %v2896, 0.2
  %v2929 = vmul.f32 %v2897, 0.2
  %v2930 = vmul.f32 %v2898, 0.2
  %v2931 = vmul.f32 %v2899, 0.2
  %v2932 = vmul.f32 %v2900, 0.2
  %v2933 = vmul.f32 %v2901, 0.2
  %v2934 = vmul.f32 %v2902, 0.2
  %v2935 = vmul.f32 %v2903, 0.2
  %v2936 = vmul.f32 %v2904, 0.2
  %v2937 = vmul.f32 %v2905, 0.2
  %v2938 = vmul.f32 %v2906, 0.2
  %v2939 = vmul.f32 %v2907, 0.2
  %v2940 = vmul.f32 %v2908, 0.2
  %v2941 = vmul.f32 %v2909, 0.2
  %v2942 = vsel %vm2910, %v2894, %v2926
  %v2943 = vsel %vm2911, %v2895, %v2927
  %v2944 = vsel %vm2912, %v2896, %v2928
  %v2945 = vsel %vm2913, %v2897, %v2929
  %v2946 = vsel %vm2914, %v2898, %v2930
  %v2947 = vsel %vm2915, %v2899, %v2931
  %v2948 = vsel %vm2916, %v2900, %v2932
  %v2949 = vsel %vm2917, %v2901, %v2933
  %v2950 = vsel %vm2918, %v2902, %v2934
  %v2951 = vsel %vm2919, %v2903, %v2935
  %v2952 = vsel %vm2920, %v2904, %v2936
  %v2953 = vsel %vm2921, %v2905, %v2937
  %v2954 = vsel %vm2922, %v2906, %v2938
  %v2955 = vsel %vm2923, %v2907, %v2939
  %v2956 = vsel %vm2924, %v2908, %v2940
  %v2957 = vsel %vm2925, %v2909, %v2941
  %s2958 = scalar_lea.vmem [#allocation2], 656
  %2959 = vst.msk [vmem:[%s2958 + $0x1] sm:$0xff] %vm665, %v2942
  %2960 = vst.msk [vmem:[%s2958 + $0x11] sm:$0xff] %vm665, %v2943
  %2961 = vst.msk [vmem:[%s2958 + $0x21] sm:$0xff] %vm665, %v2944
  %2962 = vst.msk [vmem:[%s2958 + $0x31] sm:$0xff] %vm665, %v2945
  %2963 = vst.msk [vmem:[%s2958 + $0x41] sm:$0xff] %vm665, %v2946
  %2964 = vst.msk [vmem:[%s2958 + $0x51] sm:$0xff] %vm665, %v2947
  %2965 = vst.msk [vmem:[%s2958 + $0x61] sm:$0xff] %vm665, %v2948
  %2966 = vst.msk [vmem:[%s2958 + $0x71] sm:$0xff] %vm665, %v2949
  %2967 = vst.msk [vmem:[%s2958 + $0xa1] sm:$0xff] %vm665, %v2950
  %2968 = vst.msk [vmem:[%s2958 + $0xb1] sm:$0xff] %vm665, %v2951
  %2969 = vst.msk [vmem:[%s2958 + $0xc1] sm:$0xff] %vm665, %v2952
  %2970 = vst.msk [vmem:[%s2958 + $0xd1] sm:$0xff] %vm665, %v2953
  %2971 = vst.msk [vmem:[%s2958 + $0xe1] sm:$0xff] %vm665, %v2954
  %2972 = vst.msk [vmem:[%s2958 + $0xf1] sm:$0xff] %vm665, %v2955
  %2973 = vst.msk [vmem:[%s2958 + $0x101] sm:$0xff] %vm665, %v2956
  %2974 = vst.msk [vmem:[%s2958 + $0x111] sm:$0xff] %vm665, %v2957
  %v2975 = vmul.f32 %v2348, %v2677
  %v2976 = vmul.f32 %v2351, %v2677
  %v2977 = vmul.f32 %v2356, %v2677
  %v2978 = vmul.f32 %v2359, %v2677
  %v2979 = vmul.f32 %v2364, %v2677
  %v2980 = vmul.f32 %v2367, %v2677
  %v2981 = vmul.f32 %v2372, %v2677
  %v2982 = vmul.f32 %v2375, %v2677
  %v2983 = vmul.f32 %v2380, %v2677
  %v2984 = vmul.f32 %v2383, %v2677
  %v2985 = vmul.f32 %v2388, %v2677
  %v2986 = vmul.f32 %v2391, %v2677
  %v2987 = vmul.f32 %v2396, %v2677
  %v2988 = vmul.f32 %v2399, %v2677
  %v2989 = vmul.f32 %v2404, %v2677
  %v2990 = vmul.f32 %v2407, %v2677
  %v2991 = vadd.f32 %v2975, %v2698
  %v2992 = vadd.f32 %v2976, %v2698
  %v2993 = vadd.f32 %v2977, %v2698
  %v2994 = vadd.f32 %v2978, %v2698
  %v2995 = vadd.f32 %v2979, %v2698
  %v2996 = vadd.f32 %v2980, %v2698
  %v2997 = vadd.f32 %v2981, %v2698
  %v2998 = vadd.f32 %v2982, %v2698
  %v2999 = vadd.f32 %v2983, %v2698
  %v3000 = vadd.f32 %v2984, %v2698
  %v3001 = vadd.f32 %v2985, %v2698
  %v3002 = vadd.f32 %v2986, %v2698
  %v3003 = vadd.f32 %v2987, %v2698
  %v3004 = vadd.f32 %v2988, %v2698
  %v3005 = vadd.f32 %v2989, %v2698
  %v3006 = vadd.f32 %v2990, %v2698
  %vm3007 = vcmp.gt.f32.partialorder %v2991, 0.0
  %vm3008 = vcmp.gt.f32.partialorder %v2992, 0.0
  %vm3009 = vcmp.gt.f32.partialorder %v2993, 0.0
  %vm3010 = vcmp.gt.f32.partialorder %v2994, 0.0
  %vm3011 = vcmp.gt.f32.partialorder %v2995, 0.0
  %vm3012 = vcmp.gt.f32.partialorder %v2996, 0.0
  %vm3013 = vcmp.gt.f32.partialorder %v2997, 0.0
  %vm3014 = vcmp.gt.f32.partialorder %v2998, 0.0
  %vm3015 = vcmp.gt.f32.partialorder %v2999, 0.0
  %vm3016 = vcmp.gt.f32.partialorder %v3000, 0.0
  %vm3017 = vcmp.gt.f32.partialorder %v3001, 0.0
  %vm3018 = vcmp.gt.f32.partialorder %v3002, 0.0
  %vm3019 = vcmp.gt.f32.partialorder %v3003, 0.0
  %vm3020 = vcmp.gt.f32.partialorder %v3004, 0.0
  %vm3021 = vcmp.gt.f32.partialorder %v3005, 0.0
  %vm3022 = vcmp.gt.f32.partialorder %v3006, 0.0
  %v3023 = vmul.f32 %v2991, 0.2
  %v3024 = vmul.f32 %v2992, 0.2
  %v3025 = vmul.f32 %v2993, 0.2
  %v3026 = vmul.f32 %v2994, 0.2
  %v3027 = vmul.f32 %v2995, 0.2
  %v3028 = vmul.f32 %v2996, 0.2
  %v3029 = vmul.f32 %v2997, 0.2
  %v3030 = vmul.f32 %v2998, 0.2
  %v3031 = vmul.f32 %v2999, 0.2
  %v3032 = vmul.f32 %v3000, 0.2
  %v3033 = vmul.f32 %v3001, 0.2
  %v3034 = vmul.f32 %v3002, 0.2
  %v3035 = vmul.f32 %v3003, 0.2
  %v3036 = vmul.f32 %v3004, 0.2
  %v3037 = vmul.f32 %v3005, 0.2
  %v3038 = vmul.f32 %v3006, 0.2
  %v3039 = vsel %vm3007, %v2991, %v3023
  %v3040 = vsel %vm3008, %v2992, %v3024
  %v3041 = vsel %vm3009, %v2993, %v3025
  %v3042 = vsel %vm3010, %v2994, %v3026
  %v3043 = vsel %vm3011, %v2995, %v3027
  %v3044 = vsel %vm3012, %v2996, %v3028
  %v3045 = vsel %vm3013, %v2997, %v3029
  %v3046 = vsel %vm3014, %v2998, %v3030
  %v3047 = vsel %vm3015, %v2999, %v3031
  %v3048 = vsel %vm3016, %v3000, %v3032
  %v3049 = vsel %vm3017, %v3001, %v3033
  %v3050 = vsel %vm3018, %v3002, %v3034
  %v3051 = vsel %vm3019, %v3003, %v3035
  %v3052 = vsel %vm3020, %v3004, %v3036
  %v3053 = vsel %vm3021, %v3005, %v3037
  %v3054 = vsel %vm3022, %v3006, %v3038
  %s3055 = scalar_lea.vmem [#allocation2], 976
  %3056 = vst.msk [vmem:[%s3055 + $0x1] sm:$0xff] %vm665, %v3039
  %3057 = vst.msk [vmem:[%s3055 + $0x11] sm:$0xff] %vm665, %v3040
  %3058 = vst.msk [vmem:[%s3055 + $0x21] sm:$0xff] %vm665, %v3041
  %3059 = vst.msk [vmem:[%s3055 + $0x31] sm:$0xff] %vm665, %v3042
  %3060 = vst.msk [vmem:[%s3055 + $0x41] sm:$0xff] %vm665, %v3043
  %3061 = vst.msk [vmem:[%s3055 + $0x51] sm:$0xff] %vm665, %v3044
  %3062 = vst.msk [vmem:[%s3055 + $0x61] sm:$0xff] %vm665, %v3045
  %3063 = vst.msk [vmem:[%s3055 + $0x71] sm:$0xff] %vm665, %v3046
  %3064 = vst.msk [vmem:[%s3055 + $0xa1] sm:$0xff] %vm665, %v3047
  %3065 = vst.msk [vmem:[%s3055 + $0xb1] sm:$0xff] %vm665, %v3048
  %3066 = vst.msk [vmem:[%s3055 + $0xc1] sm:$0xff] %vm665, %v3049
  %3067 = vst.msk [vmem:[%s3055 + $0xd1] sm:$0xff] %vm665, %v3050
  %3068 = vst.msk [vmem:[%s3055 + $0xe1] sm:$0xff] %vm665, %v3051
  %3069 = vst.msk [vmem:[%s3055 + $0xf1] sm:$0xff] %vm665, %v3052
  %3070 = vst.msk [vmem:[%s3055 + $0x101] sm:$0xff] %vm665, %v3053
  %3071 = vst.msk [vmem:[%s3055 + $0x111] sm:$0xff] %vm665, %v3054
  %s3072 = scalar_lea.vmem [#allocation2], 960
  %v3073 = vld [vmem:[%s3072] sm:$0xff]
  %v3074 = vld [vmem:[%s3072 + $0x10] sm:$0xff]
  %v3075 = vld [vmem:[%s3072 + $0x20] sm:$0xff]
  %v3076 = vld [vmem:[%s3072 + $0x30] sm:$0xff]
  %v3077 = vld [vmem:[%s3072 + $0x40] sm:$0xff]
  %v3078 = vld [vmem:[%s3072 + $0x50] sm:$0xff]
  %v3079 = vld [vmem:[%s3072 + $0x60] sm:$0xff]
  %v3080 = vld [vmem:[%s3072 + $0x70] sm:$0xff]
  %v3081 = vld [vmem:[%s3072 + $0xa0] sm:$0xff]
  %v3082 = vld [vmem:[%s3072 + $0xb0] sm:$0xff]
  %v3083 = vld [vmem:[%s3072 + $0xc0] sm:$0xff]
  %v3084 = vld [vmem:[%s3072 + $0xd0] sm:$0xff]
  %v3085 = vld [vmem:[%s3072 + $0xe0] sm:$0xff]
  %v3086 = vld [vmem:[%s3072 + $0xf0] sm:$0xff]
  %v3087 = vld [vmem:[%s3072 + $0x100] sm:$0xff]
  %v3088 = vld [vmem:[%s3072 + $0x110] sm:$0xff]
  %s3089 = scalar_lea.vmem [#allocation2], 640
  %v3090 = vld [vmem:[%s3089 + $0x1] sm:$0xff]
  %v3091 = vld [vmem:[%s3089 + $0x11] sm:$0xff]
  %v3092 = vld [vmem:[%s3089 + $0x21] sm:$0xff]
  %v3093 = vld [vmem:[%s3089 + $0x31] sm:$0xff]
  %v3094 = vld [vmem:[%s3089 + $0x41] sm:$0xff]
  %v3095 = vld [vmem:[%s3089 + $0x51] sm:$0xff]
  %v3096 = vld [vmem:[%s3089 + $0x61] sm:$0xff]
  %v3097 = vld [vmem:[%s3089 + $0x71] sm:$0xff]
  %v3098 = vld [vmem:[%s3089 + $0xa1] sm:$0xff]
  %v3099 = vld [vmem:[%s3089 + $0xb1] sm:$0xff]
  %v3100 = vld [vmem:[%s3089 + $0xc1] sm:$0xff]
  %v3101 = vld [vmem:[%s3089 + $0xd1] sm:$0xff]
  %v3102 = vld [vmem:[%s3089 + $0xe1] sm:$0xff]
  %v3103 = vld [vmem:[%s3089 + $0xf1] sm:$0xff]
  %v3104 = vld [vmem:[%s3089 + $0x101] sm:$0xff]
  %v3105 = vld [vmem:[%s3089 + $0x111] sm:$0xff]
  %v3106 = vld [vmem:[%s3072 + $0x1] sm:$0xff]
  %v3107 = vld [vmem:[%s3072 + $0x11] sm:$0xff]
  %v3108 = vld [vmem:[%s3072 + $0x21] sm:$0xff]
  %v3109 = vld [vmem:[%s3072 + $0x31] sm:$0xff]
  %v3110 = vld [vmem:[%s3072 + $0x41] sm:$0xff]
  %v3111 = vld [vmem:[%s3072 + $0x51] sm:$0xff]
  %v3112 = vld [vmem:[%s3072 + $0x61] sm:$0xff]
  %v3113 = vld [vmem:[%s3072 + $0x71] sm:$0xff]
  %v3114 = vld [vmem:[%s3072 + $0xa1] sm:$0xff]
  %v3115 = vld [vmem:[%s3072 + $0xb1] sm:$0xff]
  %v3116 = vld [vmem:[%s3072 + $0xc1] sm:$0xff]
  %v3117 = vld [vmem:[%s3072 + $0xd1] sm:$0xff]
  %v3118 = vld [vmem:[%s3072 + $0xe1] sm:$0xff]
  %v3119 = vld [vmem:[%s3072 + $0xf1] sm:$0xff]
  %v3120 = vld [vmem:[%s3072 + $0x101] sm:$0xff]
  %v3121 = vld [vmem:[%s3072 + $0x111] sm:$0xff]
  %v3122 = vld [vmem:[%s2861] sm:$0xff]
  %v3123 = vld [vmem:[%s2861 + $0x10] sm:$0xff]
  %v3124 = vld [vmem:[%s2861 + $0x20] sm:$0xff]
  %v3125 = vld [vmem:[%s2861 + $0x30] sm:$0xff]
  %v3126 = vld [vmem:[%s2861 + $0x40] sm:$0xff]
  %v3127 = vld [vmem:[%s2861 + $0x50] sm:$0xff]
  %v3128 = vld [vmem:[%s2861 + $0x60] sm:$0xff]
  %v3129 = vld [vmem:[%s2861 + $0x70] sm:$0xff]
  %v3130 = vld [vmem:[%s2861 + $0xa0] sm:$0xff]
  %v3131 = vld [vmem:[%s2861 + $0xb0] sm:$0xff]
  %v3132 = vld [vmem:[%s2861 + $0xc0] sm:$0xff]
  %v3133 = vld [vmem:[%s2861 + $0xd0] sm:$0xff]
  %v3134 = vld [vmem:[%s2861 + $0xe0] sm:$0xff]
  %v3135 = vld [vmem:[%s2861 + $0xf0] sm:$0xff]
  %v3136 = vld [vmem:[%s2861 + $0x100] sm:$0xff]
  %v3137 = vld [vmem:[%s2861 + $0x110] sm:$0xff]
  %v3138 = vld [vmem:[%s2764 + $0x1] sm:$0xff]
  %v3139 = vld [vmem:[%s2764 + $0x11] sm:$0xff]
  %v3140 = vld [vmem:[%s2764 + $0x21] sm:$0xff]
  %v3141 = vld [vmem:[%s2764 + $0x31] sm:$0xff]
  %v3142 = vld [vmem:[%s2764 + $0x41] sm:$0xff]
  %v3143 = vld [vmem:[%s2764 + $0x51] sm:$0xff]
  %v3144 = vld [vmem:[%s2764 + $0x61] sm:$0xff]
  %v3145 = vld [vmem:[%s2764 + $0x71] sm:$0xff]
  %v3146 = vld [vmem:[%s2764 + $0xa1] sm:$0xff]
  %v3147 = vld [vmem:[%s2764 + $0xb1] sm:$0xff]
  %v3148 = vld [vmem:[%s2764 + $0xc1] sm:$0xff]
  %v3149 = vld [vmem:[%s2764 + $0xd1] sm:$0xff]
  %v3150 = vld [vmem:[%s2764 + $0xe1] sm:$0xff]
  %v3151 = vld [vmem:[%s2764 + $0xf1] sm:$0xff]
  %v3152 = vld [vmem:[%s2764 + $0x101] sm:$0xff]
  %v3153 = vld [vmem:[%s2764 + $0x111] sm:$0xff]
  %v3154 = vld [vmem:[%s2861 + $0x1] sm:$0xff]
  %v3155 = vld [vmem:[%s2861 + $0x11] sm:$0xff]
  %v3156 = vld [vmem:[%s2861 + $0x21] sm:$0xff]
  %v3157 = vld [vmem:[%s2861 + $0x31] sm:$0xff]
  %v3158 = vld [vmem:[%s2861 + $0x41] sm:$0xff]
  %v3159 = vld [vmem:[%s2861 + $0x51] sm:$0xff]
  %v3160 = vld [vmem:[%s2861 + $0x61] sm:$0xff]
  %v3161 = vld [vmem:[%s2861 + $0x71] sm:$0xff]
  %v3162 = vld [vmem:[%s2861 + $0xa1] sm:$0xff]
  %v3163 = vld [vmem:[%s2861 + $0xb1] sm:$0xff]
  %v3164 = vld [vmem:[%s2861 + $0xc1] sm:$0xff]
  %v3165 = vld [vmem:[%s2861 + $0xd1] sm:$0xff]
  %v3166 = vld [vmem:[%s2861 + $0xe1] sm:$0xff]
  %v3167 = vld [vmem:[%s2861 + $0xf1] sm:$0xff]
  %v3168 = vld [vmem:[%s2861 + $0x101] sm:$0xff]
  %v3169 = vld [vmem:[%s2861 + $0x111] sm:$0xff]
  %v3170 = vld [vmem:[%s3055] sm:$0xff]
  %v3171 = vld [vmem:[%s3055 + $0x10] sm:$0xff]
  %v3172 = vld [vmem:[%s3055 + $0x20] sm:$0xff]
  %v3173 = vld [vmem:[%s3055 + $0x30] sm:$0xff]
  %v3174 = vld [vmem:[%s3055 + $0x40] sm:$0xff]
  %v3175 = vld [vmem:[%s3055 + $0x50] sm:$0xff]
  %v3176 = vld [vmem:[%s3055 + $0x60] sm:$0xff]
  %v3177 = vld [vmem:[%s3055 + $0x70] sm:$0xff]
  %v3178 = vld [vmem:[%s3055 + $0xa0] sm:$0xff]
  %v3179 = vld [vmem:[%s3055 + $0xb0] sm:$0xff]
  %v3180 = vld [vmem:[%s3055 + $0xc0] sm:$0xff]
  %v3181 = vld [vmem:[%s3055 + $0xd0] sm:$0xff]
  %v3182 = vld [vmem:[%s3055 + $0xe0] sm:$0xff]
  %v3183 = vld [vmem:[%s3055 + $0xf0] sm:$0xff]
  %v3184 = vld [vmem:[%s3055 + $0x100] sm:$0xff]
  %v3185 = vld [vmem:[%s3055 + $0x110] sm:$0xff]
  %v3186 = vld [vmem:[%s2958 + $0x1] sm:$0xff]
  %v3187 = vld [vmem:[%s2958 + $0x11] sm:$0xff]
  %v3188 = vld [vmem:[%s2958 + $0x21] sm:$0xff]
  %v3189 = vld [vmem:[%s2958 + $0x31] sm:$0xff]
  %v3190 = vld [vmem:[%s2958 + $0x41] sm:$0xff]
  %v3191 = vld [vmem:[%s2958 + $0x51] sm:$0xff]
  %v3192 = vld [vmem:[%s2958 + $0x61] sm:$0xff]
  %v3193 = vld [vmem:[%s2958 + $0x71] sm:$0xff]
  %v3194 = vld [vmem:[%s2958 + $0xa1] sm:$0xff]
  %v3195 = vld [vmem:[%s2958 + $0xb1] sm:$0xff]
  %v3196 = vld [vmem:[%s2958 + $0xc1] sm:$0xff]
  %v3197 = vld [vmem:[%s2958 + $0xd1] sm:$0xff]
  %v3198 = vld [vmem:[%s2958 + $0xe1] sm:$0xff]
  %v3199 = vld [vmem:[%s2958 + $0xf1] sm:$0xff]
  %v3200 = vld [vmem:[%s2958 + $0x101] sm:$0xff]
  %v3201 = vld [vmem:[%s2958 + $0x111] sm:$0xff]
  %v3202 = vld [vmem:[%s3055 + $0x1] sm:$0xff]
  %v3203 = vld [vmem:[%s3055 + $0x11] sm:$0xff]
  %v3204 = vld [vmem:[%s3055 + $0x21] sm:$0xff]
  %v3205 = vld [vmem:[%s3055 + $0x31] sm:$0xff]
  %v3206 = vld [vmem:[%s3055 + $0x41] sm:$0xff]
  %v3207 = vld [vmem:[%s3055 + $0x51] sm:$0xff]
  %v3208 = vld [vmem:[%s3055 + $0x61] sm:$0xff]
  %v3209 = vld [vmem:[%s3055 + $0x71] sm:$0xff]
  %v3210 = vld [vmem:[%s3055 + $0xa1] sm:$0xff]
  %v3211 = vld [vmem:[%s3055 + $0xb1] sm:$0xff]
  %v3212 = vld [vmem:[%s3055 + $0xc1] sm:$0xff]
  %v3213 = vld [vmem:[%s3055 + $0xd1] sm:$0xff]
  %v3214 = vld [vmem:[%s3055 + $0xe1] sm:$0xff]
  %v3215 = vld [vmem:[%s3055 + $0xf1] sm:$0xff]
  %v3216 = vld [vmem:[%s3055 + $0x101] sm:$0xff]
  %v3217 = vld [vmem:[%s3055 + $0x111] sm:$0xff]
  %v3218 = vpack.c.bf16 %v3074, %v3073
  %v3219 = vpack.c.bf16 %v3091, %v3090
  %v3220 = vpack.c.bf16 %v3107, %v3106
  %v3221 = vpack.c.bf16 %v3123, %v3122
  %v3222 = vpack.c.bf16 %v3139, %v3138
  %v3223 = vpack.c.bf16 %v3155, %v3154
  %v3224 = vpack.c.bf16 %v3171, %v3170
  %v3225 = vpack.c.bf16 %v3187, %v3186
  %v3226 = vpack.c.bf16 %v3203, %v3202
  %v3227 = vpack.c.bf16 %v3076, %v3075
  %v3228 = vpack.c.bf16 %v3093, %v3092
  %v3229 = vpack.c.bf16 %v3109, %v3108
  %v3230 = vpack.c.bf16 %v3125, %v3124
  %v3231 = vpack.c.bf16 %v3141, %v3140
  %v3232 = vpack.c.bf16 %v3157, %v3156
  %v3233 = vpack.c.bf16 %v3173, %v3172
  %v3234 = vpack.c.bf16 %v3189, %v3188
  %v3235 = vpack.c.bf16 %v3205, %v3204
  %v3236 = vpack.c.bf16 %v3078, %v3077
  %v3237 = vpack.c.bf16 %v3095, %v3094
  %v3238 = vpack.c.bf16 %v3111, %v3110
  %v3239 = vpack.c.bf16 %v3127, %v3126
  %v3240 = vpack.c.bf16 %v3143, %v3142
  %v3241 = vpack.c.bf16 %v3159, %v3158
  %v3242 = vpack.c.bf16 %v3175, %v3174
  %v3243 = vpack.c.bf16 %v3191, %v3190
  %v3244 = vpack.c.bf16 %v3207, %v3206
  %v3245 = vpack.c.bf16 %v3080, %v3079
  %v3246 = vpack.c.bf16 %v3097, %v3096
  %v3247 = vpack.c.bf16 %v3113, %v3112
  %v3248 = vpack.c.bf16 %v3129, %v3128
  %v3249 = vpack.c.bf16 %v3145, %v3144
  %v3250 = vpack.c.bf16 %v3161, %v3160
  %v3251 = vpack.c.bf16 %v3177, %v3176
  %v3252 = vpack.c.bf16 %v3193, %v3192
  %v3253 = vpack.c.bf16 %v3209, %v3208
  %v3254 = vpack.c.bf16 %v3082, %v3081
  %v3255 = vpack.c.bf16 %v3099, %v3098
  %v3256 = vpack.c.bf16 %v3115, %v3114
  %v3257 = vpack.c.bf16 %v3131, %v3130
  %v3258 = vpack.c.bf16 %v3147, %v3146
  %v3259 = vpack.c.bf16 %v3163, %v3162
  %v3260 = vpack.c.bf16 %v3179, %v3178
  %v3261 = vpack.c.bf16 %v3195, %v3194
  %v3262 = vpack.c.bf16 %v3211, %v3210
  %v3263 = vpack.c.bf16 %v3084, %v3083
  %v3264 = vpack.c.bf16 %v3101, %v3100
  %v3265 = vpack.c.bf16 %v3117, %v3116
  %v3266 = vpack.c.bf16 %v3133, %v3132
  %v3267 = vpack.c.bf16 %v3149, %v3148
  %v3268 = vpack.c.bf16 %v3165, %v3164
  %v3269 = vpack.c.bf16 %v3181, %v3180
  %v3270 = vpack.c.bf16 %v3197, %v3196
  %v3271 = vpack.c.bf16 %v3213, %v3212
  %v3272 = vpack.c.bf16 %v3086, %v3085
  %v3273 = vpack.c.bf16 %v3103, %v3102
  %v3274 = vpack.c.bf16 %v3119, %v3118
  %v3275 = vpack.c.bf16 %v3135, %v3134
  %v3276 = vpack.c.bf16 %v3151, %v3150
  %v3277 = vpack.c.bf16 %v3167, %v3166
  %v3278 = vpack.c.bf16 %v3183, %v3182
  %v3279 = vpack.c.bf16 %v3199, %v3198
  %v3280 = vpack.c.bf16 %v3215, %v3214
  %v3281 = vpack.c.bf16 %v3088, %v3087
  %v3282 = vpack.c.bf16 %v3105, %v3104
  %v3283 = vpack.c.bf16 %v3121, %v3120
  %v3284 = vpack.c.bf16 %v3137, %v3136
  %v3285 = vpack.c.bf16 %v3153, %v3152
  %v3286 = vpack.c.bf16 %v3169, %v3168
  %v3287 = vpack.c.bf16 %v3185, %v3184
  %v3288 = vpack.c.bf16 %v3201, %v3200
  %v3289 = vpack.c.bf16 %v3217, %v3216
  %v3290 = vld [vmem:[%s5] sm:$0xf]
  %v3291 = vld [vmem:[%s5 + $0x4] sm:$0xf]
  %v3292 = vld [vmem:[%s5 + $0x8] sm:$0xf]
  %v3293 = vld [vmem:[%s5 + $0xc] sm:$0xf]
  %v3294 = vld [vmem:[%s5 + $0x10] sm:$0xf]
  %v3295 = vld [vmem:[%s5 + $0x14] sm:$0xf]
  %v3296 = vld [vmem:[%s5 + $0x18] sm:$0xf]
  %v3297 = vld [vmem:[%s5 + $0x1c] sm:$0xf]
  %v3298 = vld [vmem:[%s5 + $0x20] sm:$0xf]
  %v3299 = vld [vmem:[%s5 + $0x24] sm:$0xf]
  %v3300 = vld [vmem:[%s5 + $0x28] sm:$0xf]
  %v3301 = vld [vmem:[%s5 + $0x2c] sm:$0xf]
  %v3302 = vld [vmem:[%s5 + $0x30] sm:$0xf]
  %v3303 = vld [vmem:[%s5 + $0x34] sm:$0xf]
  %v3304 = vld [vmem:[%s5 + $0x38] sm:$0xf]
  %v3305 = vld [vmem:[%s5 + $0x3c] sm:$0xf]
  %v3306 = vld [vmem:[%s5 + $0x40] sm:$0xf]
  %v3307 = vld [vmem:[%s5 + $0x44] sm:$0xf]
  %v3308 = vld [vmem:[%s5 + $0x48] sm:$0xf]
  %v3309 = vld [vmem:[%s5 + $0x4c] sm:$0xf]
  %v3310 = vld [vmem:[%s5 + $0x50] sm:$0xf]
  %v3311 = vld [vmem:[%s5 + $0x54] sm:$0xf]
  %v3312 = vld [vmem:[%s5 + $0x58] sm:$0xf]
  %v3313 = vld [vmem:[%s5 + $0x5c] sm:$0xf]
  %v3314 = vld [vmem:[%s5 + $0x60] sm:$0xf]
  %v3315 = vld [vmem:[%s5 + $0x64] sm:$0xf]
  %v3316 = vld [vmem:[%s5 + $0x68] sm:$0xf]
  %v3317 = vld [vmem:[%s5 + $0x6c] sm:$0xf]
  %v3318 = vld [vmem:[%s5 + $0x70] sm:$0xf]
  %v3319 = vld [vmem:[%s5 + $0x74] sm:$0xf]
  %v3320 = vld [vmem:[%s5 + $0x78] sm:$0xf]
  %v3321 = vld [vmem:[%s5 + $0x7c] sm:$0xf]
  %v3322 = vld [vmem:[%s5 + $0x80] sm:$0xf]
  %v3323 = vld [vmem:[%s5 + $0x84] sm:$0xf]
  %v3324 = vld [vmem:[%s5 + $0x88] sm:$0xf]
  %v3325 = vld [vmem:[%s5 + $0x8c] sm:$0xf]
  %v3326 = vld [vmem:[%s5 + $0x90] sm:$0xf]
  %v3327 = vld [vmem:[%s5 + $0x94] sm:$0xf]
  %v3328 = vld [vmem:[%s5 + $0x98] sm:$0xf]
  %v3329 = vld [vmem:[%s5 + $0x9c] sm:$0xf]
  %v3330 = vld [vmem:[%s5 + $0xa0] sm:$0xf]
  %v3331 = vld [vmem:[%s5 + $0xa4] sm:$0xf]
  %v3332 = vld [vmem:[%s5 + $0xa8] sm:$0xf]
  %v3333 = vld [vmem:[%s5 + $0xac] sm:$0xf]
  %v3334 = vld [vmem:[%s5 + $0xb0] sm:$0xf]
  %v3335 = vld [vmem:[%s5 + $0xb4] sm:$0xf]
  %v3336 = vld [vmem:[%s5 + $0xb8] sm:$0xf]
  %v3337 = vld [vmem:[%s5 + $0xbc] sm:$0xf]
  %v3338 = vld [vmem:[%s5 + $0xc0] sm:$0xf]
  %v3339 = vld [vmem:[%s5 + $0xc4] sm:$0xf]
  %v3340 = vld [vmem:[%s5 + $0xc8] sm:$0xf]
  %v3341 = vld [vmem:[%s5 + $0xcc] sm:$0xf]
  %v3342 = vld [vmem:[%s5 + $0xd0] sm:$0xf]
  %v3343 = vld [vmem:[%s5 + $0xd4] sm:$0xf]
  %v3344 = vld [vmem:[%s5 + $0xd8] sm:$0xf]
  %v3345 = vld [vmem:[%s5 + $0xdc] sm:$0xf]
  %v3346 = vld [vmem:[%s5 + $0xe0] sm:$0xf]
  %v3347 = vld [vmem:[%s5 + $0xe4] sm:$0xf]
  %v3348 = vld [vmem:[%s5 + $0xe8] sm:$0xf]
  %v3349 = vld [vmem:[%s5 + $0xec] sm:$0xf]
  %v3350 = vld [vmem:[%s5 + $0xf0] sm:$0xf]
  %v3351 = vld [vmem:[%s5 + $0xf4] sm:$0xf]
  %v3352 = vld [vmem:[%s5 + $0xf8] sm:$0xf]
  %v3353 = vld [vmem:[%s5 + $0xfc] sm:$0xf]
  %v3354 = vld [vmem:[%s5 + $0x100] sm:$0xf]
  %v3355 = vld [vmem:[%s5 + $0x104] sm:$0xf]
  %v3356 = vld [vmem:[%s5 + $0x108] sm:$0xf]
  %v3357 = vld [vmem:[%s5 + $0x10c] sm:$0xf]
  %v3358 = vld [vmem:[%s5 + $0x110] sm:$0xf]
  %v3359 = vld [vmem:[%s5 + $0x114] sm:$0xf]
  %v3360 = vld [vmem:[%s5 + $0x118] sm:$0xf]
  %v3361 = vld [vmem:[%s5 + $0x11c] sm:$0xf]
  %v3362 = vld [vmem:[%s5 + $0x120] sm:$0xf]
  %v3363 = vld [vmem:[%s5 + $0x124] sm:$0xf]
  %v3364 = vld [vmem:[%s5 + $0x128] sm:$0xf]
  %v3365 = vld [vmem:[%s5 + $0x12c] sm:$0xf]
  %v3366 = vld [vmem:[%s5 + $0x130] sm:$0xf]
  %v3367 = vld [vmem:[%s5 + $0x134] sm:$0xf]
  %v3368 = vld [vmem:[%s5 + $0x138] sm:$0xf]
  %v3369 = vld [vmem:[%s5 + $0x13c] sm:$0xf]
  %v3370 = vld [vmem:[%s5 + $0x140] sm:$0xf]
  %v3371 = vld [vmem:[%s5 + $0x144] sm:$0xf]
  %v3372 = vld [vmem:[%s5 + $0x148] sm:$0xf]
  %v3373 = vld [vmem:[%s5 + $0x14c] sm:$0xf]
  %v3374 = vld [vmem:[%s5 + $0x150] sm:$0xf]
  %v3375 = vld [vmem:[%s5 + $0x154] sm:$0xf]
  %v3376 = vld [vmem:[%s5 + $0x158] sm:$0xf]
  %v3377 = vld [vmem:[%s5 + $0x15c] sm:$0xf]
  %v3378 = vld [vmem:[%s5 + $0x160] sm:$0xf]
  %v3379 = vld [vmem:[%s5 + $0x164] sm:$0xf]
  %v3380 = vld [vmem:[%s5 + $0x168] sm:$0xf]
  %v3381 = vld [vmem:[%s5 + $0x16c] sm:$0xf]
  %v3382 = vld [vmem:[%s5 + $0x170] sm:$0xf]
  %v3383 = vld [vmem:[%s5 + $0x174] sm:$0xf]
  %v3384 = vld [vmem:[%s5 + $0x178] sm:$0xf]
  %v3385 = vld [vmem:[%s5 + $0x17c] sm:$0xf]
  %v3386 = vld [vmem:[%s5 + $0x180] sm:$0xf]
  %v3387 = vld [vmem:[%s5 + $0x184] sm:$0xf]
  %v3388 = vld [vmem:[%s5 + $0x188] sm:$0xf]
  %v3389 = vld [vmem:[%s5 + $0x18c] sm:$0xf]
  %v3390 = vld [vmem:[%s5 + $0x190] sm:$0xf]
  %v3391 = vld [vmem:[%s5 + $0x194] sm:$0xf]
  %v3392 = vld [vmem:[%s5 + $0x198] sm:$0xf]
  %v3393 = vld [vmem:[%s5 + $0x19c] sm:$0xf]
  %v3394 = vld [vmem:[%s5 + $0x1a0] sm:$0xf]
  %v3395 = vld [vmem:[%s5 + $0x1a4] sm:$0xf]
  %v3396 = vld [vmem:[%s5 + $0x1a8] sm:$0xf]
  %v3397 = vld [vmem:[%s5 + $0x1ac] sm:$0xf]
  %v3398 = vld [vmem:[%s5 + $0x1b0] sm:$0xf]
  %v3399 = vld [vmem:[%s5 + $0x1b4] sm:$0xf]
  %v3400 = vld [vmem:[%s5 + $0x1b8] sm:$0xf]
  %v3401 = vld [vmem:[%s5 + $0x1bc] sm:$0xf]
  %v3402 = vld [vmem:[%s5 + $0x1c0] sm:$0xf]
  %v3403 = vld [vmem:[%s5 + $0x1c4] sm:$0xf]
  %v3404 = vld [vmem:[%s5 + $0x1c8] sm:$0xf]
  %v3405 = vld [vmem:[%s5 + $0x1cc] sm:$0xf]
  %v3406 = vld [vmem:[%s5 + $0x1d0] sm:$0xf]
  %v3407 = vld [vmem:[%s5 + $0x1d4] sm:$0xf]
  %v3408 = vld [vmem:[%s5 + $0x1d8] sm:$0xf]
  %v3409 = vld [vmem:[%s5 + $0x1dc] sm:$0xf]
  %v3410 = vld [vmem:[%s5 + $0x1e0] sm:$0xf]
  %v3411 = vld [vmem:[%s5 + $0x1e4] sm:$0xf]
  %v3412 = vld [vmem:[%s5 + $0x1e8] sm:$0xf]
  %v3413 = vld [vmem:[%s5 + $0x1ec] sm:$0xf]
  %v3414 = vld [vmem:[%s5 + $0x1f0] sm:$0xf]
  %v3415 = vld [vmem:[%s5 + $0x1f4] sm:$0xf]
  %v3416 = vld [vmem:[%s5 + $0x1f8] sm:$0xf]
  %v3417 = vld [vmem:[%s5 + $0x1fc] sm:$0xf]
  %v3418 = vld [vmem:[%s5 + $0x200] sm:$0xf]
  %v3419 = vld [vmem:[%s5 + $0x204] sm:$0xf]
  %v3420 = vld [vmem:[%s5 + $0x208] sm:$0xf]
  %v3421 = vld [vmem:[%s5 + $0x20c] sm:$0xf]
  %v3422 = vld [vmem:[%s5 + $0x210] sm:$0xf]
  %v3423 = vld [vmem:[%s5 + $0x214] sm:$0xf]
  %v3424 = vld [vmem:[%s5 + $0x218] sm:$0xf]
  %v3425 = vld [vmem:[%s5 + $0x21c] sm:$0xf]
  %v3426 = vld [vmem:[%s5 + $0x220] sm:$0xf]
  %v3427 = vld [vmem:[%s5 + $0x224] sm:$0xf]
  %v3428 = vld [vmem:[%s5 + $0x228] sm:$0xf]
  %v3429 = vld [vmem:[%s5 + $0x22c] sm:$0xf]
  %v3430 = vld [vmem:[%s5 + $0x230] sm:$0xf]
  %v3431 = vld [vmem:[%s5 + $0x234] sm:$0xf]
  %v3432 = vld [vmem:[%s5 + $0x238] sm:$0xf]
  %v3433 = vld [vmem:[%s5 + $0x23c] sm:$0xf]
  %v3434 = vld [vmem:[%s6] sm:$0x1]
  %v3436 = vlaneseq
  %v3437 = vshrl.u32 %v3436, 7
  %v3438 = vsub.s32 0, %v3437
  %v3439 = vrot.slane %v3434, %v3438
  %v3585 = vunpack.c.l.b16 %v3290
  %v3586 = vunpack.c.l.b16 %v3291
  %v3587 = vunpack.c.l.b16 %v3292
  %v3588 = vunpack.c.l.b16 %v3293
  %v3589 = vunpack.c.l.b16 %v3294
  %v3590 = vunpack.c.l.b16 %v3295
  %v3591 = vunpack.c.l.b16 %v3296
  %v3592 = vunpack.c.l.b16 %v3297
  %v3593 = vunpack.c.l.b16 %v3298
  %v3594 = vunpack.c.l.b16 %v3299
  %v3595 = vunpack.c.l.b16 %v3300
  %v3596 = vunpack.c.l.b16 %v3301
  %v3597 = vunpack.c.l.b16 %v3302
  %v3598 = vunpack.c.l.b16 %v3303
  %v3599 = vunpack.c.l.b16 %v3304
  %v3600 = vunpack.c.l.b16 %v3305
  %v3601 = vunpack.c.l.b16 %v3306
  %v3602 = vunpack.c.l.b16 %v3307
  %v3603 = vunpack.c.l.b16 %v3308
  %v3604 = vunpack.c.l.b16 %v3309
  %v3605 = vunpack.c.l.b16 %v3310
  %v3606 = vunpack.c.l.b16 %v3311
  %v3607 = vunpack.c.l.b16 %v3312
  %v3608 = vunpack.c.l.b16 %v3313
  %v3609 = vunpack.c.l.b16 %v3314
  %v3610 = vunpack.c.l.b16 %v3315
  %v3611 = vunpack.c.l.b16 %v3316
  %v3612 = vunpack.c.l.b16 %v3317
  %v3613 = vunpack.c.l.b16 %v3318
  %v3614 = vunpack.c.l.b16 %v3319
  %v3615 = vunpack.c.l.b16 %v3320
  %v3616 = vunpack.c.l.b16 %v3321
  %v3617 = vunpack.c.l.b16 %v3322
  %v3618 = vunpack.c.l.b16 %v3323
  %v3619 = vunpack.c.l.b16 %v3324
  %v3620 = vunpack.c.l.b16 %v3325
  %v3621 = vunpack.c.l.b16 %v3326
  %v3622 = vunpack.c.l.b16 %v3327
  %v3623 = vunpack.c.l.b16 %v3328
  %v3624 = vunpack.c.l.b16 %v3329
  %v3625 = vunpack.c.l.b16 %v3330
  %v3626 = vunpack.c.l.b16 %v3331
  %v3627 = vunpack.c.l.b16 %v3332
  %v3628 = vunpack.c.l.b16 %v3333
  %v3629 = vunpack.c.l.b16 %v3334
  %v3630 = vunpack.c.l.b16 %v3335
  %v3631 = vunpack.c.l.b16 %v3336
  %v3632 = vunpack.c.l.b16 %v3337
  %v3633 = vunpack.c.l.b16 %v3338
  %v3634 = vunpack.c.l.b16 %v3339
  %v3635 = vunpack.c.l.b16 %v3340
  %v3636 = vunpack.c.l.b16 %v3341
  %v3637 = vunpack.c.l.b16 %v3342
  %v3638 = vunpack.c.l.b16 %v3343
  %v3639 = vunpack.c.l.b16 %v3344
  %v3640 = vunpack.c.l.b16 %v3345
  %v3641 = vunpack.c.l.b16 %v3346
  %v3642 = vunpack.c.l.b16 %v3347
  %v3643 = vunpack.c.l.b16 %v3348
  %v3644 = vunpack.c.l.b16 %v3349
  %v3645 = vunpack.c.l.b16 %v3350
  %v3646 = vunpack.c.l.b16 %v3351
  %v3647 = vunpack.c.l.b16 %v3352
  %v3648 = vunpack.c.l.b16 %v3353
  %v3649 = vunpack.c.l.b16 %v3354
  %v3650 = vunpack.c.l.b16 %v3355
  %v3651 = vunpack.c.l.b16 %v3356
  %v3652 = vunpack.c.l.b16 %v3357
  %v3653 = vunpack.c.l.b16 %v3358
  %v3654 = vunpack.c.l.b16 %v3359
  %v3655 = vunpack.c.l.b16 %v3360
  %v3656 = vunpack.c.l.b16 %v3361
  %v3657 = vunpack.c.l.b16 %v3362
  %v3658 = vunpack.c.l.b16 %v3363
  %v3659 = vunpack.c.l.b16 %v3364
  %v3660 = vunpack.c.l.b16 %v3365
  %v3661 = vunpack.c.l.b16 %v3366
  %v3662 = vunpack.c.l.b16 %v3367
  %v3663 = vunpack.c.l.b16 %v3368
  %v3664 = vunpack.c.l.b16 %v3369
  %v3665 = vunpack.c.l.b16 %v3370
  %v3666 = vunpack.c.l.b16 %v3371
  %v3667 = vunpack.c.l.b16 %v3372
  %v3668 = vunpack.c.l.b16 %v3373
  %v3669 = vunpack.c.l.b16 %v3374
  %v3670 = vunpack.c.l.b16 %v3375
  %v3671 = vunpack.c.l.b16 %v3376
  %v3672 = vunpack.c.l.b16 %v3377
  %v3673 = vunpack.c.l.b16 %v3378
  %v3674 = vunpack.c.l.b16 %v3379
  %v3675 = vunpack.c.l.b16 %v3380
  %v3676 = vunpack.c.l.b16 %v3381
  %v3677 = vunpack.c.l.b16 %v3382
  %v3678 = vunpack.c.l.b16 %v3383
  %v3679 = vunpack.c.l.b16 %v3384
  %v3680 = vunpack.c.l.b16 %v3385
  %v3681 = vunpack.c.l.b16 %v3386
  %v3682 = vunpack.c.l.b16 %v3387
  %v3683 = vunpack.c.l.b16 %v3388
  %v3684 = vunpack.c.l.b16 %v3389
  %v3685 = vunpack.c.l.b16 %v3390
  %v3686 = vunpack.c.l.b16 %v3391
  %v3687 = vunpack.c.l.b16 %v3392
  %v3688 = vunpack.c.l.b16 %v3393
  %v3689 = vunpack.c.l.b16 %v3394
  %v3690 = vunpack.c.l.b16 %v3395
  %v3691 = vunpack.c.l.b16 %v3396
  %v3692 = vunpack.c.l.b16 %v3397
  %v3693 = vunpack.c.l.b16 %v3398
  %v3694 = vunpack.c.l.b16 %v3399
  %v3695 = vunpack.c.l.b16 %v3400
  %v3696 = vunpack.c.l.b16 %v3401
  %v3697 = vunpack.c.l.b16 %v3402
  %v3698 = vunpack.c.l.b16 %v3403
  %v3699 = vunpack.c.l.b16 %v3404
  %v3700 = vunpack.c.l.b16 %v3405
  %v3701 = vunpack.c.l.b16 %v3406
  %v3702 = vunpack.c.l.b16 %v3407
  %v3703 = vunpack.c.l.b16 %v3408
  %v3704 = vunpack.c.l.b16 %v3409
  %v3705 = vunpack.c.l.b16 %v3410
  %v3706 = vunpack.c.l.b16 %v3411
  %v3707 = vunpack.c.l.b16 %v3412
  %v3708 = vunpack.c.l.b16 %v3413
  %v3709 = vunpack.c.l.b16 %v3414
  %v3710 = vunpack.c.l.b16 %v3415
  %v3711 = vunpack.c.l.b16 %v3416
  %v3712 = vunpack.c.l.b16 %v3417
  %v3713 = vunpack.c.l.b16 %v3418
  %v3714 = vunpack.c.l.b16 %v3419
  %v3715 = vunpack.c.l.b16 %v3420
  %v3716 = vunpack.c.l.b16 %v3421
  %v3717 = vunpack.c.l.b16 %v3422
  %v3718 = vunpack.c.l.b16 %v3423
  %v3719 = vunpack.c.l.b16 %v3424
  %v3720 = vunpack.c.l.b16 %v3425
  %v3721 = vunpack.c.l.b16 %v3426
  %v3722 = vunpack.c.l.b16 %v3427
  %v3723 = vunpack.c.l.b16 %v3428
  %v3724 = vunpack.c.l.b16 %v3429
  %v3725 = vunpack.c.l.b16 %v3430
  %v3726 = vunpack.c.l.b16 %v3431
  %v3727 = vunpack.c.l.b16 %v3432
  %v3728 = vunpack.c.l.b16 %v3433
  %v3729 = vpack.c.b16 %v3586, %v3585
  %v3730 = vpack.c.b16 %v3588, %v3587
  %v3731 = vpack.c.b16 %v3590, %v3589
  %v3732 = vpack.c.b16 %v3592, %v3591
  %v3733 = vpack.c.b16 %v3594, %v3593
  %v3734 = vpack.c.b16 %v3596, %v3595
  %v3735 = vpack.c.b16 %v3598, %v3597
  %v3736 = vpack.c.b16 %v3600, %v3599
  %v3737 = vpack.c.b16 %v3602, %v3601
  %v3738 = vpack.c.b16 %v3604, %v3603
  %v3739 = vpack.c.b16 %v3606, %v3605
  %v3740 = vpack.c.b16 %v3608, %v3607
  %v3741 = vpack.c.b16 %v3610, %v3609
  %v3742 = vpack.c.b16 %v3612, %v3611
  %v3743 = vpack.c.b16 %v3614, %v3613
  %v3744 = vpack.c.b16 %v3616, %v3615
  %v3745 = vpack.c.b16 %v3618, %v3617
  %v3746 = vpack.c.b16 %v3620, %v3619
  %v3747 = vpack.c.b16 %v3622, %v3621
  %v3748 = vpack.c.b16 %v3624, %v3623
  %v3749 = vpack.c.b16 %v3626, %v3625
  %v3750 = vpack.c.b16 %v3628, %v3627
  %v3751 = vpack.c.b16 %v3630, %v3629
  %v3752 = vpack.c.b16 %v3632, %v3631
  %v3753 = vpack.c.b16 %v3634, %v3633
  %v3754 = vpack.c.b16 %v3636, %v3635
  %v3755 = vpack.c.b16 %v3638, %v3637
  %v3756 = vpack.c.b16 %v3640, %v3639
  %v3757 = vpack.c.b16 %v3642, %v3641
  %v3758 = vpack.c.b16 %v3644, %v3643
  %v3759 = vpack.c.b16 %v3646, %v3645
  %v3760 = vpack.c.b16 %v3648, %v3647
  %v3761 = vpack.c.b16 %v3650, %v3649
  %v3762 = vpack.c.b16 %v3652, %v3651
  %v3763 = vpack.c.b16 %v3654, %v3653
  %v3764 = vpack.c.b16 %v3656, %v3655
  %v3765 = vpack.c.b16 %v3658, %v3657
  %v3766 = vpack.c.b16 %v3660, %v3659
  %v3767 = vpack.c.b16 %v3662, %v3661
  %v3768 = vpack.c.b16 %v3664, %v3663
  %v3769 = vpack.c.b16 %v3666, %v3665
  %v3770 = vpack.c.b16 %v3668, %v3667
  %v3771 = vpack.c.b16 %v3670, %v3669
  %v3772 = vpack.c.b16 %v3672, %v3671
  %v3773 = vpack.c.b16 %v3674, %v3673
  %v3774 = vpack.c.b16 %v3676, %v3675
  %v3775 = vpack.c.b16 %v3678, %v3677
  %v3776 = vpack.c.b16 %v3680, %v3679
  %v3777 = vpack.c.b16 %v3682, %v3681
  %v3778 = vpack.c.b16 %v3684, %v3683
  %v3779 = vpack.c.b16 %v3686, %v3685
  %v3780 = vpack.c.b16 %v3688, %v3687
  %v3781 = vpack.c.b16 %v3690, %v3689
  %v3782 = vpack.c.b16 %v3692, %v3691
  %v3783 = vpack.c.b16 %v3694, %v3693
  %v3784 = vpack.c.b16 %v3696, %v3695
  %v3785 = vpack.c.b16 %v3698, %v3697
  %v3786 = vpack.c.b16 %v3700, %v3699
  %v3787 = vpack.c.b16 %v3702, %v3701
  %v3788 = vpack.c.b16 %v3704, %v3703
  %v3789 = vpack.c.b16 %v3706, %v3705
  %v3790 = vpack.c.b16 %v3708, %v3707
  %v3791 = vpack.c.b16 %v3710, %v3709
  %v3792 = vpack.c.b16 %v3712, %v3711
  %v3793 = vpack.c.b16 %v3714, %v3713
  %v3794 = vpack.c.b16 %v3716, %v3715
  %v3795 = vpack.c.b16 %v3718, %v3717
  %v3796 = vpack.c.b16 %v3720, %v3719
  %v3797 = vpack.c.b16 %v3722, %v3721
  %v3798 = vpack.c.b16 %v3724, %v3723
  %v3799 = vpack.c.b16 %v3726, %v3725
  %v3800 = vpack.c.b16 %v3728, %v3727
  %3873 = vmatprep.subr.bf16.mxu0 0
  %3874 = vmatpush1.bf16.msra.mxu0 %v3729
  %3875 = vmatprep.subr.bf16.mxu0 0
  %3876 = vmatpush1.bf16.msra.mxu0 %v3730
  %3877 = vmatprep.subr.bf16.mxu0 0
  %3878 = vmatpush1.bf16.msra.mxu0 %v3731
  %3879 = vmatprep.subr.bf16.mxu0 0
  %3880 = vmatpush1.bf16.msra.mxu0 %v3732
  %3881 = vmatprep.subr.bf16.mxu0 0
  %3882 = vmatpush1.bf16.msra.mxu0 %v3733
  %3883 = vmatprep.subr.bf16.mxu0 0
  %3884 = vmatpush1.bf16.msra.mxu0 %v3734
  %3885 = vmatprep.subr.bf16.mxu0 0
  %3886 = vmatpush1.bf16.msra.mxu0 %v3735
  %3887 = vmatprep.subr.bf16.mxu0 0
  %3888 = vmatpush1.bf16.msra.mxu0 %v3736
  %3889 = vmatprep.subr.bf16.mxu0 0
  %3890 = vmatpush1.bf16.msra.mxu0 %v3737
  %3891 = vmatprep.subr.bf16.mxu0 0
  %3892 = vmatpush1.bf16.msra.mxu0 %v3738
  %3893 = vmatprep.subr.bf16.mxu0 0
  %3894 = vmatpush1.bf16.msra.mxu0 %v3739
  %3895 = vmatprep.subr.bf16.mxu0 0
  %3896 = vmatpush1.bf16.msra.mxu0 %v3740
  %3897 = vmatprep.subr.bf16.mxu0 0
  %3898 = vmatpush1.bf16.msra.mxu0 %v3741
  %3899 = vmatprep.subr.bf16.mxu0 0
  %3900 = vmatpush1.bf16.msra.mxu0 %v3742
  %3901 = vmatprep.subr.bf16.mxu0 0
  %3902 = vmatpush1.bf16.msra.mxu0 %v3743
  %3903 = vmatprep.subr.bf16.mxu0 0
  %3904 = vmatpush1.bf16.msra.mxu0 %v3744
  %3905 = vmatprep.mubr.bf16.mxu0 %v3219
  %3906 = vmatmul.mubr.bf16.gmra.mrb[0].mxu0 %v3218
  %v3907 = vpop.f32.mrb[0].mxu0
  %v3908 = vadd.f32 %v3439, %v3907
  %v3909 = vpop.f32.mrb[0].mxu0
  %v3910 = vpop.f32.mrb[0].mxu0
  %v3911 = vadd.f32 %v3439, %v3910
  %v3912 = vpop.f32.mrb[0].mxu0
  %3913 = vmatprep.mubr.bf16.mxu0 %v3228
  %3914 = vmatmul.mubr.bf16.gmra.mrb[0].mxu0 %v3227
  %v3915 = vpop.f32.mrb[0].mxu0
  %v3916 = vadd.f32 %v3439, %v3915
  %v3917 = vpop.f32.mrb[0].mxu0
  %v3918 = vpop.f32.mrb[0].mxu0
  %v3919 = vadd.f32 %v3439, %v3918
  %v3920 = vpop.f32.mrb[0].mxu0
  %3921 = vmatprep.mubr.bf16.mxu0 %v3237
  %3922 = vmatmul.mubr.bf16.gmra.mrb[0].mxu0 %v3236
  %v3923 = vpop.f32.mrb[0].mxu0
  %v3924 = vadd.f32 %v3439, %v3923
  %v3925 = vpop.f32.mrb[0].mxu0
  %v3926 = vpop.f32.mrb[0].mxu0
  %v3927 = vadd.f32 %v3439, %v3926
  %v3928 = vpop.f32.mrb[0].mxu0
  %3929 = vmatprep.mubr.bf16.mxu0 %v3246
  %3930 = vmatmul.mubr.bf16.gmra.mrb[0].mxu0 %v3245
  %v3931 = vpop.f32.mrb[0].mxu0
  %v3932 = vadd.f32 %v3439, %v3931
  %v3933 = vpop.f32.mrb[0].mxu0
  %v3934 = vpop.f32.mrb[0].mxu0
  %v3935 = vadd.f32 %v3439, %v3934
  %v3936 = vpop.f32.mrb[0].mxu0
  %3937 = vmatprep.mubr.bf16.mxu0 %v3255
  %3938 = vmatmul.mubr.bf16.gmra.mrb[0].mxu0 %v3254
  %v3939 = vpop.f32.mrb[0].mxu0
  %v3940 = vadd.f32 %v3439, %v3939
  %v3941 = vpop.f32.mrb[0].mxu0
  %v3942 = vpop.f32.mrb[0].mxu0
  %v3943 = vadd.f32 %v3439, %v3942
  %v3944 = vpop.f32.mrb[0].mxu0
  %3945 = vmatprep.mubr.bf16.mxu0 %v3264
  %3946 = vmatmul.mubr.bf16.gmra.mrb[0].mxu0 %v3263
  %v3947 = vpop.f32.mrb[0].mxu0
  %v3948 = vadd.f32 %v3439, %v3947
  %v3949 = vpop.f32.mrb[0].mxu0
  %v3950 = vpop.f32.mrb[0].mxu0
  %v3951 = vadd.f32 %v3439, %v3950
  %v3952 = vpop.f32.mrb[0].mxu0
  %3953 = vmatprep.mubr.bf16.mxu0 %v3273
  %3954 = vmatmul.mubr.bf16.gmra.mrb[0].mxu0 %v3272
  %v3955 = vpop.f32.mrb[0].mxu0
  %v3956 = vadd.f32 %v3439, %v3955
  %v3957 = vpop.f32.mrb[0].mxu0
  %v3958 = vpop.f32.mrb[0].mxu0
  %v3959 = vadd.f32 %v3439, %v3958
  %v3960 = vpop.f32.mrb[0].mxu0
  %3961 = vmatprep.mubr.bf16.mxu0 %v3282
  %3962 = vmatmul.mubr.bf16.gmra.mrb[0].mxu0 %v3281
  %v3963 = vpop.f32.mrb[0].mxu0
  %v3964 = vadd.f32 %v3439, %v3963
  %v3965 = vpop.f32.mrb[0].mxu0
  %v3966 = vpop.f32.mrb[0].mxu0
  %v3967 = vadd.f32 %v3439, %v3966
  %v3968 = vpop.f32.mrb[0].mxu0
  %3969 = vdwg.mxu0
  %3970 = vmatprep.subr.bf16.mxu0 0
  %3971 = vmatpush1.bf16.msra.mxu0 %v3745
  %3972 = vmatprep.subr.bf16.mxu0 0
  %3973 = vmatpush1.bf16.msra.mxu0 %v3746
  %3974 = vmatprep.subr.bf16.mxu0 0
  %3975 = vmatpush1.bf16.msra.mxu0 %v3747
  %3976 = vmatprep.subr.bf16.mxu0 0
  %3977 = vmatpush1.bf16.msra.mxu0 %v3748
  %3978 = vmatprep.subr.bf16.mxu0 0
  %3979 = vmatpush1.bf16.msra.mxu0 %v3749
  %3980 = vmatprep.subr.bf16.mxu0 0
  %3981 = vmatpush1.bf16.msra.mxu0 %v3750
  %3982 = vmatprep.subr.bf16.mxu0 0
  %3983 = vmatpush1.bf16.msra.mxu0 %v3751
  %3984 = vmatprep.subr.bf16.mxu0 0
  %3985 = vmatpush1.bf16.msra.mxu0 %v3752
  %3986 = vmatprep.subr.bf16.mxu0 0
  %3987 = vmatpush1.bf16.msra.mxu0 %v3753
  %3988 = vmatprep.subr.bf16.mxu0 0
  %3989 = vmatpush1.bf16.msra.mxu0 %v3754
  %3990 = vmatprep.subr.bf16.mxu0 0
  %3991 = vmatpush1.bf16.msra.mxu0 %v3755
  %3992 = vmatprep.subr.bf16.mxu0 0
  %3993 = vmatpush1.bf16.msra.mxu0 %v3756
  %3994 = vmatprep.subr.bf16.mxu0 0
  %3995 = vmatpush1.bf16.msra.mxu0 %v3757
  %3996 = vmatprep.subr.bf16.mxu0 0
  %3997 = vmatpush1.bf16.msra.mxu0 %v3758
  %3998 = vmatprep.subr.bf16.mxu0 0
  %3999 = vmatpush1.bf16.msra.mxu0 %v3759
  %4000 = vmatprep.subr.bf16.mxu0 0
  %4001 = vmatpush1.bf16.msra.mxu0 %v3760
  %4002 = vmatprep.mubr.bf16.mxu0 %v3221
  %4003 = vmatmul.mubr.bf16.gmra.mrb[0].mxu0 %v3220
  %v4004 = vpop.f32.mrb[0].mxu0
  %v4005 = vadd.f32 %v3908, %v4004
  %v4006 = vpop.f32.mrb[0].mxu0
  %v4007 = vpop.f32.mrb[0].mxu0
  %v4008 = vadd.f32 %v3911, %v4007
  %v4009 = vpop.f32.mrb[0].mxu0
  %4010 = vmatprep.mubr.bf16.mxu0 %v3230
  %4011 = vmatmul.mubr.bf16.gmra.mrb[0].mxu0 %v3229
  %v4012 = vpop.f32.mrb[0].mxu0
  %v4013 = vadd.f32 %v3916, %v4012
  %v4014 = vpop.f32.mrb[0].mxu0
  %v4015 = vpop.f32.mrb[0].mxu0
  %v4016 = vadd.f32 %v3919, %v4015
  %v4017 = vpop.f32.mrb[0].mxu0
  %4018 = vmatprep.mubr.bf16.mxu0 %v3239
  %4019 = vmatmul.mubr.bf16.gmra.mrb[0].mxu0 %v3238
  %v4020 = vpop.f32.mrb[0].mxu0
  %v4021 = vadd.f32 %v3924, %v4020
  %v4022 = vpop.f32.mrb[0].mxu0
  %v4023 = vpop.f32.mrb[0].mxu0
  %v4024 = vadd.f32 %v3927, %v4023
  %v4025 = vpop.f32.mrb[0].mxu0
  %4026 = vmatprep.mubr.bf16.mxu0 %v3248
  %4027 = vmatmul.mubr.bf16.gmra.mrb[0].mxu0 %v3247
  %v4028 = vpop.f32.mrb[0].mxu0
  %v4029 = vadd.f32 %v3932, %v4028
  %v4030 = vpop.f32.mrb[0].mxu0
  %v4031 = vpop.f32.mrb[0].mxu0
  %v4032 = vadd.f32 %v3935, %v4031
  %v4033 = vpop.f32.mrb[0].mxu0
  %4034 = vmatprep.mubr.bf16.mxu0 %v3257
  %4035 = vmatmul.mubr.bf16.gmra.mrb[0].mxu0 %v3256
  %v4036 = vpop.f32.mrb[0].mxu0
  %v4037 = vadd.f32 %v3940, %v4036
  %v4038 = vpop.f32.mrb[0].mxu0
  %v4039 = vpop.f32.mrb[0].mxu0
  %v4040 = vadd.f32 %v3943, %v4039
  %v4041 = vpop.f32.mrb[0].mxu0
  %4042 = vmatprep.mubr.bf16.mxu0 %v3266
  %4043 = vmatmul.mubr.bf16.gmra.mrb[0].mxu0 %v3265
  %v4044 = vpop.f32.mrb[0].mxu0
  %v4045 = vadd.f32 %v3948, %v4044
  %v4046 = vpop.f32.mrb[0].mxu0
  %v4047 = vpop.f32.mrb[0].mxu0
  %v4048 = vadd.f32 %v3951, %v4047
  %v4049 = vpop.f32.mrb[0].mxu0
  %4050 = vmatprep.mubr.bf16.mxu0 %v3275
  %4051 = vmatmul.mubr.bf16.gmra.mrb[0].mxu0 %v3274
  %v4052 = vpop.f32.mrb[0].mxu0
  %v4053 = vadd.f32 %v3956, %v4052
  %v4054 = vpop.f32.mrb[0].mxu0
  %v4055 = vpop.f32.mrb[0].mxu0
  %v4056 = vadd.f32 %v3959, %v4055
  %v4057 = vpop.f32.mrb[0].mxu0
  %4058 = vmatprep.mubr.bf16.mxu0 %v3284
  %4059 = vmatmul.mubr.bf16.gmra.mrb[0].mxu0 %v3283
  %v4060 = vpop.f32.mrb[0].mxu0
  %v4061 = vadd.f32 %v3964, %v4060
  %v4062 = vpop.f32.mrb[0].mxu0
  %v4063 = vpop.f32.mrb[0].mxu0
  %v4064 = vadd.f32 %v3967, %v4063
  %v4065 = vpop.f32.mrb[0].mxu0
  %4066 = vdwg.mxu0
  %4067 = vmatprep.subr.bf16.mxu0 0
  %4068 = vmatpush1.bf16.msra.mxu0 %v3761
  %4069 = vmatprep.subr.bf16.mxu0 0
  %4070 = vmatpush1.bf16.msra.mxu0 %v3762
  %4071 = vmatprep.subr.bf16.mxu0 0
  %4072 = vmatpush1.bf16.msra.mxu0 %v3763
  %4073 = vmatprep.subr.bf16.mxu0 0
  %4074 = vmatpush1.bf16.msra.mxu0 %v3764
  %4075 = vmatprep.subr.bf16.mxu0 0
  %4076 = vmatpush1.bf16.msra.mxu0 %v3765
  %4077 = vmatprep.subr.bf16.mxu0 0
  %4078 = vmatpush1.bf16.msra.mxu0 %v3766
  %4079 = vmatprep.subr.bf16.mxu0 0
  %4080 = vmatpush1.bf16.msra.mxu0 %v3767
  %4081 = vmatprep.subr.bf16.mxu0 0
  %4082 = vmatpush1.bf16.msra.mxu0 %v3768
  %4083 = vmatprep.subr.bf16.mxu0 0
  %4084 = vmatpush1.bf16.msra.mxu0 %v3769
  %4085 = vmatprep.subr.bf16.mxu0 0
  %4086 = vmatpush1.bf16.msra.mxu0 %v3770
  %4087 = vmatprep.subr.bf16.mxu0 0
  %4088 = vmatpush1.bf16.msra.mxu0 %v3771
  %4089 = vmatprep.subr.bf16.mxu0 0
  %4090 = vmatpush1.bf16.msra.mxu0 %v3772
  %4091 = vmatprep.subr.bf16.mxu0 0
  %4092 = vmatpush1.bf16.msra.mxu0 %v3773
  %4093 = vmatprep.subr.bf16.mxu0 0
  %4094 = vmatpush1.bf16.msra.mxu0 %v3774
  %4095 = vmatprep.subr.bf16.mxu0 0
  %4096 = vmatpush1.bf16.msra.mxu0 %v3775
  %4097 = vmatprep.subr.bf16.mxu0 0
  %4098 = vmatpush1.bf16.msra.mxu0 %v3776
  %4099 = vmatprep.mubr.bf16.mxu0 %v3223
  %4100 = vmatmul.mubr.bf16.gmra.mrb[0].mxu0 %v3222
  %v4101 = vpop.f32.mrb[0].mxu0
  %v4102 = vadd.f32 %v4005, %v4101
  %v4103 = vpop.f32.mrb[0].mxu0
  %v4104 = vpop.f32.mrb[0].mxu0
  %v4105 = vadd.f32 %v4008, %v4104
  %v4106 = vpop.f32.mrb[0].mxu0
  %4107 = vmatprep.mubr.bf16.mxu0 %v3232
  %4108 = vmatmul.mubr.bf16.gmra.mrb[0].mxu0 %v3231
  %v4109 = vpop.f32.mrb[0].mxu0
  %v4110 = vadd.f32 %v4013, %v4109
  %v4111 = vpop.f32.mrb[0].mxu0
  %v4112 = vpop.f32.mrb[0].mxu0
  %v4113 = vadd.f32 %v4016, %v4112
  %v4114 = vpop.f32.mrb[0].mxu0
  %4115 = vmatprep.mubr.bf16.mxu0 %v3241
  %4116 = vmatmul.mubr.bf16.gmra.mrb[0].mxu0 %v3240
  %v4117 = vpop.f32.mrb[0].mxu0
  %v4118 = vadd.f32 %v4021, %v4117
  %v4119 = vpop.f32.mrb[0].mxu0
  %v4120 = vpop.f32.mrb[0].mxu0
  %v4121 = vadd.f32 %v4024, %v4120
  %v4122 = vpop.f32.mrb[0].mxu0
  %4123 = vmatprep.mubr.bf16.mxu0 %v3250
  %4124 = vmatmul.mubr.bf16.gmra.mrb[0].mxu0 %v3249
  %v4125 = vpop.f32.mrb[0].mxu0
  %v4126 = vadd.f32 %v4029, %v4125
  %v4127 = vpop.f32.mrb[0].mxu0
  %v4128 = vpop.f32.mrb[0].mxu0
  %v4129 = vadd.f32 %v4032, %v4128
  %v4130 = vpop.f32.mrb[0].mxu0
  %4131 = vmatprep.mubr.bf16.mxu0 %v3259
  %4132 = vmatmul.mubr.bf16.gmra.mrb[0].mxu0 %v3258
  %v4133 = vpop.f32.mrb[0].mxu0
  %v4134 = vadd.f32 %v4037, %v4133
  %v4135 = vpop.f32.mrb[0].mxu0
  %v4136 = vpop.f32.mrb[0].mxu0
  %v4137 = vadd.f32 %v4040, %v4136
  %v4138 = vpop.f32.mrb[0].mxu0
  %4139 = vmatprep.mubr.bf16.mxu0 %v3268
  %4140 = vmatmul.mubr.bf16.gmra.mrb[0].mxu0 %v3267
  %v4141 = vpop.f32.mrb[0].mxu0
  %v4142 = vadd.f32 %v4045, %v4141
  %v4143 = vpop.f32.mrb[0].mxu0
  %v4144 = vpop.f32.mrb[0].mxu0
  %v4145 = vadd.f32 %v4048, %v4144
  %v4146 = vpop.f32.mrb[0].mxu0
  %4147 = vmatprep.mubr.bf16.mxu0 %v3277
  %4148 = vmatmul.mubr.bf16.gmra.mrb[0].mxu0 %v3276
  %v4149 = vpop.f32.mrb[0].mxu0
  %v4150 = vadd.f32 %v4053, %v4149
  %v4151 = vpop.f32.mrb[0].mxu0
  %v4152 = vpop.f32.mrb[0].mxu0
  %v4153 = vadd.f32 %v4056, %v4152
  %v4154 = vpop.f32.mrb[0].mxu0
  %4155 = vmatprep.mubr.bf16.mxu0 %v3286
  %4156 = vmatmul.mubr.bf16.gmra.mrb[0].mxu0 %v3285
  %v4157 = vpop.f32.mrb[0].mxu0
  %v4158 = vadd.f32 %v4061, %v4157
  %v4159 = vpop.f32.mrb[0].mxu0
  %v4160 = vpop.f32.mrb[0].mxu0
  %v4161 = vadd.f32 %v4064, %v4160
  %v4162 = vpop.f32.mrb[0].mxu0
  %4163 = vdwg.mxu0
  %4164 = vmatprep.subr.bf16.mxu0 0
  %4165 = vmatpush1.bf16.msra.mxu0 %v3777
  %4166 = vmatprep.subr.bf16.mxu0 0
  %4167 = vmatpush1.bf16.msra.mxu0 %v3778
  %4168 = vmatprep.subr.bf16.mxu0 0
  %4169 = vmatpush1.bf16.msra.mxu0 %v3779
  %4170 = vmatprep.subr.bf16.mxu0 0
  %4171 = vmatpush1.bf16.msra.mxu0 %v3780
  %4172 = vmatprep.subr.bf16.mxu0 0
  %4173 = vmatpush1.bf16.msra.mxu0 %v3781
  %4174 = vmatprep.subr.bf16.mxu0 0
  %4175 = vmatpush1.bf16.msra.mxu0 %v3782
  %4176 = vmatprep.subr.bf16.mxu0 0
  %4177 = vmatpush1.bf16.msra.mxu0 %v3783
  %4178 = vmatprep.subr.bf16.mxu0 0
  %4179 = vmatpush1.bf16.msra.mxu0 %v3784
  %4180 = vmatprep.subr.bf16.mxu0 0
  %4181 = vmatpush1.bf16.msra.mxu0 %v3785
  %4182 = vmatprep.subr.bf16.mxu0 0
  %4183 = vmatpush1.bf16.msra.mxu0 %v3786
  %4184 = vmatprep.subr.bf16.mxu0 0
  %4185 = vmatpush1.bf16.msra.mxu0 %v3787
  %4186 = vmatprep.subr.bf16.mxu0 0
  %4187 = vmatpush1.bf16.msra.mxu0 %v3788
  %4188 = vmatprep.subr.bf16.mxu0 0
  %4189 = vmatpush1.bf16.msra.mxu0 %v3789
  %4190 = vmatprep.subr.bf16.mxu0 0
  %4191 = vmatpush1.bf16.msra.mxu0 %v3790
  %4192 = vmatprep.subr.bf16.mxu0 0
  %4193 = vmatpush1.bf16.msra.mxu0 %v3791
  %4194 = vmatprep.subr.bf16.mxu0 0
  %4195 = vmatpush1.bf16.msra.mxu0 %v3792
  %4196 = vmatprep.mubr.bf16.mxu0 %v3225
  %4197 = vmatmul.mubr.bf16.gmra.mrb[0].mxu0 %v3224
  %v4198 = vpop.f32.mrb[0].mxu0
  %v4199 = vadd.f32 %v4102, %v4198
  %v4200 = vpop.f32.mrb[0].mxu0
  %v4201 = vpop.f32.mrb[0].mxu0
  %v4202 = vadd.f32 %v4105, %v4201
  %v4203 = vpop.f32.mrb[0].mxu0
  %4204 = vmatprep.mubr.bf16.mxu0 %v3234
  %4205 = vmatmul.mubr.bf16.gmra.mrb[0].mxu0 %v3233
  %v4206 = vpop.f32.mrb[0].mxu0
  %v4207 = vadd.f32 %v4110, %v4206
  %v4208 = vpop.f32.mrb[0].mxu0
  %v4209 = vpop.f32.mrb[0].mxu0
  %v4210 = vadd.f32 %v4113, %v4209
  %v4211 = vpop.f32.mrb[0].mxu0
  %4212 = vmatprep.mubr.bf16.mxu0 %v3243
  %4213 = vmatmul.mubr.bf16.gmra.mrb[0].mxu0 %v3242
  %v4214 = vpop.f32.mrb[0].mxu0
  %v4215 = vadd.f32 %v4118, %v4214
  %v4216 = vpop.f32.mrb[0].mxu0
  %v4217 = vpop.f32.mrb[0].mxu0
  %v4218 = vadd.f32 %v4121, %v4217
  %v4219 = vpop.f32.mrb[0].mxu0
  %4220 = vmatprep.mubr.bf16.mxu0 %v3252
  %4221 = vmatmul.mubr.bf16.gmra.mrb[0].mxu0 %v3251
  %v4222 = vpop.f32.mrb[0].mxu0
  %v4223 = vadd.f32 %v4126, %v4222
  %v4224 = vpop.f32.mrb[0].mxu0
  %v4225 = vpop.f32.mrb[0].mxu0
  %v4226 = vadd.f32 %v4129, %v4225
  %v4227 = vpop.f32.mrb[0].mxu0
  %4228 = vmatprep.mubr.bf16.mxu0 %v3261
  %4229 = vmatmul.mubr.bf16.gmra.mrb[0].mxu0 %v3260
  %v4230 = vpop.f32.mrb[0].mxu0
  %v4231 = vadd.f32 %v4134, %v4230
  %v4232 = vpop.f32.mrb[0].mxu0
  %v4233 = vpop.f32.mrb[0].mxu0
  %v4234 = vadd.f32 %v4137, %v4233
  %v4235 = vpop.f32.mrb[0].mxu0
  %4236 = vmatprep.mubr.bf16.mxu0 %v3270
  %4237 = vmatmul.mubr.bf16.gmra.mrb[0].mxu0 %v3269
  %v4238 = vpop.f32.mrb[0].mxu0
  %v4239 = vadd.f32 %v4142, %v4238
  %v4240 = vpop.f32.mrb[0].mxu0
  %v4241 = vpop.f32.mrb[0].mxu0
  %v4242 = vadd.f32 %v4145, %v4241
  %v4243 = vpop.f32.mrb[0].mxu0
  %4244 = vmatprep.mubr.bf16.mxu0 %v3279
  %4245 = vmatmul.mubr.bf16.gmra.mrb[0].mxu0 %v3278
  %v4246 = vpop.f32.mrb[0].mxu0
  %v4247 = vadd.f32 %v4150, %v4246
  %v4248 = vpop.f32.mrb[0].mxu0
  %v4249 = vpop.f32.mrb[0].mxu0
  %v4250 = vadd.f32 %v4153, %v4249
  %v4251 = vpop.f32.mrb[0].mxu0
  %4252 = vmatprep.mubr.bf16.mxu0 %v3288
  %4253 = vmatmul.mubr.bf16.gmra.mrb[0].mxu0 %v3287
  %v4254 = vpop.f32.mrb[0].mxu0
  %v4255 = vadd.f32 %v4158, %v4254
  %v4256 = vpop.f32.mrb[0].mxu0
  %v4257 = vpop.f32.mrb[0].mxu0
  %v4258 = vadd.f32 %v4161, %v4257
  %v4259 = vpop.f32.mrb[0].mxu0
  %4260 = vdwg.mxu0
  %4261 = vmatprep.subr.bf16.mxu0 0
  %4262 = vmatpush1.bf16.msra.mxu0 %v3793
  %4263 = vmatprep.subr.bf16.mxu0 0
  %4264 = vmatpush1.bf16.msra.mxu0 %v3794
  %4265 = vmatprep.subr.bf16.mxu0 0
  %4266 = vmatpush1.bf16.msra.mxu0 %v3795
  %4267 = vmatprep.subr.bf16.mxu0 0
  %4268 = vmatpush1.bf16.msra.mxu0 %v3796
  %4269 = vmatprep.subr.bf16.mxu0 0
  %4270 = vmatpush1.bf16.msra.mxu0 %v3797
  %4271 = vmatprep.subr.bf16.mxu0 0
  %4272 = vmatpush1.bf16.msra.mxu0 %v3798
  %4273 = vmatprep.subr.bf16.mxu0 0
  %4274 = vmatpush1.bf16.msra.mxu0 %v3799
  %4275 = vmatprep.subr.bf16.mxu0 0
  %4276 = vmatpush1.bf16.msra.mxu0 %v3800
  %4277 = vmatprep.subr.bf16.mxu0 0
  %4278 = vmatpush1.bf16.msra.mxu0 0
  %4279 = vmatprep.subr.bf16.mxu0 0
  %4280 = vmatpush1.bf16.msra.mxu0 0
  %4281 = vmatprep.subr.bf16.mxu0 0
  %4282 = vmatpush1.bf16.msra.mxu0 0
  %4283 = vmatprep.subr.bf16.mxu0 0
  %4284 = vmatpush1.bf16.msra.mxu0 0
  %4285 = vmatprep.subr.bf16.mxu0 0
  %4286 = vmatpush1.bf16.msra.mxu0 0
  %4287 = vmatprep.subr.bf16.mxu0 0
  %4288 = vmatpush1.bf16.msra.mxu0 0
  %4289 = vmatprep.subr.bf16.mxu0 0
  %4290 = vmatpush1.bf16.msra.mxu0 0
  %4291 = vmatprep.subr.bf16.mxu0 0
  %4292 = vmatpush1.bf16.msra.mxu0 0
  %4293 = vmatprep.mubr.bf16.mxu0 0
  %4294 = vmatmul.mubr.bf16.gmra.mrb[0].mxu0 %v3226
  %v4295 = vpop.f32.mrb[0].mxu0
  %v4296 = vadd.f32 %v4199, %v4295
  %v4297 = vpop.f32.mrb[0].mxu0
  %v4298 = vpop.f32.mrb[0].mxu0
  %v4299 = vadd.f32 %v4202, %v4298
  %v4300 = vpop.f32.mrb[0].mxu0
  %4301 = vmatprep.mubr.bf16.mxu0 0
  %4302 = vmatmul.mubr.bf16.gmra.mrb[0].mxu0 %v3235
  %v4303 = vpop.f32.mrb[0].mxu0
  %v4304 = vadd.f32 %v4207, %v4303
  %v4305 = vpop.f32.mrb[0].mxu0
  %v4306 = vpop.f32.mrb[0].mxu0
  %v4307 = vadd.f32 %v4210, %v4306
  %v4308 = vpop.f32.mrb[0].mxu0
  %4309 = vmatprep.mubr.bf16.mxu0 0
  %4310 = vmatmul.mubr.bf16.gmra.mrb[0].mxu0 %v3244
  %v4311 = vpop.f32.mrb[0].mxu0
  %v4312 = vadd.f32 %v4215, %v4311
  %v4313 = vpop.f32.mrb[0].mxu0
  %v4314 = vpop.f32.mrb[0].mxu0
  %v4315 = vadd.f32 %v4218, %v4314
  %v4316 = vpop.f32.mrb[0].mxu0
  %4317 = vmatprep.mubr.bf16.mxu0 0
  %4318 = vmatmul.mubr.bf16.gmra.mrb[0].mxu0 %v3253
  %v4319 = vpop.f32.mrb[0].mxu0
  %v4320 = vadd.f32 %v4223, %v4319
  %v4321 = vpop.f32.mrb[0].mxu0
  %v4322 = vpop.f32.mrb[0].mxu0
  %v4323 = vadd.f32 %v4226, %v4322
  %v4324 = vpop.f32.mrb[0].mxu0
  %4325 = vmatprep.mubr.bf16.mxu0 0
  %4326 = vmatmul.mubr.bf16.gmra.mrb[0].mxu0 %v3262
  %v4327 = vpop.f32.mrb[0].mxu0
  %v4328 = vadd.f32 %v4231, %v4327
  %v4329 = vpop.f32.mrb[0].mxu0
  %v4330 = vpop.f32.mrb[0].mxu0
  %v4331 = vadd.f32 %v4234, %v4330
  %v4332 = vpop.f32.mrb[0].mxu0
  %4333 = vmatprep.mubr.bf16.mxu0 0
  %4334 = vmatmul.mubr.bf16.gmra.mrb[0].mxu0 %v3271
  %v4335 = vpop.f32.mrb[0].mxu0
  %v4336 = vadd.f32 %v4239, %v4335
  %v4337 = vpop.f32.mrb[0].mxu0
  %v4338 = vpop.f32.mrb[0].mxu0
  %v4339 = vadd.f32 %v4242, %v4338
  %v4340 = vpop.f32.mrb[0].mxu0
  %4341 = vmatprep.mubr.bf16.mxu0 0
  %4342 = vmatmul.mubr.bf16.gmra.mrb[0].mxu0 %v3280
  %v4343 = vpop.f32.mrb[0].mxu0
  %v4344 = vadd.f32 %v4247, %v4343
  %v4345 = vpop.f32.mrb[0].mxu0
  %v4346 = vpop.f32.mrb[0].mxu0
  %v4347 = vadd.f32 %v4250, %v4346
  %v4348 = vpop.f32.mrb[0].mxu0
  %4349 = vmatprep.mubr.bf16.mxu0 0
  %4350 = vmatmul.mubr.bf16.gmra.mrb[0].mxu0 %v3289
  %v4351 = vpop.f32.mrb[0].mxu0
  %v4352 = vadd.f32 %v4255, %v4351
  %v4353 = vpop.f32.mrb[0].mxu0
  %v4354 = vpop.f32.mrb[0].mxu0
  %v4355 = vadd.f32 %v4258, %v4354
  %v4356 = vpop.f32.mrb[0].mxu0
  %4357 = vdwg.mxu0
  %v4358 = vtanh.pop %v4296
  %v4359 = vtanh.pop %v4299
  %v4360 = vtanh.pop %v4304
  %v4361 = vtanh.pop %v4307
  %v4362 = vtanh.pop %v4312
  %v4363 = vtanh.pop %v4315
  %v4364 = vtanh.pop %v4320
  %v4365 = vtanh.pop %v4323
  %v4366 = vtanh.pop %v4328
  %v4367 = vtanh.pop %v4331
  %v4368 = vtanh.pop %v4336
  %v4369 = vtanh.pop %v4339
  %v4370 = vtanh.pop %v4344
  %v4371 = vtanh.pop %v4347
  %v4372 = vtanh.pop %v4352
  %v4373 = vtanh.pop %v4355
  %v4374 = vadd.f32 %v4358, %v4359
  %v4375 = vadd.f32 %v4374, %v4360
  %v4376 = vadd.f32 %v4375, %v4361
  %v4377 = vadd.f32 %v4376, %v4362
  %v4378 = vadd.f32 %v4377, %v4363
  %v4379 = vadd.f32 %v4378, %v4364
  %v4380 = vadd.f32 %v4379, %v4365
  %v4381 = vadd.f32 %v4380, %v4366
  %v4382 = vadd.f32 %v4381, %v4367
  %v4383 = vadd.f32 %v4382, %v4368
  %v4384 = vadd.f32 %v4383, %v4369
  %v4385 = vadd.f32 %v4384, %v4370
  %v4386 = vadd.f32 %v4385, %v4371
  %v4387 = vadd.f32 %v4386, %v4372
  %v4388 = vadd.f32 %v4387, %v4373
  %v4389 = vrot.slane %v4388, 4
  %v4390 = vadd.f32 %v4388, %v4389
  %v4391 = vrot.slane %v4390, 2
  %v4392 = vadd.f32 %v4390, %v4391
  %v4393 = vrot.slane %v4392, 1
  %v4394 = vadd.f32 %v4392, %v4393
  %v4395 = vadd.f32 %v4394, 0.0
  %v4396 = vmul.f32 %v4358, %v4358
  %v4397 = vmul.f32 %v4359, %v4359
  %v4398 = vmul.f32 %v4360, %v4360
  %v4399 = vmul.f32 %v4361, %v4361
  %v4400 = vmul.f32 %v4362, %v4362
  %v4401 = vmul.f32 %v4363, %v4363
  %v4402 = vmul.f32 %v4364, %v4364
  %v4403 = vmul.f32 %v4365, %v4365
  %v4404 = vmul.f32 %v4366, %v4366
  %v4405 = vmul.f32 %v4367, %v4367
  %v4406 = vmul.f32 %v4368, %v4368
  %v4407 = vmul.f32 %v4369, %v4369
  %v4408 = vmul.f32 %v4370, %v4370
  %v4409 = vmul.f32 %v4371, %v4371
  %v4410 = vmul.f32 %v4372, %v4372
  %v4411 = vmul.f32 %v4373, %v4373
  %v4412 = vadd.f32 %v4396, %v4397
  %v4413 = vadd.f32 %v4412, %v4398
  %v4414 = vadd.f32 %v4413, %v4399
  %v4415 = vadd.f32 %v4414, %v4400
  %v4416 = vadd.f32 %v4415, %v4401
  %v4417 = vadd.f32 %v4416, %v4402
  %v4418 = vadd.f32 %v4417, %v4403
  %v4419 = vadd.f32 %v4418, %v4404
  %v4420 = vadd.f32 %v4419, %v4405
  %v4421 = vadd.f32 %v4420, %v4406
  %v4422 = vadd.f32 %v4421, %v4407
  %v4423 = vadd.f32 %v4422, %v4408
  %v4424 = vadd.f32 %v4423, %v4409
  %v4425 = vadd.f32 %v4424, %v4410
  %v4426 = vadd.f32 %v4425, %v4411
  %v4427 = vrot.slane %v4426, 4
  %v4428 = vadd.f32 %v4426, %v4427
  %v4429 = vrot.slane %v4428, 2
  %v4430 = vadd.f32 %v4428, %v4429
  %v4431 = vrot.slane %v4430, 1
  %v4432 = vadd.f32 %v4430, %v4431
  %v4433 = vadd.f32 %v4432, 0.0
  %v4434 = vld [vmem:[%s3089 + $0x2] sm:$0xff]
  %v4435 = vld [vmem:[%s3089 + $0x12] sm:$0xff]
  %v4436 = vld [vmem:[%s3089 + $0x22] sm:$0xff]
  %v4437 = vld [vmem:[%s3089 + $0x32] sm:$0xff]
  %v4438 = vld [vmem:[%s3089 + $0x42] sm:$0xff]
  %v4439 = vld [vmem:[%s3089 + $0x52] sm:$0xff]
  %v4440 = vld [vmem:[%s3089 + $0x62] sm:$0xff]
  %v4441 = vld [vmem:[%s3089 + $0x72] sm:$0xff]
  %v4442 = vld [vmem:[%s3089 + $0xa2] sm:$0xff]
  %v4443 = vld [vmem:[%s3089 + $0xb2] sm:$0xff]
  %v4444 = vld [vmem:[%s3089 + $0xc2] sm:$0xff]
  %v4445 = vld [vmem:[%s3089 + $0xd2] sm:$0xff]
  %v4446 = vld [vmem:[%s3089 + $0xe2] sm:$0xff]
  %v4447 = vld [vmem:[%s3089 + $0xf2] sm:$0xff]
  %v4448 = vld [vmem:[%s3089 + $0x102] sm:$0xff]
  %v4449 = vld [vmem:[%s3089 + $0x112] sm:$0xff]
  %v4450 = vld [vmem:[%s2764 + $0x2] sm:$0xff]
  %v4451 = vld [vmem:[%s2764 + $0x12] sm:$0xff]
  %v4452 = vld [vmem:[%s2764 + $0x22] sm:$0xff]
  %v4453 = vld [vmem:[%s2764 + $0x32] sm:$0xff]
  %v4454 = vld [vmem:[%s2764 + $0x42] sm:$0xff]
  %v4455 = vld [vmem:[%s2764 + $0x52] sm:$0xff]
  %v4456 = vld [vmem:[%s2764 + $0x62] sm:$0xff]
  %v4457 = vld [vmem:[%s2764 + $0x72] sm:$0xff]
  %v4458 = vld [vmem:[%s2764 + $0xa2] sm:$0xff]
  %v4459 = vld [vmem:[%s2764 + $0xb2] sm:$0xff]
  %v4460 = vld [vmem:[%s2764 + $0xc2] sm:$0xff]
  %v4461 = vld [vmem:[%s2764 + $0xd2] sm:$0xff]
  %v4462 = vld [vmem:[%s2764 + $0xe2] sm:$0xff]
  %v4463 = vld [vmem:[%s2764 + $0xf2] sm:$0xff]
  %v4464 = vld [vmem:[%s2764 + $0x102] sm:$0xff]
  %v4465 = vld [vmem:[%s2764 + $0x112] sm:$0xff]
  %v4466 = vld [vmem:[%s2958 + $0x2] sm:$0xff]
  %v4467 = vld [vmem:[%s2958 + $0x12] sm:$0xff]
  %v4468 = vld [vmem:[%s2958 + $0x22] sm:$0xff]
  %v4469 = vld [vmem:[%s2958 + $0x32] sm:$0xff]
  %v4470 = vld [vmem:[%s2958 + $0x42] sm:$0xff]
  %v4471 = vld [vmem:[%s2958 + $0x52] sm:$0xff]
  %v4472 = vld [vmem:[%s2958 + $0x62] sm:$0xff]
  %v4473 = vld [vmem:[%s2958 + $0x72] sm:$0xff]
  %v4474 = vld [vmem:[%s2958 + $0xa2] sm:$0xff]
  %v4475 = vld [vmem:[%s2958 + $0xb2] sm:$0xff]
  %v4476 = vld [vmem:[%s2958 + $0xc2] sm:$0xff]
  %v4477 = vld [vmem:[%s2958 + $0xd2] sm:$0xff]
  %v4478 = vld [vmem:[%s2958 + $0xe2] sm:$0xff]
  %v4479 = vld [vmem:[%s2958 + $0xf2] sm:$0xff]
  %v4480 = vld [vmem:[%s2958 + $0x102] sm:$0xff]
  %v4481 = vld [vmem:[%s2958 + $0x112] sm:$0xff]
  %v4482 = vpack.c.bf16 %v4435, %v4434
  %v4483 = vpack.c.bf16 %v4451, %v4450
  %v4484 = vpack.c.bf16 %v4467, %v4466
  %v4485 = vpack.c.bf16 %v4437, %v4436
  %v4486 = vpack.c.bf16 %v4453, %v4452
  %v4487 = vpack.c.bf16 %v4469, %v4468
  %v4488 = vpack.c.bf16 %v4439, %v4438
  %v4489 = vpack.c.bf16 %v4455, %v4454
  %v4490 = vpack.c.bf16 %v4471, %v4470
  %v4491 = vpack.c.bf16 %v4441, %v4440
  %v4492 = vpack.c.bf16 %v4457, %v4456
  %v4493 = vpack.c.bf16 %v4473, %v4472
  %v4494 = vpack.c.bf16 %v4443, %v4442
  %v4495 = vpack.c.bf16 %v4459, %v4458
  %v4496 = vpack.c.bf16 %v4475, %v4474
  %v4497 = vpack.c.bf16 %v4445, %v4444
  %v4498 = vpack.c.bf16 %v4461, %v4460
  %v4499 = vpack.c.bf16 %v4477, %v4476
  %v4500 = vpack.c.bf16 %v4447, %v4446
  %v4501 = vpack.c.bf16 %v4463, %v4462
  %v4502 = vpack.c.bf16 %v4479, %v4478
  %v4503 = vpack.c.bf16 %v4449, %v4448
  %v4504 = vpack.c.bf16 %v4465, %v4464
  %v4505 = vpack.c.bf16 %v4481, %v4480
  %4506 = vmatprep.subr.bf16.mxu0 0
  %4507 = vmatpush1.bf16.msra.mxu0 %v3729
  %4508 = vmatprep.subr.bf16.mxu0 0
  %4509 = vmatpush1.bf16.msra.mxu0 %v3730
  %4510 = vmatprep.subr.bf16.mxu0 0
  %4511 = vmatpush1.bf16.msra.mxu0 %v3731
  %4512 = vmatprep.subr.bf16.mxu0 0
  %4513 = vmatpush1.bf16.msra.mxu0 %v3732
  %4514 = vmatprep.subr.bf16.mxu0 0
  %4515 = vmatpush1.bf16.msra.mxu0 %v3733
  %4516 = vmatprep.subr.bf16.mxu0 0
  %4517 = vmatpush1.bf16.msra.mxu0 %v3734
  %4518 = vmatprep.subr.bf16.mxu0 0
  %4519 = vmatpush1.bf16.msra.mxu0 %v3735
  %4520 = vmatprep.subr.bf16.mxu0 0
  %4521 = vmatpush1.bf16.msra.mxu0 %v3736
  %4522 = vmatprep.subr.bf16.mxu0 0
  %4523 = vmatpush1.bf16.msra.mxu0 %v3737
  %4524 = vmatprep.subr.bf16.mxu0 0
  %4525 = vmatpush1.bf16.msra.mxu0 %v3738
  %4526 = vmatprep.subr.bf16.mxu0 0
  %4527 = vmatpush1.bf16.msra.mxu0 %v3739
  %4528 = vmatprep.subr.bf16.mxu0 0
  %4529 = vmatpush1.bf16.msra.mxu0 %v3740
  %4530 = vmatprep.subr.bf16.mxu0 0
  %4531 = vmatpush1.bf16.msra.mxu0 %v3741
  %4532 = vmatprep.subr.bf16.mxu0 0
  %4533 = vmatpush1.bf16.msra.mxu0 %v3742
  %4534 = vmatprep.subr.bf16.mxu0 0
  %4535 = vmatpush1.bf16.msra.mxu0 %v3743
  %4536 = vmatprep.subr.bf16.mxu0 0
  %4537 = vmatpush1.bf16.msra.mxu0 %v3744
  %4538 = vmatprep.mubr.bf16.mxu0 %v3220
  %4539 = vmatmul.mubr.bf16.gmra.mrb[0].mxu0 %v3219
  %v4540 = vpop.f32.mrb[0].mxu0
  %v4541 = vadd.f32 %v3439, %v4540
  %v4542 = vpop.f32.mrb[0].mxu0
  %v4543 = vpop.f32.mrb[0].mxu0
  %v4544 = vadd.f32 %v3439, %v4543
  %v4545 = vpop.f32.mrb[0].mxu0
  %4546 = vmatprep.mubr.bf16.mxu0 %v3229
  %4547 = vmatmul.mubr.bf16.gmra.mrb[0].mxu0 %v3228
  %v4548 = vpop.f32.mrb[0].mxu0
  %v4549 = vadd.f32 %v3439, %v4548
  %v4550 = vpop.f32.mrb[0].mxu0
  %v4551 = vpop.f32.mrb[0].mxu0
  %v4552 = vadd.f32 %v3439, %v4551
  %v4553 = vpop.f32.mrb[0].mxu0
  %4554 = vmatprep.mubr.bf16.mxu0 %v3238
  %4555 = vmatmul.mubr.bf16.gmra.mrb[0].mxu0 %v3237
  %v4556 = vpop.f32.mrb[0].mxu0
  %v4557 = vadd.f32 %v3439, %v4556
  %v4558 = vpop.f32.mrb[0].mxu0
  %v4559 = vpop.f32.mrb[0].mxu0
  %v4560 = vadd.f32 %v3439, %v4559
  %v4561 = vpop.f32.mrb[0].mxu0
  %4562 = vmatprep.mubr.bf16.mxu0 %v3247
  %4563 = vmatmul.mubr.bf16.gmra.mrb[0].mxu0 %v3246
  %v4564 = vpop.f32.mrb[0].mxu0
  %v4565 = vadd.f32 %v3439, %v4564
  %v4566 = vpop.f32.mrb[0].mxu0
  %v4567 = vpop.f32.mrb[0].mxu0
  %v4568 = vadd.f32 %v3439, %v4567
  %v4569 = vpop.f32.mrb[0].mxu0
  %4570 = vmatprep.mubr.bf16.mxu0 %v3256
  %4571 = vmatmul.mubr.bf16.gmra.mrb[0].mxu0 %v3255
  %v4572 = vpop.f32.mrb[0].mxu0
  %v4573 = vadd.f32 %v3439, %v4572
  %v4574 = vpop.f32.mrb[0].mxu0
  %v4575 = vpop.f32.mrb[0].mxu0
  %v4576 = vadd.f32 %v3439, %v4575
  %v4577 = vpop.f32.mrb[0].mxu0
  %4578 = vmatprep.mubr.bf16.mxu0 %v3265
  %4579 = vmatmul.mubr.bf16.gmra.mrb[0].mxu0 %v3264
  %v4580 = vpop.f32.mrb[0].mxu0
  %v4581 = vadd.f32 %v3439, %v4580
  %v4582 = vpop.f32.mrb[0].mxu0
  %v4583 = vpop.f32.mrb[0].mxu0
  %v4584 = vadd.f32 %v3439, %v4583
  %v4585 = vpop.f32.mrb[0].mxu0
  %4586 = vmatprep.mubr.bf16.mxu0 %v3274
  %4587 = vmatmul.mubr.bf16.gmra.mrb[0].mxu0 %v3273
  %v4588 = vpop.f32.mrb[0].mxu0
  %v4589 = vadd.f32 %v3439, %v4588
  %v4590 = vpop.f32.mrb[0].mxu0
  %v4591 = vpop.f32.mrb[0].mxu0
  %v4592 = vadd.f32 %v3439, %v4591
  %v4593 = vpop.f32.mrb[0].mxu0
  %4594 = vmatprep.mubr.bf16.mxu0 %v3283
  %4595 = vmatmul.mubr.bf16.gmra.mrb[0].mxu0 %v3282
  %v4596 = vpop.f32.mrb[0].mxu0
  %v4597 = vadd.f32 %v3439, %v4596
  %v4598 = vpop.f32.mrb[0].mxu0
  %v4599 = vpop.f32.mrb[0].mxu0
  %v4600 = vadd.f32 %v3439, %v4599
  %v4601 = vpop.f32.mrb[0].mxu0
  %4602 = vdwg.mxu0
  %4603 = vmatprep.subr.bf16.mxu0 0
  %4604 = vmatpush1.bf16.msra.mxu0 %v3745
  %4605 = vmatprep.subr.bf16.mxu0 0
  %4606 = vmatpush1.bf16.msra.mxu0 %v3746
  %4607 = vmatprep.subr.bf16.mxu0 0
  %4608 = vmatpush1.bf16.msra.mxu0 %v3747
  %4609 = vmatprep.subr.bf16.mxu0 0
  %4610 = vmatpush1.bf16.msra.mxu0 %v3748
  %4611 = vmatprep.subr.bf16.mxu0 0
  %4612 = vmatpush1.bf16.msra.mxu0 %v3749
  %4613 = vmatprep.subr.bf16.mxu0 0
  %4614 = vmatpush1.bf16.msra.mxu0 %v3750
  %4615 = vmatprep.subr.bf16.mxu0 0
  %4616 = vmatpush1.bf16.msra.mxu0 %v3751
  %4617 = vmatprep.subr.bf16.mxu0 0
  %4618 = vmatpush1.bf16.msra.mxu0 %v3752
  %4619 = vmatprep.subr.bf16.mxu0 0
  %4620 = vmatpush1.bf16.msra.mxu0 %v3753
  %4621 = vmatprep.subr.bf16.mxu0 0
  %4622 = vmatpush1.bf16.msra.mxu0 %v3754
  %4623 = vmatprep.subr.bf16.mxu0 0
  %4624 = vmatpush1.bf16.msra.mxu0 %v3755
  %4625 = vmatprep.subr.bf16.mxu0 0
  %4626 = vmatpush1.bf16.msra.mxu0 %v3756
  %4627 = vmatprep.subr.bf16.mxu0 0
  %4628 = vmatpush1.bf16.msra.mxu0 %v3757
  %4629 = vmatprep.subr.bf16.mxu0 0
  %4630 = vmatpush1.bf16.msra.mxu0 %v3758
  %4631 = vmatprep.subr.bf16.mxu0 0
  %4632 = vmatpush1.bf16.msra.mxu0 %v3759
  %4633 = vmatprep.subr.bf16.mxu0 0
  %4634 = vmatpush1.bf16.msra.mxu0 %v3760
  %4635 = vmatprep.mubr.bf16.mxu0 %v3222
  %4636 = vmatmul.mubr.bf16.gmra.mrb[0].mxu0 %v4482
  %v4637 = vpop.f32.mrb[0].mxu0
  %v4638 = vadd.f32 %v4541, %v4637
  %v4639 = vpop.f32.mrb[0].mxu0
  %v4640 = vpop.f32.mrb[0].mxu0
  %v4641 = vadd.f32 %v4544, %v4640
  %v4642 = vpop.f32.mrb[0].mxu0
  %4643 = vmatprep.mubr.bf16.mxu0 %v3231
  %4644 = vmatmul.mubr.bf16.gmra.mrb[0].mxu0 %v4485
  %v4645 = vpop.f32.mrb[0].mxu0
  %v4646 = vadd.f32 %v4549, %v4645
  %v4647 = vpop.f32.mrb[0].mxu0
  %v4648 = vpop.f32.mrb[0].mxu0
  %v4649 = vadd.f32 %v4552, %v4648
  %v4650 = vpop.f32.mrb[0].mxu0
  %4651 = vmatprep.mubr.bf16.mxu0 %v3240
  %4652 = vmatmul.mubr.bf16.gmra.mrb[0].mxu0 %v4488
  %v4653 = vpop.f32.mrb[0].mxu0
  %v4654 = vadd.f32 %v4557, %v4653
  %v4655 = vpop.f32.mrb[0].mxu0
  %v4656 = vpop.f32.mrb[0].mxu0
  %v4657 = vadd.f32 %v4560, %v4656
  %v4658 = vpop.f32.mrb[0].mxu0
  %4659 = vmatprep.mubr.bf16.mxu0 %v3249
  %4660 = vmatmul.mubr.bf16.gmra.mrb[0].mxu0 %v4491
  %v4661 = vpop.f32.mrb[0].mxu0
  %v4662 = vadd.f32 %v4565, %v4661
  %v4663 = vpop.f32.mrb[0].mxu0
  %v4664 = vpop.f32.mrb[0].mxu0
  %v4665 = vadd.f32 %v4568, %v4664
  %v4666 = vpop.f32.mrb[0].mxu0
  %4667 = vmatprep.mubr.bf16.mxu0 %v3258
  %4668 = vmatmul.mubr.bf16.gmra.mrb[0].mxu0 %v4494
  %v4669 = vpop.f32.mrb[0].mxu0
  %v4670 = vadd.f32 %v4573, %v4669
  %v4671 = vpop.f32.mrb[0].mxu0
  %v4672 = vpop.f32.mrb[0].mxu0
  %v4673 = vadd.f32 %v4576, %v4672
  %v4674 = vpop.f32.mrb[0].mxu0
  %4675 = vmatprep.mubr.bf16.mxu0 %v3267
  %4676 = vmatmul.mubr.bf16.gmra.mrb[0].mxu0 %v4497
  %v4677 = vpop.f32.mrb[0].mxu0
  %v4678 = vadd.f32 %v4581, %v4677
  %v4679 = vpop.f32.mrb[0].mxu0
  %v4680 = vpop.f32.mrb[0].mxu0
  %v4681 = vadd.f32 %v4584, %v4680
  %v4682 = vpop.f32.mrb[0].mxu0
  %4683 = vmatprep.mubr.bf16.mxu0 %v3276
  %4684 = vmatmul.mubr.bf16.gmra.mrb[0].mxu0 %v4500
  %v4685 = vpop.f32.mrb[0].mxu0
  %v4686 = vadd.f32 %v4589, %v4685
  %v4687 = vpop.f32.mrb[0].mxu0
  %v4688 = vpop.f32.mrb[0].mxu0
  %v4689 = vadd.f32 %v4592, %v4688
  %v4690 = vpop.f32.mrb[0].mxu0
  %4691 = vmatprep.mubr.bf16.mxu0 %v3285
  %4692 = vmatmul.mubr.bf16.gmra.mrb[0].mxu0 %v4503
  %v4693 = vpop.f32.mrb[0].mxu0
  %v4694 = vadd.f32 %v4597, %v4693
  %v4695 = vpop.f32.mrb[0].mxu0
  %v4696 = vpop.f32.mrb[0].mxu0
  %v4697 = vadd.f32 %v4600, %v4696
  %v4698 = vpop.f32.mrb[0].mxu0
  %4699 = vdwg.mxu0
  %4700 = vmatprep.subr.bf16.mxu0 0
  %4701 = vmatpush1.bf16.msra.mxu0 %v3761
  %4702 = vmatprep.subr.bf16.mxu0 0
  %4703 = vmatpush1.bf16.msra.mxu0 %v3762
  %4704 = vmatprep.subr.bf16.mxu0 0
  %4705 = vmatpush1.bf16.msra.mxu0 %v3763
  %4706 = vmatprep.subr.bf16.mxu0 0
  %4707 = vmatpush1.bf16.msra.mxu0 %v3764
  %4708 = vmatprep.subr.bf16.mxu0 0
  %4709 = vmatpush1.bf16.msra.mxu0 %v3765
  %4710 = vmatprep.subr.bf16.mxu0 0
  %4711 = vmatpush1.bf16.msra.mxu0 %v3766
  %4712 = vmatprep.subr.bf16.mxu0 0
  %4713 = vmatpush1.bf16.msra.mxu0 %v3767
  %4714 = vmatprep.subr.bf16.mxu0 0
  %4715 = vmatpush1.bf16.msra.mxu0 %v3768
  %4716 = vmatprep.subr.bf16.mxu0 0
  %4717 = vmatpush1.bf16.msra.mxu0 %v3769
  %4718 = vmatprep.subr.bf16.mxu0 0
  %4719 = vmatpush1.bf16.msra.mxu0 %v3770
  %4720 = vmatprep.subr.bf16.mxu0 0
  %4721 = vmatpush1.bf16.msra.mxu0 %v3771
  %4722 = vmatprep.subr.bf16.mxu0 0
  %4723 = vmatpush1.bf16.msra.mxu0 %v3772
  %4724 = vmatprep.subr.bf16.mxu0 0
  %4725 = vmatpush1.bf16.msra.mxu0 %v3773
  %4726 = vmatprep.subr.bf16.mxu0 0
  %4727 = vmatpush1.bf16.msra.mxu0 %v3774
  %4728 = vmatprep.subr.bf16.mxu0 0
  %4729 = vmatpush1.bf16.msra.mxu0 %v3775
  %4730 = vmatprep.subr.bf16.mxu0 0
  %4731 = vmatpush1.bf16.msra.mxu0 %v3776
  %4732 = vmatprep.mubr.bf16.mxu0 %v4483
  %4733 = vmatmul.mubr.bf16.gmra.mrb[0].mxu0 %v3223
  %v4734 = vpop.f32.mrb[0].mxu0
  %v4735 = vadd.f32 %v4638, %v4734
  %v4736 = vpop.f32.mrb[0].mxu0
  %v4737 = vpop.f32.mrb[0].mxu0
  %v4738 = vadd.f32 %v4641, %v4737
  %v4739 = vpop.f32.mrb[0].mxu0
  %4740 = vmatprep.mubr.bf16.mxu0 %v4486
  %4741 = vmatmul.mubr.bf16.gmra.mrb[0].mxu0 %v3232
  %v4742 = vpop.f32.mrb[0].mxu0
  %v4743 = vadd.f32 %v4646, %v4742
  %v4744 = vpop.f32.mrb[0].mxu0
  %v4745 = vpop.f32.mrb[0].mxu0
  %v4746 = vadd.f32 %v4649, %v4745
  %v4747 = vpop.f32.mrb[0].mxu0
  %4748 = vmatprep.mubr.bf16.mxu0 %v4489
  %4749 = vmatmul.mubr.bf16.gmra.mrb[0].mxu0 %v3241
  %v4750 = vpop.f32.mrb[0].mxu0
  %v4751 = vadd.f32 %v4654, %v4750
  %v4752 = vpop.f32.mrb[0].mxu0
  %v4753 = vpop.f32.mrb[0].mxu0
  %v4754 = vadd.f32 %v4657, %v4753
  %v4755 = vpop.f32.mrb[0].mxu0
  %4756 = vmatprep.mubr.bf16.mxu0 %v4492
  %4757 = vmatmul.mubr.bf16.gmra.mrb[0].mxu0 %v3250
  %v4758 = vpop.f32.mrb[0].mxu0
  %v4759 = vadd.f32 %v4662, %v4758
  %v4760 = vpop.f32.mrb[0].mxu0
  %v4761 = vpop.f32.mrb[0].mxu0
  %v4762 = vadd.f32 %v4665, %v4761
  %v4763 = vpop.f32.mrb[0].mxu0
  %4764 = vmatprep.mubr.bf16.mxu0 %v4495
  %4765 = vmatmul.mubr.bf16.gmra.mrb[0].mxu0 %v3259
  %v4766 = vpop.f32.mrb[0].mxu0
  %v4767 = vadd.f32 %v4670, %v4766
  %v4768 = vpop.f32.mrb[0].mxu0
  %v4769 = vpop.f32.mrb[0].mxu0
  %v4770 = vadd.f32 %v4673, %v4769
  %v4771 = vpop.f32.mrb[0].mxu0
  %4772 = vmatprep.mubr.bf16.mxu0 %v4498
  %4773 = vmatmul.mubr.bf16.gmra.mrb[0].mxu0 %v3268
  %v4774 = vpop.f32.mrb[0].mxu0
  %v4775 = vadd.f32 %v4678, %v4774
  %v4776 = vpop.f32.mrb[0].mxu0
  %v4777 = vpop.f32.mrb[0].mxu0
  %v4778 = vadd.f32 %v4681, %v4777
  %v4779 = vpop.f32.mrb[0].mxu0
  %4780 = vmatprep.mubr.bf16.mxu0 %v4501
  %4781 = vmatmul.mubr.bf16.gmra.mrb[0].mxu0 %v3277
  %v4782 = vpop.f32.mrb[0].mxu0
  %v4783 = vadd.f32 %v4686, %v4782
  %v4784 = vpop.f32.mrb[0].mxu0
  %v4785 = vpop.f32.mrb[0].mxu0
  %v4786 = vadd.f32 %v4689, %v4785
  %v4787 = vpop.f32.mrb[0].mxu0
  %4788 = vmatprep.mubr.bf16.mxu0 %v4504
  %4789 = vmatmul.mubr.bf16.gmra.mrb[0].mxu0 %v3286
  %v4790 = vpop.f32.mrb[0].mxu0
  %v4791 = vadd.f32 %v4694, %v4790
  %v4792 = vpop.f32.mrb[0].mxu0
  %v4793 = vpop.f32.mrb[0].mxu0
  %v4794 = vadd.f32 %v4697, %v4793
  %v4795 = vpop.f32.mrb[0].mxu0
  %4796 = vdwg.mxu0
  %4797 = vmatprep.subr.bf16.mxu0 0
  %4798 = vmatpush1.bf16.msra.mxu0 %v3777
  %4799 = vmatprep.subr.bf16.mxu0 0
  %4800 = vmatpush1.bf16.msra.mxu0 %v3778
  %4801 = vmatprep.subr.bf16.mxu0 0
  %4802 = vmatpush1.bf16.msra.mxu0 %v3779
  %4803 = vmatprep.subr.bf16.mxu0 0
  %4804 = vmatpush1.bf16.msra.mxu0 %v3780
  %4805 = vmatprep.subr.bf16.mxu0 0
  %4806 = vmatpush1.bf16.msra.mxu0 %v3781
  %4807 = vmatprep.subr.bf16.mxu0 0
  %4808 = vmatpush1.bf16.msra.mxu0 %v3782
  %4809 = vmatprep.subr.bf16.mxu0 0
  %4810 = vmatpush1.bf16.msra.mxu0 %v3783
  %4811 = vmatprep.subr.bf16.mxu0 0
  %4812 = vmatpush1.bf16.msra.mxu0 %v3784
  %4813 = vmatprep.subr.bf16.mxu0 0
  %4814 = vmatpush1.bf16.msra.mxu0 %v3785
  %4815 = vmatprep.subr.bf16.mxu0 0
  %4816 = vmatpush1.bf16.msra.mxu0 %v3786
  %4817 = vmatprep.subr.bf16.mxu0 0
  %4818 = vmatpush1.bf16.msra.mxu0 %v3787
  %4819 = vmatprep.subr.bf16.mxu0 0
  %4820 = vmatpush1.bf16.msra.mxu0 %v3788
  %4821 = vmatprep.subr.bf16.mxu0 0
  %4822 = vmatpush1.bf16.msra.mxu0 %v3789
  %4823 = vmatprep.subr.bf16.mxu0 0
  %4824 = vmatpush1.bf16.msra.mxu0 %v3790
  %4825 = vmatprep.subr.bf16.mxu0 0
  %4826 = vmatpush1.bf16.msra.mxu0 %v3791
  %4827 = vmatprep.subr.bf16.mxu0 0
  %4828 = vmatpush1.bf16.msra.mxu0 %v3792
  %4829 = vmatprep.mubr.bf16.mxu0 %v3226
  %4830 = vmatmul.mubr.bf16.gmra.mrb[0].mxu0 %v3225
  %v4831 = vpop.f32.mrb[0].mxu0
  %v4832 = vadd.f32 %v4735, %v4831
  %v4833 = vpop.f32.mrb[0].mxu0
  %v4834 = vpop.f32.mrb[0].mxu0
  %v4835 = vadd.f32 %v4738, %v4834
  %v4836 = vpop.f32.mrb[0].mxu0
  %4837 = vmatprep.mubr.bf16.mxu0 %v3235
  %4838 = vmatmul.mubr.bf16.gmra.mrb[0].mxu0 %v3234
  %v4839 = vpop.f32.mrb[0].mxu0
  %v4840 = vadd.f32 %v4743, %v4839
  %v4841 = vpop.f32.mrb[0].mxu0
  %v4842 = vpop.f32.mrb[0].mxu0
  %v4843 = vadd.f32 %v4746, %v4842
  %v4844 = vpop.f32.mrb[0].mxu0
  %4845 = vmatprep.mubr.bf16.mxu0 %v3244
  %4846 = vmatmul.mubr.bf16.gmra.mrb[0].mxu0 %v3243
  %v4847 = vpop.f32.mrb[0].mxu0
  %v4848 = vadd.f32 %v4751, %v4847
  %v4849 = vpop.f32.mrb[0].mxu0
  %v4850 = vpop.f32.mrb[0].mxu0
  %v4851 = vadd.f32 %v4754, %v4850
  %v4852 = vpop.f32.mrb[0].mxu0
  %4853 = vmatprep.mubr.bf16.mxu0 %v3253
  %4854 = vmatmul.mubr.bf16.gmra.mrb[0].mxu0 %v3252
  %v4855 = vpop.f32.mrb[0].mxu0
  %v4856 = vadd.f32 %v4759, %v4855
  %v4857 = vpop.f32.mrb[0].mxu0
  %v4858 = vpop.f32.mrb[0].mxu0
  %v4859 = vadd.f32 %v4762, %v4858
  %v4860 = vpop.f32.mrb[0].mxu0
  %4861 = vmatprep.mubr.bf16.mxu0 %v3262
  %4862 = vmatmul.mubr.bf16.gmra.mrb[0].mxu0 %v3261
  %v4863 = vpop.f32.mrb[0].mxu0
  %v4864 = vadd.f32 %v4767, %v4863
  %v4865 = vpop.f32.mrb[0].mxu0
  %v4866 = vpop.f32.mrb[0].mxu0
  %v4867 = vadd.f32 %v4770, %v4866
  %v4868 = vpop.f32.mrb[0].mxu0
  %4869 = vmatprep.mubr.bf16.mxu0 %v3271
  %4870 = vmatmul.mubr.bf16.gmra.mrb[0].mxu0 %v3270
  %v4871 = vpop.f32.mrb[0].mxu0
  %v4872 = vadd.f32 %v4775, %v4871
  %v4873 = vpop.f32.mrb[0].mxu0
  %v4874 = vpop.f32.mrb[0].mxu0
  %v4875 = vadd.f32 %v4778, %v4874
  %v4876 = vpop.f32.mrb[0].mxu0
  %4877 = vmatprep.mubr.bf16.mxu0 %v3280
  %4878 = vmatmul.mubr.bf16.gmra.mrb[0].mxu0 %v3279
  %v4879 = vpop.f32.mrb[0].mxu0
  %v4880 = vadd.f32 %v4783, %v4879
  %v4881 = vpop.f32.mrb[0].mxu0
  %v4882 = vpop.f32.mrb[0].mxu0
  %v4883 = vadd.f32 %v4786, %v4882
  %v4884 = vpop.f32.mrb[0].mxu0
  %4885 = vmatprep.mubr.bf16.mxu0 %v3289
  %4886 = vmatmul.mubr.bf16.gmra.mrb[0].mxu0 %v3288
  %v4887 = vpop.f32.mrb[0].mxu0
  %v4888 = vadd.f32 %v4791, %v4887
  %v4889 = vpop.f32.mrb[0].mxu0
  %v4890 = vpop.f32.mrb[0].mxu0
  %v4891 = vadd.f32 %v4794, %v4890
  %v4892 = vpop.f32.mrb[0].mxu0
  %4893 = vdwg.mxu0
  %4894 = vmatprep.subr.bf16.mxu0 0
  %4895 = vmatpush1.bf16.msra.mxu0 %v3793
  %4896 = vmatprep.subr.bf16.mxu0 0
  %4897 = vmatpush1.bf16.msra.mxu0 %v3794
  %4898 = vmatprep.subr.bf16.mxu0 0
  %4899 = vmatpush1.bf16.msra.mxu0 %v3795
  %4900 = vmatprep.subr.bf16.mxu0 0
  %4901 = vmatpush1.bf16.msra.mxu0 %v3796
  %4902 = vmatprep.subr.bf16.mxu0 0
  %4903 = vmatpush1.bf16.msra.mxu0 %v3797
  %4904 = vmatprep.subr.bf16.mxu0 0
  %4905 = vmatpush1.bf16.msra.mxu0 %v3798
  %4906 = vmatprep.subr.bf16.mxu0 0
  %4907 = vmatpush1.bf16.msra.mxu0 %v3799
  %4908 = vmatprep.subr.bf16.mxu0 0
  %4909 = vmatpush1.bf16.msra.mxu0 %v3800
  %4910 = vmatprep.subr.bf16.mxu0 0
  %4911 = vmatpush1.bf16.msra.mxu0 0
  %4912 = vmatprep.subr.bf16.mxu0 0
  %4913 = vmatpush1.bf16.msra.mxu0 0
  %4914 = vmatprep.subr.bf16.mxu0 0
  %4915 = vmatpush1.bf16.msra.mxu0 0
  %4916 = vmatprep.subr.bf16.mxu0 0
  %4917 = vmatpush1.bf16.msra.mxu0 0
  %4918 = vmatprep.subr.bf16.mxu0 0
  %4919 = vmatpush1.bf16.msra.mxu0 0
  %4920 = vmatprep.subr.bf16.mxu0 0
  %4921 = vmatpush1.bf16.msra.mxu0 0
  %4922 = vmatprep.subr.bf16.mxu0 0
  %4923 = vmatpush1.bf16.msra.mxu0 0
  %4924 = vmatprep.subr.bf16.mxu0 0
  %4925 = vmatpush1.bf16.msra.mxu0 0
  %4926 = vmatprep.mubr.bf16.mxu0 0
  %4927 = vmatmul.mubr.bf16.gmra.mrb[0].mxu0 %v4484
  %v4928 = vpop.f32.mrb[0].mxu0
  %v4929 = vadd.f32 %v4832, %v4928
  %v4930 = vpop.f32.mrb[0].mxu0
  %v4931 = vpop.f32.mrb[0].mxu0
  %v4932 = vadd.f32 %v4835, %v4931
  %v4933 = vpop.f32.mrb[0].mxu0
  %4934 = vmatprep.mubr.bf16.mxu0 0
  %4935 = vmatmul.mubr.bf16.gmra.mrb[0].mxu0 %v4487
  %v4936 = vpop.f32.mrb[0].mxu0
  %v4937 = vadd.f32 %v4840, %v4936
  %v4938 = vpop.f32.mrb[0].mxu0
  %v4939 = vpop.f32.mrb[0].mxu0
  %v4940 = vadd.f32 %v4843, %v4939
  %v4941 = vpop.f32.mrb[0].mxu0
  %4942 = vmatprep.mubr.bf16.mxu0 0
  %4943 = vmatmul.mubr.bf16.gmra.mrb[0].mxu0 %v4490
  %v4944 = vpop.f32.mrb[0].mxu0
  %v4945 = vadd.f32 %v4848, %v4944
  %v4946 = vpop.f32.mrb[0].mxu0
  %v4947 = vpop.f32.mrb[0].mxu0
  %v4948 = vadd.f32 %v4851, %v4947
  %v4949 = vpop.f32.mrb[0].mxu0
  %4950 = vmatprep.mubr.bf16.mxu0 0
  %4951 = vmatmul.mubr.bf16.gmra.mrb[0].mxu0 %v4493
  %v4952 = vpop.f32.mrb[0].mxu0
  %v4953 = vadd.f32 %v4856, %v4952
  %v4954 = vpop.f32.mrb[0].mxu0
  %v4955 = vpop.f32.mrb[0].mxu0
  %v4956 = vadd.f32 %v4859, %v4955
  %v4957 = vpop.f32.mrb[0].mxu0
  %4958 = vmatprep.mubr.bf16.mxu0 0
  %4959 = vmatmul.mubr.bf16.gmra.mrb[0].mxu0 %v4496
  %v4960 = vpop.f32.mrb[0].mxu0
  %v4961 = vadd.f32 %v4864, %v4960
  %v4962 = vpop.f32.mrb[0].mxu0
  %v4963 = vpop.f32.mrb[0].mxu0
  %v4964 = vadd.f32 %v4867, %v4963
  %v4965 = vpop.f32.mrb[0].mxu0
  %4966 = vmatprep.mubr.bf16.mxu0 0
  %4967 = vmatmul.mubr.bf16.gmra.mrb[0].mxu0 %v4499
  %v4968 = vpop.f32.mrb[0].mxu0
  %v4969 = vadd.f32 %v4872, %v4968
  %v4970 = vpop.f32.mrb[0].mxu0
  %v4971 = vpop.f32.mrb[0].mxu0
  %v4972 = vadd.f32 %v4875, %v4971
  %v4973 = vpop.f32.mrb[0].mxu0
  %4974 = vmatprep.mubr.bf16.mxu0 0
  %4975 = vmatmul.mubr.bf16.gmra.mrb[0].mxu0 %v4502
  %v4976 = vpop.f32.mrb[0].mxu0
  %v4977 = vadd.f32 %v4880, %v4976
  %v4978 = vpop.f32.mrb[0].mxu0
  %v4979 = vpop.f32.mrb[0].mxu0
  %v4980 = vadd.f32 %v4883, %v4979
  %v4981 = vpop.f32.mrb[0].mxu0
  %4982 = vmatprep.mubr.bf16.mxu0 0
  %4983 = vmatmul.mubr.bf16.gmra.mrb[0].mxu0 %v4505
  %v4984 = vpop.f32.mrb[0].mxu0
  %v4985 = vadd.f32 %v4888, %v4984
  %v4986 = vpop.f32.mrb[0].mxu0
  %v4987 = vpop.f32.mrb[0].mxu0
  %v4988 = vadd.f32 %v4891, %v4987
  %v4989 = vpop.f32.mrb[0].mxu0
  %4990 = vdwg.mxu0
  %v4991 = vtanh.pop %v4929
  %v4992 = vtanh.pop %v4932
  %v4993 = vtanh.pop %v4937
  %v4994 = vtanh.pop %v4940
  %v4995 = vtanh.pop %v4945
  %v4996 = vtanh.pop %v4948
  %v4997 = vtanh.pop %v4953
  %v4998 = vtanh.pop %v4956
  %v4999 = vtanh.pop %v4961
  %v5000 = vtanh.pop %v4964
  %v5001 = vtanh.pop %v4969
  %v5002 = vtanh.pop %v4972
  %v5003 = vtanh.pop %v4977
  %v5004 = vtanh.pop %v4980
  %v5005 = vtanh.pop %v4985
  %v5006 = vtanh.pop %v4988
  %v5007 = vadd.f32 %v4991, %v4992
  %v5008 = vadd.f32 %v5007, %v4993
  %v5009 = vadd.f32 %v5008, %v4994
  %v5010 = vadd.f32 %v5009, %v4995
  %v5011 = vadd.f32 %v5010, %v4996
  %v5012 = vadd.f32 %v5011, %v4997
  %v5013 = vadd.f32 %v5012, %v4998
  %v5014 = vadd.f32 %v5013, %v4999
  %v5015 = vadd.f32 %v5014, %v5000
  %v5016 = vadd.f32 %v5015, %v5001
  %v5017 = vadd.f32 %v5016, %v5002
  %v5018 = vadd.f32 %v5017, %v5003
  %v5019 = vadd.f32 %v5018, %v5004
  %v5020 = vadd.f32 %v5019, %v5005
  %v5021 = vadd.f32 %v5020, %v5006
  %v5022 = vrot.slane %v5021, 4
  %v5023 = vadd.f32 %v5021, %v5022
  %v5024 = vrot.slane %v5023, 2
  %v5025 = vadd.f32 %v5023, %v5024
  %v5026 = vrot.slane %v5025, 1
  %v5027 = vadd.f32 %v5025, %v5026
  %v5028 = vadd.f32 %v4395, %v5027
  %v5029 = vmul.f32 %v4991, %v4991
  %v5030 = vmul.f32 %v4992, %v4992
  %v5031 = vmul.f32 %v4993, %v4993
  %v5032 = vmul.f32 %v4994, %v4994
  %v5033 = vmul.f32 %v4995, %v4995
  %v5034 = vmul.f32 %v4996, %v4996
  %v5035 = vmul.f32 %v4997, %v4997
  %v5036 = vmul.f32 %v4998, %v4998
  %v5037 = vmul.f32 %v4999, %v4999
  %v5038 = vmul.f32 %v5000, %v5000
  %v5039 = vmul.f32 %v5001, %v5001
  %v5040 = vmul.f32 %v5002, %v5002
  %v5041 = vmul.f32 %v5003, %v5003
  %v5042 = vmul.f32 %v5004, %v5004
  %v5043 = vmul.f32 %v5005, %v5005
  %v5044 = vmul.f32 %v5006, %v5006
  %v5045 = vadd.f32 %v5029, %v5030
  %v5046 = vadd.f32 %v5045, %v5031
  %v5047 = vadd.f32 %v5046, %v5032
  %v5048 = vadd.f32 %v5047, %v5033
  %v5049 = vadd.f32 %v5048, %v5034
  %v5050 = vadd.f32 %v5049, %v5035
  %v5051 = vadd.f32 %v5050, %v5036
  %v5052 = vadd.f32 %v5051, %v5037
  %v5053 = vadd.f32 %v5052, %v5038
  %v5054 = vadd.f32 %v5053, %v5039
  %v5055 = vadd.f32 %v5054, %v5040
  %v5056 = vadd.f32 %v5055, %v5041
  %v5057 = vadd.f32 %v5056, %v5042
  %v5058 = vadd.f32 %v5057, %v5043
  %v5059 = vadd.f32 %v5058, %v5044
  %v5060 = vrot.slane %v5059, 4
  %v5061 = vadd.f32 %v5059, %v5060
  %v5062 = vrot.slane %v5061, 2
  %v5063 = vadd.f32 %v5061, %v5062
  %v5064 = vrot.slane %v5063, 1
  %v5065 = vadd.f32 %v5063, %v5064
  %v5066 = vadd.f32 %v4433, %v5065
  %s5067 = scalar_lea.vmem [#allocation2], 352
  %v5068 = vld [vmem:[%s5067] sm:$0xff]
  %v5069 = vld [vmem:[%s5067 + $0x10] sm:$0xff]
  %v5070 = vld [vmem:[%s5067 + $0x20] sm:$0xff]
  %v5071 = vld [vmem:[%s5067 + $0x30] sm:$0xff]
  %v5072 = vld [vmem:[%s5067 + $0x40] sm:$0xff]
  %v5073 = vld [vmem:[%s5067 + $0x50] sm:$0xff]
  %v5074 = vld [vmem:[%s5067 + $0x60] sm:$0xff]
  %v5075 = vld [vmem:[%s5067 + $0x70] sm:$0xff]
  %v5076 = vld [vmem:[%s5067 + $0xa0] sm:$0xff]
  %v5077 = vld [vmem:[%s5067 + $0xb0] sm:$0xff]
  %v5078 = vld [vmem:[%s5067 + $0xc0] sm:$0xff]
  %v5079 = vld [vmem:[%s5067 + $0xd0] sm:$0xff]
  %v5080 = vld [vmem:[%s5067 + $0xe0] sm:$0xff]
  %v5081 = vld [vmem:[%s5067 + $0xf0] sm:$0xff]
  %v5082 = vld [vmem:[%s5067 + $0x100] sm:$0xff]
  %v5083 = vld [vmem:[%s5067 + $0x110] sm:$0xff]
  %s5084 = scalar_lea.vmem [#allocation2], 32
  %v5085 = vld [vmem:[%s5084 + $0x1] sm:$0xff]
  %v5086 = vld [vmem:[%s5084 + $0x11] sm:$0xff]
  %v5087 = vld [vmem:[%s5084 + $0x21] sm:$0xff]
  %v5088 = vld [vmem:[%s5084 + $0x31] sm:$0xff]
  %v5089 = vld [vmem:[%s5084 + $0x41] sm:$0xff]
  %v5090 = vld [vmem:[%s5084 + $0x51] sm:$0xff]
  %v5091 = vld [vmem:[%s5084 + $0x61] sm:$0xff]
  %v5092 = vld [vmem:[%s5084 + $0x71] sm:$0xff]
  %v5093 = vld [vmem:[%s5084 + $0xa1] sm:$0xff]
  %v5094 = vld [vmem:[%s5084 + $0xb1] sm:$0xff]
  %v5095 = vld [vmem:[%s5084 + $0xc1] sm:$0xff]
  %v5096 = vld [vmem:[%s5084 + $0xd1] sm:$0xff]
  %v5097 = vld [vmem:[%s5084 + $0xe1] sm:$0xff]
  %v5098 = vld [vmem:[%s5084 + $0xf1] sm:$0xff]
  %v5099 = vld [vmem:[%s5084 + $0x101] sm:$0xff]
  %v5100 = vld [vmem:[%s5084 + $0x111] sm:$0xff]
  %v5101 = vld [vmem:[%s5067 + $0x1] sm:$0xff]
  %v5102 = vld [vmem:[%s5067 + $0x11] sm:$0xff]
  %v5103 = vld [vmem:[%s5067 + $0x21] sm:$0xff]
  %v5104 = vld [vmem:[%s5067 + $0x31] sm:$0xff]
  %v5105 = vld [vmem:[%s5067 + $0x41] sm:$0xff]
  %v5106 = vld [vmem:[%s5067 + $0x51] sm:$0xff]
  %v5107 = vld [vmem:[%s5067 + $0x61] sm:$0xff]
  %v5108 = vld [vmem:[%s5067 + $0x71] sm:$0xff]
  %v5109 = vld [vmem:[%s5067 + $0xa1] sm:$0xff]
  %v5110 = vld [vmem:[%s5067 + $0xb1] sm:$0xff]
  %v5111 = vld [vmem:[%s5067 + $0xc1] sm:$0xff]
  %v5112 = vld [vmem:[%s5067 + $0xd1] sm:$0xff]
  %v5113 = vld [vmem:[%s5067 + $0xe1] sm:$0xff]
  %v5114 = vld [vmem:[%s5067 + $0xf1] sm:$0xff]
  %v5115 = vld [vmem:[%s5067 + $0x101] sm:$0xff]
  %v5116 = vld [vmem:[%s5067 + $0x111] sm:$0xff]
  %v5117 = vpack.c.bf16 %v5069, %v5068
  %v5118 = vpack.c.bf16 %v5086, %v5085
  %v5119 = vpack.c.bf16 %v5102, %v5101
  %v5120 = vpack.c.bf16 %v5071, %v5070
  %v5121 = vpack.c.bf16 %v5088, %v5087
  %v5122 = vpack.c.bf16 %v5104, %v5103
  %v5123 = vpack.c.bf16 %v5073, %v5072
  %v5124 = vpack.c.bf16 %v5090, %v5089
  %v5125 = vpack.c.bf16 %v5106, %v5105
  %v5126 = vpack.c.bf16 %v5075, %v5074
  %v5127 = vpack.c.bf16 %v5092, %v5091
  %v5128 = vpack.c.bf16 %v5108, %v5107
  %v5129 = vpack.c.bf16 %v5077, %v5076
  %v5130 = vpack.c.bf16 %v5094, %v5093
  %v5131 = vpack.c.bf16 %v5110, %v5109
  %v5132 = vpack.c.bf16 %v5079, %v5078
  %v5133 = vpack.c.bf16 %v5096, %v5095
  %v5134 = vpack.c.bf16 %v5112, %v5111
  %v5135 = vpack.c.bf16 %v5081, %v5080
  %v5136 = vpack.c.bf16 %v5098, %v5097
  %v5137 = vpack.c.bf16 %v5114, %v5113
  %v5138 = vpack.c.bf16 %v5083, %v5082
  %v5139 = vpack.c.bf16 %v5100, %v5099
  %v5140 = vpack.c.bf16 %v5116, %v5115
  %5141 = vmatprep.subr.bf16.mxu0 0
  %5142 = vmatpush1.bf16.msra.mxu0 %v3729
  %5143 = vmatprep.subr.bf16.mxu0 0
  %5144 = vmatpush1.bf16.msra.mxu0 %v3730
  %5145 = vmatprep.subr.bf16.mxu0 0
  %5146 = vmatpush1.bf16.msra.mxu0 %v3731
  %5147 = vmatprep.subr.bf16.mxu0 0
  %5148 = vmatpush1.bf16.msra.mxu0 %v3732
  %5149 = vmatprep.subr.bf16.mxu0 0
  %5150 = vmatpush1.bf16.msra.mxu0 %v3733
  %5151 = vmatprep.subr.bf16.mxu0 0
  %5152 = vmatpush1.bf16.msra.mxu0 %v3734
  %5153 = vmatprep.subr.bf16.mxu0 0
  %5154 = vmatpush1.bf16.msra.mxu0 %v3735
  %5155 = vmatprep.subr.bf16.mxu0 0
  %5156 = vmatpush1.bf16.msra.mxu0 %v3736
  %5157 = vmatprep.subr.bf16.mxu0 0
  %5158 = vmatpush1.bf16.msra.mxu0 %v3737
  %5159 = vmatprep.subr.bf16.mxu0 0
  %5160 = vmatpush1.bf16.msra.mxu0 %v3738
  %5161 = vmatprep.subr.bf16.mxu0 0
  %5162 = vmatpush1.bf16.msra.mxu0 %v3739
  %5163 = vmatprep.subr.bf16.mxu0 0
  %5164 = vmatpush1.bf16.msra.mxu0 %v3740
  %5165 = vmatprep.subr.bf16.mxu0 0
  %5166 = vmatpush1.bf16.msra.mxu0 %v3741
  %5167 = vmatprep.subr.bf16.mxu0 0
  %5168 = vmatpush1.bf16.msra.mxu0 %v3742
  %5169 = vmatprep.subr.bf16.mxu0 0
  %5170 = vmatpush1.bf16.msra.mxu0 %v3743
  %5171 = vmatprep.subr.bf16.mxu0 0
  %5172 = vmatpush1.bf16.msra.mxu0 %v3744
  %5173 = vmatprep.mubr.bf16.mxu0 %v3222
  %5174 = vmatmul.mubr.bf16.gmra.mrb[0].mxu0 %v3221
  %v5175 = vpop.f32.mrb[0].mxu0
  %v5176 = vadd.f32 %v3439, %v5175
  %v5177 = vpop.f32.mrb[0].mxu0
  %v5178 = vpop.f32.mrb[0].mxu0
  %v5179 = vadd.f32 %v3439, %v5178
  %v5180 = vpop.f32.mrb[0].mxu0
  %5181 = vmatprep.mubr.bf16.mxu0 %v3231
  %5182 = vmatmul.mubr.bf16.gmra.mrb[0].mxu0 %v3230
  %v5183 = vpop.f32.mrb[0].mxu0
  %v5184 = vadd.f32 %v3439, %v5183
  %v5185 = vpop.f32.mrb[0].mxu0
  %v5186 = vpop.f32.mrb[0].mxu0
  %v5187 = vadd.f32 %v3439, %v5186
  %v5188 = vpop.f32.mrb[0].mxu0
  %5189 = vmatprep.mubr.bf16.mxu0 %v3240
  %5190 = vmatmul.mubr.bf16.gmra.mrb[0].mxu0 %v3239
  %v5191 = vpop.f32.mrb[0].mxu0
  %v5192 = vadd.f32 %v3439, %v5191
  %v5193 = vpop.f32.mrb[0].mxu0
  %v5194 = vpop.f32.mrb[0].mxu0
  %v5195 = vadd.f32 %v3439, %v5194
  %v5196 = vpop.f32.mrb[0].mxu0
  %5197 = vmatprep.mubr.bf16.mxu0 %v3249
  %5198 = vmatmul.mubr.bf16.gmra.mrb[0].mxu0 %v3248
  %v5199 = vpop.f32.mrb[0].mxu0
  %v5200 = vadd.f32 %v3439, %v5199
  %v5201 = vpop.f32.mrb[0].mxu0
  %v5202 = vpop.f32.mrb[0].mxu0
  %v5203 = vadd.f32 %v3439, %v5202
  %v5204 = vpop.f32.mrb[0].mxu0
  %5205 = vmatprep.mubr.bf16.mxu0 %v3258
  %5206 = vmatmul.mubr.bf16.gmra.mrb[0].mxu0 %v3257
  %v5207 = vpop.f32.mrb[0].mxu0
  %v5208 = vadd.f32 %v3439, %v5207
  %v5209 = vpop.f32.mrb[0].mxu0
  %v5210 = vpop.f32.mrb[0].mxu0
  %v5211 = vadd.f32 %v3439, %v5210
  %v5212 = vpop.f32.mrb[0].mxu0
  %5213 = vmatprep.mubr.bf16.mxu0 %v3267
  %5214 = vmatmul.mubr.bf16.gmra.mrb[0].mxu0 %v3266
  %v5215 = vpop.f32.mrb[0].mxu0
  %v5216 = vadd.f32 %v3439, %v5215
  %v5217 = vpop.f32.mrb[0].mxu0
  %v5218 = vpop.f32.mrb[0].mxu0
  %v5219 = vadd.f32 %v3439, %v5218
  %v5220 = vpop.f32.mrb[0].mxu0
  %5221 = vmatprep.mubr.bf16.mxu0 %v3276
  %5222 = vmatmul.mubr.bf16.gmra.mrb[0].mxu0 %v3275
  %v5223 = vpop.f32.mrb[0].mxu0
  %v5224 = vadd.f32 %v3439, %v5223
  %v5225 = vpop.f32.mrb[0].mxu0
  %v5226 = vpop.f32.mrb[0].mxu0
  %v5227 = vadd.f32 %v3439, %v5226
  %v5228 = vpop.f32.mrb[0].mxu0
  %5229 = vmatprep.mubr.bf16.mxu0 %v3285
  %5230 = vmatmul.mubr.bf16.gmra.mrb[0].mxu0 %v3284
  %v5231 = vpop.f32.mrb[0].mxu0
  %v5232 = vadd.f32 %v3439, %v5231
  %v5233 = vpop.f32.mrb[0].mxu0
  %v5234 = vpop.f32.mrb[0].mxu0
  %v5235 = vadd.f32 %v3439, %v5234
  %v5236 = vpop.f32.mrb[0].mxu0
  %5237 = vdwg.mxu0
  %5238 = vmatprep.subr.bf16.mxu0 0
  %5239 = vmatpush1.bf16.msra.mxu0 %v3745
  %5240 = vmatprep.subr.bf16.mxu0 0
  %5241 = vmatpush1.bf16.msra.mxu0 %v3746
  %5242 = vmatprep.subr.bf16.mxu0 0
  %5243 = vmatpush1.bf16.msra.mxu0 %v3747
  %5244 = vmatprep.subr.bf16.mxu0 0
  %5245 = vmatpush1.bf16.msra.mxu0 %v3748
  %5246 = vmatprep.subr.bf16.mxu0 0
  %5247 = vmatpush1.bf16.msra.mxu0 %v3749
  %5248 = vmatprep.subr.bf16.mxu0 0
  %5249 = vmatpush1.bf16.msra.mxu0 %v3750
  %5250 = vmatprep.subr.bf16.mxu0 0
  %5251 = vmatpush1.bf16.msra.mxu0 %v3751
  %5252 = vmatprep.subr.bf16.mxu0 0
  %5253 = vmatpush1.bf16.msra.mxu0 %v3752
  %5254 = vmatprep.subr.bf16.mxu0 0
  %5255 = vmatpush1.bf16.msra.mxu0 %v3753
  %5256 = vmatprep.subr.bf16.mxu0 0
  %5257 = vmatpush1.bf16.msra.mxu0 %v3754
  %5258 = vmatprep.subr.bf16.mxu0 0
  %5259 = vmatpush1.bf16.msra.mxu0 %v3755
  %5260 = vmatprep.subr.bf16.mxu0 0
  %5261 = vmatpush1.bf16.msra.mxu0 %v3756
  %5262 = vmatprep.subr.bf16.mxu0 0
  %5263 = vmatpush1.bf16.msra.mxu0 %v3757
  %5264 = vmatprep.subr.bf16.mxu0 0
  %5265 = vmatpush1.bf16.msra.mxu0 %v3758
  %5266 = vmatprep.subr.bf16.mxu0 0
  %5267 = vmatpush1.bf16.msra.mxu0 %v3759
  %5268 = vmatprep.subr.bf16.mxu0 0
  %5269 = vmatpush1.bf16.msra.mxu0 %v3760
  %5270 = vmatprep.mubr.bf16.mxu0 %v3224
  %5271 = vmatmul.mubr.bf16.gmra.mrb[0].mxu0 %v3223
  %v5272 = vpop.f32.mrb[0].mxu0
  %v5273 = vadd.f32 %v5176, %v5272
  %v5274 = vpop.f32.mrb[0].mxu0
  %v5275 = vpop.f32.mrb[0].mxu0
  %v5276 = vadd.f32 %v5179, %v5275
  %v5277 = vpop.f32.mrb[0].mxu0
  %5278 = vmatprep.mubr.bf16.mxu0 %v3233
  %5279 = vmatmul.mubr.bf16.gmra.mrb[0].mxu0 %v3232
  %v5280 = vpop.f32.mrb[0].mxu0
  %v5281 = vadd.f32 %v5184, %v5280
  %v5282 = vpop.f32.mrb[0].mxu0
  %v5283 = vpop.f32.mrb[0].mxu0
  %v5284 = vadd.f32 %v5187, %v5283
  %v5285 = vpop.f32.mrb[0].mxu0
  %5286 = vmatprep.mubr.bf16.mxu0 %v3242
  %5287 = vmatmul.mubr.bf16.gmra.mrb[0].mxu0 %v3241
  %v5288 = vpop.f32.mrb[0].mxu0
  %v5289 = vadd.f32 %v5192, %v5288
  %v5290 = vpop.f32.mrb[0].mxu0
  %v5291 = vpop.f32.mrb[0].mxu0
  %v5292 = vadd.f32 %v5195, %v5291
  %v5293 = vpop.f32.mrb[0].mxu0
  %5294 = vmatprep.mubr.bf16.mxu0 %v3251
  %5295 = vmatmul.mubr.bf16.gmra.mrb[0].mxu0 %v3250
  %v5296 = vpop.f32.mrb[0].mxu0
  %v5297 = vadd.f32 %v5200, %v5296
  %v5298 = vpop.f32.mrb[0].mxu0
  %v5299 = vpop.f32.mrb[0].mxu0
  %v5300 = vadd.f32 %v5203, %v5299
  %v5301 = vpop.f32.mrb[0].mxu0
  %5302 = vmatprep.mubr.bf16.mxu0 %v3260
  %5303 = vmatmul.mubr.bf16.gmra.mrb[0].mxu0 %v3259
  %v5304 = vpop.f32.mrb[0].mxu0
  %v5305 = vadd.f32 %v5208, %v5304
  %v5306 = vpop.f32.mrb[0].mxu0
  %v5307 = vpop.f32.mrb[0].mxu0
  %v5308 = vadd.f32 %v5211, %v5307
  %v5309 = vpop.f32.mrb[0].mxu0
  %5310 = vmatprep.mubr.bf16.mxu0 %v3269
  %5311 = vmatmul.mubr.bf16.gmra.mrb[0].mxu0 %v3268
  %v5312 = vpop.f32.mrb[0].mxu0
  %v5313 = vadd.f32 %v5216, %v5312
  %v5314 = vpop.f32.mrb[0].mxu0
  %v5315 = vpop.f32.mrb[0].mxu0
  %v5316 = vadd.f32 %v5219, %v5315
  %v5317 = vpop.f32.mrb[0].mxu0
  %5318 = vmatprep.mubr.bf16.mxu0 %v3278
  %5319 = vmatmul.mubr.bf16.gmra.mrb[0].mxu0 %v3277
  %v5320 = vpop.f32.mrb[0].mxu0
  %v5321 = vadd.f32 %v5224, %v5320
  %v5322 = vpop.f32.mrb[0].mxu0
  %v5323 = vpop.f32.mrb[0].mxu0
  %v5324 = vadd.f32 %v5227, %v5323
  %v5325 = vpop.f32.mrb[0].mxu0
  %5326 = vmatprep.mubr.bf16.mxu0 %v3287
  %5327 = vmatmul.mubr.bf16.gmra.mrb[0].mxu0 %v3286
  %v5328 = vpop.f32.mrb[0].mxu0
  %v5329 = vadd.f32 %v5232, %v5328
  %v5330 = vpop.f32.mrb[0].mxu0
  %v5331 = vpop.f32.mrb[0].mxu0
  %v5332 = vadd.f32 %v5235, %v5331
  %v5333 = vpop.f32.mrb[0].mxu0
  %5334 = vdwg.mxu0
  %5335 = vmatprep.subr.bf16.mxu0 0
  %5336 = vmatpush1.bf16.msra.mxu0 %v3761
  %5337 = vmatprep.subr.bf16.mxu0 0
  %5338 = vmatpush1.bf16.msra.mxu0 %v3762
  %5339 = vmatprep.subr.bf16.mxu0 0
  %5340 = vmatpush1.bf16.msra.mxu0 %v3763
  %5341 = vmatprep.subr.bf16.mxu0 0
  %5342 = vmatpush1.bf16.msra.mxu0 %v3764
  %5343 = vmatprep.subr.bf16.mxu0 0
  %5344 = vmatpush1.bf16.msra.mxu0 %v3765
  %5345 = vmatprep.subr.bf16.mxu0 0
  %5346 = vmatpush1.bf16.msra.mxu0 %v3766
  %5347 = vmatprep.subr.bf16.mxu0 0
  %5348 = vmatpush1.bf16.msra.mxu0 %v3767
  %5349 = vmatprep.subr.bf16.mxu0 0
  %5350 = vmatpush1.bf16.msra.mxu0 %v3768
  %5351 = vmatprep.subr.bf16.mxu0 0
  %5352 = vmatpush1.bf16.msra.mxu0 %v3769
  %5353 = vmatprep.subr.bf16.mxu0 0
  %5354 = vmatpush1.bf16.msra.mxu0 %v3770
  %5355 = vmatprep.subr.bf16.mxu0 0
  %5356 = vmatpush1.bf16.msra.mxu0 %v3771
  %5357 = vmatprep.subr.bf16.mxu0 0
  %5358 = vmatpush1.bf16.msra.mxu0 %v3772
  %5359 = vmatprep.subr.bf16.mxu0 0
  %5360 = vmatpush1.bf16.msra.mxu0 %v3773
  %5361 = vmatprep.subr.bf16.mxu0 0
  %5362 = vmatpush1.bf16.msra.mxu0 %v3774
  %5363 = vmatprep.subr.bf16.mxu0 0
  %5364 = vmatpush1.bf16.msra.mxu0 %v3775
  %5365 = vmatprep.subr.bf16.mxu0 0
  %5366 = vmatpush1.bf16.msra.mxu0 %v3776
  %5367 = vmatprep.mubr.bf16.mxu0 %v3226
  %5368 = vmatmul.mubr.bf16.gmra.mrb[0].mxu0 %v3225
  %v5369 = vpop.f32.mrb[0].mxu0
  %v5370 = vadd.f32 %v5273, %v5369
  %v5371 = vpop.f32.mrb[0].mxu0
  %v5372 = vpop.f32.mrb[0].mxu0
  %v5373 = vadd.f32 %v5276, %v5372
  %v5374 = vpop.f32.mrb[0].mxu0
  %5375 = vmatprep.mubr.bf16.mxu0 %v3235
  %5376 = vmatmul.mubr.bf16.gmra.mrb[0].mxu0 %v3234
  %v5377 = vpop.f32.mrb[0].mxu0
  %v5378 = vadd.f32 %v5281, %v5377
  %v5379 = vpop.f32.mrb[0].mxu0
  %v5380 = vpop.f32.mrb[0].mxu0
  %v5381 = vadd.f32 %v5284, %v5380
  %v5382 = vpop.f32.mrb[0].mxu0
  %5383 = vmatprep.mubr.bf16.mxu0 %v3244
  %5384 = vmatmul.mubr.bf16.gmra.mrb[0].mxu0 %v3243
  %v5385 = vpop.f32.mrb[0].mxu0
  %v5386 = vadd.f32 %v5289, %v5385
  %v5387 = vpop.f32.mrb[0].mxu0
  %v5388 = vpop.f32.mrb[0].mxu0
  %v5389 = vadd.f32 %v5292, %v5388
  %v5390 = vpop.f32.mrb[0].mxu0
  %5391 = vmatprep.mubr.bf16.mxu0 %v3253
  %5392 = vmatmul.mubr.bf16.gmra.mrb[0].mxu0 %v3252
  %v5393 = vpop.f32.mrb[0].mxu0
  %v5394 = vadd.f32 %v5297, %v5393
  %v5395 = vpop.f32.mrb[0].mxu0
  %v5396 = vpop.f32.mrb[0].mxu0
  %v5397 = vadd.f32 %v5300, %v5396
  %v5398 = vpop.f32.mrb[0].mxu0
  %5399 = vmatprep.mubr.bf16.mxu0 %v3262
  %5400 = vmatmul.mubr.bf16.gmra.mrb[0].mxu0 %v3261
  %v5401 = vpop.f32.mrb[0].mxu0
  %v5402 = vadd.f32 %v5305, %v5401
  %v5403 = vpop.f32.mrb[0].mxu0
  %v5404 = vpop.f32.mrb[0].mxu0
  %v5405 = vadd.f32 %v5308, %v5404
  %v5406 = vpop.f32.mrb[0].mxu0
  %5407 = vmatprep.mubr.bf16.mxu0 %v3271
  %5408 = vmatmul.mubr.bf16.gmra.mrb[0].mxu0 %v3270
  %v5409 = vpop.f32.mrb[0].mxu0
  %v5410 = vadd.f32 %v5313, %v5409
  %v5411 = vpop.f32.mrb[0].mxu0
  %v5412 = vpop.f32.mrb[0].mxu0
  %v5413 = vadd.f32 %v5316, %v5412
  %v5414 = vpop.f32.mrb[0].mxu0
  %5415 = vmatprep.mubr.bf16.mxu0 %v3280
  %5416 = vmatmul.mubr.bf16.gmra.mrb[0].mxu0 %v3279
  %v5417 = vpop.f32.mrb[0].mxu0
  %v5418 = vadd.f32 %v5321, %v5417
  %v5419 = vpop.f32.mrb[0].mxu0
  %v5420 = vpop.f32.mrb[0].mxu0
  %v5421 = vadd.f32 %v5324, %v5420
  %v5422 = vpop.f32.mrb[0].mxu0
  %5423 = vmatprep.mubr.bf16.mxu0 %v3289
  %5424 = vmatmul.mubr.bf16.gmra.mrb[0].mxu0 %v3288
  %v5425 = vpop.f32.mrb[0].mxu0
  %v5426 = vadd.f32 %v5329, %v5425
  %v5427 = vpop.f32.mrb[0].mxu0
  %v5428 = vpop.f32.mrb[0].mxu0
  %v5429 = vadd.f32 %v5332, %v5428
  %v5430 = vpop.f32.mrb[0].mxu0
  %5431 = vdwg.mxu0
  %5432 = vmatprep.subr.bf16.mxu0 0
  %5433 = vmatpush1.bf16.msra.mxu0 %v3777
  %5434 = vmatprep.subr.bf16.mxu0 0
  %5435 = vmatpush1.bf16.msra.mxu0 %v3778
  %5436 = vmatprep.subr.bf16.mxu0 0
  %5437 = vmatpush1.bf16.msra.mxu0 %v3779
  %5438 = vmatprep.subr.bf16.mxu0 0
  %5439 = vmatpush1.bf16.msra.mxu0 %v3780
  %5440 = vmatprep.subr.bf16.mxu0 0
  %5441 = vmatpush1.bf16.msra.mxu0 %v3781
  %5442 = vmatprep.subr.bf16.mxu0 0
  %5443 = vmatpush1.bf16.msra.mxu0 %v3782
  %5444 = vmatprep.subr.bf16.mxu0 0
  %5445 = vmatpush1.bf16.msra.mxu0 %v3783
  %5446 = vmatprep.subr.bf16.mxu0 0
  %5447 = vmatpush1.bf16.msra.mxu0 %v3784
  %5448 = vmatprep.subr.bf16.mxu0 0
  %5449 = vmatpush1.bf16.msra.mxu0 %v3785
  %5450 = vmatprep.subr.bf16.mxu0 0
  %5451 = vmatpush1.bf16.msra.mxu0 %v3786
  %5452 = vmatprep.subr.bf16.mxu0 0
  %5453 = vmatpush1.bf16.msra.mxu0 %v3787
  %5454 = vmatprep.subr.bf16.mxu0 0
  %5455 = vmatpush1.bf16.msra.mxu0 %v3788
  %5456 = vmatprep.subr.bf16.mxu0 0
  %5457 = vmatpush1.bf16.msra.mxu0 %v3789
  %5458 = vmatprep.subr.bf16.mxu0 0
  %5459 = vmatpush1.bf16.msra.mxu0 %v3790
  %5460 = vmatprep.subr.bf16.mxu0 0
  %5461 = vmatpush1.bf16.msra.mxu0 %v3791
  %5462 = vmatprep.subr.bf16.mxu0 0
  %5463 = vmatpush1.bf16.msra.mxu0 %v3792
  %5464 = vmatprep.mubr.bf16.mxu0 %v5118
  %5465 = vmatmul.mubr.bf16.gmra.mrb[0].mxu0 %v5117
  %v5466 = vpop.f32.mrb[0].mxu0
  %v5467 = vadd.f32 %v5370, %v5466
  %v5468 = vpop.f32.mrb[0].mxu0
  %v5469 = vpop.f32.mrb[0].mxu0
  %v5470 = vadd.f32 %v5373, %v5469
  %v5471 = vpop.f32.mrb[0].mxu0
  %5472 = vmatprep.mubr.bf16.mxu0 %v5121
  %5473 = vmatmul.mubr.bf16.gmra.mrb[0].mxu0 %v5120
  %v5474 = vpop.f32.mrb[0].mxu0
  %v5475 = vadd.f32 %v5378, %v5474
  %v5476 = vpop.f32.mrb[0].mxu0
  %v5477 = vpop.f32.mrb[0].mxu0
  %v5478 = vadd.f32 %v5381, %v5477
  %v5479 = vpop.f32.mrb[0].mxu0
  %5480 = vmatprep.mubr.bf16.mxu0 %v5124
  %5481 = vmatmul.mubr.bf16.gmra.mrb[0].mxu0 %v5123
  %v5482 = vpop.f32.mrb[0].mxu0
  %v5483 = vadd.f32 %v5386, %v5482
  %v5484 = vpop.f32.mrb[0].mxu0
  %v5485 = vpop.f32.mrb[0].mxu0
  %v5486 = vadd.f32 %v5389, %v5485
  %v5487 = vpop.f32.mrb[0].mxu0
  %5488 = vmatprep.mubr.bf16.mxu0 %v5127
  %5489 = vmatmul.mubr.bf16.gmra.mrb[0].mxu0 %v5126
  %v5490 = vpop.f32.mrb[0].mxu0
  %v5491 = vadd.f32 %v5394, %v5490
  %v5492 = vpop.f32.mrb[0].mxu0
  %v5493 = vpop.f32.mrb[0].mxu0
  %v5494 = vadd.f32 %v5397, %v5493
  %v5495 = vpop.f32.mrb[0].mxu0
  %5496 = vmatprep.mubr.bf16.mxu0 %v5130
  %5497 = vmatmul.mubr.bf16.gmra.mrb[0].mxu0 %v5129
  %v5498 = vpop.f32.mrb[0].mxu0
  %v5499 = vadd.f32 %v5402, %v5498
  %v5500 = vpop.f32.mrb[0].mxu0
  %v5501 = vpop.f32.mrb[0].mxu0
  %v5502 = vadd.f32 %v5405, %v5501
  %v5503 = vpop.f32.mrb[0].mxu0
  %5504 = vmatprep.mubr.bf16.mxu0 %v5133
  %5505 = vmatmul.mubr.bf16.gmra.mrb[0].mxu0 %v5132
  %v5506 = vpop.f32.mrb[0].mxu0
  %v5507 = vadd.f32 %v5410, %v5506
  %v5508 = vpop.f32.mrb[0].mxu0
  %v5509 = vpop.f32.mrb[0].mxu0
  %v5510 = vadd.f32 %v5413, %v5509
  %v5511 = vpop.f32.mrb[0].mxu0
  %5512 = vmatprep.mubr.bf16.mxu0 %v5136
  %5513 = vmatmul.mubr.bf16.gmra.mrb[0].mxu0 %v5135
  %v5514 = vpop.f32.mrb[0].mxu0
  %v5515 = vadd.f32 %v5418, %v5514
  %v5516 = vpop.f32.mrb[0].mxu0
  %v5517 = vpop.f32.mrb[0].mxu0
  %v5518 = vadd.f32 %v5421, %v5517
  %v5519 = vpop.f32.mrb[0].mxu0
  %5520 = vmatprep.mubr.bf16.mxu0 %v5139
  %5521 = vmatmul.mubr.bf16.gmra.mrb[0].mxu0 %v5138
  %v5522 = vpop.f32.mrb[0].mxu0
  %v5523 = vadd.f32 %v5426, %v5522
  %v5524 = vpop.f32.mrb[0].mxu0
  %v5525 = vpop.f32.mrb[0].mxu0
  %v5526 = vadd.f32 %v5429, %v5525
  %v5527 = vpop.f32.mrb[0].mxu0
  %5528 = vdwg.mxu0
  %5529 = vmatprep.subr.bf16.mxu0 0
  %5530 = vmatpush1.bf16.msra.mxu0 %v3793
  %5531 = vmatprep.subr.bf16.mxu0 0
  %5532 = vmatpush1.bf16.msra.mxu0 %v3794
  %5533 = vmatprep.subr.bf16.mxu0 0
  %5534 = vmatpush1.bf16.msra.mxu0 %v3795
  %5535 = vmatprep.subr.bf16.mxu0 0
  %5536 = vmatpush1.bf16.msra.mxu0 %v3796
  %5537 = vmatprep.subr.bf16.mxu0 0
  %5538 = vmatpush1.bf16.msra.mxu0 %v3797
  %5539 = vmatprep.subr.bf16.mxu0 0
  %5540 = vmatpush1.bf16.msra.mxu0 %v3798
  %5541 = vmatprep.subr.bf16.mxu0 0
  %5542 = vmatpush1.bf16.msra.mxu0 %v3799
  %5543 = vmatprep.subr.bf16.mxu0 0
  %5544 = vmatpush1.bf16.msra.mxu0 %v3800
  %5545 = vmatprep.subr.bf16.mxu0 0
  %5546 = vmatpush1.bf16.msra.mxu0 0
  %5547 = vmatprep.subr.bf16.mxu0 0
  %5548 = vmatpush1.bf16.msra.mxu0 0
  %5549 = vmatprep.subr.bf16.mxu0 0
  %5550 = vmatpush1.bf16.msra.mxu0 0
  %5551 = vmatprep.subr.bf16.mxu0 0
  %5552 = vmatpush1.bf16.msra.mxu0 0
  %5553 = vmatprep.subr.bf16.mxu0 0
  %5554 = vmatpush1.bf16.msra.mxu0 0
  %5555 = vmatprep.subr.bf16.mxu0 0
  %5556 = vmatpush1.bf16.msra.mxu0 0
  %5557 = vmatprep.subr.bf16.mxu0 0
  %5558 = vmatpush1.bf16.msra.mxu0 0
  %5559 = vmatprep.subr.bf16.mxu0 0
  %5560 = vmatpush1.bf16.msra.mxu0 0
  %5561 = vmatprep.mubr.bf16.mxu0 0
  %5562 = vmatmul.mubr.bf16.gmra.mrb[0].mxu0 %v5119
  %v5563 = vpop.f32.mrb[0].mxu0
  %v5564 = vadd.f32 %v5467, %v5563
  %v5565 = vpop.f32.mrb[0].mxu0
  %v5566 = vpop.f32.mrb[0].mxu0
  %v5567 = vadd.f32 %v5470, %v5566
  %v5568 = vpop.f32.mrb[0].mxu0
  %5569 = vmatprep.mubr.bf16.mxu0 0
  %5570 = vmatmul.mubr.bf16.gmra.mrb[0].mxu0 %v5122
  %v5571 = vpop.f32.mrb[0].mxu0
  %v5572 = vadd.f32 %v5475, %v5571
  %v5573 = vpop.f32.mrb[0].mxu0
  %v5574 = vpop.f32.mrb[0].mxu0
  %v5575 = vadd.f32 %v5478, %v5574
  %v5576 = vpop.f32.mrb[0].mxu0
  %5577 = vmatprep.mubr.bf16.mxu0 0
  %5578 = vmatmul.mubr.bf16.gmra.mrb[0].mxu0 %v5125
  %v5579 = vpop.f32.mrb[0].mxu0
  %v5580 = vadd.f32 %v5483, %v5579
  %v5581 = vpop.f32.mrb[0].mxu0
  %v5582 = vpop.f32.mrb[0].mxu0
  %v5583 = vadd.f32 %v5486, %v5582
  %v5584 = vpop.f32.mrb[0].mxu0
  %5585 = vmatprep.mubr.bf16.mxu0 0
  %5586 = vmatmul.mubr.bf16.gmra.mrb[0].mxu0 %v5128
  %v5587 = vpop.f32.mrb[0].mxu0
  %v5588 = vadd.f32 %v5491, %v5587
  %v5589 = vpop.f32.mrb[0].mxu0
  %v5590 = vpop.f32.mrb[0].mxu0
  %v5591 = vadd.f32 %v5494, %v5590
  %v5592 = vpop.f32.mrb[0].mxu0
  %5593 = vmatprep.mubr.bf16.mxu0 0
  %5594 = vmatmul.mubr.bf16.gmra.mrb[0].mxu0 %v5131
  %v5595 = vpop.f32.mrb[0].mxu0
  %v5596 = vadd.f32 %v5499, %v5595
  %v5597 = vpop.f32.mrb[0].mxu0
  %v5598 = vpop.f32.mrb[0].mxu0
  %v5599 = vadd.f32 %v5502, %v5598
  %v5600 = vpop.f32.mrb[0].mxu0
  %5601 = vmatprep.mubr.bf16.mxu0 0
  %5602 = vmatmul.mubr.bf16.gmra.mrb[0].mxu0 %v5134
  %v5603 = vpop.f32.mrb[0].mxu0
  %v5604 = vadd.f32 %v5507, %v5603
  %v5605 = vpop.f32.mrb[0].mxu0
  %v5606 = vpop.f32.mrb[0].mxu0
  %v5607 = vadd.f32 %v5510, %v5606
  %v5608 = vpop.f32.mrb[0].mxu0
  %5609 = vmatprep.mubr.bf16.mxu0 0
  %5610 = vmatmul.mubr.bf16.gmra.mrb[0].mxu0 %v5137
  %v5611 = vpop.f32.mrb[0].mxu0
  %v5612 = vadd.f32 %v5515, %v5611
  %v5613 = vpop.f32.mrb[0].mxu0
  %v5614 = vpop.f32.mrb[0].mxu0
  %v5615 = vadd.f32 %v5518, %v5614
  %v5616 = vpop.f32.mrb[0].mxu0
  %5617 = vmatprep.mubr.bf16.mxu0 0
  %5618 = vmatmul.mubr.bf16.gmra.mrb[0].mxu0 %v5140
  %v5619 = vpop.f32.mrb[0].mxu0
  %v5620 = vadd.f32 %v5523, %v5619
  %v5621 = vpop.f32.mrb[0].mxu0
  %v5622 = vpop.f32.mrb[0].mxu0
  %v5623 = vadd.f32 %v5526, %v5622
  %v5624 = vpop.f32.mrb[0].mxu0
  %5625 = vdwg.mxu0
  %v5626 = vtanh.pop %v5564
  %v5627 = vtanh.pop %v5567
  %v5628 = vtanh.pop %v5572
  %v5629 = vtanh.pop %v5575
  %v5630 = vtanh.pop %v5580
  %v5631 = vtanh.pop %v5583
  %v5632 = vtanh.pop %v5588
  %v5633 = vtanh.pop %v5591
  %v5634 = vtanh.pop %v5596
  %v5635 = vtanh.pop %v5599
  %v5636 = vtanh.pop %v5604
  %v5637 = vtanh.pop %v5607
  %v5638 = vtanh.pop %v5612
  %v5639 = vtanh.pop %v5615
  %v5640 = vtanh.pop %v5620
  %v5641 = vtanh.pop %v5623
  %v5642 = vadd.f32 %v5626, %v5627
  %v5643 = vadd.f32 %v5642, %v5628
  %v5644 = vadd.f32 %v5643, %v5629
  %v5645 = vadd.f32 %v5644, %v5630
  %v5646 = vadd.f32 %v5645, %v5631
  %v5647 = vadd.f32 %v5646, %v5632
  %v5648 = vadd.f32 %v5647, %v5633
  %v5649 = vadd.f32 %v5648, %v5634
  %v5650 = vadd.f32 %v5649, %v5635
  %v5651 = vadd.f32 %v5650, %v5636
  %v5652 = vadd.f32 %v5651, %v5637
  %v5653 = vadd.f32 %v5652, %v5638
  %v5654 = vadd.f32 %v5653, %v5639
  %v5655 = vadd.f32 %v5654, %v5640
  %v5656 = vadd.f32 %v5655, %v5641
  %v5657 = vrot.slane %v5656, 4
  %v5658 = vadd.f32 %v5656, %v5657
  %v5659 = vrot.slane %v5658, 2
  %v5660 = vadd.f32 %v5658, %v5659
  %v5661 = vrot.slane %v5660, 1
  %v5662 = vadd.f32 %v5660, %v5661
  %v5663 = vadd.f32 %v5028, %v5662
  %v5664 = vmul.f32 %v5626, %v5626
  %v5665 = vmul.f32 %v5627, %v5627
  %v5666 = vmul.f32 %v5628, %v5628
  %v5667 = vmul.f32 %v5629, %v5629
  %v5668 = vmul.f32 %v5630, %v5630
  %v5669 = vmul.f32 %v5631, %v5631
  %v5670 = vmul.f32 %v5632, %v5632
  %v5671 = vmul.f32 %v5633, %v5633
  %v5672 = vmul.f32 %v5634, %v5634
  %v5673 = vmul.f32 %v5635, %v5635
  %v5674 = vmul.f32 %v5636, %v5636
  %v5675 = vmul.f32 %v5637, %v5637
  %v5676 = vmul.f32 %v5638, %v5638
  %v5677 = vmul.f32 %v5639, %v5639
  %v5678 = vmul.f32 %v5640, %v5640
  %v5679 = vmul.f32 %v5641, %v5641
  %v5680 = vadd.f32 %v5664, %v5665
  %v5681 = vadd.f32 %v5680, %v5666
  %v5682 = vadd.f32 %v5681, %v5667
  %v5683 = vadd.f32 %v5682, %v5668
  %v5684 = vadd.f32 %v5683, %v5669
  %v5685 = vadd.f32 %v5684, %v5670
  %v5686 = vadd.f32 %v5685, %v5671
  %v5687 = vadd.f32 %v5686, %v5672
  %v5688 = vadd.f32 %v5687, %v5673
  %v5689 = vadd.f32 %v5688, %v5674
  %v5690 = vadd.f32 %v5689, %v5675
  %v5691 = vadd.f32 %v5690, %v5676
  %v5692 = vadd.f32 %v5691, %v5677
  %v5693 = vadd.f32 %v5692, %v5678
  %v5694 = vadd.f32 %v5693, %v5679
  %v5695 = vrot.slane %v5694, 4
  %v5696 = vadd.f32 %v5694, %v5695
  %v5697 = vrot.slane %v5696, 2
  %v5698 = vadd.f32 %v5696, %v5697
  %v5699 = vrot.slane %v5698, 1
  %v5700 = vadd.f32 %v5698, %v5699
  %v5701 = vadd.f32 %v5066, %v5700
  %v5702 = vld [vmem:[%s5084 + $0x2] sm:$0xff]
  %v5703 = vld [vmem:[%s5084 + $0x12] sm:$0xff]
  %v5704 = vld [vmem:[%s5084 + $0x22] sm:$0xff]
  %v5705 = vld [vmem:[%s5084 + $0x32] sm:$0xff]
  %v5706 = vld [vmem:[%s5084 + $0x42] sm:$0xff]
  %v5707 = vld [vmem:[%s5084 + $0x52] sm:$0xff]
  %v5708 = vld [vmem:[%s5084 + $0x62] sm:$0xff]
  %v5709 = vld [vmem:[%s5084 + $0x72] sm:$0xff]
  %v5710 = vld [vmem:[%s5084 + $0xa2] sm:$0xff]
  %v5711 = vld [vmem:[%s5084 + $0xb2] sm:$0xff]
  %v5712 = vld [vmem:[%s5084 + $0xc2] sm:$0xff]
  %v5713 = vld [vmem:[%s5084 + $0xd2] sm:$0xff]
  %v5714 = vld [vmem:[%s5084 + $0xe2] sm:$0xff]
  %v5715 = vld [vmem:[%s5084 + $0xf2] sm:$0xff]
  %v5716 = vld [vmem:[%s5084 + $0x102] sm:$0xff]
  %v5717 = vld [vmem:[%s5084 + $0x112] sm:$0xff]
  %v5718 = vpack.c.bf16 %v5703, %v5702
  %v5719 = vpack.c.bf16 %v5705, %v5704
  %v5720 = vpack.c.bf16 %v5707, %v5706
  %v5721 = vpack.c.bf16 %v5709, %v5708
  %v5722 = vpack.c.bf16 %v5711, %v5710
  %v5723 = vpack.c.bf16 %v5713, %v5712
  %v5724 = vpack.c.bf16 %v5715, %v5714
  %v5725 = vpack.c.bf16 %v5717, %v5716
  %5726 = vmatprep.subr.bf16.mxu0 0
  %5727 = vmatpush1.bf16.msra.mxu0 %v3729
  %5728 = vmatprep.subr.bf16.mxu0 0
  %5729 = vmatpush1.bf16.msra.mxu0 %v3730
  %5730 = vmatprep.subr.bf16.mxu0 0
  %5731 = vmatpush1.bf16.msra.mxu0 %v3731
  %5732 = vmatprep.subr.bf16.mxu0 0
  %5733 = vmatpush1.bf16.msra.mxu0 %v3732
  %5734 = vmatprep.subr.bf16.mxu0 0
  %5735 = vmatpush1.bf16.msra.mxu0 %v3733
  %5736 = vmatprep.subr.bf16.mxu0 0
  %5737 = vmatpush1.bf16.msra.mxu0 %v3734
  %5738 = vmatprep.subr.bf16.mxu0 0
  %5739 = vmatpush1.bf16.msra.mxu0 %v3735
  %5740 = vmatprep.subr.bf16.mxu0 0
  %5741 = vmatpush1.bf16.msra.mxu0 %v3736
  %5742 = vmatprep.subr.bf16.mxu0 0
  %5743 = vmatpush1.bf16.msra.mxu0 %v3737
  %5744 = vmatprep.subr.bf16.mxu0 0
  %5745 = vmatpush1.bf16.msra.mxu0 %v3738
  %5746 = vmatprep.subr.bf16.mxu0 0
  %5747 = vmatpush1.bf16.msra.mxu0 %v3739
  %5748 = vmatprep.subr.bf16.mxu0 0
  %5749 = vmatpush1.bf16.msra.mxu0 %v3740
  %5750 = vmatprep.subr.bf16.mxu0 0
  %5751 = vmatpush1.bf16.msra.mxu0 %v3741
  %5752 = vmatprep.subr.bf16.mxu0 0
  %5753 = vmatpush1.bf16.msra.mxu0 %v3742
  %5754 = vmatprep.subr.bf16.mxu0 0
  %5755 = vmatpush1.bf16.msra.mxu0 %v3743
  %5756 = vmatprep.subr.bf16.mxu0 0
  %5757 = vmatpush1.bf16.msra.mxu0 %v3744
  %5758 = vmatprep.mubr.bf16.mxu0 %v3223
  %5759 = vmatmul.mubr.bf16.gmra.mrb[0].mxu0 %v3222
  %v5760 = vpop.f32.mrb[0].mxu0
  %v5761 = vadd.f32 %v3439, %v5760
  %v5762 = vpop.f32.mrb[0].mxu0
  %v5763 = vpop.f32.mrb[0].mxu0
  %v5764 = vadd.f32 %v3439, %v5763
  %v5765 = vpop.f32.mrb[0].mxu0
  %5766 = vmatprep.mubr.bf16.mxu0 %v3232
  %5767 = vmatmul.mubr.bf16.gmra.mrb[0].mxu0 %v3231
  %v5768 = vpop.f32.mrb[0].mxu0
  %v5769 = vadd.f32 %v3439, %v5768
  %v5770 = vpop.f32.mrb[0].mxu0
  %v5771 = vpop.f32.mrb[0].mxu0
  %v5772 = vadd.f32 %v3439, %v5771
  %v5773 = vpop.f32.mrb[0].mxu0
  %5774 = vmatprep.mubr.bf16.mxu0 %v3241
  %5775 = vmatmul.mubr.bf16.gmra.mrb[0].mxu0 %v3240
  %v5776 = vpop.f32.mrb[0].mxu0
  %v5777 = vadd.f32 %v3439, %v5776
  %v5778 = vpop.f32.mrb[0].mxu0
  %v5779 = vpop.f32.mrb[0].mxu0
  %v5780 = vadd.f32 %v3439, %v5779
  %v5781 = vpop.f32.mrb[0].mxu0
  %5782 = vmatprep.mubr.bf16.mxu0 %v3250
  %5783 = vmatmul.mubr.bf16.gmra.mrb[0].mxu0 %v3249
  %v5784 = vpop.f32.mrb[0].mxu0
  %v5785 = vadd.f32 %v3439, %v5784
  %v5786 = vpop.f32.mrb[0].mxu0
  %v5787 = vpop.f32.mrb[0].mxu0
  %v5788 = vadd.f32 %v3439, %v5787
  %v5789 = vpop.f32.mrb[0].mxu0
  %5790 = vmatprep.mubr.bf16.mxu0 %v3259
  %5791 = vmatmul.mubr.bf16.gmra.mrb[0].mxu0 %v3258
  %v5792 = vpop.f32.mrb[0].mxu0
  %v5793 = vadd.f32 %v3439, %v5792
  %v5794 = vpop.f32.mrb[0].mxu0
  %v5795 = vpop.f32.mrb[0].mxu0
  %v5796 = vadd.f32 %v3439, %v5795
  %v5797 = vpop.f32.mrb[0].mxu0
  %5798 = vmatprep.mubr.bf16.mxu0 %v3268
  %5799 = vmatmul.mubr.bf16.gmra.mrb[0].mxu0 %v3267
  %v5800 = vpop.f32.mrb[0].mxu0
  %v5801 = vadd.f32 %v3439, %v5800
  %v5802 = vpop.f32.mrb[0].mxu0
  %v5803 = vpop.f32.mrb[0].mxu0
  %v5804 = vadd.f32 %v3439, %v5803
  %v5805 = vpop.f32.mrb[0].mxu0
  %5806 = vmatprep.mubr.bf16.mxu0 %v3277
  %5807 = vmatmul.mubr.bf16.gmra.mrb[0].mxu0 %v3276
  %v5808 = vpop.f32.mrb[0].mxu0
  %v5809 = vadd.f32 %v3439, %v5808
  %v5810 = vpop.f32.mrb[0].mxu0
  %v5811 = vpop.f32.mrb[0].mxu0
  %v5812 = vadd.f32 %v3439, %v5811
  %v5813 = vpop.f32.mrb[0].mxu0
  %5814 = vmatprep.mubr.bf16.mxu0 %v3286
  %5815 = vmatmul.mubr.bf16.gmra.mrb[0].mxu0 %v3285
  %v5816 = vpop.f32.mrb[0].mxu0
  %v5817 = vadd.f32 %v3439, %v5816
  %v5818 = vpop.f32.mrb[0].mxu0
  %v5819 = vpop.f32.mrb[0].mxu0
  %v5820 = vadd.f32 %v3439, %v5819
  %v5821 = vpop.f32.mrb[0].mxu0
  %5822 = vdwg.mxu0
  %5823 = vmatprep.subr.bf16.mxu0 0
  %5824 = vmatpush1.bf16.msra.mxu0 %v3745
  %5825 = vmatprep.subr.bf16.mxu0 0
  %5826 = vmatpush1.bf16.msra.mxu0 %v3746
  %5827 = vmatprep.subr.bf16.mxu0 0
  %5828 = vmatpush1.bf16.msra.mxu0 %v3747
  %5829 = vmatprep.subr.bf16.mxu0 0
  %5830 = vmatpush1.bf16.msra.mxu0 %v3748
  %5831 = vmatprep.subr.bf16.mxu0 0
  %5832 = vmatpush1.bf16.msra.mxu0 %v3749
  %5833 = vmatprep.subr.bf16.mxu0 0
  %5834 = vmatpush1.bf16.msra.mxu0 %v3750
  %5835 = vmatprep.subr.bf16.mxu0 0
  %5836 = vmatpush1.bf16.msra.mxu0 %v3751
  %5837 = vmatprep.subr.bf16.mxu0 0
  %5838 = vmatpush1.bf16.msra.mxu0 %v3752
  %5839 = vmatprep.subr.bf16.mxu0 0
  %5840 = vmatpush1.bf16.msra.mxu0 %v3753
  %5841 = vmatprep.subr.bf16.mxu0 0
  %5842 = vmatpush1.bf16.msra.mxu0 %v3754
  %5843 = vmatprep.subr.bf16.mxu0 0
  %5844 = vmatpush1.bf16.msra.mxu0 %v3755
  %5845 = vmatprep.subr.bf16.mxu0 0
  %5846 = vmatpush1.bf16.msra.mxu0 %v3756
  %5847 = vmatprep.subr.bf16.mxu0 0
  %5848 = vmatpush1.bf16.msra.mxu0 %v3757
  %5849 = vmatprep.subr.bf16.mxu0 0
  %5850 = vmatpush1.bf16.msra.mxu0 %v3758
  %5851 = vmatprep.subr.bf16.mxu0 0
  %5852 = vmatpush1.bf16.msra.mxu0 %v3759
  %5853 = vmatprep.subr.bf16.mxu0 0
  %5854 = vmatpush1.bf16.msra.mxu0 %v3760
  %5855 = vmatprep.mubr.bf16.mxu0 %v3225
  %5856 = vmatmul.mubr.bf16.gmra.mrb[0].mxu0 %v4483
  %v5857 = vpop.f32.mrb[0].mxu0
  %v5858 = vadd.f32 %v5761, %v5857
  %v5859 = vpop.f32.mrb[0].mxu0
  %v5860 = vpop.f32.mrb[0].mxu0
  %v5861 = vadd.f32 %v5764, %v5860
  %v5862 = vpop.f32.mrb[0].mxu0
  %5863 = vmatprep.mubr.bf16.mxu0 %v3234
  %5864 = vmatmul.mubr.bf16.gmra.mrb[0].mxu0 %v4486
  %v5865 = vpop.f32.mrb[0].mxu0
  %v5866 = vadd.f32 %v5769, %v5865
  %v5867 = vpop.f32.mrb[0].mxu0
  %v5868 = vpop.f32.mrb[0].mxu0
  %v5869 = vadd.f32 %v5772, %v5868
  %v5870 = vpop.f32.mrb[0].mxu0
  %5871 = vmatprep.mubr.bf16.mxu0 %v3243
  %5872 = vmatmul.mubr.bf16.gmra.mrb[0].mxu0 %v4489
  %v5873 = vpop.f32.mrb[0].mxu0
  %v5874 = vadd.f32 %v5777, %v5873
  %v5875 = vpop.f32.mrb[0].mxu0
  %v5876 = vpop.f32.mrb[0].mxu0
  %v5877 = vadd.f32 %v5780, %v5876
  %v5878 = vpop.f32.mrb[0].mxu0
  %5879 = vmatprep.mubr.bf16.mxu0 %v3252
  %5880 = vmatmul.mubr.bf16.gmra.mrb[0].mxu0 %v4492
  %v5881 = vpop.f32.mrb[0].mxu0
  %v5882 = vadd.f32 %v5785, %v5881
  %v5883 = vpop.f32.mrb[0].mxu0
  %v5884 = vpop.f32.mrb[0].mxu0
  %v5885 = vadd.f32 %v5788, %v5884
  %v5886 = vpop.f32.mrb[0].mxu0
  %5887 = vmatprep.mubr.bf16.mxu0 %v3261
  %5888 = vmatmul.mubr.bf16.gmra.mrb[0].mxu0 %v4495
  %v5889 = vpop.f32.mrb[0].mxu0
  %v5890 = vadd.f32 %v5793, %v5889
  %v5891 = vpop.f32.mrb[0].mxu0
  %v5892 = vpop.f32.mrb[0].mxu0
  %v5893 = vadd.f32 %v5796, %v5892
  %v5894 = vpop.f32.mrb[0].mxu0
  %5895 = vmatprep.mubr.bf16.mxu0 %v3270
  %5896 = vmatmul.mubr.bf16.gmra.mrb[0].mxu0 %v4498
  %v5897 = vpop.f32.mrb[0].mxu0
  %v5898 = vadd.f32 %v5801, %v5897
  %v5899 = vpop.f32.mrb[0].mxu0
  %v5900 = vpop.f32.mrb[0].mxu0
  %v5901 = vadd.f32 %v5804, %v5900
  %v5902 = vpop.f32.mrb[0].mxu0
  %5903 = vmatprep.mubr.bf16.mxu0 %v3279
  %5904 = vmatmul.mubr.bf16.gmra.mrb[0].mxu0 %v4501
  %v5905 = vpop.f32.mrb[0].mxu0
  %v5906 = vadd.f32 %v5809, %v5905
  %v5907 = vpop.f32.mrb[0].mxu0
  %v5908 = vpop.f32.mrb[0].mxu0
  %v5909 = vadd.f32 %v5812, %v5908
  %v5910 = vpop.f32.mrb[0].mxu0
  %5911 = vmatprep.mubr.bf16.mxu0 %v3288
  %5912 = vmatmul.mubr.bf16.gmra.mrb[0].mxu0 %v4504
  %v5913 = vpop.f32.mrb[0].mxu0
  %v5914 = vadd.f32 %v5817, %v5913
  %v5915 = vpop.f32.mrb[0].mxu0
  %v5916 = vpop.f32.mrb[0].mxu0
  %v5917 = vadd.f32 %v5820, %v5916
  %v5918 = vpop.f32.mrb[0].mxu0
  %5919 = vdwg.mxu0
  %5920 = vmatprep.subr.bf16.mxu0 0
  %5921 = vmatpush1.bf16.msra.mxu0 %v3761
  %5922 = vmatprep.subr.bf16.mxu0 0
  %5923 = vmatpush1.bf16.msra.mxu0 %v3762
  %5924 = vmatprep.subr.bf16.mxu0 0
  %5925 = vmatpush1.bf16.msra.mxu0 %v3763
  %5926 = vmatprep.subr.bf16.mxu0 0
  %5927 = vmatpush1.bf16.msra.mxu0 %v3764
  %5928 = vmatprep.subr.bf16.mxu0 0
  %5929 = vmatpush1.bf16.msra.mxu0 %v3765
  %5930 = vmatprep.subr.bf16.mxu0 0
  %5931 = vmatpush1.bf16.msra.mxu0 %v3766
  %5932 = vmatprep.subr.bf16.mxu0 0
  %5933 = vmatpush1.bf16.msra.mxu0 %v3767
  %5934 = vmatprep.subr.bf16.mxu0 0
  %5935 = vmatpush1.bf16.msra.mxu0 %v3768
  %5936 = vmatprep.subr.bf16.mxu0 0
  %5937 = vmatpush1.bf16.msra.mxu0 %v3769
  %5938 = vmatprep.subr.bf16.mxu0 0
  %5939 = vmatpush1.bf16.msra.mxu0 %v3770
  %5940 = vmatprep.subr.bf16.mxu0 0
  %5941 = vmatpush1.bf16.msra.mxu0 %v3771
  %5942 = vmatprep.subr.bf16.mxu0 0
  %5943 = vmatpush1.bf16.msra.mxu0 %v3772
  %5944 = vmatprep.subr.bf16.mxu0 0
  %5945 = vmatpush1.bf16.msra.mxu0 %v3773
  %5946 = vmatprep.subr.bf16.mxu0 0
  %5947 = vmatpush1.bf16.msra.mxu0 %v3774
  %5948 = vmatprep.subr.bf16.mxu0 0
  %5949 = vmatpush1.bf16.msra.mxu0 %v3775
  %5950 = vmatprep.subr.bf16.mxu0 0
  %5951 = vmatpush1.bf16.msra.mxu0 %v3776
  %5952 = vmatprep.mubr.bf16.mxu0 %v4484
  %5953 = vmatmul.mubr.bf16.gmra.mrb[0].mxu0 %v3226
  %v5954 = vpop.f32.mrb[0].mxu0
  %v5955 = vadd.f32 %v5858, %v5954
  %v5956 = vpop.f32.mrb[0].mxu0
  %v5957 = vpop.f32.mrb[0].mxu0
  %v5958 = vadd.f32 %v5861, %v5957
  %v5959 = vpop.f32.mrb[0].mxu0
  %5960 = vmatprep.mubr.bf16.mxu0 %v4487
  %5961 = vmatmul.mubr.bf16.gmra.mrb[0].mxu0 %v3235
  %v5962 = vpop.f32.mrb[0].mxu0
  %v5963 = vadd.f32 %v5866, %v5962
  %v5964 = vpop.f32.mrb[0].mxu0
  %v5965 = vpop.f32.mrb[0].mxu0
  %v5966 = vadd.f32 %v5869, %v5965
  %v5967 = vpop.f32.mrb[0].mxu0
  %5968 = vmatprep.mubr.bf16.mxu0 %v4490
  %5969 = vmatmul.mubr.bf16.gmra.mrb[0].mxu0 %v3244
  %v5970 = vpop.f32.mrb[0].mxu0
  %v5971 = vadd.f32 %v5874, %v5970
  %v5972 = vpop.f32.mrb[0].mxu0
  %v5973 = vpop.f32.mrb[0].mxu0
  %v5974 = vadd.f32 %v5877, %v5973
  %v5975 = vpop.f32.mrb[0].mxu0
  %5976 = vmatprep.mubr.bf16.mxu0 %v4493
  %5977 = vmatmul.mubr.bf16.gmra.mrb[0].mxu0 %v3253
  %v5978 = vpop.f32.mrb[0].mxu0
  %v5979 = vadd.f32 %v5882, %v5978
  %v5980 = vpop.f32.mrb[0].mxu0
  %v5981 = vpop.f32.mrb[0].mxu0
  %v5982 = vadd.f32 %v5885, %v5981
  %v5983 = vpop.f32.mrb[0].mxu0
  %5984 = vmatprep.mubr.bf16.mxu0 %v4496
  %5985 = vmatmul.mubr.bf16.gmra.mrb[0].mxu0 %v3262
  %v5986 = vpop.f32.mrb[0].mxu0
  %v5987 = vadd.f32 %v5890, %v5986
  %v5988 = vpop.f32.mrb[0].mxu0
  %v5989 = vpop.f32.mrb[0].mxu0
  %v5990 = vadd.f32 %v5893, %v5989
  %v5991 = vpop.f32.mrb[0].mxu0
  %5992 = vmatprep.mubr.bf16.mxu0 %v4499
  %5993 = vmatmul.mubr.bf16.gmra.mrb[0].mxu0 %v3271
  %v5994 = vpop.f32.mrb[0].mxu0
  %v5995 = vadd.f32 %v5898, %v5994
  %v5996 = vpop.f32.mrb[0].mxu0
  %v5997 = vpop.f32.mrb[0].mxu0
  %v5998 = vadd.f32 %v5901, %v5997
  %v5999 = vpop.f32.mrb[0].mxu0
  %6000 = vmatprep.mubr.bf16.mxu0 %v4502
  %6001 = vmatmul.mubr.bf16.gmra.mrb[0].mxu0 %v3280
  %v6002 = vpop.f32.mrb[0].mxu0
  %v6003 = vadd.f32 %v5906, %v6002
  %v6004 = vpop.f32.mrb[0].mxu0
  %v6005 = vpop.f32.mrb[0].mxu0
  %v6006 = vadd.f32 %v5909, %v6005
  %v6007 = vpop.f32.mrb[0].mxu0
  %6008 = vmatprep.mubr.bf16.mxu0 %v4505
  %6009 = vmatmul.mubr.bf16.gmra.mrb[0].mxu0 %v3289
  %v6010 = vpop.f32.mrb[0].mxu0
  %v6011 = vadd.f32 %v5914, %v6010
  %v6012 = vpop.f32.mrb[0].mxu0
  %v6013 = vpop.f32.mrb[0].mxu0
  %v6014 = vadd.f32 %v5917, %v6013
  %v6015 = vpop.f32.mrb[0].mxu0
  %6016 = vdwg.mxu0
  %6017 = vmatprep.subr.bf16.mxu0 0
  %6018 = vmatpush1.bf16.msra.mxu0 %v3777
  %6019 = vmatprep.subr.bf16.mxu0 0
  %6020 = vmatpush1.bf16.msra.mxu0 %v3778
  %6021 = vmatprep.subr.bf16.mxu0 0
  %6022 = vmatpush1.bf16.msra.mxu0 %v3779
  %6023 = vmatprep.subr.bf16.mxu0 0
  %6024 = vmatpush1.bf16.msra.mxu0 %v3780
  %6025 = vmatprep.subr.bf16.mxu0 0
  %6026 = vmatpush1.bf16.msra.mxu0 %v3781
  %6027 = vmatprep.subr.bf16.mxu0 0
  %6028 = vmatpush1.bf16.msra.mxu0 %v3782
  %6029 = vmatprep.subr.bf16.mxu0 0
  %6030 = vmatpush1.bf16.msra.mxu0 %v3783
  %6031 = vmatprep.subr.bf16.mxu0 0
  %6032 = vmatpush1.bf16.msra.mxu0 %v3784
  %6033 = vmatprep.subr.bf16.mxu0 0
  %6034 = vmatpush1.bf16.msra.mxu0 %v3785
  %6035 = vmatprep.subr.bf16.mxu0 0
  %6036 = vmatpush1.bf16.msra.mxu0 %v3786
  %6037 = vmatprep.subr.bf16.mxu0 0
  %6038 = vmatpush1.bf16.msra.mxu0 %v3787
  %6039 = vmatprep.subr.bf16.mxu0 0
  %6040 = vmatpush1.bf16.msra.mxu0 %v3788
  %6041 = vmatprep.subr.bf16.mxu0 0
  %6042 = vmatpush1.bf16.msra.mxu0 %v3789
  %6043 = vmatprep.subr.bf16.mxu0 0
  %6044 = vmatpush1.bf16.msra.mxu0 %v3790
  %6045 = vmatprep.subr.bf16.mxu0 0
  %6046 = vmatpush1.bf16.msra.mxu0 %v3791
  %6047 = vmatprep.subr.bf16.mxu0 0
  %6048 = vmatpush1.bf16.msra.mxu0 %v3792
  %6049 = vmatprep.mubr.bf16.mxu0 %v5119
  %6050 = vmatmul.mubr.bf16.gmra.mrb[0].mxu0 %v5118
  %v6051 = vpop.f32.mrb[0].mxu0
  %v6052 = vadd.f32 %v5955, %v6051
  %v6053 = vpop.f32.mrb[0].mxu0
  %v6054 = vpop.f32.mrb[0].mxu0
  %v6055 = vadd.f32 %v5958, %v6054
  %v6056 = vpop.f32.mrb[0].mxu0
  %6057 = vmatprep.mubr.bf16.mxu0 %v5122
  %6058 = vmatmul.mubr.bf16.gmra.mrb[0].mxu0 %v5121
  %v6059 = vpop.f32.mrb[0].mxu0
  %v6060 = vadd.f32 %v5963, %v6059
  %v6061 = vpop.f32.mrb[0].mxu0
  %v6062 = vpop.f32.mrb[0].mxu0
  %v6063 = vadd.f32 %v5966, %v6062
  %v6064 = vpop.f32.mrb[0].mxu0
  %6065 = vmatprep.mubr.bf16.mxu0 %v5125
  %6066 = vmatmul.mubr.bf16.gmra.mrb[0].mxu0 %v5124
  %v6067 = vpop.f32.mrb[0].mxu0
  %v6068 = vadd.f32 %v5971, %v6067
  %v6069 = vpop.f32.mrb[0].mxu0
  %v6070 = vpop.f32.mrb[0].mxu0
  %v6071 = vadd.f32 %v5974, %v6070
  %v6072 = vpop.f32.mrb[0].mxu0
  %6073 = vmatprep.mubr.bf16.mxu0 %v5128
  %6074 = vmatmul.mubr.bf16.gmra.mrb[0].mxu0 %v5127
  %v6075 = vpop.f32.mrb[0].mxu0
  %v6076 = vadd.f32 %v5979, %v6075
  %v6077 = vpop.f32.mrb[0].mxu0
  %v6078 = vpop.f32.mrb[0].mxu0
  %v6079 = vadd.f32 %v5982, %v6078
  %v6080 = vpop.f32.mrb[0].mxu0
  %6081 = vmatprep.mubr.bf16.mxu0 %v5131
  %6082 = vmatmul.mubr.bf16.gmra.mrb[0].mxu0 %v5130
  %v6083 = vpop.f32.mrb[0].mxu0
  %v6084 = vadd.f32 %v5987, %v6083
  %v6085 = vpop.f32.mrb[0].mxu0
  %v6086 = vpop.f32.mrb[0].mxu0
  %v6087 = vadd.f32 %v5990, %v6086
  %v6088 = vpop.f32.mrb[0].mxu0
  %6089 = vmatprep.mubr.bf16.mxu0 %v5134
  %6090 = vmatmul.mubr.bf16.gmra.mrb[0].mxu0 %v5133
  %v6091 = vpop.f32.mrb[0].mxu0
  %v6092 = vadd.f32 %v5995, %v6091
  %v6093 = vpop.f32.mrb[0].mxu0
  %v6094 = vpop.f32.mrb[0].mxu0
  %v6095 = vadd.f32 %v5998, %v6094
  %v6096 = vpop.f32.mrb[0].mxu0
  %6097 = vmatprep.mubr.bf16.mxu0 %v5137
  %6098 = vmatmul.mubr.bf16.gmra.mrb[0].mxu0 %v5136
  %v6099 = vpop.f32.mrb[0].mxu0
  %v6100 = vadd.f32 %v6003, %v6099
  %v6101 = vpop.f32.mrb[0].mxu0
  %v6102 = vpop.f32.mrb[0].mxu0
  %v6103 = vadd.f32 %v6006, %v6102
  %v6104 = vpop.f32.mrb[0].mxu0
  %6105 = vmatprep.mubr.bf16.mxu0 %v5140
  %6106 = vmatmul.mubr.bf16.gmra.mrb[0].mxu0 %v5139
  %v6107 = vpop.f32.mrb[0].mxu0
  %v6108 = vadd.f32 %v6011, %v6107
  %v6109 = vpop.f32.mrb[0].mxu0
  %v6110 = vpop.f32.mrb[0].mxu0
  %v6111 = vadd.f32 %v6014, %v6110
  %v6112 = vpop.f32.mrb[0].mxu0
  %6113 = vdwg.mxu0
  %6114 = vmatprep.subr.bf16.mxu0 0
  %6115 = vmatpush1.bf16.msra.mxu0 %v3793
  %6116 = vmatprep.subr.bf16.mxu0 0
  %6117 = vmatpush1.bf16.msra.mxu0 %v3794
  %6118 = vmatprep.subr.bf16.mxu0 0
  %6119 = vmatpush1.bf16.msra.mxu0 %v3795
  %6120 = vmatprep.subr.bf16.mxu0 0
  %6121 = vmatpush1.bf16.msra.mxu0 %v3796
  %6122 = vmatprep.subr.bf16.mxu0 0
  %6123 = vmatpush1.bf16.msra.mxu0 %v3797
  %6124 = vmatprep.subr.bf16.mxu0 0
  %6125 = vmatpush1.bf16.msra.mxu0 %v3798
  %6126 = vmatprep.subr.bf16.mxu0 0
  %6127 = vmatpush1.bf16.msra.mxu0 %v3799
  %6128 = vmatprep.subr.bf16.mxu0 0
  %6129 = vmatpush1.bf16.msra.mxu0 %v3800
  %6130 = vmatprep.subr.bf16.mxu0 0
  %6131 = vmatpush1.bf16.msra.mxu0 0
  %6132 = vmatprep.subr.bf16.mxu0 0
  %6133 = vmatpush1.bf16.msra.mxu0 0
  %6134 = vmatprep.subr.bf16.mxu0 0
  %6135 = vmatpush1.bf16.msra.mxu0 0
  %6136 = vmatprep.subr.bf16.mxu0 0
  %6137 = vmatpush1.bf16.msra.mxu0 0
  %6138 = vmatprep.subr.bf16.mxu0 0
  %6139 = vmatpush1.bf16.msra.mxu0 0
  %6140 = vmatprep.subr.bf16.mxu0 0
  %6141 = vmatpush1.bf16.msra.mxu0 0
  %6142 = vmatprep.subr.bf16.mxu0 0
  %6143 = vmatpush1.bf16.msra.mxu0 0
  %6144 = vmatprep.subr.bf16.mxu0 0
  %6145 = vmatpush1.bf16.msra.mxu0 0
  %6146 = vmatprep.mubr.bf16.mxu0 0
  %6147 = vmatmul.mubr.bf16.gmra.mrb[0].mxu0 %v5718
  %v6148 = vpop.f32.mrb[0].mxu0
  %v6149 = vadd.f32 %v6052, %v6148
  %v6150 = vpop.f32.mrb[0].mxu0
  %v6151 = vpop.f32.mrb[0].mxu0
  %v6152 = vadd.f32 %v6055, %v6151
  %v6153 = vpop.f32.mrb[0].mxu0
  %6154 = vmatprep.mubr.bf16.mxu0 0
  %6155 = vmatmul.mubr.bf16.gmra.mrb[0].mxu0 %v5719
  %v6156 = vpop.f32.mrb[0].mxu0
  %v6157 = vadd.f32 %v6060, %v6156
  %v6158 = vpop.f32.mrb[0].mxu0
  %v6159 = vpop.f32.mrb[0].mxu0
  %v6160 = vadd.f32 %v6063, %v6159
  %v6161 = vpop.f32.mrb[0].mxu0
  %6162 = vmatprep.mubr.bf16.mxu0 0
  %6163 = vmatmul.mubr.bf16.gmra.mrb[0].mxu0 %v5720
  %v6164 = vpop.f32.mrb[0].mxu0
  %v6165 = vadd.f32 %v6068, %v6164
  %v6166 = vpop.f32.mrb[0].mxu0
  %v6167 = vpop.f32.mrb[0].mxu0
  %v6168 = vadd.f32 %v6071, %v6167
  %v6169 = vpop.f32.mrb[0].mxu0
  %6170 = vmatprep.mubr.bf16.mxu0 0
  %6171 = vmatmul.mubr.bf16.gmra.mrb[0].mxu0 %v5721
  %v6172 = vpop.f32.mrb[0].mxu0
  %v6173 = vadd.f32 %v6076, %v6172
  %v6174 = vpop.f32.mrb[0].mxu0
  %v6175 = vpop.f32.mrb[0].mxu0
  %v6176 = vadd.f32 %v6079, %v6175
  %v6177 = vpop.f32.mrb[0].mxu0
  %6178 = vmatprep.mubr.bf16.mxu0 0
  %6179 = vmatmul.mubr.bf16.gmra.mrb[0].mxu0 %v5722
  %v6180 = vpop.f32.mrb[0].mxu0
  %v6181 = vadd.f32 %v6084, %v6180
  %v6182 = vpop.f32.mrb[0].mxu0
  %v6183 = vpop.f32.mrb[0].mxu0
  %v6184 = vadd.f32 %v6087, %v6183
  %v6185 = vpop.f32.mrb[0].mxu0
  %6186 = vmatprep.mubr.bf16.mxu0 0
  %6187 = vmatmul.mubr.bf16.gmra.mrb[0].mxu0 %v5723
  %v6188 = vpop.f32.mrb[0].mxu0
  %v6189 = vadd.f32 %v6092, %v6188
  %v6190 = vpop.f32.mrb[0].mxu0
  %v6191 = vpop.f32.mrb[0].mxu0
  %v6192 = vadd.f32 %v6095, %v6191
  %v6193 = vpop.f32.mrb[0].mxu0
  %6194 = vmatprep.mubr.bf16.mxu0 0
  %6195 = vmatmul.mubr.bf16.gmra.mrb[0].mxu0 %v5724
  %v6196 = vpop.f32.mrb[0].mxu0
  %v6197 = vadd.f32 %v6100, %v6196
  %v6198 = vpop.f32.mrb[0].mxu0
  %v6199 = vpop.f32.mrb[0].mxu0
  %v6200 = vadd.f32 %v6103, %v6199
  %v6201 = vpop.f32.mrb[0].mxu0
  %6202 = vmatprep.mubr.bf16.mxu0 0
  %6203 = vmatmul.mubr.bf16.gmra.mrb[0].mxu0 %v5725
  %v6204 = vpop.f32.mrb[0].mxu0
  %v6205 = vadd.f32 %v6108, %v6204
  %v6206 = vpop.f32.mrb[0].mxu0
  %v6207 = vpop.f32.mrb[0].mxu0
  %v6208 = vadd.f32 %v6111, %v6207
  %v6209 = vpop.f32.mrb[0].mxu0
  %6210 = vdwg.mxu0
  %v6211 = vtanh.pop %v6149
  %v6212 = vtanh.pop %v6152
  %v6213 = vtanh.pop %v6157
  %v6214 = vtanh.pop %v6160
  %v6215 = vtanh.pop %v6165
  %v6216 = vtanh.pop %v6168
  %v6217 = vtanh.pop %v6173
  %v6218 = vtanh.pop %v6176
  %v6219 = vtanh.pop %v6181
  %v6220 = vtanh.pop %v6184
  %v6221 = vtanh.pop %v6189
  %v6222 = vtanh.pop %v6192
  %v6223 = vtanh.pop %v6197
  %v6224 = vtanh.pop %v6200
  %v6225 = vtanh.pop %v6205
  %v6226 = vtanh.pop %v6208
  %v6227 = vadd.f32 %v6211, %v6212
  %v6228 = vadd.f32 %v6227, %v6213
  %v6229 = vadd.f32 %v6228, %v6214
  %v6230 = vadd.f32 %v6229, %v6215
  %v6231 = vadd.f32 %v6230, %v6216
  %v6232 = vadd.f32 %v6231, %v6217
  %v6233 = vadd.f32 %v6232, %v6218
  %v6234 = vadd.f32 %v6233, %v6219
  %v6235 = vadd.f32 %v6234, %v6220
  %v6236 = vadd.f32 %v6235, %v6221
  %v6237 = vadd.f32 %v6236, %v6222
  %v6238 = vadd.f32 %v6237, %v6223
  %v6239 = vadd.f32 %v6238, %v6224
  %v6240 = vadd.f32 %v6239, %v6225
  %v6241 = vadd.f32 %v6240, %v6226
  %v6242 = vrot.slane %v6241, 4
  %v6243 = vadd.f32 %v6241, %v6242
  %v6244 = vrot.slane %v6243, 2
  %v6245 = vadd.f32 %v6243, %v6244
  %v6246 = vrot.slane %v6245, 1
  %v6247 = vadd.f32 %v6245, %v6246
  %v6248 = vadd.f32 %v5663, %v6247
  %v6249 = vmul.f32 %v6211, %v6211
  %v6250 = vmul.f32 %v6212, %v6212
  %v6251 = vmul.f32 %v6213, %v6213
  %v6252 = vmul.f32 %v6214, %v6214
  %v6253 = vmul.f32 %v6215, %v6215
  %v6254 = vmul.f32 %v6216, %v6216
  %v6255 = vmul.f32 %v6217, %v6217
  %v6256 = vmul.f32 %v6218, %v6218
  %v6257 = vmul.f32 %v6219, %v6219
  %v6258 = vmul.f32 %v6220, %v6220
  %v6259 = vmul.f32 %v6221, %v6221
  %v6260 = vmul.f32 %v6222, %v6222
  %v6261 = vmul.f32 %v6223, %v6223
  %v6262 = vmul.f32 %v6224, %v6224
  %v6263 = vmul.f32 %v6225, %v6225
  %v6264 = vmul.f32 %v6226, %v6226
  %v6265 = vadd.f32 %v6249, %v6250
  %v6266 = vadd.f32 %v6265, %v6251
  %v6267 = vadd.f32 %v6266, %v6252
  %v6268 = vadd.f32 %v6267, %v6253
  %v6269 = vadd.f32 %v6268, %v6254
  %v6270 = vadd.f32 %v6269, %v6255
  %v6271 = vadd.f32 %v6270, %v6256
  %v6272 = vadd.f32 %v6271, %v6257
  %v6273 = vadd.f32 %v6272, %v6258
  %v6274 = vadd.f32 %v6273, %v6259
  %v6275 = vadd.f32 %v6274, %v6260
  %v6276 = vadd.f32 %v6275, %v6261
  %v6277 = vadd.f32 %v6276, %v6262
  %v6278 = vadd.f32 %v6277, %v6263
  %v6279 = vadd.f32 %v6278, %v6264
  %v6280 = vrot.slane %v6279, 4
  %v6281 = vadd.f32 %v6279, %v6280
  %v6282 = vrot.slane %v6281, 2
  %v6283 = vadd.f32 %v6281, %v6282
  %v6284 = vrot.slane %v6283, 1
  %v6285 = vadd.f32 %v6283, %v6284
  %v6286 = vadd.f32 %v5701, %v6285
  %v6287 = vmul.f32 %v6248, %v2502
  %v6288 = vmul.f32 %v6286, %v2502
  %v6289 = vmul.f32 %v6287, %v6287
  %v6290 = vsub.f32 %v6288, %v6289
  %v6291 = vadd.f32 %v6290, 1e-05
  %v6292 = vrsqrt.pop %v6291
  %v6293 = vsub.f32 %v4358, %v6287
  %v6294 = vsub.f32 %v4359, %v6287
  %v6295 = vsub.f32 %v4360, %v6287
  %v6296 = vsub.f32 %v4361, %v6287
  %v6297 = vsub.f32 %v4362, %v6287
  %v6298 = vsub.f32 %v4363, %v6287
  %v6299 = vsub.f32 %v4364, %v6287
  %v6300 = vsub.f32 %v4365, %v6287
  %v6301 = vsub.f32 %v4366, %v6287
  %v6302 = vsub.f32 %v4367, %v6287
  %v6303 = vsub.f32 %v4368, %v6287
  %v6304 = vsub.f32 %v4369, %v6287
  %v6305 = vsub.f32 %v4370, %v6287
  %v6306 = vsub.f32 %v4371, %v6287
  %v6307 = vsub.f32 %v4372, %v6287
  %v6308 = vsub.f32 %v4373, %v6287
  %v6309 = vmul.f32 %v6293, %v6292
  %v6310 = vmul.f32 %v6294, %v6292
  %v6311 = vmul.f32 %v6295, %v6292
  %v6312 = vmul.f32 %v6296, %v6292
  %v6313 = vmul.f32 %v6297, %v6292
  %v6314 = vmul.f32 %v6298, %v6292
  %v6315 = vmul.f32 %v6299, %v6292
  %v6316 = vmul.f32 %v6300, %v6292
  %v6317 = vmul.f32 %v6301, %v6292
  %v6318 = vmul.f32 %v6302, %v6292
  %v6319 = vmul.f32 %v6303, %v6292
  %v6320 = vmul.f32 %v6304, %v6292
  %v6321 = vmul.f32 %v6305, %v6292
  %v6322 = vmul.f32 %v6306, %v6292
  %v6323 = vmul.f32 %v6307, %v6292
  %v6324 = vmul.f32 %v6308, %v6292
  %6325 = vst [vmem:[%s7] sm:$0xff] %v6309
  %6326 = vst [vmem:[%s7 + $0x8] sm:$0xff] %v6310
  %6327 = vst [vmem:[%s7 + $0x10] sm:$0xff] %v6311
  %6328 = vst [vmem:[%s7 + $0x18] sm:$0xff] %v6312
  %6329 = vst [vmem:[%s7 + $0x20] sm:$0xff] %v6313
  %6330 = vst [vmem:[%s7 + $0x28] sm:$0xff] %v6314
  %6331 = vst [vmem:[%s7 + $0x30] sm:$0xff] %v6315
  %6332 = vst [vmem:[%s7 + $0x38] sm:$0xff] %v6316
  %6333 = vst [vmem:[%s7 + $0x40] sm:$0xff] %v6317
  %6334 = vst [vmem:[%s7 + $0x48] sm:$0xff] %v6318
  %6335 = vst [vmem:[%s7 + $0x50] sm:$0xff] %v6319
  %6336 = vst [vmem:[%s7 + $0x58] sm:$0xff] %v6320
  %6337 = vst [vmem:[%s7 + $0x60] sm:$0xff] %v6321
  %6338 = vst [vmem:[%s7 + $0x68] sm:$0xff] %v6322
  %6339 = vst [vmem:[%s7 + $0x70] sm:$0xff] %v6323
  %6340 = vst [vmem:[%s7 + $0x78] sm:$0xff] %v6324
  %v6341 = vsub.f32 %v4991, %v6287
  %v6342 = vsub.f32 %v4992, %v6287
  %v6343 = vsub.f32 %v4993, %v6287
  %v6344 = vsub.f32 %v4994, %v6287
  %v6345 = vsub.f32 %v4995, %v6287
  %v6346 = vsub.f32 %v4996, %v6287
  %v6347 = vsub.f32 %v4997, %v6287
  %v6348 = vsub.f32 %v4998, %v6287
  %v6349 = vsub.f32 %v4999, %v6287
  %v6350 = vsub.f32 %v5000, %v6287
  %v6351 = vsub.f32 %v5001, %v6287
  %v6352 = vsub.f32 %v5002, %v6287
  %v6353 = vsub.f32 %v5003, %v6287
  %v6354 = vsub.f32 %v5004, %v6287
  %v6355 = vsub.f32 %v5005, %v6287
  %v6356 = vsub.f32 %v5006, %v6287
  %v6357 = vmul.f32 %v6341, %v6292
  %v6358 = vmul.f32 %v6342, %v6292
  %v6359 = vmul.f32 %v6343, %v6292
  %v6360 = vmul.f32 %v6344, %v6292
  %v6361 = vmul.f32 %v6345, %v6292
  %v6362 = vmul.f32 %v6346, %v6292
  %v6363 = vmul.f32 %v6347, %v6292
  %v6364 = vmul.f32 %v6348, %v6292
  %v6365 = vmul.f32 %v6349, %v6292
  %v6366 = vmul.f32 %v6350, %v6292
  %v6367 = vmul.f32 %v6351, %v6292
  %v6368 = vmul.f32 %v6352, %v6292
  %v6369 = vmul.f32 %v6353, %v6292
  %v6370 = vmul.f32 %v6354, %v6292
  %v6371 = vmul.f32 %v6355, %v6292
  %v6372 = vmul.f32 %v6356, %v6292
  %s6373 = scalar_lea.vmem %s7, 128
  %6374 = vst [vmem:[%s6373] sm:$0xff] %v6357
  %6375 = vst [vmem:[%s6373 + $0x8] sm:$0xff] %v6358
  %6376 = vst [vmem:[%s6373 + $0x10] sm:$0xff] %v6359
  %6377 = vst [vmem:[%s6373 + $0x18] sm:$0xff] %v6360
  %6378 = vst [vmem:[%s6373 + $0x20] sm:$0xff] %v6361
  %6379 = vst [vmem:[%s6373 + $0x28] sm:$0xff] %v6362
  %6380 = vst [vmem:[%s6373 + $0x30] sm:$0xff] %v6363
  %6381 = vst [vmem:[%s6373 + $0x38] sm:$0xff] %v6364
  %6382 = vst [vmem:[%s6373 + $0x40] sm:$0xff] %v6365
  %6383 = vst [vmem:[%s6373 + $0x48] sm:$0xff] %v6366
  %6384 = vst [vmem:[%s6373 + $0x50] sm:$0xff] %v6367
  %6385 = vst [vmem:[%s6373 + $0x58] sm:$0xff] %v6368
  %6386 = vst [vmem:[%s6373 + $0x60] sm:$0xff] %v6369
  %6387 = vst [vmem:[%s6373 + $0x68] sm:$0xff] %v6370
  %6388 = vst [vmem:[%s6373 + $0x70] sm:$0xff] %v6371
  %6389 = vst [vmem:[%s6373 + $0x78] sm:$0xff] %v6372
  %v6390 = vsub.f32 %v5626, %v6287
  %v6391 = vsub.f32 %v5627, %v6287
  %v6392 = vsub.f32 %v5628, %v6287
  %v6393 = vsub.f32 %v5629, %v6287
  %v6394 = vsub.f32 %v5630, %v6287
  %v6395 = vsub.f32 %v5631, %v6287
  %v6396 = vsub.f32 %v5632, %v6287
  %v6397 = vsub.f32 %v5633, %v6287
  %v6398 = vsub.f32 %v5634, %v6287
  %v6399 = vsub.f32 %v5635, %v6287
  %v6400 = vsub.f32 %v5636, %v6287
  %v6401 = vsub.f32 %v5637, %v6287
  %v6402 = vsub.f32 %v5638, %v6287
  %v6403 = vsub.f32 %v5639, %v6287
  %v6404 = vsub.f32 %v5640, %v6287
  %v6405 = vsub.f32 %v5641, %v6287
  %v6406 = vmul.f32 %v6390, %v6292
  %v6407 = vmul.f32 %v6391, %v6292
  %v6408 = vmul.f32 %v6392, %v6292
  %v6409 = vmul.f32 %v6393, %v6292
  %v6410 = vmul.f32 %v6394, %v6292
  %v6411 = vmul.f32 %v6395, %v6292
  %v6412 = vmul.f32 %v6396, %v6292
  %v6413 = vmul.f32 %v6397, %v6292
  %v6414 = vmul.f32 %v6398, %v6292
  %v6415 = vmul.f32 %v6399, %v6292
  %v6416 = vmul.f32 %v6400, %v6292
  %v6417 = vmul.f32 %v6401, %v6292
  %v6418 = vmul.f32 %v6402, %v6292
  %v6419 = vmul.f32 %v6403, %v6292
  %v6420 = vmul.f32 %v6404, %v6292
  %v6421 = vmul.f32 %v6405, %v6292
  %s6422 = scalar_lea.vmem %s7, 256
  %6423 = vst [vmem:[%s6422] sm:$0xff] %v6406
  %6424 = vst [vmem:[%s6422 + $0x8] sm:$0xff] %v6407
  %6425 = vst [vmem:[%s6422 + $0x10] sm:$0xff] %v6408
  %6426 = vst [vmem:[%s6422 + $0x18] sm:$0xff] %v6409
  %6427 = vst [vmem:[%s6422 + $0x20] sm:$0xff] %v6410
  %6428 = vst [vmem:[%s6422 + $0x28] sm:$0xff] %v6411
  %6429 = vst [vmem:[%s6422 + $0x30] sm:$0xff] %v6412
  %6430 = vst [vmem:[%s6422 + $0x38] sm:$0xff] %v6413
  %6431 = vst [vmem:[%s6422 + $0x40] sm:$0xff] %v6414
  %6432 = vst [vmem:[%s6422 + $0x48] sm:$0xff] %v6415
  %6433 = vst [vmem:[%s6422 + $0x50] sm:$0xff] %v6416
  %6434 = vst [vmem:[%s6422 + $0x58] sm:$0xff] %v6417
  %6435 = vst [vmem:[%s6422 + $0x60] sm:$0xff] %v6418
  %6436 = vst [vmem:[%s6422 + $0x68] sm:$0xff] %v6419
  %6437 = vst [vmem:[%s6422 + $0x70] sm:$0xff] %v6420
  %6438 = vst [vmem:[%s6422 + $0x78] sm:$0xff] %v6421
  %v6439 = vsub.f32 %v6211, %v6287
  %v6440 = vsub.f32 %v6212, %v6287
  %v6441 = vsub.f32 %v6213, %v6287
  %v6442 = vsub.f32 %v6214, %v6287
  %v6443 = vsub.f32 %v6215, %v6287
  %v6444 = vsub.f32 %v6216, %v6287
  %v6445 = vsub.f32 %v6217, %v6287
  %v6446 = vsub.f32 %v6218, %v6287
  %v6447 = vsub.f32 %v6219, %v6287
  %v6448 = vsub.f32 %v6220, %v6287
  %v6449 = vsub.f32 %v6221, %v6287
  %v6450 = vsub.f32 %v6222, %v6287
  %v6451 = vsub.f32 %v6223, %v6287
  %v6452 = vsub.f32 %v6224, %v6287
  %v6453 = vsub.f32 %v6225, %v6287
  %v6454 = vsub.f32 %v6226, %v6287
  %v6455 = vmul.f32 %v6439, %v6292
  %v6456 = vmul.f32 %v6440, %v6292
  %v6457 = vmul.f32 %v6441, %v6292
  %v6458 = vmul.f32 %v6442, %v6292
  %v6459 = vmul.f32 %v6443, %v6292
  %v6460 = vmul.f32 %v6444, %v6292
  %v6461 = vmul.f32 %v6445, %v6292
  %v6462 = vmul.f32 %v6446, %v6292
  %v6463 = vmul.f32 %v6447, %v6292
  %v6464 = vmul.f32 %v6448, %v6292
  %v6465 = vmul.f32 %v6449, %v6292
  %v6466 = vmul.f32 %v6450, %v6292
  %v6467 = vmul.f32 %v6451, %v6292
  %v6468 = vmul.f32 %v6452, %v6292
  %v6469 = vmul.f32 %v6453, %v6292
  %v6470 = vmul.f32 %v6454, %v6292
  %s6471 = scalar_lea.vmem %s7, 384
  %6472 = vst [vmem:[%s6471] sm:$0xff] %v6455
  %6473 = vst [vmem:[%s6471 + $0x8] sm:$0xff] %v6456
  %6474 = vst [vmem:[%s6471 + $0x10] sm:$0xff] %v6457
  %6475 = vst [vmem:[%s6471 + $0x18] sm:$0xff] %v6458
  %6476 = vst [vmem:[%s6471 + $0x20] sm:$0xff] %v6459
  %6477 = vst [vmem:[%s6471 + $0x28] sm:$0xff] %v6460
  %6478 = vst [vmem:[%s6471 + $0x30] sm:$0xff] %v6461
  %6479 = vst [vmem:[%s6471 + $0x38] sm:$0xff] %v6462
  %6480 = vst [vmem:[%s6471 + $0x40] sm:$0xff] %v6463
  %6481 = vst [vmem:[%s6471 + $0x48] sm:$0xff] %v6464
  %6482 = vst [vmem:[%s6471 + $0x50] sm:$0xff] %v6465
  %6483 = vst [vmem:[%s6471 + $0x58] sm:$0xff] %v6466
  %6484 = vst [vmem:[%s6471 + $0x60] sm:$0xff] %v6467
  %6485 = vst [vmem:[%s6471 + $0x68] sm:$0xff] %v6468
  %6486 = vst [vmem:[%s6471 + $0x70] sm:$0xff] %v6469
  %6487 = vst [vmem:[%s6471 + $0x78] sm:$0xff] %v6470
  // Predicated region
  $region30: #{generator_forward.5} parent=0 // pred_check
    _
  $region31: #{generator_forward.5} parent=0 // pred_check_branch
    %6489 = sbr.rel (0) target = $region33
  $region32: #{generator_forward.5} parent=0 // pred_region
    _
  $region33: #{generator_forward.5} parent=0 // pred_fallthru
    _
  // Predicated region
  $region34: #{generator_forward.5} parent=0 // pred_check
    _
  $region35: #{generator_forward.5} parent=0 // pred_check_branch
    %6491 = sbr.rel (0) target = $region37
  $region36: #{generator_forward.5} parent=0 // pred_region
    _
  $region37: #{generator_forward.5} parent=0 // pred_fallthru
    _

</llo_original>
